<compile_context>
chip_gen: v6e
topology: v6e:2x2x1
jax: 0.10.0
libtpu: 0.0.40
codegen_flags: <defaults>
</compile_context>

<pallas_src>
import functools

import jax
import jax.numpy as jnp
from jax.experimental import pallas as pl
from jax.experimental.pallas import tpu as pltpu

EPS = 1e-5
CHUNK = 32   # streamed row-chunk; multiple of 16 -> aligned packed-bf16 stores


def _fused_kernel(H, W, x59_ref, x62_ref, g1_ref, b1_ref, w_hbm_ref,
                  g2_ref, b2_ref, out_ref, p_ref, w_vmem, w_sem):
    # x59_ref, x62_ref : (H*Wp, C) f32   width-padded slabs (image cols 0..W-1,
    #                                    zero cols W..Wp-1 per flat row of Wp)
    # g*/b*_ref        : (1, C)    f32   BN affine parameters
    # w_hbm_ref        : (9, C, C) bf16  conv taps, left in HBM (manual DMA)
    # out_ref          : (H*Wp, C) f32   conv accumulator, rewritten in place
    #                                    with the BN2 result (wrapper drops the
    #                                    2 garbage columns per row)
    # p_ref            : ((H+4)*Wp, C) bf16  zero-haloed activation, flat row-major
    # w_vmem / w_sem   : VMEM weight staging buffer + DMA completion semaphore
    M, C = x59_ref.shape
    Wp = W + 2
    S = 2 * Wp                       # slab start inside p_ref (multiple of 16)
    inv_n = 1.0 / float(H * W)
    n_chunks = M // CHUNK

    # ---- kick off the conv-weight DMA; it hides behind the BN1/scatter phase
    w_copy = pltpu.make_async_copy(w_hbm_ref, w_vmem, w_sem)
    w_copy.start()

    # Column-validity mask for one CHUNK of flat rows.  CHUNK % Wp == 0 and Wp
    # is a power of two, so (flat_row & (Wp-1)) < W is chunk-position-invariant.
    col = jax.lax.broadcasted_iota(jnp.int32, (CHUNK, 1), 0)
    valid = jnp.bitwise_and(col, Wp - 1) < W                       # (CHUNK, 1)

    # ---- BN1 batch statistics (training-mode BatchNorm2d).  Pad columns are
    # zero in the input slab, so they don't perturb the sums; divide by H*W.
    s1 = jnp.zeros((1, C), jnp.float32)
    q1 = jnp.zeros((1, C), jnp.float32)
    for i in range(n_chunks):
        xc = x59_ref[pl.ds(i * CHUNK, CHUNK), :]
        s1 = s1 + jnp.sum(xc, axis=0, keepdims=True)
        q1 = q1 + jnp.sum(xc * xc, axis=0, keepdims=True)
    mean1 = s1 * inv_n
    var1 = q1 * inv_n - mean1 * mean1
    scale1 = jax.lax.rsqrt(var1 + EPS) * g1_ref[...]
    shift1 = b1_ref[...] - mean1 * scale1

    # ---- Halo zeros: two tile-aligned bulk stores (top pad block; bottom pad
    # block + overrun slack).  Interior + left/right halo columns come from the
    # slab stores below (pad columns are re-zeroed after ReLU).
    zeros_blk = jnp.zeros((S, C), jnp.bfloat16)
    p_ref[pl.ds(0, S), :] = zeros_blk
    p_ref[pl.ds(S + M, S), :] = zeros_blk

    # ---- BN1 + residual add + ReLU, pad cols forced back to zero, written as
    # 16-row-aligned packed-bf16 chunk stores (no masked/shifted stores).
    for i in range(n_chunks):
        xc = x59_ref[pl.ds(i * CHUNK, CHUNK), :]
        rc = x62_ref[pl.ds(i * CHUNK, CHUNK), :]
        a = jnp.maximum(xc * scale1 + shift1 + rc, 0.0)
        a = jnp.where(valid, a, 0.0)          # ReLU(shift1) may be nonzero
        p_ref[pl.ds(S + i * CHUNK, CHUNK), :] = a.astype(jnp.bfloat16)

    # ---- 3x3 conv as 9 whole-image MXU matmuls, accumulated in VMEM ---------
    # Output flat index o = h*Wp + w accumulates
    #   p_ref[S + (kh-1)*Wp + (kw-1) + o] @ W[kh,kw]
    #     == zero-padded act[h+kh-1, w+kw-1] @ W[kh,kw].
    # Wrap-around terms only pollute the discarded pad columns w in [W, Wp).
    # (Odd tap offsets are sublane-misaligned bf16 loads; the realignment rides
    # on otherwise-idle XLU slots during the matmul stream.)
    w_copy.wait()
    for t in range(9):
        kh, kw = divmod(t, 3)
        base = S + (kh - 1) * Wp + (kw - 1)
        lhs = p_ref[pl.ds(base, M), :]                            # (M, C) bf16
        d = jnp.dot(lhs, w_vmem[t], preferred_element_type=jnp.float32)
        if t == 0:
            out_ref[...] = d
        else:
            out_ref[...] += d

    # ---- BN2 batch statistics over valid columns, streamed from out_ref -----
    s2 = jnp.zeros((1, C), jnp.float32)
    q2 = jnp.zeros((1, C), jnp.float32)
    for i in range(n_chunks):
        v = out_ref[pl.ds(i * CHUNK, CHUNK), :]
        vm = jnp.where(valid, v, 0.0)
        s2 = s2 + jnp.sum(vm, axis=0, keepdims=True)
        q2 = q2 + jnp.sum(vm * vm, axis=0, keepdims=True)
    mean2 = s2 * inv_n
    var2 = q2 * inv_n - mean2 * mean2
    scale2 = jax.lax.rsqrt(var2 + EPS) * g2_ref[...]
    shift2 = b2_ref[...] - mean2 * scale2

    # ---- BN2 apply in place: lane-dense aligned f32 chunk stores -------------
    for i in range(n_chunks):
        v = out_ref[pl.ds(i * CHUNK, CHUNK), :]
        out_ref[pl.ds(i * CHUNK, CHUNK), :] = v * scale2 + shift2


def prepack_conv_weight(conv_w_oihw):
    """OIHW -> (kh*3+kw, Cin, Cout) bf16.  Do once per weight and reuse."""
    Cout, Cin, KH, KW = conv_w_oihw.shape
    w = jnp.transpose(conv_w_oihw, (2, 3, 1, 0)).reshape(KH * KW, Cin, Cout)
    return w.astype(jnp.bfloat16)


@jax.jit
def fused_bn_add_relu_conv_bn(x59_nchw, x62_nchw, g1, b1, w_flat, g2, b2):
    """x59/x62: (1, C, H, W) f32; w_flat: prepacked (9, C, C) bf16; g/b: (C,)."""
    N, C, H, W = x59_nchw.shape
    assert N == 1, "kernel handles batch 1 (as in the reference module)"
    Wp = W + 2
    assert (Wp & (Wp - 1)) == 0 and Wp % 16 == 0, "design assumes W+2 = 16"
    M = H * Wp
    assert M % CHUNK == 0 and CHUNK % Wp == 0

    # NCHW -> (H, W, C), right-pad width with 2 zero columns, flatten rows.
    # TODO(synk): in real use these layout ops belong in the producer/consumer.
    def to_slab(x):
        hwc = jnp.transpose(x[0], (1, 2, 0)).astype(jnp.float32)
        return jnp.pad(hwc, ((0, 0), (0, 2), (0, 0))).reshape(M, C)

    x59 = to_slab(x59_nchw)
    x62 = to_slab(x62_nchw)

    vmem = pl.BlockSpec(memory_space=pltpu.MemorySpace.VMEM)
    hbm = pl.BlockSpec(memory_space=pl.ANY)        # weights: manual overlapped DMA
    cost = pl.CostEstimate(
        flops=2 * 9 * M * C * C,
        transcendentals=0,
        bytes_accessed=2 * M * C * 4 + 9 * C * C * 2 + M * C * 4)

    y_flat = pl.pallas_call(
        functools.partial(_fused_kernel, H, W),
        out_shape=jax.ShapeDtypeStruct((M, C), jnp.float32),
        in_specs=[vmem, vmem, vmem, vmem, hbm, vmem, vmem],
        out_specs=vmem,
        scratch_shapes=[
            pltpu.VMEM(((H + 4) * Wp, C), jnp.bfloat16),   # zero-haloed activation
            pltpu.VMEM((9, C, C), jnp.bfloat16),           # weight staging buffer
            pltpu.SemaphoreType.DMA(()),                   # weight-copy semaphore
        ],
        cost_estimate=cost,
    )(x59, x62,
      g1.reshape(1, C).astype(jnp.float32), b1.reshape(1, C).astype(jnp.float32),
      w_flat,
      g2.reshape(1, C).astype(jnp.float32), b2.reshape(1, C).astype(jnp.float32))

    # Drop the 2 padded columns per row, then HWC -> NCHW.
    y = y_flat.reshape(H, Wp, C)[:, :W, :]
    return jnp.transpose(y, (2, 0, 1))[None]


def reference(x59, x62, g1, b1, w, g2, b2):
    """Pure-JAX f32 reference of the PyTorch forward (training-mode BN), NCHW."""
    def bn_train(x, g, b):
        m = jnp.mean(x, axis=(0, 2, 3), keepdims=True)
        v = jnp.mean((x - m) ** 2, axis=(0, 2, 3), keepdims=True)
        return (x - m) * jax.lax.rsqrt(v + EPS) * g.reshape(1, -1, 1, 1) \
               + b.reshape(1, -1, 1, 1)

    a = jnp.maximum(bn_train(x59, g1, b1) + x62, 0.0)
    y = jax.lax.conv_general_dilated(
        a, w, window_strides=(1, 1), padding=((1, 1), (1, 1)),
        dimension_numbers=("NCHW", "OIHW", "NCHW"))
    return bn_train(y, g2, b2)


if __name__ == "__main__":
    N, C, H, W = 1, 256, 14, 14   # shapes implied by the module

    key = jax.random.PRNGKey(0)
    k1, k2, k3, k4, k5, k6, k7 = jax.random.split(key, 7)

    x59 = jax.random.normal(k1, (N, C, H, W), jnp.float32)
    x62 = jax.random.normal(k2, (N, C, H, W), jnp.float32)

    # deterministic synthetic parameters (shapes from the module __init__)
    g1 = 1.0 + 0.1 * jax.random.normal(k3, (C,), jnp.float32)
    b1 = 0.1 * jax.random.normal(k4, (C,), jnp.float32)
    conv_w = 0.05 * jax.random.normal(k5, (C, C, 3, 3), jnp.float32)  # OIHW
    g2 = 1.0 + 0.1 * jax.random.normal(k6, (C,), jnp.float32)
    b2 = 0.1 * jax.random.normal(k7, (C,), jnp.float32)

    # Weight repack done once, outside the jitted wrapper (cached across calls).
    w_flat = jax.block_until_ready(prepack_conv_weight(conv_w))

    out = fused_bn_add_relu_conv_bn(x59, x62, g1, b1, w_flat, g2, b2)
    out = jax.block_until_ready(out)

    ref = jax.block_until_ready(reference(x59, x62, g1, b1, conv_w, g2, b2))
    err = float(jnp.max(jnp.abs(out - ref)))
    # bf16 MXU operands (f32 accumulation) vs. the all-f32 reference.
    assert out.shape == (N, C, H, W) and err < 2e-2, f"mismatch: max abs err {err}"

    print("KERNEL_OK")
</pallas_src>

<mosaic_0001>
module attributes {stable_mosaic.version = 11 : i64} {
  func.func @_fused_kernel(%arg0: memref<224x256xf32, #tpu.memory_space<vmem>>, %arg1: memref<224x256xf32, #tpu.memory_space<vmem>>, %arg2: memref<1x256xf32, #tpu.memory_space<vmem>>, %arg3: memref<1x256xf32, #tpu.memory_space<vmem>>, %arg4: memref<9x256x256xbf16, #tpu.memory_space<any>>, %arg5: memref<1x256xf32, #tpu.memory_space<vmem>>, %arg6: memref<1x256xf32, #tpu.memory_space<vmem>>, %arg7: memref<224x256xf32, #tpu.memory_space<vmem>>, %arg8: memref<288x256xbf16, #tpu.memory_space<vmem>>, %arg9: memref<9x256x256xbf16, #tpu.memory_space<vmem>>, %arg10: memref<!tpu.dma_semaphore, #tpu.memory_space<semaphore_mem>>) attributes {dimension_semantics = [], scalar_prefetch = 0 : i64, scratch_operands = 3 : i64, tpu.core_type = #tpu.core_type<tc>} {
    tpu.enqueue_dma source(%arg4 : memref<9x256x256xbf16, #tpu.memory_space<any>>) target(%arg9 : memref<9x256x256xbf16, #tpu.memory_space<vmem>>) target_semaphore(%arg10 : memref<!tpu.dma_semaphore, #tpu.memory_space<semaphore_mem>>)
    %0 = tpu.iota {dimensions = array<i32: 0>} : vector<32x1xi32>
    %c15_i32 = arith.constant 15 : i32
    %1 = vector.broadcast %c15_i32 : i32 to vector<32x1xi32>
    %2 = arith.andi %0, %1 : vector<32x1xi32>
    %c14_i32 = arith.constant 14 : i32
    %3 = vector.broadcast %c14_i32 : i32 to vector<32x1xi32>
    %4 = arith.cmpi slt, %2, %3 : vector<32x1xi32>
    %cst = arith.constant 0.000000e+00 : f32
    %5 = vector.broadcast %cst : f32 to vector<1x256xf32>
    %cst_0 = arith.constant 0.000000e+00 : f32
    %6 = vector.broadcast %cst_0 : f32 to vector<1x256xf32>
    %c0 = arith.constant 0 : index
    %c0_1 = arith.constant 0 : index
    %7 = vector.load %arg0[%c0, %c0_1] : memref<224x256xf32, #tpu.memory_space<vmem>>, vector<32x256xf32>
    %cst_2 = arith.constant dense<0.000000e+00> : vector<256xf32>
    %8 = vector.multi_reduction <add>, %7, %cst_2 [0] : vector<32x256xf32> to vector<256xf32>
    %9 = vector.shape_cast %8 : vector<256xf32> to vector<1x256xf32>
    %10 = arith.addf %5, %9 : vector<1x256xf32>
    %11 = arith.mulf %7, %7 : vector<32x256xf32>
    %cst_3 = arith.constant dense<0.000000e+00> : vector<256xf32>
    %12 = vector.multi_reduction <add>, %11, %cst_3 [0] : vector<32x256xf32> to vector<256xf32>
    %13 = vector.shape_cast %12 : vector<256xf32> to vector<1x256xf32>
    %14 = arith.addf %6, %13 : vector<1x256xf32>
    %c32 = arith.constant 32 : index
    %c0_4 = arith.constant 0 : index
    %15 = vector.load %arg0[%c32, %c0_4] : memref<224x256xf32, #tpu.memory_space<vmem>>, vector<32x256xf32>
    %cst_5 = arith.constant dense<0.000000e+00> : vector<256xf32>
    %16 = vector.multi_reduction <add>, %15, %cst_5 [0] : vector<32x256xf32> to vector<256xf32>
    %17 = vector.shape_cast %16 : vector<256xf32> to vector<1x256xf32>
    %18 = arith.addf %10, %17 : vector<1x256xf32>
    %19 = arith.mulf %15, %15 : vector<32x256xf32>
    %cst_6 = arith.constant dense<0.000000e+00> : vector<256xf32>
    %20 = vector.multi_reduction <add>, %19, %cst_6 [0] : vector<32x256xf32> to vector<256xf32>
    %21 = vector.shape_cast %20 : vector<256xf32> to vector<1x256xf32>
    %22 = arith.addf %14, %21 : vector<1x256xf32>
    %c64 = arith.constant 64 : index
    %c0_7 = arith.constant 0 : index
    %23 = vector.load %arg0[%c64, %c0_7] : memref<224x256xf32, #tpu.memory_space<vmem>>, vector<32x256xf32>
    %cst_8 = arith.constant dense<0.000000e+00> : vector<256xf32>
    %24 = vector.multi_reduction <add>, %23, %cst_8 [0] : vector<32x256xf32> to vector<256xf32>
    %25 = vector.shape_cast %24 : vector<256xf32> to vector<1x256xf32>
    %26 = arith.addf %18, %25 : vector<1x256xf32>
    %27 = arith.mulf %23, %23 : vector<32x256xf32>
    %cst_9 = arith.constant dense<0.000000e+00> : vector<256xf32>
    %28 = vector.multi_reduction <add>, %27, %cst_9 [0] : vector<32x256xf32> to vector<256xf32>
    %29 = vector.shape_cast %28 : vector<256xf32> to vector<1x256xf32>
    %30 = arith.addf %22, %29 : vector<1x256xf32>
    %c96 = arith.constant 96 : index
    %c0_10 = arith.constant 0 : index
    %31 = vector.load %arg0[%c96, %c0_10] : memref<224x256xf32, #tpu.memory_space<vmem>>, vector<32x256xf32>
    %cst_11 = arith.constant dense<0.000000e+00> : vector<256xf32>
    %32 = vector.multi_reduction <add>, %31, %cst_11 [0] : vector<32x256xf32> to vector<256xf32>
    %33 = vector.shape_cast %32 : vector<256xf32> to vector<1x256xf32>
    %34 = arith.addf %26, %33 : vector<1x256xf32>
    %35 = arith.mulf %31, %31 : vector<32x256xf32>
    %cst_12 = arith.constant dense<0.000000e+00> : vector<256xf32>
    %36 = vector.multi_reduction <add>, %35, %cst_12 [0] : vector<32x256xf32> to vector<256xf32>
    %37 = vector.shape_cast %36 : vector<256xf32> to vector<1x256xf32>
    %38 = arith.addf %30, %37 : vector<1x256xf32>
    %c128 = arith.constant 128 : index
    %c0_13 = arith.constant 0 : index
    %39 = vector.load %arg0[%c128, %c0_13] : memref<224x256xf32, #tpu.memory_space<vmem>>, vector<32x256xf32>
    %cst_14 = arith.constant dense<0.000000e+00> : vector<256xf32>
    %40 = vector.multi_reduction <add>, %39, %cst_14 [0] : vector<32x256xf32> to vector<256xf32>
    %41 = vector.shape_cast %40 : vector<256xf32> to vector<1x256xf32>
    %42 = arith.addf %34, %41 : vector<1x256xf32>
    %43 = arith.mulf %39, %39 : vector<32x256xf32>
    %cst_15 = arith.constant dense<0.000000e+00> : vector<256xf32>
    %44 = vector.multi_reduction <add>, %43, %cst_15 [0] : vector<32x256xf32> to vector<256xf32>
    %45 = vector.shape_cast %44 : vector<256xf32> to vector<1x256xf32>
    %46 = arith.addf %38, %45 : vector<1x256xf32>
    %c160 = arith.constant 160 : index
    %c0_16 = arith.constant 0 : index
    %47 = vector.load %arg0[%c160, %c0_16] : memref<224x256xf32, #tpu.memory_space<vmem>>, vector<32x256xf32>
    %cst_17 = arith.constant dense<0.000000e+00> : vector<256xf32>
    %48 = vector.multi_reduction <add>, %47, %cst_17 [0] : vector<32x256xf32> to vector<256xf32>
    %49 = vector.shape_cast %48 : vector<256xf32> to vector<1x256xf32>
    %50 = arith.addf %42, %49 : vector<1x256xf32>
    %51 = arith.mulf %47, %47 : vector<32x256xf32>
    %cst_18 = arith.constant dense<0.000000e+00> : vector<256xf32>
    %52 = vector.multi_reduction <add>, %51, %cst_18 [0] : vector<32x256xf32> to vector<256xf32>
    %53 = vector.shape_cast %52 : vector<256xf32> to vector<1x256xf32>
    %54 = arith.addf %46, %53 : vector<1x256xf32>
    %c192 = arith.constant 192 : index
    %c0_19 = arith.constant 0 : index
    %55 = vector.load %arg0[%c192, %c0_19] : memref<224x256xf32, #tpu.memory_space<vmem>>, vector<32x256xf32>
    %cst_20 = arith.constant dense<0.000000e+00> : vector<256xf32>
    %56 = vector.multi_reduction <add>, %55, %cst_20 [0] : vector<32x256xf32> to vector<256xf32>
    %57 = vector.shape_cast %56 : vector<256xf32> to vector<1x256xf32>
    %58 = arith.addf %50, %57 : vector<1x256xf32>
    %59 = arith.mulf %55, %55 : vector<32x256xf32>
    %cst_21 = arith.constant dense<0.000000e+00> : vector<256xf32>
    %60 = vector.multi_reduction <add>, %59, %cst_21 [0] : vector<32x256xf32> to vector<256xf32>
    %61 = vector.shape_cast %60 : vector<256xf32> to vector<1x256xf32>
    %62 = arith.addf %54, %61 : vector<1x256xf32>
    %cst_22 = arith.constant 0.00510204071 : f32
    %63 = vector.broadcast %cst_22 : f32 to vector<1x256xf32>
    %64 = arith.mulf %58, %63 : vector<1x256xf32>
    %cst_23 = arith.constant 0.00510204071 : f32
    %65 = vector.broadcast %cst_23 : f32 to vector<1x256xf32>
    %66 = arith.mulf %62, %65 : vector<1x256xf32>
    %67 = arith.mulf %64, %64 : vector<1x256xf32>
    %68 = arith.subf %66, %67 : vector<1x256xf32>
    %cst_24 = arith.constant 9.99999974E-6 : f32
    %69 = vector.broadcast %cst_24 : f32 to vector<1x256xf32>
    %70 = arith.addf %68, %69 : vector<1x256xf32>
    %71 = math.rsqrt %70 : vector<1x256xf32>
    %c0_25 = arith.constant 0 : index
    %c0_26 = arith.constant 0 : index
    %72 = vector.load %arg2[%c0_25, %c0_26] : memref<1x256xf32, #tpu.memory_space<vmem>>, vector<1x256xf32>
    %73 = arith.mulf %71, %72 : vector<1x256xf32>
    %c0_27 = arith.constant 0 : index
    %c0_28 = arith.constant 0 : index
    %74 = vector.load %arg3[%c0_27, %c0_28] : memref<1x256xf32, #tpu.memory_space<vmem>>, vector<1x256xf32>
    %75 = arith.mulf %64, %73 : vector<1x256xf32>
    %76 = arith.subf %74, %75 : vector<1x256xf32>
    %cst_29 = arith.constant 0.000000e+00 : bf16
    %77 = vector.broadcast %cst_29 : bf16 to vector<32x256xbf16>
    %c0_30 = arith.constant 0 : index
    %c0_31 = arith.constant 0 : index
    %78 = vector.load %arg8[%c0_30, %c0_31] : memref<288x256xbf16, #tpu.memory_space<vmem>>, vector<32x256xbf16>
    tpu.vector_store %arg8[%c0_30, %c0_31], %77 {strides = array<i32>} : memref<288x256xbf16, #tpu.memory_space<vmem>>, vector<32x256xbf16>,
    %c256 = arith.constant 256 : index
    %c0_32 = arith.constant 0 : index
    %79 = vector.load %arg8[%c256, %c0_32] : memref<288x256xbf16, #tpu.memory_space<vmem>>, vector<32x256xbf16>
    tpu.vector_store %arg8[%c256, %c0_32], %77 {strides = array<i32>} : memref<288x256xbf16, #tpu.memory_space<vmem>>, vector<32x256xbf16>,
    %c0_33 = arith.constant 0 : index
    %c0_34 = arith.constant 0 : index
    %80 = vector.load %arg0[%c0_33, %c0_34] : memref<224x256xf32, #tpu.memory_space<vmem>>, vector<32x256xf32>
    %c0_35 = arith.constant 0 : index
    %c0_36 = arith.constant 0 : index
    %81 = vector.load %arg1[%c0_35, %c0_36] : memref<224x256xf32, #tpu.memory_space<vmem>>, vector<32x256xf32>
    %82 = vector.broadcast %73 : vector<1x256xf32> to vector<32x256xf32>
    %83 = arith.mulf %80, %82 : vector<32x256xf32>
    %84 = vector.broadcast %76 : vector<1x256xf32> to vector<32x256xf32>
    %85 = arith.addf %83, %84 : vector<32x256xf32>
    %86 = arith.addf %85, %81 : vector<32x256xf32>
    %cst_37 = arith.constant 0.000000e+00 : f32
    %87 = vector.broadcast %cst_37 : f32 to vector<32x256xf32>
    %88 = arith.maximumf %86, %87 : vector<32x256xf32>
    %cst_38 = arith.constant 0.000000e+00 : f32
    %89 = vector.shape_cast %4 : vector<32x1xi1> to vector<32x1xi1>
    %90 = vector.broadcast %89 : vector<32x1xi1> to vector<32x256xi1>
    %91 = vector.broadcast %cst_38 : f32 to vector<32x256xf32>
    %92 = arith.select %90, %88, %91 : vector<32x256xi1>, vector<32x256xf32>
    %93 = arith.truncf %92 : vector<32x256xf32> to vector<32x256xbf16>
    %c32_39 = arith.constant 32 : index
    %c0_40 = arith.constant 0 : index
    %94 = vector.load %arg8[%c32_39, %c0_40] : memref<288x256xbf16, #tpu.memory_space<vmem>>, vector<32x256xbf16>
    tpu.vector_store %arg8[%c32_39, %c0_40], %93 {strides = array<i32>} : memref<288x256xbf16, #tpu.memory_space<vmem>>, vector<32x256xbf16>,
    %c32_41 = arith.constant 32 : index
    %c0_42 = arith.constant 0 : index
    %95 = vector.load %arg0[%c32_41, %c0_42] : memref<224x256xf32, #tpu.memory_space<vmem>>, vector<32x256xf32>
    %c32_43 = arith.constant 32 : index
    %c0_44 = arith.constant 0 : index
    %96 = vector.load %arg1[%c32_43, %c0_44] : memref<224x256xf32, #tpu.memory_space<vmem>>, vector<32x256xf32>
    %97 = vector.broadcast %73 : vector<1x256xf32> to vector<32x256xf32>
    %98 = arith.mulf %95, %97 : vector<32x256xf32>
    %99 = vector.broadcast %76 : vector<1x256xf32> to vector<32x256xf32>
    %100 = arith.addf %98, %99 : vector<32x256xf32>
    %101 = arith.addf %100, %96 : vector<32x256xf32>
    %cst_45 = arith.constant 0.000000e+00 : f32
    %102 = vector.broadcast %cst_45 : f32 to vector<32x256xf32>
    %103 = arith.maximumf %101, %102 : vector<32x256xf32>
    %cst_46 = arith.constant 0.000000e+00 : f32
    %104 = vector.shape_cast %4 : vector<32x1xi1> to vector<32x1xi1>
    %105 = vector.broadcast %104 : vector<32x1xi1> to vector<32x256xi1>
    %106 = vector.broadcast %cst_46 : f32 to vector<32x256xf32>
    %107 = arith.select %105, %103, %106 : vector<32x256xi1>, vector<32x256xf32>
    %108 = arith.truncf %107 : vector<32x256xf32> to vector<32x256xbf16>
    %c64_47 = arith.constant 64 : index
    %c0_48 = arith.constant 0 : index
    %109 = vector.load %arg8[%c64_47, %c0_48] : memref<288x256xbf16, #tpu.memory_space<vmem>>, vector<32x256xbf16>
    tpu.vector_store %arg8[%c64_47, %c0_48], %108 {strides = array<i32>} : memref<288x256xbf16, #tpu.memory_space<vmem>>, vector<32x256xbf16>,
    %c64_49 = arith.constant 64 : index
    %c0_50 = arith.constant 0 : index
    %110 = vector.load %arg0[%c64_49, %c0_50] : memref<224x256xf32, #tpu.memory_space<vmem>>, vector<32x256xf32>
    %c64_51 = arith.constant 64 : index
    %c0_52 = arith.constant 0 : index
    %111 = vector.load %arg1[%c64_51, %c0_52] : memref<224x256xf32, #tpu.memory_space<vmem>>, vector<32x256xf32>
    %112 = vector.broadcast %73 : vector<1x256xf32> to vector<32x256xf32>
    %113 = arith.mulf %110, %112 : vector<32x256xf32>
    %114 = vector.broadcast %76 : vector<1x256xf32> to vector<32x256xf32>
    %115 = arith.addf %113, %114 : vector<32x256xf32>
    %116 = arith.addf %115, %111 : vector<32x256xf32>
    %cst_53 = arith.constant 0.000000e+00 : f32
    %117 = vector.broadcast %cst_53 : f32 to vector<32x256xf32>
    %118 = arith.maximumf %116, %117 : vector<32x256xf32>
    %cst_54 = arith.constant 0.000000e+00 : f32
    %119 = vector.shape_cast %4 : vector<32x1xi1> to vector<32x1xi1>
    %120 = vector.broadcast %119 : vector<32x1xi1> to vector<32x256xi1>
    %121 = vector.broadcast %cst_54 : f32 to vector<32x256xf32>
    %122 = arith.select %120, %118, %121 : vector<32x256xi1>, vector<32x256xf32>
    %123 = arith.truncf %122 : vector<32x256xf32> to vector<32x256xbf16>
    %c96_55 = arith.constant 96 : index
    %c0_56 = arith.constant 0 : index
    %124 = vector.load %arg8[%c96_55, %c0_56] : memref<288x256xbf16, #tpu.memory_space<vmem>>, vector<32x256xbf16>
    tpu.vector_store %arg8[%c96_55, %c0_56], %123 {strides = array<i32>} : memref<288x256xbf16, #tpu.memory_space<vmem>>, vector<32x256xbf16>,
    %c96_57 = arith.constant 96 : index
    %c0_58 = arith.constant 0 : index
    %125 = vector.load %arg0[%c96_57, %c0_58] : memref<224x256xf32, #tpu.memory_space<vmem>>, vector<32x256xf32>
    %c96_59 = arith.constant 96 : index
    %c0_60 = arith.constant 0 : index
    %126 = vector.load %arg1[%c96_59, %c0_60] : memref<224x256xf32, #tpu.memory_space<vmem>>, vector<32x256xf32>
    %127 = vector.broadcast %73 : vector<1x256xf32> to vector<32x256xf32>
    %128 = arith.mulf %125, %127 : vector<32x256xf32>
    %129 = vector.broadcast %76 : vector<1x256xf32> to vector<32x256xf32>
    %130 = arith.addf %128, %129 : vector<32x256xf32>
    %131 = arith.addf %130, %126 : vector<32x256xf32>
    %cst_61 = arith.constant 0.000000e+00 : f32
    %132 = vector.broadcast %cst_61 : f32 to vector<32x256xf32>
    %133 = arith.maximumf %131, %132 : vector<32x256xf32>
    %cst_62 = arith.constant 0.000000e+00 : f32
    %134 = vector.shape_cast %4 : vector<32x1xi1> to vector<32x1xi1>
    %135 = vector.broadcast %134 : vector<32x1xi1> to vector<32x256xi1>
    %136 = vector.broadcast %cst_62 : f32 to vector<32x256xf32>
    %137 = arith.select %135, %133, %136 : vector<32x256xi1>, vector<32x256xf32>
    %138 = arith.truncf %137 : vector<32x256xf32> to vector<32x256xbf16>
    %c128_63 = arith.constant 128 : index
    %c0_64 = arith.constant 0 : index
    %139 = vector.load %arg8[%c128_63, %c0_64] : memref<288x256xbf16, #tpu.memory_space<vmem>>, vector<32x256xbf16>
    tpu.vector_store %arg8[%c128_63, %c0_64], %138 {strides = array<i32>} : memref<288x256xbf16, #tpu.memory_space<vmem>>, vector<32x256xbf16>,
    %c128_65 = arith.constant 128 : index
    %c0_66 = arith.constant 0 : index
    %140 = vector.load %arg0[%c128_65, %c0_66] : memref<224x256xf32, #tpu.memory_space<vmem>>, vector<32x256xf32>
    %c128_67 = arith.constant 128 : index
    %c0_68 = arith.constant 0 : index
    %141 = vector.load %arg1[%c128_67, %c0_68] : memref<224x256xf32, #tpu.memory_space<vmem>>, vector<32x256xf32>
    %142 = vector.broadcast %73 : vector<1x256xf32> to vector<32x256xf32>
    %143 = arith.mulf %140, %142 : vector<32x256xf32>
    %144 = vector.broadcast %76 : vector<1x256xf32> to vector<32x256xf32>
    %145 = arith.addf %143, %144 : vector<32x256xf32>
    %146 = arith.addf %145, %141 : vector<32x256xf32>
    %cst_69 = arith.constant 0.000000e+00 : f32
    %147 = vector.broadcast %cst_69 : f32 to vector<32x256xf32>
    %148 = arith.maximumf %146, %147 : vector<32x256xf32>
    %cst_70 = arith.constant 0.000000e+00 : f32
    %149 = vector.shape_cast %4 : vector<32x1xi1> to vector<32x1xi1>
    %150 = vector.broadcast %149 : vector<32x1xi1> to vector<32x256xi1>
    %151 = vector.broadcast %cst_70 : f32 to vector<32x256xf32>
    %152 = arith.select %150, %148, %151 : vector<32x256xi1>, vector<32x256xf32>
    %153 = arith.truncf %152 : vector<32x256xf32> to vector<32x256xbf16>
    %c160_71 = arith.constant 160 : index
    %c0_72 = arith.constant 0 : index
    %154 = vector.load %arg8[%c160_71, %c0_72] : memref<288x256xbf16, #tpu.memory_space<vmem>>, vector<32x256xbf16>
    tpu.vector_store %arg8[%c160_71, %c0_72], %153 {strides = array<i32>} : memref<288x256xbf16, #tpu.memory_space<vmem>>, vector<32x256xbf16>,
    %c160_73 = arith.constant 160 : index
    %c0_74 = arith.constant 0 : index
    %155 = vector.load %arg0[%c160_73, %c0_74] : memref<224x256xf32, #tpu.memory_space<vmem>>, vector<32x256xf32>
    %c160_75 = arith.constant 160 : index
    %c0_76 = arith.constant 0 : index
    %156 = vector.load %arg1[%c160_75, %c0_76] : memref<224x256xf32, #tpu.memory_space<vmem>>, vector<32x256xf32>
    %157 = vector.broadcast %73 : vector<1x256xf32> to vector<32x256xf32>
    %158 = arith.mulf %155, %157 : vector<32x256xf32>
    %159 = vector.broadcast %76 : vector<1x256xf32> to vector<32x256xf32>
    %160 = arith.addf %158, %159 : vector<32x256xf32>
    %161 = arith.addf %160, %156 : vector<32x256xf32>
    %cst_77 = arith.constant 0.000000e+00 : f32
    %162 = vector.broadcast %cst_77 : f32 to vector<32x256xf32>
    %163 = arith.maximumf %161, %162 : vector<32x256xf32>
    %cst_78 = arith.constant 0.000000e+00 : f32
    %164 = vector.shape_cast %4 : vector<32x1xi1> to vector<32x1xi1>
    %165 = vector.broadcast %164 : vector<32x1xi1> to vector<32x256xi1>
    %166 = vector.broadcast %cst_78 : f32 to vector<32x256xf32>
    %167 = arith.select %165, %163, %166 : vector<32x256xi1>, vector<32x256xf32>
    %168 = arith.truncf %167 : vector<32x256xf32> to vector<32x256xbf16>
    %c192_79 = arith.constant 192 : index
    %c0_80 = arith.constant 0 : index
    %169 = vector.load %arg8[%c192_79, %c0_80] : memref<288x256xbf16, #tpu.memory_space<vmem>>, vector<32x256xbf16>
    tpu.vector_store %arg8[%c192_79, %c0_80], %168 {strides = array<i32>} : memref<288x256xbf16, #tpu.memory_space<vmem>>, vector<32x256xbf16>,
    %c192_81 = arith.constant 192 : index
    %c0_82 = arith.constant 0 : index
    %170 = vector.load %arg0[%c192_81, %c0_82] : memref<224x256xf32, #tpu.memory_space<vmem>>, vector<32x256xf32>
    %c192_83 = arith.constant 192 : index
    %c0_84 = arith.constant 0 : index
    %171 = vector.load %arg1[%c192_83, %c0_84] : memref<224x256xf32, #tpu.memory_space<vmem>>, vector<32x256xf32>
    %172 = vector.broadcast %73 : vector<1x256xf32> to vector<32x256xf32>
    %173 = arith.mulf %170, %172 : vector<32x256xf32>
    %174 = vector.broadcast %76 : vector<1x256xf32> to vector<32x256xf32>
    %175 = arith.addf %173, %174 : vector<32x256xf32>
    %176 = arith.addf %175, %171 : vector<32x256xf32>
    %cst_85 = arith.constant 0.000000e+00 : f32
    %177 = vector.broadcast %cst_85 : f32 to vector<32x256xf32>
    %178 = arith.maximumf %176, %177 : vector<32x256xf32>
    %cst_86 = arith.constant 0.000000e+00 : f32
    %179 = vector.shape_cast %4 : vector<32x1xi1> to vector<32x1xi1>
    %180 = vector.broadcast %179 : vector<32x1xi1> to vector<32x256xi1>
    %181 = vector.broadcast %cst_86 : f32 to vector<32x256xf32>
    %182 = arith.select %180, %178, %181 : vector<32x256xi1>, vector<32x256xf32>
    %183 = arith.truncf %182 : vector<32x256xf32> to vector<32x256xbf16>
    %c224 = arith.constant 224 : index
    %c0_87 = arith.constant 0 : index
    %184 = vector.load %arg8[%c224, %c0_87] : memref<288x256xbf16, #tpu.memory_space<vmem>>, vector<32x256xbf16>
    tpu.vector_store %arg8[%c224, %c0_87], %183 {strides = array<i32>} : memref<288x256xbf16, #tpu.memory_space<vmem>>, vector<32x256xbf16>,
    tpu.wait_dma2 semaphore(%arg10 : memref<!tpu.dma_semaphore, #tpu.memory_space<semaphore_mem>>) src(%arg4 : memref<9x256x256xbf16, #tpu.memory_space<any>>) dst(%arg9 : memref<9x256x256xbf16, #tpu.memory_space<vmem>>)
    %c15 = arith.constant 15 : index
    %c0_88 = arith.constant 0 : index
    %185 = vector.load %arg8[%c15, %c0_88] : memref<288x256xbf16, #tpu.memory_space<vmem>>, vector<224x256xbf16>
    %c0_89 = arith.constant 0 : index
    %c0_90 = arith.constant 0 : index
    %c0_91 = arith.constant 0 : index
    %186 = vector.load %arg9[%c0_89, %c0_90, %c0_91] : memref<9x256x256xbf16, #tpu.memory_space<vmem>>, vector<1x256x256xbf16>
    %187 = vector.shape_cast %186 : vector<1x256x256xbf16> to vector<256x256xbf16>
    %cst_92 = arith.constant dense<0.000000e+00> : vector<224x256xf32>
    %188 = tpu.matmul %185, %187, %cst_92 {dimension_numbers = #tpu.dot_dimension_numbers<[1], [0], [0], [1], [0, 0, 1, 1], [], []>} : vector<224x256xbf16>, vector<256x256xbf16>, vector<224x256xf32> -> vector<224x256xf32>
    %c0_93 = arith.constant 0 : index
    %c0_94 = arith.constant 0 : index
    %189 = vector.load %arg7[%c0_93, %c0_94] : memref<224x256xf32, #tpu.memory_space<vmem>>, vector<224x256xf32>
    tpu.vector_store %arg7[%c0_93, %c0_94], %188 {strides = array<i32>} : memref<224x256xf32, #tpu.memory_space<vmem>>, vector<224x256xf32>,
    %c16 = arith.constant 16 : index
    %c0_95 = arith.constant 0 : index
    %190 = vector.load %arg8[%c16, %c0_95] : memref<288x256xbf16, #tpu.memory_space<vmem>>, vector<224x256xbf16>
    %c1 = arith.constant 1 : index
    %c0_96 = arith.constant 0 : index
    %c0_97 = arith.constant 0 : index
    %191 = vector.load %arg9[%c1, %c0_96, %c0_97] : memref<9x256x256xbf16, #tpu.memory_space<vmem>>, vector<1x256x256xbf16>
    %192 = vector.shape_cast %191 : vector<1x256x256xbf16> to vector<256x256xbf16>
    %cst_98 = arith.constant dense<0.000000e+00> : vector<224x256xf32>
    %193 = tpu.matmul %190, %192, %cst_98 {dimension_numbers = #tpu.dot_dimension_numbers<[1], [0], [0], [1], [0, 0, 1, 1], [], []>} : vector<224x256xbf16>, vector<256x256xbf16>, vector<224x256xf32> -> vector<224x256xf32>
    %c0_99 = arith.constant 0 : index
    %c0_100 = arith.constant 0 : index
    %194 = vector.load %arg7[%c0_99, %c0_100] : memref<224x256xf32, #tpu.memory_space<vmem>>, vector<224x256xf32>
    %195 = arith.addf %194, %193 : vector<224x256xf32>
    %c0_101 = arith.constant 0 : index
    %c0_102 = arith.constant 0 : index
    %196 = vector.load %arg7[%c0_101, %c0_102] : memref<224x256xf32, #tpu.memory_space<vmem>>, vector<224x256xf32>
    tpu.vector_store %arg7[%c0_101, %c0_102], %195 {strides = array<i32>} : memref<224x256xf32, #tpu.memory_space<vmem>>, vector<224x256xf32>,
    %c17 = arith.constant 17 : index
    %c0_103 = arith.constant 0 : index
    %197 = vector.load %arg8[%c17, %c0_103] : memref<288x256xbf16, #tpu.memory_space<vmem>>, vector<224x256xbf16>
    %c2 = arith.constant 2 : index
    %c0_104 = arith.constant 0 : index
    %c0_105 = arith.constant 0 : index
    %198 = vector.load %arg9[%c2, %c0_104, %c0_105] : memref<9x256x256xbf16, #tpu.memory_space<vmem>>, vector<1x256x256xbf16>
    %199 = vector.shape_cast %198 : vector<1x256x256xbf16> to vector<256x256xbf16>
    %cst_106 = arith.constant dense<0.000000e+00> : vector<224x256xf32>
    %200 = tpu.matmul %197, %199, %cst_106 {dimension_numbers = #tpu.dot_dimension_numbers<[1], [0], [0], [1], [0, 0, 1, 1], [], []>} : vector<224x256xbf16>, vector<256x256xbf16>, vector<224x256xf32> -> vector<224x256xf32>
    %c0_107 = arith.constant 0 : index
    %c0_108 = arith.constant 0 : index
    %201 = vector.load %arg7[%c0_107, %c0_108] : memref<224x256xf32, #tpu.memory_space<vmem>>, vector<224x256xf32>
    %202 = arith.addf %201, %200 : vector<224x256xf32>
    %c0_109 = arith.constant 0 : index
    %c0_110 = arith.constant 0 : index
    %203 = vector.load %arg7[%c0_109, %c0_110] : memref<224x256xf32, #tpu.memory_space<vmem>>, vector<224x256xf32>
    tpu.vector_store %arg7[%c0_109, %c0_110], %202 {strides = array<i32>} : memref<224x256xf32, #tpu.memory_space<vmem>>, vector<224x256xf32>,
    %c31 = arith.constant 31 : index
    %c0_111 = arith.constant 0 : index
    %204 = vector.load %arg8[%c31, %c0_111] : memref<288x256xbf16, #tpu.memory_space<vmem>>, vector<224x256xbf16>
    %c3 = arith.constant 3 : index
    %c0_112 = arith.constant 0 : index
    %c0_113 = arith.constant 0 : index
    %205 = vector.load %arg9[%c3, %c0_112, %c0_113] : memref<9x256x256xbf16, #tpu.memory_space<vmem>>, vector<1x256x256xbf16>
    %206 = vector.shape_cast %205 : vector<1x256x256xbf16> to vector<256x256xbf16>
    %cst_114 = arith.constant dense<0.000000e+00> : vector<224x256xf32>
    %207 = tpu.matmul %204, %206, %cst_114 {dimension_numbers = #tpu.dot_dimension_numbers<[1], [0], [0], [1], [0, 0, 1, 1], [], []>} : vector<224x256xbf16>, vector<256x256xbf16>, vector<224x256xf32> -> vector<224x256xf32>
    %c0_115 = arith.constant 0 : index
    %c0_116 = arith.constant 0 : index
    %208 = vector.load %arg7[%c0_115, %c0_116] : memref<224x256xf32, #tpu.memory_space<vmem>>, vector<224x256xf32>
    %209 = arith.addf %208, %207 : vector<224x256xf32>
    %c0_117 = arith.constant 0 : index
    %c0_118 = arith.constant 0 : index
    %210 = vector.load %arg7[%c0_117, %c0_118] : memref<224x256xf32, #tpu.memory_space<vmem>>, vector<224x256xf32>
    tpu.vector_store %arg7[%c0_117, %c0_118], %209 {strides = array<i32>} : memref<224x256xf32, #tpu.memory_space<vmem>>, vector<224x256xf32>,
    %c32_119 = arith.constant 32 : index
    %c0_120 = arith.constant 0 : index
    %211 = vector.load %arg8[%c32_119, %c0_120] : memref<288x256xbf16, #tpu.memory_space<vmem>>, vector<224x256xbf16>
    %c4 = arith.constant 4 : index
    %c0_121 = arith.constant 0 : index
    %c0_122 = arith.constant 0 : index
    %212 = vector.load %arg9[%c4, %c0_121, %c0_122] : memref<9x256x256xbf16, #tpu.memory_space<vmem>>, vector<1x256x256xbf16>
    %213 = vector.shape_cast %212 : vector<1x256x256xbf16> to vector<256x256xbf16>
    %cst_123 = arith.constant dense<0.000000e+00> : vector<224x256xf32>
    %214 = tpu.matmul %211, %213, %cst_123 {dimension_numbers = #tpu.dot_dimension_numbers<[1], [0], [0], [1], [0, 0, 1, 1], [], []>} : vector<224x256xbf16>, vector<256x256xbf16>, vector<224x256xf32> -> vector<224x256xf32>
    %c0_124 = arith.constant 0 : index
    %c0_125 = arith.constant 0 : index
    %215 = vector.load %arg7[%c0_124, %c0_125] : memref<224x256xf32, #tpu.memory_space<vmem>>, vector<224x256xf32>
    %216 = arith.addf %215, %214 : vector<224x256xf32>
    %c0_126 = arith.constant 0 : index
    %c0_127 = arith.constant 0 : index
    %217 = vector.load %arg7[%c0_126, %c0_127] : memref<224x256xf32, #tpu.memory_space<vmem>>, vector<224x256xf32>
    tpu.vector_store %arg7[%c0_126, %c0_127], %216 {strides = array<i32>} : memref<224x256xf32, #tpu.memory_space<vmem>>, vector<224x256xf32>,
    %c33 = arith.constant 33 : index
    %c0_128 = arith.constant 0 : index
    %218 = vector.load %arg8[%c33, %c0_128] : memref<288x256xbf16, #tpu.memory_space<vmem>>, vector<224x256xbf16>
    %c5 = arith.constant 5 : index
    %c0_129 = arith.constant 0 : index
    %c0_130 = arith.constant 0 : index
    %219 = vector.load %arg9[%c5, %c0_129, %c0_130] : memref<9x256x256xbf16, #tpu.memory_space<vmem>>, vector<1x256x256xbf16>
    %220 = vector.shape_cast %219 : vector<1x256x256xbf16> to vector<256x256xbf16>
    %cst_131 = arith.constant dense<0.000000e+00> : vector<224x256xf32>
    %221 = tpu.matmul %218, %220, %cst_131 {dimension_numbers = #tpu.dot_dimension_numbers<[1], [0], [0], [1], [0, 0, 1, 1], [], []>} : vector<224x256xbf16>, vector<256x256xbf16>, vector<224x256xf32> -> vector<224x256xf32>
    %c0_132 = arith.constant 0 : index
    %c0_133 = arith.constant 0 : index
    %222 = vector.load %arg7[%c0_132, %c0_133] : memref<224x256xf32, #tpu.memory_space<vmem>>, vector<224x256xf32>
    %223 = arith.addf %222, %221 : vector<224x256xf32>
    %c0_134 = arith.constant 0 : index
    %c0_135 = arith.constant 0 : index
    %224 = vector.load %arg7[%c0_134, %c0_135] : memref<224x256xf32, #tpu.memory_space<vmem>>, vector<224x256xf32>
    tpu.vector_store %arg7[%c0_134, %c0_135], %223 {strides = array<i32>} : memref<224x256xf32, #tpu.memory_space<vmem>>, vector<224x256xf32>,
    %c47 = arith.constant 47 : index
    %c0_136 = arith.constant 0 : index
    %225 = vector.load %arg8[%c47, %c0_136] : memref<288x256xbf16, #tpu.memory_space<vmem>>, vector<224x256xbf16>
    %c6 = arith.constant 6 : index
    %c0_137 = arith.constant 0 : index
    %c0_138 = arith.constant 0 : index
    %226 = vector.load %arg9[%c6, %c0_137, %c0_138] : memref<9x256x256xbf16, #tpu.memory_space<vmem>>, vector<1x256x256xbf16>
    %227 = vector.shape_cast %226 : vector<1x256x256xbf16> to vector<256x256xbf16>
    %cst_139 = arith.constant dense<0.000000e+00> : vector<224x256xf32>
    %228 = tpu.matmul %225, %227, %cst_139 {dimension_numbers = #tpu.dot_dimension_numbers<[1], [0], [0], [1], [0, 0, 1, 1], [], []>} : vector<224x256xbf16>, vector<256x256xbf16>, vector<224x256xf32> -> vector<224x256xf32>
    %c0_140 = arith.constant 0 : index
    %c0_141 = arith.constant 0 : index
    %229 = vector.load %arg7[%c0_140, %c0_141] : memref<224x256xf32, #tpu.memory_space<vmem>>, vector<224x256xf32>
    %230 = arith.addf %229, %228 : vector<224x256xf32>
    %c0_142 = arith.constant 0 : index
    %c0_143 = arith.constant 0 : index
    %231 = vector.load %arg7[%c0_142, %c0_143] : memref<224x256xf32, #tpu.memory_space<vmem>>, vector<224x256xf32>
    tpu.vector_store %arg7[%c0_142, %c0_143], %230 {strides = array<i32>} : memref<224x256xf32, #tpu.memory_space<vmem>>, vector<224x256xf32>,
    %c48 = arith.constant 48 : index
    %c0_144 = arith.constant 0 : index
    %232 = vector.load %arg8[%c48, %c0_144] : memref<288x256xbf16, #tpu.memory_space<vmem>>, vector<224x256xbf16>
    %c7 = arith.constant 7 : index
    %c0_145 = arith.constant 0 : index
    %c0_146 = arith.constant 0 : index
    %233 = vector.load %arg9[%c7, %c0_145, %c0_146] : memref<9x256x256xbf16, #tpu.memory_space<vmem>>, vector<1x256x256xbf16>
    %234 = vector.shape_cast %233 : vector<1x256x256xbf16> to vector<256x256xbf16>
    %cst_147 = arith.constant dense<0.000000e+00> : vector<224x256xf32>
    %235 = tpu.matmul %232, %234, %cst_147 {dimension_numbers = #tpu.dot_dimension_numbers<[1], [0], [0], [1], [0, 0, 1, 1], [], []>} : vector<224x256xbf16>, vector<256x256xbf16>, vector<224x256xf32> -> vector<224x256xf32>
    %c0_148 = arith.constant 0 : index
    %c0_149 = arith.constant 0 : index
    %236 = vector.load %arg7[%c0_148, %c0_149] : memref<224x256xf32, #tpu.memory_space<vmem>>, vector<224x256xf32>
    %237 = arith.addf %236, %235 : vector<224x256xf32>
    %c0_150 = arith.constant 0 : index
    %c0_151 = arith.constant 0 : index
    %238 = vector.load %arg7[%c0_150, %c0_151] : memref<224x256xf32, #tpu.memory_space<vmem>>, vector<224x256xf32>
    tpu.vector_store %arg7[%c0_150, %c0_151], %237 {strides = array<i32>} : memref<224x256xf32, #tpu.memory_space<vmem>>, vector<224x256xf32>,
    %c49 = arith.constant 49 : index
    %c0_152 = arith.constant 0 : index
    %239 = vector.load %arg8[%c49, %c0_152] : memref<288x256xbf16, #tpu.memory_space<vmem>>, vector<224x256xbf16>
    %c8 = arith.constant 8 : index
    %c0_153 = arith.constant 0 : index
    %c0_154 = arith.constant 0 : index
    %240 = vector.load %arg9[%c8, %c0_153, %c0_154] : memref<9x256x256xbf16, #tpu.memory_space<vmem>>, vector<1x256x256xbf16>
    %241 = vector.shape_cast %240 : vector<1x256x256xbf16> to vector<256x256xbf16>
    %cst_155 = arith.constant dense<0.000000e+00> : vector<224x256xf32>
    %242 = tpu.matmul %239, %241, %cst_155 {dimension_numbers = #tpu.dot_dimension_numbers<[1], [0], [0], [1], [0, 0, 1, 1], [], []>} : vector<224x256xbf16>, vector<256x256xbf16>, vector<224x256xf32> -> vector<224x256xf32>
    %c0_156 = arith.constant 0 : index
    %c0_157 = arith.constant 0 : index
    %243 = vector.load %arg7[%c0_156, %c0_157] : memref<224x256xf32, #tpu.memory_space<vmem>>, vector<224x256xf32>
    %244 = arith.addf %243, %242 : vector<224x256xf32>
    %c0_158 = arith.constant 0 : index
    %c0_159 = arith.constant 0 : index
    %245 = vector.load %arg7[%c0_158, %c0_159] : memref<224x256xf32, #tpu.memory_space<vmem>>, vector<224x256xf32>
    tpu.vector_store %arg7[%c0_158, %c0_159], %244 {strides = array<i32>} : memref<224x256xf32, #tpu.memory_space<vmem>>, vector<224x256xf32>,
    %cst_160 = arith.constant 0.000000e+00 : f32
    %246 = vector.broadcast %cst_160 : f32 to vector<1x256xf32>
    %cst_161 = arith.constant 0.000000e+00 : f32
    %247 = vector.broadcast %cst_161 : f32 to vector<1x256xf32>
    %c0_162 = arith.constant 0 : index
    %c0_163 = arith.constant 0 : index
    %248 = vector.load %arg7[%c0_162, %c0_163] : memref<224x256xf32, #tpu.memory_space<vmem>>, vector<32x256xf32>
    %cst_164 = arith.constant 0.000000e+00 : f32
    %249 = vector.shape_cast %4 : vector<32x1xi1> to vector<32x1xi1>
    %250 = vector.broadcast %249 : vector<32x1xi1> to vector<32x256xi1>
    %251 = vector.broadcast %cst_164 : f32 to vector<32x256xf32>
    %252 = arith.select %250, %248, %251 : vector<32x256xi1>, vector<32x256xf32>
    %cst_165 = arith.constant dense<0.000000e+00> : vector<256xf32>
    %253 = vector.multi_reduction <add>, %252, %cst_165 [0] : vector<32x256xf32> to vector<256xf32>
    %254 = vector.shape_cast %253 : vector<256xf32> to vector<1x256xf32>
    %255 = arith.addf %246, %254 : vector<1x256xf32>
    %256 = arith.mulf %252, %252 : vector<32x256xf32>
    %cst_166 = arith.constant dense<0.000000e+00> : vector<256xf32>
    %257 = vector.multi_reduction <add>, %256, %cst_166 [0] : vector<32x256xf32> to vector<256xf32>
    %258 = vector.shape_cast %257 : vector<256xf32> to vector<1x256xf32>
    %259 = arith.addf %247, %258 : vector<1x256xf32>
    %c32_167 = arith.constant 32 : index
    %c0_168 = arith.constant 0 : index
    %260 = vector.load %arg7[%c32_167, %c0_168] : memref<224x256xf32, #tpu.memory_space<vmem>>, vector<32x256xf32>
    %cst_169 = arith.constant 0.000000e+00 : f32
    %261 = vector.shape_cast %4 : vector<32x1xi1> to vector<32x1xi1>
    %262 = vector.broadcast %261 : vector<32x1xi1> to vector<32x256xi1>
    %263 = vector.broadcast %cst_169 : f32 to vector<32x256xf32>
    %264 = arith.select %262, %260, %263 : vector<32x256xi1>, vector<32x256xf32>
    %cst_170 = arith.constant dense<0.000000e+00> : vector<256xf32>
    %265 = vector.multi_reduction <add>, %264, %cst_170 [0] : vector<32x256xf32> to vector<256xf32>
    %266 = vector.shape_cast %265 : vector<256xf32> to vector<1x256xf32>
    %267 = arith.addf %255, %266 : vector<1x256xf32>
    %268 = arith.mulf %264, %264 : vector<32x256xf32>
    %cst_171 = arith.constant dense<0.000000e+00> : vector<256xf32>
    %269 = vector.multi_reduction <add>, %268, %cst_171 [0] : vector<32x256xf32> to vector<256xf32>
    %270 = vector.shape_cast %269 : vector<256xf32> to vector<1x256xf32>
    %271 = arith.addf %259, %270 : vector<1x256xf32>
    %c64_172 = arith.constant 64 : index
    %c0_173 = arith.constant 0 : index
    %272 = vector.load %arg7[%c64_172, %c0_173] : memref<224x256xf32, #tpu.memory_space<vmem>>, vector<32x256xf32>
    %cst_174 = arith.constant 0.000000e+00 : f32
    %273 = vector.shape_cast %4 : vector<32x1xi1> to vector<32x1xi1>
    %274 = vector.broadcast %273 : vector<32x1xi1> to vector<32x256xi1>
    %275 = vector.broadcast %cst_174 : f32 to vector<32x256xf32>
    %276 = arith.select %274, %272, %275 : vector<32x256xi1>, vector<32x256xf32>
    %cst_175 = arith.constant dense<0.000000e+00> : vector<256xf32>
    %277 = vector.multi_reduction <add>, %276, %cst_175 [0] : vector<32x256xf32> to vector<256xf32>
    %278 = vector.shape_cast %277 : vector<256xf32> to vector<1x256xf32>
    %279 = arith.addf %267, %278 : vector<1x256xf32>
    %280 = arith.mulf %276, %276 : vector<32x256xf32>
    %cst_176 = arith.constant dense<0.000000e+00> : vector<256xf32>
    %281 = vector.multi_reduction <add>, %280, %cst_176 [0] : vector<32x256xf32> to vector<256xf32>
    %282 = vector.shape_cast %281 : vector<256xf32> to vector<1x256xf32>
    %283 = arith.addf %271, %282 : vector<1x256xf32>
    %c96_177 = arith.constant 96 : index
    %c0_178 = arith.constant 0 : index
    %284 = vector.load %arg7[%c96_177, %c0_178] : memref<224x256xf32, #tpu.memory_space<vmem>>, vector<32x256xf32>
    %cst_179 = arith.constant 0.000000e+00 : f32
    %285 = vector.shape_cast %4 : vector<32x1xi1> to vector<32x1xi1>
    %286 = vector.broadcast %285 : vector<32x1xi1> to vector<32x256xi1>
    %287 = vector.broadcast %cst_179 : f32 to vector<32x256xf32>
    %288 = arith.select %286, %284, %287 : vector<32x256xi1>, vector<32x256xf32>
    %cst_180 = arith.constant dense<0.000000e+00> : vector<256xf32>
    %289 = vector.multi_reduction <add>, %288, %cst_180 [0] : vector<32x256xf32> to vector<256xf32>
    %290 = vector.shape_cast %289 : vector<256xf32> to vector<1x256xf32>
    %291 = arith.addf %279, %290 : vector<1x256xf32>
    %292 = arith.mulf %288, %288 : vector<32x256xf32>
    %cst_181 = arith.constant dense<0.000000e+00> : vector<256xf32>
    %293 = vector.multi_reduction <add>, %292, %cst_181 [0] : vector<32x256xf32> to vector<256xf32>
    %294 = vector.shape_cast %293 : vector<256xf32> to vector<1x256xf32>
    %295 = arith.addf %283, %294 : vector<1x256xf32>
    %c128_182 = arith.constant 128 : index
    %c0_183 = arith.constant 0 : index
    %296 = vector.load %arg7[%c128_182, %c0_183] : memref<224x256xf32, #tpu.memory_space<vmem>>, vector<32x256xf32>
    %cst_184 = arith.constant 0.000000e+00 : f32
    %297 = vector.shape_cast %4 : vector<32x1xi1> to vector<32x1xi1>
    %298 = vector.broadcast %297 : vector<32x1xi1> to vector<32x256xi1>
    %299 = vector.broadcast %cst_184 : f32 to vector<32x256xf32>
    %300 = arith.select %298, %296, %299 : vector<32x256xi1>, vector<32x256xf32>
    %cst_185 = arith.constant dense<0.000000e+00> : vector<256xf32>
    %301 = vector.multi_reduction <add>, %300, %cst_185 [0] : vector<32x256xf32> to vector<256xf32>
    %302 = vector.shape_cast %301 : vector<256xf32> to vector<1x256xf32>
    %303 = arith.addf %291, %302 : vector<1x256xf32>
    %304 = arith.mulf %300, %300 : vector<32x256xf32>
    %cst_186 = arith.constant dense<0.000000e+00> : vector<256xf32>
    %305 = vector.multi_reduction <add>, %304, %cst_186 [0] : vector<32x256xf32> to vector<256xf32>
    %306 = vector.shape_cast %305 : vector<256xf32> to vector<1x256xf32>
    %307 = arith.addf %295, %306 : vector<1x256xf32>
    %c160_187 = arith.constant 160 : index
    %c0_188 = arith.constant 0 : index
    %308 = vector.load %arg7[%c160_187, %c0_188] : memref<224x256xf32, #tpu.memory_space<vmem>>, vector<32x256xf32>
    %cst_189 = arith.constant 0.000000e+00 : f32
    %309 = vector.shape_cast %4 : vector<32x1xi1> to vector<32x1xi1>
    %310 = vector.broadcast %309 : vector<32x1xi1> to vector<32x256xi1>
    %311 = vector.broadcast %cst_189 : f32 to vector<32x256xf32>
    %312 = arith.select %310, %308, %311 : vector<32x256xi1>, vector<32x256xf32>
    %cst_190 = arith.constant dense<0.000000e+00> : vector<256xf32>
    %313 = vector.multi_reduction <add>, %312, %cst_190 [0] : vector<32x256xf32> to vector<256xf32>
    %314 = vector.shape_cast %313 : vector<256xf32> to vector<1x256xf32>
    %315 = arith.addf %303, %314 : vector<1x256xf32>
    %316 = arith.mulf %312, %312 : vector<32x256xf32>
    %cst_191 = arith.constant dense<0.000000e+00> : vector<256xf32>
    %317 = vector.multi_reduction <add>, %316, %cst_191 [0] : vector<32x256xf32> to vector<256xf32>
    %318 = vector.shape_cast %317 : vector<256xf32> to vector<1x256xf32>
    %319 = arith.addf %307, %318 : vector<1x256xf32>
    %c192_192 = arith.constant 192 : index
    %c0_193 = arith.constant 0 : index
    %320 = vector.load %arg7[%c192_192, %c0_193] : memref<224x256xf32, #tpu.memory_space<vmem>>, vector<32x256xf32>
    %cst_194 = arith.constant 0.000000e+00 : f32
    %321 = vector.shape_cast %4 : vector<32x1xi1> to vector<32x1xi1>
    %322 = vector.broadcast %321 : vector<32x1xi1> to vector<32x256xi1>
    %323 = vector.broadcast %cst_194 : f32 to vector<32x256xf32>
    %324 = arith.select %322, %320, %323 : vector<32x256xi1>, vector<32x256xf32>
    %cst_195 = arith.constant dense<0.000000e+00> : vector<256xf32>
    %325 = vector.multi_reduction <add>, %324, %cst_195 [0] : vector<32x256xf32> to vector<256xf32>
    %326 = vector.shape_cast %325 : vector<256xf32> to vector<1x256xf32>
    %327 = arith.addf %315, %326 : vector<1x256xf32>
    %328 = arith.mulf %324, %324 : vector<32x256xf32>
    %cst_196 = arith.constant dense<0.000000e+00> : vector<256xf32>
    %329 = vector.multi_reduction <add>, %328, %cst_196 [0] : vector<32x256xf32> to vector<256xf32>
    %330 = vector.shape_cast %329 : vector<256xf32> to vector<1x256xf32>
    %331 = arith.addf %319, %330 : vector<1x256xf32>
    %cst_197 = arith.constant 0.00510204071 : f32
    %332 = vector.broadcast %cst_197 : f32 to vector<1x256xf32>
    %333 = arith.mulf %327, %332 : vector<1x256xf32>
    %cst_198 = arith.constant 0.00510204071 : f32
    %334 = vector.broadcast %cst_198 : f32 to vector<1x256xf32>
    %335 = arith.mulf %331, %334 : vector<1x256xf32>
    %336 = arith.mulf %333, %333 : vector<1x256xf32>
    %337 = arith.subf %335, %336 : vector<1x256xf32>
    %cst_199 = arith.constant 9.99999974E-6 : f32
    %338 = vector.broadcast %cst_199 : f32 to vector<1x256xf32>
    %339 = arith.addf %337, %338 : vector<1x256xf32>
    %340 = math.rsqrt %339 : vector<1x256xf32>
    %c0_200 = arith.constant 0 : index
    %c0_201 = arith.constant 0 : index
    %341 = vector.load %arg5[%c0_200, %c0_201] : memref<1x256xf32, #tpu.memory_space<vmem>>, vector<1x256xf32>
    %342 = arith.mulf %340, %341 : vector<1x256xf32>
    %c0_202 = arith.constant 0 : index
    %c0_203 = arith.constant 0 : index
    %343 = vector.load %arg6[%c0_202, %c0_203] : memref<1x256xf32, #tpu.memory_space<vmem>>, vector<1x256xf32>
    %344 = arith.mulf %333, %342 : vector<1x256xf32>
    %345 = arith.subf %343, %344 : vector<1x256xf32>
    %c0_204 = arith.constant 0 : index
    %c0_205 = arith.constant 0 : index
    %346 = vector.load %arg7[%c0_204, %c0_205] : memref<224x256xf32, #tpu.memory_space<vmem>>, vector<32x256xf32>
    %347 = vector.broadcast %342 : vector<1x256xf32> to vector<32x256xf32>
    %348 = arith.mulf %346, %347 : vector<32x256xf32>
    %349 = vector.broadcast %345 : vector<1x256xf32> to vector<32x256xf32>
    %350 = arith.addf %348, %349 : vector<32x256xf32>
    %c0_206 = arith.constant 0 : index
    %c0_207 = arith.constant 0 : index
    %351 = vector.load %arg7[%c0_206, %c0_207] : memref<224x256xf32, #tpu.memory_space<vmem>>, vector<32x256xf32>
    tpu.vector_store %arg7[%c0_206, %c0_207], %350 {strides = array<i32>} : memref<224x256xf32, #tpu.memory_space<vmem>>, vector<32x256xf32>,
    %c32_208 = arith.constant 32 : index
    %c0_209 = arith.constant 0 : index
    %352 = vector.load %arg7[%c32_208, %c0_209] : memref<224x256xf32, #tpu.memory_space<vmem>>, vector<32x256xf32>
    %353 = vector.broadcast %342 : vector<1x256xf32> to vector<32x256xf32>
    %354 = arith.mulf %352, %353 : vector<32x256xf32>
    %355 = vector.broadcast %345 : vector<1x256xf32> to vector<32x256xf32>
    %356 = arith.addf %354, %355 : vector<32x256xf32>
    %c32_210 = arith.constant 32 : index
    %c0_211 = arith.constant 0 : index
    %357 = vector.load %arg7[%c32_210, %c0_211] : memref<224x256xf32, #tpu.memory_space<vmem>>, vector<32x256xf32>
    tpu.vector_store %arg7[%c32_210, %c0_211], %356 {strides = array<i32>} : memref<224x256xf32, #tpu.memory_space<vmem>>, vector<32x256xf32>,
    %c64_212 = arith.constant 64 : index
    %c0_213 = arith.constant 0 : index
    %358 = vector.load %arg7[%c64_212, %c0_213] : memref<224x256xf32, #tpu.memory_space<vmem>>, vector<32x256xf32>
    %359 = vector.broadcast %342 : vector<1x256xf32> to vector<32x256xf32>
    %360 = arith.mulf %358, %359 : vector<32x256xf32>
    %361 = vector.broadcast %345 : vector<1x256xf32> to vector<32x256xf32>
    %362 = arith.addf %360, %361 : vector<32x256xf32>
    %c64_214 = arith.constant 64 : index
    %c0_215 = arith.constant 0 : index
    %363 = vector.load %arg7[%c64_214, %c0_215] : memref<224x256xf32, #tpu.memory_space<vmem>>, vector<32x256xf32>
    tpu.vector_store %arg7[%c64_214, %c0_215], %362 {strides = array<i32>} : memref<224x256xf32, #tpu.memory_space<vmem>>, vector<32x256xf32>,
    %c96_216 = arith.constant 96 : index
    %c0_217 = arith.constant 0 : index
    %364 = vector.load %arg7[%c96_216, %c0_217] : memref<224x256xf32, #tpu.memory_space<vmem>>, vector<32x256xf32>
    %365 = vector.broadcast %342 : vector<1x256xf32> to vector<32x256xf32>
    %366 = arith.mulf %364, %365 : vector<32x256xf32>
    %367 = vector.broadcast %345 : vector<1x256xf32> to vector<32x256xf32>
    %368 = arith.addf %366, %367 : vector<32x256xf32>
    %c96_218 = arith.constant 96 : index
    %c0_219 = arith.constant 0 : index
    %369 = vector.load %arg7[%c96_218, %c0_219] : memref<224x256xf32, #tpu.memory_space<vmem>>, vector<32x256xf32>
    tpu.vector_store %arg7[%c96_218, %c0_219], %368 {strides = array<i32>} : memref<224x256xf32, #tpu.memory_space<vmem>>, vector<32x256xf32>,
    %c128_220 = arith.constant 128 : index
    %c0_221 = arith.constant 0 : index
    %370 = vector.load %arg7[%c128_220, %c0_221] : memref<224x256xf32, #tpu.memory_space<vmem>>, vector<32x256xf32>
    %371 = vector.broadcast %342 : vector<1x256xf32> to vector<32x256xf32>
    %372 = arith.mulf %370, %371 : vector<32x256xf32>
    %373 = vector.broadcast %345 : vector<1x256xf32> to vector<32x256xf32>
    %374 = arith.addf %372, %373 : vector<32x256xf32>
    %c128_222 = arith.constant 128 : index
    %c0_223 = arith.constant 0 : index
    %375 = vector.load %arg7[%c128_222, %c0_223] : memref<224x256xf32, #tpu.memory_space<vmem>>, vector<32x256xf32>
    tpu.vector_store %arg7[%c128_222, %c0_223], %374 {strides = array<i32>} : memref<224x256xf32, #tpu.memory_space<vmem>>, vector<32x256xf32>,
    %c160_224 = arith.constant 160 : index
    %c0_225 = arith.constant 0 : index
    %376 = vector.load %arg7[%c160_224, %c0_225] : memref<224x256xf32, #tpu.memory_space<vmem>>, vector<32x256xf32>
    %377 = vector.broadcast %342 : vector<1x256xf32> to vector<32x256xf32>
    %378 = arith.mulf %376, %377 : vector<32x256xf32>
    %379 = vector.broadcast %345 : vector<1x256xf32> to vector<32x256xf32>
    %380 = arith.addf %378, %379 : vector<32x256xf32>
    %c160_226 = arith.constant 160 : index
    %c0_227 = arith.constant 0 : index
    %381 = vector.load %arg7[%c160_226, %c0_227] : memref<224x256xf32, #tpu.memory_space<vmem>>, vector<32x256xf32>
    tpu.vector_store %arg7[%c160_226, %c0_227], %380 {strides = array<i32>} : memref<224x256xf32, #tpu.memory_space<vmem>>, vector<32x256xf32>,
    %c192_228 = arith.constant 192 : index
    %c0_229 = arith.constant 0 : index
    %382 = vector.load %arg7[%c192_228, %c0_229] : memref<224x256xf32, #tpu.memory_space<vmem>>, vector<32x256xf32>
    %383 = vector.broadcast %342 : vector<1x256xf32> to vector<32x256xf32>
    %384 = arith.mulf %382, %383 : vector<32x256xf32>
    %385 = vector.broadcast %345 : vector<1x256xf32> to vector<32x256xf32>
    %386 = arith.addf %384, %385 : vector<32x256xf32>
    %c192_230 = arith.constant 192 : index
    %c0_231 = arith.constant 0 : index
    %387 = vector.load %arg7[%c192_230, %c0_231] : memref<224x256xf32, #tpu.memory_space<vmem>>, vector<32x256xf32>
    tpu.vector_store %arg7[%c192_230, %c0_231], %386 {strides = array<i32>} : memref<224x256xf32, #tpu.memory_space<vmem>>, vector<32x256xf32>,
    return
  }
}

</mosaic_0001>

<llo_original>
// kernel: fused_bn_add_relu_conv_bn.1
$region0: #{fused_bn_add_relu_conv_bn.1}
  #allocation0 [shape = 'u32[]', space=smem, size = 0x4, offset = 0x4, fixed_abs, tag = 'smem constant byte address 0x4 - core index']
  #allocation1 [shape = 'u32[144,128]{1,0:T(1,128)}', space=vmem, size = 0x12000, scoped, tag = 'internal scratch']
  #allocation2 [shape = 'bf16[288,256]{1,0:T(8,128)(2,1)}', space=vmem, size = 0x24000, scoped, tag = 'scratch operand']
  #allocation3 [shape = 'bf16[9,256,256]{2,1,0:T(8,128)(2,1)}', space=vmem, size = 0x120000, scoped, tag = 'scratch operand']
  #allocation4 [shape = 's32[1]{0}', space=sflag, size = 0x4, scoped, tag = 'scratch operand']
  #allocation5 [shape = 's32[]', space=sflag, size = 0x4, offset = 0, fixed_abs, tag = 'sflag constant byte address 0x0 - dummy sync flag']
  %s0 = inlined_call_operand.vmem [shape: f32[224,256], index: 0, kind: input, shape index: {}]
  %s1 = inlined_call_operand.vmem [shape: f32[224,256], index: 1, kind: input, shape index: {}]
  %s2 = inlined_call_operand.vmem [shape: f32[1,256], index: 2, kind: input, shape index: {}]
  %s3 = inlined_call_operand.vmem [shape: f32[1,256], index: 3, kind: input, shape index: {}]
  %s4 = inlined_call_operand.vmem [shape: bf16[9,256,256], index: 4, kind: input, shape index: {}]
  %s5 = inlined_call_operand.vmem [shape: f32[1,256], index: 5, kind: input, shape index: {}]
  %s6 = inlined_call_operand.vmem [shape: f32[1,256], index: 6, kind: input, shape index: {}]
  %s7 = inlined_call_operand.vmem [shape: f32[224,256], index: 7, kind: output, shape index: {}]
  %s8 = sld [smem:[#allocation0]]
  $region68: #{fused_bn_add_relu_conv_bn.1} parent=0
    _
  %s10 = ssub.s32 1, %s8
  %s11 = scalar_select 0, %s10, %s8
  // Predicated region
  $region2: #{fused_bn_add_relu_conv_bn.1} parent=0 // pred_check
    _
  $region3: #{fused_bn_add_relu_conv_bn.1} parent=0 // pred_check_branch
    %13 = sbr.rel (0) target = $region5
  $region4: #{fused_bn_add_relu_conv_bn.1} parent=0 // pred_region
    _
  $region5: #{fused_bn_add_relu_conv_bn.1} parent=0 // pred_fallthru
    _
  // Predicated region
  $region6: #{fused_bn_add_relu_conv_bn.1} parent=0 // pred_check
    _
  $region7: #{fused_bn_add_relu_conv_bn.1} parent=0 // pred_check_branch
    %15 = sbr.rel (0) target = $region9
  $region8: #{fused_bn_add_relu_conv_bn.1} parent=0 // pred_region
    _
  $region9: #{fused_bn_add_relu_conv_bn.1} parent=0 // pred_fallthru
    _
  // Predicated region
  $region10: #{fused_bn_add_relu_conv_bn.1} parent=0 // pred_check
    _
  $region11: #{fused_bn_add_relu_conv_bn.1} parent=0 // pred_check_branch
    %17 = sbr.rel (0) target = $region13
  $region12: #{fused_bn_add_relu_conv_bn.1} parent=0 // pred_region
    _
  $region13: #{fused_bn_add_relu_conv_bn.1} parent=0 // pred_fallthru
    _
  // Predicated region
  $region14: #{fused_bn_add_relu_conv_bn.1} parent=0 // pred_check
    _
  $region15: #{fused_bn_add_relu_conv_bn.1} parent=0 // pred_check_branch
    %19 = sbr.rel (0) target = $region17
  $region16: #{fused_bn_add_relu_conv_bn.1} parent=0 // pred_region
    _
  $region17: #{fused_bn_add_relu_conv_bn.1} parent=0 // pred_fallthru
    _
  // Predicated region
  $region18: #{fused_bn_add_relu_conv_bn.1} parent=0 // pred_check
    _
  $region19: #{fused_bn_add_relu_conv_bn.1} parent=0 // pred_check_branch
    %21 = sbr.rel (0) target = $region21
  $region20: #{fused_bn_add_relu_conv_bn.1} parent=0 // pred_region
    _
  $region21: #{fused_bn_add_relu_conv_bn.1} parent=0 // pred_fallthru
    _
  // Predicated region
  $region22: #{fused_bn_add_relu_conv_bn.1} parent=0 // pred_check
    _
  $region23: #{fused_bn_add_relu_conv_bn.1} parent=0 // pred_check_branch
    %23 = sbr.rel (0) target = $region25
  $region24: #{fused_bn_add_relu_conv_bn.1} parent=0 // pred_region
    _
  $region25: #{fused_bn_add_relu_conv_bn.1} parent=0 // pred_fallthru
    _
  %p26 = scmp.lt.u32.totalorder 2304, 8
  %p27 = pneg %p26
  // Predicated region
  $region26: #{fused_bn_add_relu_conv_bn.1} parent=0 // pred_check
    _
  $region27: #{fused_bn_add_relu_conv_bn.1} parent=0 // pred_check_branch
    %29 = sbr.rel (%p26) target = $region29
  $region28: #{fused_bn_add_relu_conv_bn.1} parent=0 // pred_region
    %s45 = sand.u32 2304, 7
    %p46 = scmp.eq.s32.totalorder %s45, 0
    // Predicated region
    $region41: #{fused_bn_add_relu_conv_bn.1} parent=28 // pred_check
      %p47 = pneg %p46
    $region42: #{fused_bn_add_relu_conv_bn.1} parent=28 // pred_check_branch
      %49 = sbr.rel (%p47) target = $region44
    $region43: #{fused_bn_add_relu_conv_bn.1} parent=28 // pred_region
      loop: start=0, step=1, limit=1
      $region45: #{fused_bn_add_relu_conv_bn.1} parent=43 // loop_pre_header
        _
      $region46: #{fused_bn_add_relu_conv_bn.1} parent=43 // loop_header
        %s51 = sphi 0, %s55
        %p52 = scmp.ge.s32.totalorder %s51, 1
        %s56 = sphi %s4, %s4
        %s57 = sphi [#allocation3], [#allocation3]
      $region47: #{fused_bn_add_relu_conv_bn.1} parent=43 // loop_header_branch
        %54 = sbr.rel (%p52) target = $region51
      $region48: #{fused_bn_add_relu_conv_bn.1} parent=43 // loop_body
        %v58 = vld [vmem:[%s56] sm:$0xff]
        %59 = vst [vmem:[%s57] sm:$0xff] %v58
        %v60 = vld [vmem:[%s56 + $0x8] sm:$0xff]
        %61 = vst [vmem:[%s57 + $0x8] sm:$0xff] %v60
        %v62 = vld [vmem:[%s56 + $0x10] sm:$0xff]
        %63 = vst [vmem:[%s57 + $0x10] sm:$0xff] %v62
        %v64 = vld [vmem:[%s56 + $0x18] sm:$0xff]
        %65 = vst [vmem:[%s57 + $0x18] sm:$0xff] %v64
        %v66 = vld [vmem:[%s56 + $0x20] sm:$0xff]
        %67 = vst [vmem:[%s57 + $0x20] sm:$0xff] %v66
        %v68 = vld [vmem:[%s56 + $0x28] sm:$0xff]
        %69 = vst [vmem:[%s57 + $0x28] sm:$0xff] %v68
        %v70 = vld [vmem:[%s56 + $0x30] sm:$0xff]
        %71 = vst [vmem:[%s57 + $0x30] sm:$0xff] %v70
        %v72 = vld [vmem:[%s56 + $0x38] sm:$0xff]
        %73 = vst [vmem:[%s57 + $0x38] sm:$0xff] %v72
        %v74 = vld [vmem:[%s56 + $0x40] sm:$0xff]
        %75 = vst [vmem:[%s57 + $0x40] sm:$0xff] %v74
        %v76 = vld [vmem:[%s56 + $0x48] sm:$0xff]
        %77 = vst [vmem:[%s57 + $0x48] sm:$0xff] %v76
        %v78 = vld [vmem:[%s56 + $0x50] sm:$0xff]
        %79 = vst [vmem:[%s57 + $0x50] sm:$0xff] %v78
        %v80 = vld [vmem:[%s56 + $0x58] sm:$0xff]
        %81 = vst [vmem:[%s57 + $0x58] sm:$0xff] %v80
        %v82 = vld [vmem:[%s56 + $0x60] sm:$0xff]
        %83 = vst [vmem:[%s57 + $0x60] sm:$0xff] %v82
        %v84 = vld [vmem:[%s56 + $0x68] sm:$0xff]
        %85 = vst [vmem:[%s57 + $0x68] sm:$0xff] %v84
        %v86 = vld [vmem:[%s56 + $0x70] sm:$0xff]
        %87 = vst [vmem:[%s57 + $0x70] sm:$0xff] %v86
        %v88 = vld [vmem:[%s56 + $0x78] sm:$0xff]
        %89 = vst [vmem:[%s57 + $0x78] sm:$0xff] %v88
        %v90 = vld [vmem:[%s56 + $0x80] sm:$0xff]
        %91 = vst [vmem:[%s57 + $0x80] sm:$0xff] %v90
        %v92 = vld [vmem:[%s56 + $0x88] sm:$0xff]
        %93 = vst [vmem:[%s57 + $0x88] sm:$0xff] %v92
        %v94 = vld [vmem:[%s56 + $0x90] sm:$0xff]
        %95 = vst [vmem:[%s57 + $0x90] sm:$0xff] %v94
        %v96 = vld [vmem:[%s56 + $0x98] sm:$0xff]
        %97 = vst [vmem:[%s57 + $0x98] sm:$0xff] %v96
        %v98 = vld [vmem:[%s56 + $0xa0] sm:$0xff]
        %99 = vst [vmem:[%s57 + $0xa0] sm:$0xff] %v98
        %v100 = vld [vmem:[%s56 + $0xa8] sm:$0xff]
        %101 = vst [vmem:[%s57 + $0xa8] sm:$0xff] %v100
        %v102 = vld [vmem:[%s56 + $0xb0] sm:$0xff]
        %103 = vst [vmem:[%s57 + $0xb0] sm:$0xff] %v102
        %v104 = vld [vmem:[%s56 + $0xb8] sm:$0xff]
        %105 = vst [vmem:[%s57 + $0xb8] sm:$0xff] %v104
        %v106 = vld [vmem:[%s56 + $0xc0] sm:$0xff]
        %107 = vst [vmem:[%s57 + $0xc0] sm:$0xff] %v106
        %v108 = vld [vmem:[%s56 + $0xc8] sm:$0xff]
        %109 = vst [vmem:[%s57 + $0xc8] sm:$0xff] %v108
        %v110 = vld [vmem:[%s56 + $0xd0] sm:$0xff]
        %111 = vst [vmem:[%s57 + $0xd0] sm:$0xff] %v110
        %v112 = vld [vmem:[%s56 + $0xd8] sm:$0xff]
        %113 = vst [vmem:[%s57 + $0xd8] sm:$0xff] %v112
        %v114 = vld [vmem:[%s56 + $0xe0] sm:$0xff]
        %115 = vst [vmem:[%s57 + $0xe0] sm:$0xff] %v114
        %v116 = vld [vmem:[%s56 + $0xe8] sm:$0xff]
        %117 = vst [vmem:[%s57 + $0xe8] sm:$0xff] %v116
        %v118 = vld [vmem:[%s56 + $0xf0] sm:$0xff]
        %119 = vst [vmem:[%s57 + $0xf0] sm:$0xff] %v118
        %v120 = vld [vmem:[%s56 + $0xf8] sm:$0xff]
        %121 = vst [vmem:[%s57 + $0xf8] sm:$0xff] %v120
        %v122 = vld [vmem:[%s56 + $0x100] sm:$0xff]
        %123 = vst [vmem:[%s57 + $0x100] sm:$0xff] %v122
        %v124 = vld [vmem:[%s56 + $0x108] sm:$0xff]
        %125 = vst [vmem:[%s57 + $0x108] sm:$0xff] %v124
        %v126 = vld [vmem:[%s56 + $0x110] sm:$0xff]
        %127 = vst [vmem:[%s57 + $0x110] sm:$0xff] %v126
        %v128 = vld [vmem:[%s56 + $0x118] sm:$0xff]
        %129 = vst [vmem:[%s57 + $0x118] sm:$0xff] %v128
        %v130 = vld [vmem:[%s56 + $0x120] sm:$0xff]
        %131 = vst [vmem:[%s57 + $0x120] sm:$0xff] %v130
        %v132 = vld [vmem:[%s56 + $0x128] sm:$0xff]
        %133 = vst [vmem:[%s57 + $0x128] sm:$0xff] %v132
        %v134 = vld [vmem:[%s56 + $0x130] sm:$0xff]
        %135 = vst [vmem:[%s57 + $0x130] sm:$0xff] %v134
        %v136 = vld [vmem:[%s56 + $0x138] sm:$0xff]
        %137 = vst [vmem:[%s57 + $0x138] sm:$0xff] %v136
        %v138 = vld [vmem:[%s56 + $0x140] sm:$0xff]
        %139 = vst [vmem:[%s57 + $0x140] sm:$0xff] %v138
        %v140 = vld [vmem:[%s56 + $0x148] sm:$0xff]
        %141 = vst [vmem:[%s57 + $0x148] sm:$0xff] %v140
        %v142 = vld [vmem:[%s56 + $0x150] sm:$0xff]
        %143 = vst [vmem:[%s57 + $0x150] sm:$0xff] %v142
        %v144 = vld [vmem:[%s56 + $0x158] sm:$0xff]
        %145 = vst [vmem:[%s57 + $0x158] sm:$0xff] %v144
        %v146 = vld [vmem:[%s56 + $0x160] sm:$0xff]
        %147 = vst [vmem:[%s57 + $0x160] sm:$0xff] %v146
        %v148 = vld [vmem:[%s56 + $0x168] sm:$0xff]
        %149 = vst [vmem:[%s57 + $0x168] sm:$0xff] %v148
        %v150 = vld [vmem:[%s56 + $0x170] sm:$0xff]
        %151 = vst [vmem:[%s57 + $0x170] sm:$0xff] %v150
        %v152 = vld [vmem:[%s56 + $0x178] sm:$0xff]
        %153 = vst [vmem:[%s57 + $0x178] sm:$0xff] %v152
        %v154 = vld [vmem:[%s56 + $0x180] sm:$0xff]
        %155 = vst [vmem:[%s57 + $0x180] sm:$0xff] %v154
        %v156 = vld [vmem:[%s56 + $0x188] sm:$0xff]
        %157 = vst [vmem:[%s57 + $0x188] sm:$0xff] %v156
        %v158 = vld [vmem:[%s56 + $0x190] sm:$0xff]
        %159 = vst [vmem:[%s57 + $0x190] sm:$0xff] %v158
        %v160 = vld [vmem:[%s56 + $0x198] sm:$0xff]
        %161 = vst [vmem:[%s57 + $0x198] sm:$0xff] %v160
        %v162 = vld [vmem:[%s56 + $0x1a0] sm:$0xff]
        %163 = vst [vmem:[%s57 + $0x1a0] sm:$0xff] %v162
        %v164 = vld [vmem:[%s56 + $0x1a8] sm:$0xff]
        %165 = vst [vmem:[%s57 + $0x1a8] sm:$0xff] %v164
        %v166 = vld [vmem:[%s56 + $0x1b0] sm:$0xff]
        %167 = vst [vmem:[%s57 + $0x1b0] sm:$0xff] %v166
        %v168 = vld [vmem:[%s56 + $0x1b8] sm:$0xff]
        %169 = vst [vmem:[%s57 + $0x1b8] sm:$0xff] %v168
        %v170 = vld [vmem:[%s56 + $0x1c0] sm:$0xff]
        %171 = vst [vmem:[%s57 + $0x1c0] sm:$0xff] %v170
        %v172 = vld [vmem:[%s56 + $0x1c8] sm:$0xff]
        %173 = vst [vmem:[%s57 + $0x1c8] sm:$0xff] %v172
        %v174 = vld [vmem:[%s56 + $0x1d0] sm:$0xff]
        %175 = vst [vmem:[%s57 + $0x1d0] sm:$0xff] %v174
        %v176 = vld [vmem:[%s56 + $0x1d8] sm:$0xff]
        %177 = vst [vmem:[%s57 + $0x1d8] sm:$0xff] %v176
        %v178 = vld [vmem:[%s56 + $0x1e0] sm:$0xff]
        %179 = vst [vmem:[%s57 + $0x1e0] sm:$0xff] %v178
        %v180 = vld [vmem:[%s56 + $0x1e8] sm:$0xff]
        %181 = vst [vmem:[%s57 + $0x1e8] sm:$0xff] %v180
        %v182 = vld [vmem:[%s56 + $0x1f0] sm:$0xff]
        %183 = vst [vmem:[%s57 + $0x1f0] sm:$0xff] %v182
        %v184 = vld [vmem:[%s56 + $0x1f8] sm:$0xff]
        %185 = vst [vmem:[%s57 + $0x1f8] sm:$0xff] %v184
        %v186 = vld [vmem:[%s56 + $0x200] sm:$0xff]
        %187 = vst [vmem:[%s57 + $0x200] sm:$0xff] %v186
        %v188 = vld [vmem:[%s56 + $0x208] sm:$0xff]
        %189 = vst [vmem:[%s57 + $0x208] sm:$0xff] %v188
        %v190 = vld [vmem:[%s56 + $0x210] sm:$0xff]
        %191 = vst [vmem:[%s57 + $0x210] sm:$0xff] %v190
        %v192 = vld [vmem:[%s56 + $0x218] sm:$0xff]
        %193 = vst [vmem:[%s57 + $0x218] sm:$0xff] %v192
        %v194 = vld [vmem:[%s56 + $0x220] sm:$0xff]
        %195 = vst [vmem:[%s57 + $0x220] sm:$0xff] %v194
        %v196 = vld [vmem:[%s56 + $0x228] sm:$0xff]
        %197 = vst [vmem:[%s57 + $0x228] sm:$0xff] %v196
        %v198 = vld [vmem:[%s56 + $0x230] sm:$0xff]
        %199 = vst [vmem:[%s57 + $0x230] sm:$0xff] %v198
        %v200 = vld [vmem:[%s56 + $0x238] sm:$0xff]
        %201 = vst [vmem:[%s57 + $0x238] sm:$0xff] %v200
        %v202 = vld [vmem:[%s56 + $0x240] sm:$0xff]
        %203 = vst [vmem:[%s57 + $0x240] sm:$0xff] %v202
        %v204 = vld [vmem:[%s56 + $0x248] sm:$0xff]
        %205 = vst [vmem:[%s57 + $0x248] sm:$0xff] %v204
        %v206 = vld [vmem:[%s56 + $0x250] sm:$0xff]
        %207 = vst [vmem:[%s57 + $0x250] sm:$0xff] %v206
        %v208 = vld [vmem:[%s56 + $0x258] sm:$0xff]
        %209 = vst [vmem:[%s57 + $0x258] sm:$0xff] %v208
        %v210 = vld [vmem:[%s56 + $0x260] sm:$0xff]
        %211 = vst [vmem:[%s57 + $0x260] sm:$0xff] %v210
        %v212 = vld [vmem:[%s56 + $0x268] sm:$0xff]
        %213 = vst [vmem:[%s57 + $0x268] sm:$0xff] %v212
        %v214 = vld [vmem:[%s56 + $0x270] sm:$0xff]
        %215 = vst [vmem:[%s57 + $0x270] sm:$0xff] %v214
        %v216 = vld [vmem:[%s56 + $0x278] sm:$0xff]
        %217 = vst [vmem:[%s57 + $0x278] sm:$0xff] %v216
        %v218 = vld [vmem:[%s56 + $0x280] sm:$0xff]
        %219 = vst [vmem:[%s57 + $0x280] sm:$0xff] %v218
        %v220 = vld [vmem:[%s56 + $0x288] sm:$0xff]
        %221 = vst [vmem:[%s57 + $0x288] sm:$0xff] %v220
        %v222 = vld [vmem:[%s56 + $0x290] sm:$0xff]
        %223 = vst [vmem:[%s57 + $0x290] sm:$0xff] %v222
        %v224 = vld [vmem:[%s56 + $0x298] sm:$0xff]
        %225 = vst [vmem:[%s57 + $0x298] sm:$0xff] %v224
        %v226 = vld [vmem:[%s56 + $0x2a0] sm:$0xff]
        %227 = vst [vmem:[%s57 + $0x2a0] sm:$0xff] %v226
        %v228 = vld [vmem:[%s56 + $0x2a8] sm:$0xff]
        %229 = vst [vmem:[%s57 + $0x2a8] sm:$0xff] %v228
        %v230 = vld [vmem:[%s56 + $0x2b0] sm:$0xff]
        %231 = vst [vmem:[%s57 + $0x2b0] sm:$0xff] %v230
        %v232 = vld [vmem:[%s56 + $0x2b8] sm:$0xff]
        %233 = vst [vmem:[%s57 + $0x2b8] sm:$0xff] %v232
        %v234 = vld [vmem:[%s56 + $0x2c0] sm:$0xff]
        %235 = vst [vmem:[%s57 + $0x2c0] sm:$0xff] %v234
        %v236 = vld [vmem:[%s56 + $0x2c8] sm:$0xff]
        %237 = vst [vmem:[%s57 + $0x2c8] sm:$0xff] %v236
        %v238 = vld [vmem:[%s56 + $0x2d0] sm:$0xff]
        %239 = vst [vmem:[%s57 + $0x2d0] sm:$0xff] %v238
        %v240 = vld [vmem:[%s56 + $0x2d8] sm:$0xff]
        %241 = vst [vmem:[%s57 + $0x2d8] sm:$0xff] %v240
        %v242 = vld [vmem:[%s56 + $0x2e0] sm:$0xff]
        %243 = vst [vmem:[%s57 + $0x2e0] sm:$0xff] %v242
        %v244 = vld [vmem:[%s56 + $0x2e8] sm:$0xff]
        %245 = vst [vmem:[%s57 + $0x2e8] sm:$0xff] %v244
        %v246 = vld [vmem:[%s56 + $0x2f0] sm:$0xff]
        %247 = vst [vmem:[%s57 + $0x2f0] sm:$0xff] %v246
        %v248 = vld [vmem:[%s56 + $0x2f8] sm:$0xff]
        %249 = vst [vmem:[%s57 + $0x2f8] sm:$0xff] %v248
        %v250 = vld [vmem:[%s56 + $0x300] sm:$0xff]
        %251 = vst [vmem:[%s57 + $0x300] sm:$0xff] %v250
        %v252 = vld [vmem:[%s56 + $0x308] sm:$0xff]
        %253 = vst [vmem:[%s57 + $0x308] sm:$0xff] %v252
        %v254 = vld [vmem:[%s56 + $0x310] sm:$0xff]
        %255 = vst [vmem:[%s57 + $0x310] sm:$0xff] %v254
        %v256 = vld [vmem:[%s56 + $0x318] sm:$0xff]
        %257 = vst [vmem:[%s57 + $0x318] sm:$0xff] %v256
        %v258 = vld [vmem:[%s56 + $0x320] sm:$0xff]
        %259 = vst [vmem:[%s57 + $0x320] sm:$0xff] %v258
        %v260 = vld [vmem:[%s56 + $0x328] sm:$0xff]
        %261 = vst [vmem:[%s57 + $0x328] sm:$0xff] %v260
        %v262 = vld [vmem:[%s56 + $0x330] sm:$0xff]
        %263 = vst [vmem:[%s57 + $0x330] sm:$0xff] %v262
        %v264 = vld [vmem:[%s56 + $0x338] sm:$0xff]
        %265 = vst [vmem:[%s57 + $0x338] sm:$0xff] %v264
        %v266 = vld [vmem:[%s56 + $0x340] sm:$0xff]
        %267 = vst [vmem:[%s57 + $0x340] sm:$0xff] %v266
        %v268 = vld [vmem:[%s56 + $0x348] sm:$0xff]
        %269 = vst [vmem:[%s57 + $0x348] sm:$0xff] %v268
        %v270 = vld [vmem:[%s56 + $0x350] sm:$0xff]
        %271 = vst [vmem:[%s57 + $0x350] sm:$0xff] %v270
        %v272 = vld [vmem:[%s56 + $0x358] sm:$0xff]
        %273 = vst [vmem:[%s57 + $0x358] sm:$0xff] %v272
        %v274 = vld [vmem:[%s56 + $0x360] sm:$0xff]
        %275 = vst [vmem:[%s57 + $0x360] sm:$0xff] %v274
        %v276 = vld [vmem:[%s56 + $0x368] sm:$0xff]
        %277 = vst [vmem:[%s57 + $0x368] sm:$0xff] %v276
        %v278 = vld [vmem:[%s56 + $0x370] sm:$0xff]
        %279 = vst [vmem:[%s57 + $0x370] sm:$0xff] %v278
        %v280 = vld [vmem:[%s56 + $0x378] sm:$0xff]
        %281 = vst [vmem:[%s57 + $0x378] sm:$0xff] %v280
        %v282 = vld [vmem:[%s56 + $0x380] sm:$0xff]
        %283 = vst [vmem:[%s57 + $0x380] sm:$0xff] %v282
        %v284 = vld [vmem:[%s56 + $0x388] sm:$0xff]
        %285 = vst [vmem:[%s57 + $0x388] sm:$0xff] %v284
        %v286 = vld [vmem:[%s56 + $0x390] sm:$0xff]
        %287 = vst [vmem:[%s57 + $0x390] sm:$0xff] %v286
        %v288 = vld [vmem:[%s56 + $0x398] sm:$0xff]
        %289 = vst [vmem:[%s57 + $0x398] sm:$0xff] %v288
        %v290 = vld [vmem:[%s56 + $0x3a0] sm:$0xff]
        %291 = vst [vmem:[%s57 + $0x3a0] sm:$0xff] %v290
        %v292 = vld [vmem:[%s56 + $0x3a8] sm:$0xff]
        %293 = vst [vmem:[%s57 + $0x3a8] sm:$0xff] %v292
        %v294 = vld [vmem:[%s56 + $0x3b0] sm:$0xff]
        %295 = vst [vmem:[%s57 + $0x3b0] sm:$0xff] %v294
        %v296 = vld [vmem:[%s56 + $0x3b8] sm:$0xff]
        %297 = vst [vmem:[%s57 + $0x3b8] sm:$0xff] %v296
        %v298 = vld [vmem:[%s56 + $0x3c0] sm:$0xff]
        %299 = vst [vmem:[%s57 + $0x3c0] sm:$0xff] %v298
        %v300 = vld [vmem:[%s56 + $0x3c8] sm:$0xff]
        %301 = vst [vmem:[%s57 + $0x3c8] sm:$0xff] %v300
        %v302 = vld [vmem:[%s56 + $0x3d0] sm:$0xff]
        %303 = vst [vmem:[%s57 + $0x3d0] sm:$0xff] %v302
        %v304 = vld [vmem:[%s56 + $0x3d8] sm:$0xff]
        %305 = vst [vmem:[%s57 + $0x3d8] sm:$0xff] %v304
        %v306 = vld [vmem:[%s56 + $0x3e0] sm:$0xff]
        %307 = vst [vmem:[%s57 + $0x3e0] sm:$0xff] %v306
        %v308 = vld [vmem:[%s56 + $0x3e8] sm:$0xff]
        %309 = vst [vmem:[%s57 + $0x3e8] sm:$0xff] %v308
        %v310 = vld [vmem:[%s56 + $0x3f0] sm:$0xff]
        %311 = vst [vmem:[%s57 + $0x3f0] sm:$0xff] %v310
        %v312 = vld [vmem:[%s56 + $0x3f8] sm:$0xff]
        %313 = vst [vmem:[%s57 + $0x3f8] sm:$0xff] %v312
        %v314 = vld [vmem:[%s56 + $0x400] sm:$0xff]
        %315 = vst [vmem:[%s57 + $0x400] sm:$0xff] %v314
        %v316 = vld [vmem:[%s56 + $0x408] sm:$0xff]
        %317 = vst [vmem:[%s57 + $0x408] sm:$0xff] %v316
        %v318 = vld [vmem:[%s56 + $0x410] sm:$0xff]
        %319 = vst [vmem:[%s57 + $0x410] sm:$0xff] %v318
        %v320 = vld [vmem:[%s56 + $0x418] sm:$0xff]
        %321 = vst [vmem:[%s57 + $0x418] sm:$0xff] %v320
        %v322 = vld [vmem:[%s56 + $0x420] sm:$0xff]
        %323 = vst [vmem:[%s57 + $0x420] sm:$0xff] %v322
        %v324 = vld [vmem:[%s56 + $0x428] sm:$0xff]
        %325 = vst [vmem:[%s57 + $0x428] sm:$0xff] %v324
        %v326 = vld [vmem:[%s56 + $0x430] sm:$0xff]
        %327 = vst [vmem:[%s57 + $0x430] sm:$0xff] %v326
        %v328 = vld [vmem:[%s56 + $0x438] sm:$0xff]
        %329 = vst [vmem:[%s57 + $0x438] sm:$0xff] %v328
        %v330 = vld [vmem:[%s56 + $0x440] sm:$0xff]
        %331 = vst [vmem:[%s57 + $0x440] sm:$0xff] %v330
        %v332 = vld [vmem:[%s56 + $0x448] sm:$0xff]
        %333 = vst [vmem:[%s57 + $0x448] sm:$0xff] %v332
        %v334 = vld [vmem:[%s56 + $0x450] sm:$0xff]
        %335 = vst [vmem:[%s57 + $0x450] sm:$0xff] %v334
        %v336 = vld [vmem:[%s56 + $0x458] sm:$0xff]
        %337 = vst [vmem:[%s57 + $0x458] sm:$0xff] %v336
        %v338 = vld [vmem:[%s56 + $0x460] sm:$0xff]
        %339 = vst [vmem:[%s57 + $0x460] sm:$0xff] %v338
        %v340 = vld [vmem:[%s56 + $0x468] sm:$0xff]
        %341 = vst [vmem:[%s57 + $0x468] sm:$0xff] %v340
        %v342 = vld [vmem:[%s56 + $0x470] sm:$0xff]
        %343 = vst [vmem:[%s57 + $0x470] sm:$0xff] %v342
        %v344 = vld [vmem:[%s56 + $0x478] sm:$0xff]
        %345 = vst [vmem:[%s57 + $0x478] sm:$0xff] %v344
        %v346 = vld [vmem:[%s56 + $0x480] sm:$0xff]
        %347 = vst [vmem:[%s57 + $0x480] sm:$0xff] %v346
        %v348 = vld [vmem:[%s56 + $0x488] sm:$0xff]
        %349 = vst [vmem:[%s57 + $0x488] sm:$0xff] %v348
        %v350 = vld [vmem:[%s56 + $0x490] sm:$0xff]
        %351 = vst [vmem:[%s57 + $0x490] sm:$0xff] %v350
        %v352 = vld [vmem:[%s56 + $0x498] sm:$0xff]
        %353 = vst [vmem:[%s57 + $0x498] sm:$0xff] %v352
        %v354 = vld [vmem:[%s56 + $0x4a0] sm:$0xff]
        %355 = vst [vmem:[%s57 + $0x4a0] sm:$0xff] %v354
        %v356 = vld [vmem:[%s56 + $0x4a8] sm:$0xff]
        %357 = vst [vmem:[%s57 + $0x4a8] sm:$0xff] %v356
        %v358 = vld [vmem:[%s56 + $0x4b0] sm:$0xff]
        %359 = vst [vmem:[%s57 + $0x4b0] sm:$0xff] %v358
        %v360 = vld [vmem:[%s56 + $0x4b8] sm:$0xff]
        %361 = vst [vmem:[%s57 + $0x4b8] sm:$0xff] %v360
        %v362 = vld [vmem:[%s56 + $0x4c0] sm:$0xff]
        %363 = vst [vmem:[%s57 + $0x4c0] sm:$0xff] %v362
        %v364 = vld [vmem:[%s56 + $0x4c8] sm:$0xff]
        %365 = vst [vmem:[%s57 + $0x4c8] sm:$0xff] %v364
        %v366 = vld [vmem:[%s56 + $0x4d0] sm:$0xff]
        %367 = vst [vmem:[%s57 + $0x4d0] sm:$0xff] %v366
        %v368 = vld [vmem:[%s56 + $0x4d8] sm:$0xff]
        %369 = vst [vmem:[%s57 + $0x4d8] sm:$0xff] %v368
        %v370 = vld [vmem:[%s56 + $0x4e0] sm:$0xff]
        %371 = vst [vmem:[%s57 + $0x4e0] sm:$0xff] %v370
        %v372 = vld [vmem:[%s56 + $0x4e8] sm:$0xff]
        %373 = vst [vmem:[%s57 + $0x4e8] sm:$0xff] %v372
        %v374 = vld [vmem:[%s56 + $0x4f0] sm:$0xff]
        %375 = vst [vmem:[%s57 + $0x4f0] sm:$0xff] %v374
        %v376 = vld [vmem:[%s56 + $0x4f8] sm:$0xff]
        %377 = vst [vmem:[%s57 + $0x4f8] sm:$0xff] %v376
        %v378 = vld [vmem:[%s56 + $0x500] sm:$0xff]
        %379 = vst [vmem:[%s57 + $0x500] sm:$0xff] %v378
        %v380 = vld [vmem:[%s56 + $0x508] sm:$0xff]
        %381 = vst [vmem:[%s57 + $0x508] sm:$0xff] %v380
        %v382 = vld [vmem:[%s56 + $0x510] sm:$0xff]
        %383 = vst [vmem:[%s57 + $0x510] sm:$0xff] %v382
        %v384 = vld [vmem:[%s56 + $0x518] sm:$0xff]
        %385 = vst [vmem:[%s57 + $0x518] sm:$0xff] %v384
        %v386 = vld [vmem:[%s56 + $0x520] sm:$0xff]
        %387 = vst [vmem:[%s57 + $0x520] sm:$0xff] %v386
        %v388 = vld [vmem:[%s56 + $0x528] sm:$0xff]
        %389 = vst [vmem:[%s57 + $0x528] sm:$0xff] %v388
        %v390 = vld [vmem:[%s56 + $0x530] sm:$0xff]
        %391 = vst [vmem:[%s57 + $0x530] sm:$0xff] %v390
        %v392 = vld [vmem:[%s56 + $0x538] sm:$0xff]
        %393 = vst [vmem:[%s57 + $0x538] sm:$0xff] %v392
        %v394 = vld [vmem:[%s56 + $0x540] sm:$0xff]
        %395 = vst [vmem:[%s57 + $0x540] sm:$0xff] %v394
        %v396 = vld [vmem:[%s56 + $0x548] sm:$0xff]
        %397 = vst [vmem:[%s57 + $0x548] sm:$0xff] %v396
        %v398 = vld [vmem:[%s56 + $0x550] sm:$0xff]
        %399 = vst [vmem:[%s57 + $0x550] sm:$0xff] %v398
        %v400 = vld [vmem:[%s56 + $0x558] sm:$0xff]
        %401 = vst [vmem:[%s57 + $0x558] sm:$0xff] %v400
        %v402 = vld [vmem:[%s56 + $0x560] sm:$0xff]
        %403 = vst [vmem:[%s57 + $0x560] sm:$0xff] %v402
        %v404 = vld [vmem:[%s56 + $0x568] sm:$0xff]
        %405 = vst [vmem:[%s57 + $0x568] sm:$0xff] %v404
        %v406 = vld [vmem:[%s56 + $0x570] sm:$0xff]
        %407 = vst [vmem:[%s57 + $0x570] sm:$0xff] %v406
        %v408 = vld [vmem:[%s56 + $0x578] sm:$0xff]
        %409 = vst [vmem:[%s57 + $0x578] sm:$0xff] %v408
        %v410 = vld [vmem:[%s56 + $0x580] sm:$0xff]
        %411 = vst [vmem:[%s57 + $0x580] sm:$0xff] %v410
        %v412 = vld [vmem:[%s56 + $0x588] sm:$0xff]
        %413 = vst [vmem:[%s57 + $0x588] sm:$0xff] %v412
        %v414 = vld [vmem:[%s56 + $0x590] sm:$0xff]
        %415 = vst [vmem:[%s57 + $0x590] sm:$0xff] %v414
        %v416 = vld [vmem:[%s56 + $0x598] sm:$0xff]
        %417 = vst [vmem:[%s57 + $0x598] sm:$0xff] %v416
        %v418 = vld [vmem:[%s56 + $0x5a0] sm:$0xff]
        %419 = vst [vmem:[%s57 + $0x5a0] sm:$0xff] %v418
        %v420 = vld [vmem:[%s56 + $0x5a8] sm:$0xff]
        %421 = vst [vmem:[%s57 + $0x5a8] sm:$0xff] %v420
        %v422 = vld [vmem:[%s56 + $0x5b0] sm:$0xff]
        %423 = vst [vmem:[%s57 + $0x5b0] sm:$0xff] %v422
        %v424 = vld [vmem:[%s56 + $0x5b8] sm:$0xff]
        %425 = vst [vmem:[%s57 + $0x5b8] sm:$0xff] %v424
        %v426 = vld [vmem:[%s56 + $0x5c0] sm:$0xff]
        %427 = vst [vmem:[%s57 + $0x5c0] sm:$0xff] %v426
        %v428 = vld [vmem:[%s56 + $0x5c8] sm:$0xff]
        %429 = vst [vmem:[%s57 + $0x5c8] sm:$0xff] %v428
        %v430 = vld [vmem:[%s56 + $0x5d0] sm:$0xff]
        %431 = vst [vmem:[%s57 + $0x5d0] sm:$0xff] %v430
        %v432 = vld [vmem:[%s56 + $0x5d8] sm:$0xff]
        %433 = vst [vmem:[%s57 + $0x5d8] sm:$0xff] %v432
        %v434 = vld [vmem:[%s56 + $0x5e0] sm:$0xff]
        %435 = vst [vmem:[%s57 + $0x5e0] sm:$0xff] %v434
        %v436 = vld [vmem:[%s56 + $0x5e8] sm:$0xff]
        %437 = vst [vmem:[%s57 + $0x5e8] sm:$0xff] %v436
        %v438 = vld [vmem:[%s56 + $0x5f0] sm:$0xff]
        %439 = vst [vmem:[%s57 + $0x5f0] sm:$0xff] %v438
        %v440 = vld [vmem:[%s56 + $0x5f8] sm:$0xff]
        %441 = vst [vmem:[%s57 + $0x5f8] sm:$0xff] %v440
        %v442 = vld [vmem:[%s56 + $0x600] sm:$0xff]
        %443 = vst [vmem:[%s57 + $0x600] sm:$0xff] %v442
        %v444 = vld [vmem:[%s56 + $0x608] sm:$0xff]
        %445 = vst [vmem:[%s57 + $0x608] sm:$0xff] %v444
        %v446 = vld [vmem:[%s56 + $0x610] sm:$0xff]
        %447 = vst [vmem:[%s57 + $0x610] sm:$0xff] %v446
        %v448 = vld [vmem:[%s56 + $0x618] sm:$0xff]
        %449 = vst [vmem:[%s57 + $0x618] sm:$0xff] %v448
        %v450 = vld [vmem:[%s56 + $0x620] sm:$0xff]
        %451 = vst [vmem:[%s57 + $0x620] sm:$0xff] %v450
        %v452 = vld [vmem:[%s56 + $0x628] sm:$0xff]
        %453 = vst [vmem:[%s57 + $0x628] sm:$0xff] %v452
        %v454 = vld [vmem:[%s56 + $0x630] sm:$0xff]
        %455 = vst [vmem:[%s57 + $0x630] sm:$0xff] %v454
        %v456 = vld [vmem:[%s56 + $0x638] sm:$0xff]
        %457 = vst [vmem:[%s57 + $0x638] sm:$0xff] %v456
        %v458 = vld [vmem:[%s56 + $0x640] sm:$0xff]
        %459 = vst [vmem:[%s57 + $0x640] sm:$0xff] %v458
        %v460 = vld [vmem:[%s56 + $0x648] sm:$0xff]
        %461 = vst [vmem:[%s57 + $0x648] sm:$0xff] %v460
        %v462 = vld [vmem:[%s56 + $0x650] sm:$0xff]
        %463 = vst [vmem:[%s57 + $0x650] sm:$0xff] %v462
        %v464 = vld [vmem:[%s56 + $0x658] sm:$0xff]
        %465 = vst [vmem:[%s57 + $0x658] sm:$0xff] %v464
        %v466 = vld [vmem:[%s56 + $0x660] sm:$0xff]
        %467 = vst [vmem:[%s57 + $0x660] sm:$0xff] %v466
        %v468 = vld [vmem:[%s56 + $0x668] sm:$0xff]
        %469 = vst [vmem:[%s57 + $0x668] sm:$0xff] %v468
        %v470 = vld [vmem:[%s56 + $0x670] sm:$0xff]
        %471 = vst [vmem:[%s57 + $0x670] sm:$0xff] %v470
        %v472 = vld [vmem:[%s56 + $0x678] sm:$0xff]
        %473 = vst [vmem:[%s57 + $0x678] sm:$0xff] %v472
        %v474 = vld [vmem:[%s56 + $0x680] sm:$0xff]
        %475 = vst [vmem:[%s57 + $0x680] sm:$0xff] %v474
        %v476 = vld [vmem:[%s56 + $0x688] sm:$0xff]
        %477 = vst [vmem:[%s57 + $0x688] sm:$0xff] %v476
        %v478 = vld [vmem:[%s56 + $0x690] sm:$0xff]
        %479 = vst [vmem:[%s57 + $0x690] sm:$0xff] %v478
        %v480 = vld [vmem:[%s56 + $0x698] sm:$0xff]
        %481 = vst [vmem:[%s57 + $0x698] sm:$0xff] %v480
        %v482 = vld [vmem:[%s56 + $0x6a0] sm:$0xff]
        %483 = vst [vmem:[%s57 + $0x6a0] sm:$0xff] %v482
        %v484 = vld [vmem:[%s56 + $0x6a8] sm:$0xff]
        %485 = vst [vmem:[%s57 + $0x6a8] sm:$0xff] %v484
        %v486 = vld [vmem:[%s56 + $0x6b0] sm:$0xff]
        %487 = vst [vmem:[%s57 + $0x6b0] sm:$0xff] %v486
        %v488 = vld [vmem:[%s56 + $0x6b8] sm:$0xff]
        %489 = vst [vmem:[%s57 + $0x6b8] sm:$0xff] %v488
        %v490 = vld [vmem:[%s56 + $0x6c0] sm:$0xff]
        %491 = vst [vmem:[%s57 + $0x6c0] sm:$0xff] %v490
        %v492 = vld [vmem:[%s56 + $0x6c8] sm:$0xff]
        %493 = vst [vmem:[%s57 + $0x6c8] sm:$0xff] %v492
        %v494 = vld [vmem:[%s56 + $0x6d0] sm:$0xff]
        %495 = vst [vmem:[%s57 + $0x6d0] sm:$0xff] %v494
        %v496 = vld [vmem:[%s56 + $0x6d8] sm:$0xff]
        %497 = vst [vmem:[%s57 + $0x6d8] sm:$0xff] %v496
        %v498 = vld [vmem:[%s56 + $0x6e0] sm:$0xff]
        %499 = vst [vmem:[%s57 + $0x6e0] sm:$0xff] %v498
        %v500 = vld [vmem:[%s56 + $0x6e8] sm:$0xff]
        %501 = vst [vmem:[%s57 + $0x6e8] sm:$0xff] %v500
        %v502 = vld [vmem:[%s56 + $0x6f0] sm:$0xff]
        %503 = vst [vmem:[%s57 + $0x6f0] sm:$0xff] %v502
        %v504 = vld [vmem:[%s56 + $0x6f8] sm:$0xff]
        %505 = vst [vmem:[%s57 + $0x6f8] sm:$0xff] %v504
        %v506 = vld [vmem:[%s56 + $0x700] sm:$0xff]
        %507 = vst [vmem:[%s57 + $0x700] sm:$0xff] %v506
        %v508 = vld [vmem:[%s56 + $0x708] sm:$0xff]
        %509 = vst [vmem:[%s57 + $0x708] sm:$0xff] %v508
        %v510 = vld [vmem:[%s56 + $0x710] sm:$0xff]
        %511 = vst [vmem:[%s57 + $0x710] sm:$0xff] %v510
        %v512 = vld [vmem:[%s56 + $0x718] sm:$0xff]
        %513 = vst [vmem:[%s57 + $0x718] sm:$0xff] %v512
        %v514 = vld [vmem:[%s56 + $0x720] sm:$0xff]
        %515 = vst [vmem:[%s57 + $0x720] sm:$0xff] %v514
        %v516 = vld [vmem:[%s56 + $0x728] sm:$0xff]
        %517 = vst [vmem:[%s57 + $0x728] sm:$0xff] %v516
        %v518 = vld [vmem:[%s56 + $0x730] sm:$0xff]
        %519 = vst [vmem:[%s57 + $0x730] sm:$0xff] %v518
        %v520 = vld [vmem:[%s56 + $0x738] sm:$0xff]
        %521 = vst [vmem:[%s57 + $0x738] sm:$0xff] %v520
        %v522 = vld [vmem:[%s56 + $0x740] sm:$0xff]
        %523 = vst [vmem:[%s57 + $0x740] sm:$0xff] %v522
        %v524 = vld [vmem:[%s56 + $0x748] sm:$0xff]
        %525 = vst [vmem:[%s57 + $0x748] sm:$0xff] %v524
        %v526 = vld [vmem:[%s56 + $0x750] sm:$0xff]
        %527 = vst [vmem:[%s57 + $0x750] sm:$0xff] %v526
        %v528 = vld [vmem:[%s56 + $0x758] sm:$0xff]
        %529 = vst [vmem:[%s57 + $0x758] sm:$0xff] %v528
        %v530 = vld [vmem:[%s56 + $0x760] sm:$0xff]
        %531 = vst [vmem:[%s57 + $0x760] sm:$0xff] %v530
        %v532 = vld [vmem:[%s56 + $0x768] sm:$0xff]
        %533 = vst [vmem:[%s57 + $0x768] sm:$0xff] %v532
        %v534 = vld [vmem:[%s56 + $0x770] sm:$0xff]
        %535 = vst [vmem:[%s57 + $0x770] sm:$0xff] %v534
        %v536 = vld [vmem:[%s56 + $0x778] sm:$0xff]
        %537 = vst [vmem:[%s57 + $0x778] sm:$0xff] %v536
        %v538 = vld [vmem:[%s56 + $0x780] sm:$0xff]
        %539 = vst [vmem:[%s57 + $0x780] sm:$0xff] %v538
        %v540 = vld [vmem:[%s56 + $0x788] sm:$0xff]
        %541 = vst [vmem:[%s57 + $0x788] sm:$0xff] %v540
        %v542 = vld [vmem:[%s56 + $0x790] sm:$0xff]
        %543 = vst [vmem:[%s57 + $0x790] sm:$0xff] %v542
        %v544 = vld [vmem:[%s56 + $0x798] sm:$0xff]
        %545 = vst [vmem:[%s57 + $0x798] sm:$0xff] %v544
        %v546 = vld [vmem:[%s56 + $0x7a0] sm:$0xff]
        %547 = vst [vmem:[%s57 + $0x7a0] sm:$0xff] %v546
        %v548 = vld [vmem:[%s56 + $0x7a8] sm:$0xff]
        %549 = vst [vmem:[%s57 + $0x7a8] sm:$0xff] %v548
        %v550 = vld [vmem:[%s56 + $0x7b0] sm:$0xff]
        %551 = vst [vmem:[%s57 + $0x7b0] sm:$0xff] %v550
        %v552 = vld [vmem:[%s56 + $0x7b8] sm:$0xff]
        %553 = vst [vmem:[%s57 + $0x7b8] sm:$0xff] %v552
        %v554 = vld [vmem:[%s56 + $0x7c0] sm:$0xff]
        %555 = vst [vmem:[%s57 + $0x7c0] sm:$0xff] %v554
        %v556 = vld [vmem:[%s56 + $0x7c8] sm:$0xff]
        %557 = vst [vmem:[%s57 + $0x7c8] sm:$0xff] %v556
        %v558 = vld [vmem:[%s56 + $0x7d0] sm:$0xff]
        %559 = vst [vmem:[%s57 + $0x7d0] sm:$0xff] %v558
        %v560 = vld [vmem:[%s56 + $0x7d8] sm:$0xff]
        %561 = vst [vmem:[%s57 + $0x7d8] sm:$0xff] %v560
        %v562 = vld [vmem:[%s56 + $0x7e0] sm:$0xff]
        %563 = vst [vmem:[%s57 + $0x7e0] sm:$0xff] %v562
        %v564 = vld [vmem:[%s56 + $0x7e8] sm:$0xff]
        %565 = vst [vmem:[%s57 + $0x7e8] sm:$0xff] %v564
        %v566 = vld [vmem:[%s56 + $0x7f0] sm:$0xff]
        %567 = vst [vmem:[%s57 + $0x7f0] sm:$0xff] %v566
        %v568 = vld [vmem:[%s56 + $0x7f8] sm:$0xff]
        %569 = vst [vmem:[%s57 + $0x7f8] sm:$0xff] %v568
        %v570 = vld [vmem:[%s56 + $0x800] sm:$0xff]
        %571 = vst [vmem:[%s57 + $0x800] sm:$0xff] %v570
        %v572 = vld [vmem:[%s56 + $0x808] sm:$0xff]
        %573 = vst [vmem:[%s57 + $0x808] sm:$0xff] %v572
        %v574 = vld [vmem:[%s56 + $0x810] sm:$0xff]
        %575 = vst [vmem:[%s57 + $0x810] sm:$0xff] %v574
        %v576 = vld [vmem:[%s56 + $0x818] sm:$0xff]
        %577 = vst [vmem:[%s57 + $0x818] sm:$0xff] %v576
        %v578 = vld [vmem:[%s56 + $0x820] sm:$0xff]
        %579 = vst [vmem:[%s57 + $0x820] sm:$0xff] %v578
        %v580 = vld [vmem:[%s56 + $0x828] sm:$0xff]
        %581 = vst [vmem:[%s57 + $0x828] sm:$0xff] %v580
        %v582 = vld [vmem:[%s56 + $0x830] sm:$0xff]
        %583 = vst [vmem:[%s57 + $0x830] sm:$0xff] %v582
        %v584 = vld [vmem:[%s56 + $0x838] sm:$0xff]
        %585 = vst [vmem:[%s57 + $0x838] sm:$0xff] %v584
        %v586 = vld [vmem:[%s56 + $0x840] sm:$0xff]
        %587 = vst [vmem:[%s57 + $0x840] sm:$0xff] %v586
        %v588 = vld [vmem:[%s56 + $0x848] sm:$0xff]
        %589 = vst [vmem:[%s57 + $0x848] sm:$0xff] %v588
        %v590 = vld [vmem:[%s56 + $0x850] sm:$0xff]
        %591 = vst [vmem:[%s57 + $0x850] sm:$0xff] %v590
        %v592 = vld [vmem:[%s56 + $0x858] sm:$0xff]
        %593 = vst [vmem:[%s57 + $0x858] sm:$0xff] %v592
        %v594 = vld [vmem:[%s56 + $0x860] sm:$0xff]
        %595 = vst [vmem:[%s57 + $0x860] sm:$0xff] %v594
        %v596 = vld [vmem:[%s56 + $0x868] sm:$0xff]
        %597 = vst [vmem:[%s57 + $0x868] sm:$0xff] %v596
        %v598 = vld [vmem:[%s56 + $0x870] sm:$0xff]
        %599 = vst [vmem:[%s57 + $0x870] sm:$0xff] %v598
        %v600 = vld [vmem:[%s56 + $0x878] sm:$0xff]
        %601 = vst [vmem:[%s57 + $0x878] sm:$0xff] %v600
        %v602 = vld [vmem:[%s56 + $0x880] sm:$0xff]
        %603 = vst [vmem:[%s57 + $0x880] sm:$0xff] %v602
        %v604 = vld [vmem:[%s56 + $0x888] sm:$0xff]
        %605 = vst [vmem:[%s57 + $0x888] sm:$0xff] %v604
        %v606 = vld [vmem:[%s56 + $0x890] sm:$0xff]
        %607 = vst [vmem:[%s57 + $0x890] sm:$0xff] %v606
        %v608 = vld [vmem:[%s56 + $0x898] sm:$0xff]
        %609 = vst [vmem:[%s57 + $0x898] sm:$0xff] %v608
        %v610 = vld [vmem:[%s56 + $0x8a0] sm:$0xff]
        %611 = vst [vmem:[%s57 + $0x8a0] sm:$0xff] %v610
        %v612 = vld [vmem:[%s56 + $0x8a8] sm:$0xff]
        %613 = vst [vmem:[%s57 + $0x8a8] sm:$0xff] %v612
        %v614 = vld [vmem:[%s56 + $0x8b0] sm:$0xff]
        %615 = vst [vmem:[%s57 + $0x8b0] sm:$0xff] %v614
        %v616 = vld [vmem:[%s56 + $0x8b8] sm:$0xff]
        %617 = vst [vmem:[%s57 + $0x8b8] sm:$0xff] %v616
        %v618 = vld [vmem:[%s56 + $0x8c0] sm:$0xff]
        %619 = vst [vmem:[%s57 + $0x8c0] sm:$0xff] %v618
        %v620 = vld [vmem:[%s56 + $0x8c8] sm:$0xff]
        %621 = vst [vmem:[%s57 + $0x8c8] sm:$0xff] %v620
        %v622 = vld [vmem:[%s56 + $0x8d0] sm:$0xff]
        %623 = vst [vmem:[%s57 + $0x8d0] sm:$0xff] %v622
        %v624 = vld [vmem:[%s56 + $0x8d8] sm:$0xff]
        %625 = vst [vmem:[%s57 + $0x8d8] sm:$0xff] %v624
        %v626 = vld [vmem:[%s56 + $0x8e0] sm:$0xff]
        %627 = vst [vmem:[%s57 + $0x8e0] sm:$0xff] %v626
        %v628 = vld [vmem:[%s56 + $0x8e8] sm:$0xff]
        %629 = vst [vmem:[%s57 + $0x8e8] sm:$0xff] %v628
        %v630 = vld [vmem:[%s56 + $0x8f0] sm:$0xff]
        %631 = vst [vmem:[%s57 + $0x8f0] sm:$0xff] %v630
        %v632 = vld [vmem:[%s56 + $0x8f8] sm:$0xff]
        %633 = vst [vmem:[%s57 + $0x8f8] sm:$0xff] %v632
      $region49: #{fused_bn_add_relu_conv_bn.1} parent=43 // loop_footer
        %s55 = sadd.s32 1, %s51
      $region50: #{fused_bn_add_relu_conv_bn.1} parent=43 // loop_footer_branch
        %50 = sbr.rel target = $region46
      $region51: #{fused_bn_add_relu_conv_bn.1} parent=43 // loop_exit
        _
    $region44: #{fused_bn_add_relu_conv_bn.1} parent=28 // pred_fallthru
      _
    %p634 = pneg %p46
    // Predicated region
    $region52: #{fused_bn_add_relu_conv_bn.1} parent=28 // pred_check
      _
    $region53: #{fused_bn_add_relu_conv_bn.1} parent=28 // pred_check_branch
      %636 = sbr.rel (%p46) target = $region55
    $region54: #{fused_bn_add_relu_conv_bn.1} parent=28 // pred_region
      %s637 = sand.u32 2304, 7
    $region55: #{fused_bn_add_relu_conv_bn.1} parent=28 // pred_fallthru
      _
  $region29: #{fused_bn_add_relu_conv_bn.1} parent=0 // pred_fallthru
    _
  // Predicated region
  $region30: #{fused_bn_add_relu_conv_bn.1} parent=0 // pred_check
    %p30 = pneg %p26
  $region31: #{fused_bn_add_relu_conv_bn.1} parent=0 // pred_check_branch
    %32 = sbr.rel (%p30) target = $region33
  $region32: #{fused_bn_add_relu_conv_bn.1} parent=0 // pred_region
    %s33 = sshll.u32 1, 2304
    %s34 = ssub.s32 %s33, 1
    loop: start=0, step=1, limit=1
    $region34: #{fused_bn_add_relu_conv_bn.1} parent=32 // loop_pre_header
      _
    $region35: #{fused_bn_add_relu_conv_bn.1} parent=32 // loop_header
      %s36 = sphi 0, %s40
      %p37 = scmp.ge.s32.totalorder %s36, 1
      %s41 = sphi %s4, %s4
      %s42 = sphi [#allocation3], [#allocation3]
    $region36: #{fused_bn_add_relu_conv_bn.1} parent=32 // loop_header_branch
      %39 = sbr.rel (%p37) target = $region40
    $region37: #{fused_bn_add_relu_conv_bn.1} parent=32 // loop_body
      %v43 = vld [vmem:[%s41] sm:%s34]
      %44 = vst [vmem:[%s42] sm:%s34] %v43
    $region38: #{fused_bn_add_relu_conv_bn.1} parent=32 // loop_footer
      %s40 = sadd.s32 1, %s36
    $region39: #{fused_bn_add_relu_conv_bn.1} parent=32 // loop_footer_branch
      %35 = sbr.rel target = $region35
    $region40: #{fused_bn_add_relu_conv_bn.1} parent=32 // loop_exit
      _
  $region33: #{fused_bn_add_relu_conv_bn.1} parent=0 // pred_fallthru
    _
  // Predicated region
  $region56: #{fused_bn_add_relu_conv_bn.1} parent=0 // pred_check
    _
  $region57: #{fused_bn_add_relu_conv_bn.1} parent=0 // pred_check_branch
    %640 = sbr.rel (0) target = $region59
  $region58: #{fused_bn_add_relu_conv_bn.1} parent=0 // pred_region
    %641 = vsyncadd [#allocation4], 36864
  $region59: #{fused_bn_add_relu_conv_bn.1} parent=0 // pred_fallthru
    _
  %v642 = vlaneseq
  %v643 = vshrl.u32 %v642, 7
  %v644 = vadd.s32 %v643, 8
  %v645 = vadd.s32 %v643, 16
  %v646 = vadd.s32 %v643, 24
  %v647 = vand.u32 %v643, 15
  %v648 = vand.u32 %v644, 15
  %v649 = vand.u32 %v645, 15
  %v650 = vand.u32 %v646, 15
  %vm651 = vcmp.lt.s32.totalorder %v647, 14
  %vm652 = vcmp.lt.s32.totalorder %v648, 14
  %vm653 = vcmp.lt.s32.totalorder %v649, 14
  %vm654 = vcmp.lt.s32.totalorder %v650, 14
  %v655 = vld [vmem:[%s0] sm:$0xff]
  %v656 = vld [vmem:[%s0 + $0x8] sm:$0xff]
  %v657 = vld [vmem:[%s0 + $0x10] sm:$0xff]
  %v658 = vld [vmem:[%s0 + $0x18] sm:$0xff]
  %v659 = vld [vmem:[%s0 + $0x20] sm:$0xff]
  %v660 = vld [vmem:[%s0 + $0x28] sm:$0xff]
  %v661 = vld [vmem:[%s0 + $0x30] sm:$0xff]
  %v662 = vld [vmem:[%s0 + $0x38] sm:$0xff]
  %v663 = vadd.f32 %v655, %v657
  %v664 = vadd.f32 %v663, %v659
  %v665 = vadd.f32 %v664, %v661
  %v666 = vrot.slane %v665, 4
  %v667 = vadd.f32 %v665, %v666
  %v668 = vrot.slane %v667, 2
  %v669 = vadd.f32 %v667, %v668
  %v670 = vrot.slane %v669, 1
  %v671 = vadd.f32 %v669, %v670
  %v672 = vadd.f32 %v656, %v658
  %v673 = vadd.f32 %v672, %v660
  %v674 = vadd.f32 %v673, %v662
  %v675 = vrot.slane %v674, 4
  %v676 = vadd.f32 %v674, %v675
  %v677 = vrot.slane %v676, 2
  %v678 = vadd.f32 %v676, %v677
  %v679 = vrot.slane %v678, 1
  %v680 = vadd.f32 %v678, %v679
  %v681 = vadd.f32 %v671, 0.0
  %v682 = vadd.f32 %v680, 0.0
  %v683 = vmul.f32 %v655, %v655
  %v684 = vmul.f32 %v656, %v656
  %v685 = vmul.f32 %v657, %v657
  %v686 = vmul.f32 %v658, %v658
  %v687 = vmul.f32 %v659, %v659
  %v688 = vmul.f32 %v660, %v660
  %v689 = vmul.f32 %v661, %v661
  %v690 = vmul.f32 %v662, %v662
  %v691 = vadd.f32 %v683, %v685
  %v692 = vadd.f32 %v691, %v687
  %v693 = vadd.f32 %v692, %v689
  %v694 = vrot.slane %v693, 4
  %v695 = vadd.f32 %v693, %v694
  %v696 = vrot.slane %v695, 2
  %v697 = vadd.f32 %v695, %v696
  %v698 = vrot.slane %v697, 1
  %v699 = vadd.f32 %v697, %v698
  %v700 = vadd.f32 %v684, %v686
  %v701 = vadd.f32 %v700, %v688
  %v702 = vadd.f32 %v701, %v690
  %v703 = vrot.slane %v702, 4
  %v704 = vadd.f32 %v702, %v703
  %v705 = vrot.slane %v704, 2
  %v706 = vadd.f32 %v704, %v705
  %v707 = vrot.slane %v706, 1
  %v708 = vadd.f32 %v706, %v707
  %v709 = vadd.f32 %v699, 0.0
  %v710 = vadd.f32 %v708, 0.0
  %v711 = vld [vmem:[%s0 + $0x40] sm:$0xff]
  %v712 = vld [vmem:[%s0 + $0x48] sm:$0xff]
  %v713 = vld [vmem:[%s0 + $0x50] sm:$0xff]
  %v714 = vld [vmem:[%s0 + $0x58] sm:$0xff]
  %v715 = vld [vmem:[%s0 + $0x60] sm:$0xff]
  %v716 = vld [vmem:[%s0 + $0x68] sm:$0xff]
  %v717 = vld [vmem:[%s0 + $0x70] sm:$0xff]
  %v718 = vld [vmem:[%s0 + $0x78] sm:$0xff]
  %v719 = vadd.f32 %v711, %v713
  %v720 = vadd.f32 %v719, %v715
  %v721 = vadd.f32 %v720, %v717
  %v722 = vrot.slane %v721, 4
  %v723 = vadd.f32 %v721, %v722
  %v724 = vrot.slane %v723, 2
  %v725 = vadd.f32 %v723, %v724
  %v726 = vrot.slane %v725, 1
  %v727 = vadd.f32 %v725, %v726
  %v728 = vadd.f32 %v712, %v714
  %v729 = vadd.f32 %v728, %v716
  %v730 = vadd.f32 %v729, %v718
  %v731 = vrot.slane %v730, 4
  %v732 = vadd.f32 %v730, %v731
  %v733 = vrot.slane %v732, 2
  %v734 = vadd.f32 %v732, %v733
  %v735 = vrot.slane %v734, 1
  %v736 = vadd.f32 %v734, %v735
  %v737 = vadd.f32 %v681, %v727
  %v738 = vadd.f32 %v682, %v736
  %v739 = vmul.f32 %v711, %v711
  %v740 = vmul.f32 %v712, %v712
  %v741 = vmul.f32 %v713, %v713
  %v742 = vmul.f32 %v714, %v714
  %v743 = vmul.f32 %v715, %v715
  %v744 = vmul.f32 %v716, %v716
  %v745 = vmul.f32 %v717, %v717
  %v746 = vmul.f32 %v718, %v718
  %v747 = vadd.f32 %v739, %v741
  %v748 = vadd.f32 %v747, %v743
  %v749 = vadd.f32 %v748, %v745
  %v750 = vrot.slane %v749, 4
  %v751 = vadd.f32 %v749, %v750
  %v752 = vrot.slane %v751, 2
  %v753 = vadd.f32 %v751, %v752
  %v754 = vrot.slane %v753, 1
  %v755 = vadd.f32 %v753, %v754
  %v756 = vadd.f32 %v740, %v742
  %v757 = vadd.f32 %v756, %v744
  %v758 = vadd.f32 %v757, %v746
  %v759 = vrot.slane %v758, 4
  %v760 = vadd.f32 %v758, %v759
  %v761 = vrot.slane %v760, 2
  %v762 = vadd.f32 %v760, %v761
  %v763 = vrot.slane %v762, 1
  %v764 = vadd.f32 %v762, %v763
  %v765 = vadd.f32 %v709, %v755
  %v766 = vadd.f32 %v710, %v764
  %v767 = vld [vmem:[%s0 + $0x80] sm:$0xff]
  %v768 = vld [vmem:[%s0 + $0x88] sm:$0xff]
  %v769 = vld [vmem:[%s0 + $0x90] sm:$0xff]
  %v770 = vld [vmem:[%s0 + $0x98] sm:$0xff]
  %v771 = vld [vmem:[%s0 + $0xa0] sm:$0xff]
  %v772 = vld [vmem:[%s0 + $0xa8] sm:$0xff]
  %v773 = vld [vmem:[%s0 + $0xb0] sm:$0xff]
  %v774 = vld [vmem:[%s0 + $0xb8] sm:$0xff]
  %v775 = vadd.f32 %v767, %v769
  %v776 = vadd.f32 %v775, %v771
  %v777 = vadd.f32 %v776, %v773
  %v778 = vrot.slane %v777, 4
  %v779 = vadd.f32 %v777, %v778
  %v780 = vrot.slane %v779, 2
  %v781 = vadd.f32 %v779, %v780
  %v782 = vrot.slane %v781, 1
  %v783 = vadd.f32 %v781, %v782
  %v784 = vadd.f32 %v768, %v770
  %v785 = vadd.f32 %v784, %v772
  %v786 = vadd.f32 %v785, %v774
  %v787 = vrot.slane %v786, 4
  %v788 = vadd.f32 %v786, %v787
  %v789 = vrot.slane %v788, 2
  %v790 = vadd.f32 %v788, %v789
  %v791 = vrot.slane %v790, 1
  %v792 = vadd.f32 %v790, %v791
  %v793 = vadd.f32 %v737, %v783
  %v794 = vadd.f32 %v738, %v792
  %v795 = vmul.f32 %v767, %v767
  %v796 = vmul.f32 %v768, %v768
  %v797 = vmul.f32 %v769, %v769
  %v798 = vmul.f32 %v770, %v770
  %v799 = vmul.f32 %v771, %v771
  %v800 = vmul.f32 %v772, %v772
  %v801 = vmul.f32 %v773, %v773
  %v802 = vmul.f32 %v774, %v774
  %v803 = vadd.f32 %v795, %v797
  %v804 = vadd.f32 %v803, %v799
  %v805 = vadd.f32 %v804, %v801
  %v806 = vrot.slane %v805, 4
  %v807 = vadd.f32 %v805, %v806
  %v808 = vrot.slane %v807, 2
  %v809 = vadd.f32 %v807, %v808
  %v810 = vrot.slane %v809, 1
  %v811 = vadd.f32 %v809, %v810
  %v812 = vadd.f32 %v796, %v798
  %v813 = vadd.f32 %v812, %v800
  %v814 = vadd.f32 %v813, %v802
  %v815 = vrot.slane %v814, 4
  %v816 = vadd.f32 %v814, %v815
  %v817 = vrot.slane %v816, 2
  %v818 = vadd.f32 %v816, %v817
  %v819 = vrot.slane %v818, 1
  %v820 = vadd.f32 %v818, %v819
  %v821 = vadd.f32 %v765, %v811
  %v822 = vadd.f32 %v766, %v820
  %v823 = vld [vmem:[%s0 + $0xc0] sm:$0xff]
  %v824 = vld [vmem:[%s0 + $0xc8] sm:$0xff]
  %v825 = vld [vmem:[%s0 + $0xd0] sm:$0xff]
  %v826 = vld [vmem:[%s0 + $0xd8] sm:$0xff]
  %v827 = vld [vmem:[%s0 + $0xe0] sm:$0xff]
  %v828 = vld [vmem:[%s0 + $0xe8] sm:$0xff]
  %v829 = vld [vmem:[%s0 + $0xf0] sm:$0xff]
  %v830 = vld [vmem:[%s0 + $0xf8] sm:$0xff]
  %v831 = vadd.f32 %v823, %v825
  %v832 = vadd.f32 %v831, %v827
  %v833 = vadd.f32 %v832, %v829
  %v834 = vrot.slane %v833, 4
  %v835 = vadd.f32 %v833, %v834
  %v836 = vrot.slane %v835, 2
  %v837 = vadd.f32 %v835, %v836
  %v838 = vrot.slane %v837, 1
  %v839 = vadd.f32 %v837, %v838
  %v840 = vadd.f32 %v824, %v826
  %v841 = vadd.f32 %v840, %v828
  %v842 = vadd.f32 %v841, %v830
  %v843 = vrot.slane %v842, 4
  %v844 = vadd.f32 %v842, %v843
  %v845 = vrot.slane %v844, 2
  %v846 = vadd.f32 %v844, %v845
  %v847 = vrot.slane %v846, 1
  %v848 = vadd.f32 %v846, %v847
  %v849 = vadd.f32 %v793, %v839
  %v850 = vadd.f32 %v794, %v848
  %v851 = vmul.f32 %v823, %v823
  %v852 = vmul.f32 %v824, %v824
  %v853 = vmul.f32 %v825, %v825
  %v854 = vmul.f32 %v826, %v826
  %v855 = vmul.f32 %v827, %v827
  %v856 = vmul.f32 %v828, %v828
  %v857 = vmul.f32 %v829, %v829
  %v858 = vmul.f32 %v830, %v830
  %v859 = vadd.f32 %v851, %v853
  %v860 = vadd.f32 %v859, %v855
  %v861 = vadd.f32 %v860, %v857
  %v862 = vrot.slane %v861, 4
  %v863 = vadd.f32 %v861, %v862
  %v864 = vrot.slane %v863, 2
  %v865 = vadd.f32 %v863, %v864
  %v866 = vrot.slane %v865, 1
  %v867 = vadd.f32 %v865, %v866
  %v868 = vadd.f32 %v852, %v854
  %v869 = vadd.f32 %v868, %v856
  %v870 = vadd.f32 %v869, %v858
  %v871 = vrot.slane %v870, 4
  %v872 = vadd.f32 %v870, %v871
  %v873 = vrot.slane %v872, 2
  %v874 = vadd.f32 %v872, %v873
  %v875 = vrot.slane %v874, 1
  %v876 = vadd.f32 %v874, %v875
  %v877 = vadd.f32 %v821, %v867
  %v878 = vadd.f32 %v822, %v876
  %v879 = vld [vmem:[%s0 + $0x100] sm:$0xff]
  %v880 = vld [vmem:[%s0 + $0x108] sm:$0xff]
  %v881 = vld [vmem:[%s0 + $0x110] sm:$0xff]
  %v882 = vld [vmem:[%s0 + $0x118] sm:$0xff]
  %v883 = vld [vmem:[%s0 + $0x120] sm:$0xff]
  %v884 = vld [vmem:[%s0 + $0x128] sm:$0xff]
  %v885 = vld [vmem:[%s0 + $0x130] sm:$0xff]
  %v886 = vld [vmem:[%s0 + $0x138] sm:$0xff]
  %v887 = vadd.f32 %v879, %v881
  %v888 = vadd.f32 %v887, %v883
  %v889 = vadd.f32 %v888, %v885
  %v890 = vrot.slane %v889, 4
  %v891 = vadd.f32 %v889, %v890
  %v892 = vrot.slane %v891, 2
  %v893 = vadd.f32 %v891, %v892
  %v894 = vrot.slane %v893, 1
  %v895 = vadd.f32 %v893, %v894
  %v896 = vadd.f32 %v880, %v882
  %v897 = vadd.f32 %v896, %v884
  %v898 = vadd.f32 %v897, %v886
  %v899 = vrot.slane %v898, 4
  %v900 = vadd.f32 %v898, %v899
  %v901 = vrot.slane %v900, 2
  %v902 = vadd.f32 %v900, %v901
  %v903 = vrot.slane %v902, 1
  %v904 = vadd.f32 %v902, %v903
  %v905 = vadd.f32 %v849, %v895
  %v906 = vadd.f32 %v850, %v904
  %v907 = vmul.f32 %v879, %v879
  %v908 = vmul.f32 %v880, %v880
  %v909 = vmul.f32 %v881, %v881
  %v910 = vmul.f32 %v882, %v882
  %v911 = vmul.f32 %v883, %v883
  %v912 = vmul.f32 %v884, %v884
  %v913 = vmul.f32 %v885, %v885
  %v914 = vmul.f32 %v886, %v886
  %v915 = vadd.f32 %v907, %v909
  %v916 = vadd.f32 %v915, %v911
  %v917 = vadd.f32 %v916, %v913
  %v918 = vrot.slane %v917, 4
  %v919 = vadd.f32 %v917, %v918
  %v920 = vrot.slane %v919, 2
  %v921 = vadd.f32 %v919, %v920
  %v922 = vrot.slane %v921, 1
  %v923 = vadd.f32 %v921, %v922
  %v924 = vadd.f32 %v908, %v910
  %v925 = vadd.f32 %v924, %v912
  %v926 = vadd.f32 %v925, %v914
  %v927 = vrot.slane %v926, 4
  %v928 = vadd.f32 %v926, %v927
  %v929 = vrot.slane %v928, 2
  %v930 = vadd.f32 %v928, %v929
  %v931 = vrot.slane %v930, 1
  %v932 = vadd.f32 %v930, %v931
  %v933 = vadd.f32 %v877, %v923
  %v934 = vadd.f32 %v878, %v932
  %v935 = vld [vmem:[%s0 + $0x140] sm:$0xff]
  %v936 = vld [vmem:[%s0 + $0x148] sm:$0xff]
  %v937 = vld [vmem:[%s0 + $0x150] sm:$0xff]
  %v938 = vld [vmem:[%s0 + $0x158] sm:$0xff]
  %v939 = vld [vmem:[%s0 + $0x160] sm:$0xff]
  %v940 = vld [vmem:[%s0 + $0x168] sm:$0xff]
  %v941 = vld [vmem:[%s0 + $0x170] sm:$0xff]
  %v942 = vld [vmem:[%s0 + $0x178] sm:$0xff]
  %v943 = vadd.f32 %v935, %v937
  %v944 = vadd.f32 %v943, %v939
  %v945 = vadd.f32 %v944, %v941
  %v946 = vrot.slane %v945, 4
  %v947 = vadd.f32 %v945, %v946
  %v948 = vrot.slane %v947, 2
  %v949 = vadd.f32 %v947, %v948
  %v950 = vrot.slane %v949, 1
  %v951 = vadd.f32 %v949, %v950
  %v952 = vadd.f32 %v936, %v938
  %v953 = vadd.f32 %v952, %v940
  %v954 = vadd.f32 %v953, %v942
  %v955 = vrot.slane %v954, 4
  %v956 = vadd.f32 %v954, %v955
  %v957 = vrot.slane %v956, 2
  %v958 = vadd.f32 %v956, %v957
  %v959 = vrot.slane %v958, 1
  %v960 = vadd.f32 %v958, %v959
  %v961 = vadd.f32 %v905, %v951
  %v962 = vadd.f32 %v906, %v960
  %v963 = vmul.f32 %v935, %v935
  %v964 = vmul.f32 %v936, %v936
  %v965 = vmul.f32 %v937, %v937
  %v966 = vmul.f32 %v938, %v938
  %v967 = vmul.f32 %v939, %v939
  %v968 = vmul.f32 %v940, %v940
  %v969 = vmul.f32 %v941, %v941
  %v970 = vmul.f32 %v942, %v942
  %v971 = vadd.f32 %v963, %v965
  %v972 = vadd.f32 %v971, %v967
  %v973 = vadd.f32 %v972, %v969
  %v974 = vrot.slane %v973, 4
  %v975 = vadd.f32 %v973, %v974
  %v976 = vrot.slane %v975, 2
  %v977 = vadd.f32 %v975, %v976
  %v978 = vrot.slane %v977, 1
  %v979 = vadd.f32 %v977, %v978
  %v980 = vadd.f32 %v964, %v966
  %v981 = vadd.f32 %v980, %v968
  %v982 = vadd.f32 %v981, %v970
  %v983 = vrot.slane %v982, 4
  %v984 = vadd.f32 %v982, %v983
  %v985 = vrot.slane %v984, 2
  %v986 = vadd.f32 %v984, %v985
  %v987 = vrot.slane %v986, 1
  %v988 = vadd.f32 %v986, %v987
  %v989 = vadd.f32 %v933, %v979
  %v990 = vadd.f32 %v934, %v988
  %v991 = vld [vmem:[%s0 + $0x180] sm:$0xff]
  %v992 = vld [vmem:[%s0 + $0x188] sm:$0xff]
  %v993 = vld [vmem:[%s0 + $0x190] sm:$0xff]
  %v994 = vld [vmem:[%s0 + $0x198] sm:$0xff]
  %v995 = vld [vmem:[%s0 + $0x1a0] sm:$0xff]
  %v996 = vld [vmem:[%s0 + $0x1a8] sm:$0xff]
  %v997 = vld [vmem:[%s0 + $0x1b0] sm:$0xff]
  %v998 = vld [vmem:[%s0 + $0x1b8] sm:$0xff]
  %v999 = vadd.f32 %v991, %v993
  %v1000 = vadd.f32 %v999, %v995
  %v1001 = vadd.f32 %v1000, %v997
  %v1002 = vrot.slane %v1001, 4
  %v1003 = vadd.f32 %v1001, %v1002
  %v1004 = vrot.slane %v1003, 2
  %v1005 = vadd.f32 %v1003, %v1004
  %v1006 = vrot.slane %v1005, 1
  %v1007 = vadd.f32 %v1005, %v1006
  %v1008 = vadd.f32 %v992, %v994
  %v1009 = vadd.f32 %v1008, %v996
  %v1010 = vadd.f32 %v1009, %v998
  %v1011 = vrot.slane %v1010, 4
  %v1012 = vadd.f32 %v1010, %v1011
  %v1013 = vrot.slane %v1012, 2
  %v1014 = vadd.f32 %v1012, %v1013
  %v1015 = vrot.slane %v1014, 1
  %v1016 = vadd.f32 %v1014, %v1015
  %v1017 = vadd.f32 %v961, %v1007
  %v1018 = vadd.f32 %v962, %v1016
  %v1019 = vmul.f32 %v991, %v991
  %v1020 = vmul.f32 %v992, %v992
  %v1021 = vmul.f32 %v993, %v993
  %v1022 = vmul.f32 %v994, %v994
  %v1023 = vmul.f32 %v995, %v995
  %v1024 = vmul.f32 %v996, %v996
  %v1025 = vmul.f32 %v997, %v997
  %v1026 = vmul.f32 %v998, %v998
  %v1027 = vadd.f32 %v1019, %v1021
  %v1028 = vadd.f32 %v1027, %v1023
  %v1029 = vadd.f32 %v1028, %v1025
  %v1030 = vrot.slane %v1029, 4
  %v1031 = vadd.f32 %v1029, %v1030
  %v1032 = vrot.slane %v1031, 2
  %v1033 = vadd.f32 %v1031, %v1032
  %v1034 = vrot.slane %v1033, 1
  %v1035 = vadd.f32 %v1033, %v1034
  %v1036 = vadd.f32 %v1020, %v1022
  %v1037 = vadd.f32 %v1036, %v1024
  %v1038 = vadd.f32 %v1037, %v1026
  %v1039 = vrot.slane %v1038, 4
  %v1040 = vadd.f32 %v1038, %v1039
  %v1041 = vrot.slane %v1040, 2
  %v1042 = vadd.f32 %v1040, %v1041
  %v1043 = vrot.slane %v1042, 1
  %v1044 = vadd.f32 %v1042, %v1043
  %v1045 = vadd.f32 %v989, %v1035
  %v1046 = vadd.f32 %v990, %v1044
  %v1047 = vmul.f32 %v1017, 0.0051020407
  %v1048 = vmul.f32 %v1018, 0.0051020407
  %v1049 = vmul.f32 %v1045, 0.0051020407
  %v1050 = vmul.f32 %v1046, 0.0051020407
  %v1051 = vmul.f32 %v1047, %v1047
  %v1052 = vmul.f32 %v1048, %v1048
  %v1053 = vsub.f32 %v1049, %v1051
  %v1054 = vsub.f32 %v1050, %v1052
  %v1055 = vadd.f32 %v1053, 1e-05
  %v1056 = vadd.f32 %v1054, 1e-05
  %v1057 = vrsqrt.pop %v1055
  %v1058 = vrsqrt.pop %v1056
  %v1059 = vld [vmem:[%s2] sm:$0x3]
  %v1061 = vlaneseq
  %v1062 = vshrl.u32 %v1061, 7
  %v1063 = vsub.s32 0, %v1062
  %v1064 = vrot.slane %v1059, %v1063
  %v1065 = vlaneseq
  %v1066 = vshrl.u32 %v1065, 7
  %v1067 = vsub.s32 1, %v1066
  %v1068 = vrot.slane %v1059, %v1067
  %v1071 = vmul.f32 %v1057, %v1064
  %v1072 = vmul.f32 %v1058, %v1068
  %v1073 = vld [vmem:[%s3] sm:$0x3]
  %v1074 = vmul.f32 %v1047, %v1071
  %v1075 = vmul.f32 %v1048, %v1072
  %v1078 = vcombine.low %v1074, %v1075
  %v1080 = vunpack.c.l.s4 1966171168
  %v1081 = vunpack.c.0.s8 %v1080
  %v1082 = vlaneseq
  %v1083 = vshrl.u32 %v1082, 7
  %v1084 = vsub.s32 %v1081, %v1083
  %v1085 = vrot.slane %v1078, %v1084
  %v1087 = vunpack.c.l.s4 1966171168
  %v1088 = vunpack.c.0.s8 %v1087
  %v1089 = vlaneseq
  %v1090 = vshrl.u32 %v1089, 7
  %v1091 = vsub.s32 %v1088, %v1090
  %v1092 = vrot.slane %v1085, %v1091
  %v1094 = vsub.f32 %v1073, %v1092
  %1095 = vst [vmem:[#allocation2] sm:$0xff] 0
  %1096 = vst [vmem:[#allocation2 + $0x8] sm:$0xff] 0
  %1097 = vst [vmem:[#allocation2 + $0x10] sm:$0xff] 0
  %1098 = vst [vmem:[#allocation2 + $0x18] sm:$0xff] 0
  %1099 = vst [vmem:[#allocation2 + $0x100] sm:$0xff] 0
  %1100 = vst [vmem:[#allocation2 + $0x108] sm:$0xff] 0
  %1101 = vst [vmem:[#allocation2 + $0x110] sm:$0xff] 0
  %1102 = vst [vmem:[#allocation2 + $0x118] sm:$0xff] 0
  %v1103 = vld [vmem:[%s0] sm:$0xff]
  %v1104 = vld [vmem:[%s0 + $0x8] sm:$0xff]
  %v1105 = vld [vmem:[%s0 + $0x10] sm:$0xff]
  %v1106 = vld [vmem:[%s0 + $0x18] sm:$0xff]
  %v1107 = vld [vmem:[%s0 + $0x20] sm:$0xff]
  %v1108 = vld [vmem:[%s0 + $0x28] sm:$0xff]
  %v1109 = vld [vmem:[%s0 + $0x30] sm:$0xff]
  %v1110 = vld [vmem:[%s0 + $0x38] sm:$0xff]
  %v1111 = vld [vmem:[%s1] sm:$0xff]
  %v1112 = vld [vmem:[%s1 + $0x8] sm:$0xff]
  %v1113 = vld [vmem:[%s1 + $0x10] sm:$0xff]
  %v1114 = vld [vmem:[%s1 + $0x18] sm:$0xff]
  %v1115 = vld [vmem:[%s1 + $0x20] sm:$0xff]
  %v1116 = vld [vmem:[%s1 + $0x28] sm:$0xff]
  %v1117 = vld [vmem:[%s1 + $0x30] sm:$0xff]
  %v1118 = vld [vmem:[%s1 + $0x38] sm:$0xff]
  %v1119 = vlaneseq
  %v1120 = vshrl.u32 %v1119, 7
  %v1121 = vsub.s32 0, %v1120
  %v1122 = vrot.slane %v1071, %v1121
  %v1123 = vlaneseq
  %v1124 = vshrl.u32 %v1123, 7
  %v1125 = vsub.s32 0, %v1124
  %v1126 = vrot.slane %v1072, %v1125
  %v1127 = vmul.f32 %v1103, %v1122
  %v1128 = vmul.f32 %v1104, %v1126
  %v1129 = vmul.f32 %v1105, %v1122
  %v1130 = vmul.f32 %v1106, %v1126
  %v1131 = vmul.f32 %v1107, %v1122
  %v1132 = vmul.f32 %v1108, %v1126
  %v1133 = vmul.f32 %v1109, %v1122
  %v1134 = vmul.f32 %v1110, %v1126
  %v1136 = vlaneseq
  %v1137 = vshrl.u32 %v1136, 7
  %v1138 = vsub.s32 0, %v1137
  %v1139 = vrot.slane %v1094, %v1138
  %v1140 = vlaneseq
  %v1141 = vshrl.u32 %v1140, 7
  %v1142 = vsub.s32 1, %v1141
  %v1143 = vrot.slane %v1094, %v1142
  %v1146 = vadd.f32 %v1127, %v1139
  %v1147 = vadd.f32 %v1128, %v1143
  %v1148 = vadd.f32 %v1129, %v1139
  %v1149 = vadd.f32 %v1130, %v1143
  %v1150 = vadd.f32 %v1131, %v1139
  %v1151 = vadd.f32 %v1132, %v1143
  %v1152 = vadd.f32 %v1133, %v1139
  %v1153 = vadd.f32 %v1134, %v1143
  %v1154 = vadd.f32 %v1146, %v1111
  %v1155 = vadd.f32 %v1147, %v1112
  %v1156 = vadd.f32 %v1148, %v1113
  %v1157 = vadd.f32 %v1149, %v1114
  %v1158 = vadd.f32 %v1150, %v1115
  %v1159 = vadd.f32 %v1151, %v1116
  %v1160 = vadd.f32 %v1152, %v1117
  %v1161 = vadd.f32 %v1153, %v1118
  %v1162 = vmax.f32 %v1154, 0.0
  %v1163 = vmax.f32 %v1155, 0.0
  %v1164 = vmax.f32 %v1156, 0.0
  %v1165 = vmax.f32 %v1157, 0.0
  %v1166 = vmax.f32 %v1158, 0.0
  %v1167 = vmax.f32 %v1159, 0.0
  %v1168 = vmax.f32 %v1160, 0.0
  %v1169 = vmax.f32 %v1161, 0.0
  %v1170 = vsel %vm651, 1, 0
  %v1171 = vsel %vm652, 1, 0
  %v1172 = vsel %vm653, 1, 0
  %v1173 = vsel %vm654, 1, 0
  %vm1174 = vcmp.eq.s32.totalorder %v1170, 1
  %vm1175 = vcmp.eq.s32.totalorder %v1171, 1
  %vm1176 = vcmp.eq.s32.totalorder %v1172, 1
  %vm1177 = vcmp.eq.s32.totalorder %v1173, 1
  %v1178 = vsel %vm1174, %v1162, 0.0
  %v1179 = vsel %vm1174, %v1163, 0.0
  %v1180 = vsel %vm1175, %v1164, 0.0
  %v1181 = vsel %vm1175, %v1165, 0.0
  %v1182 = vsel %vm1176, %v1166, 0.0
  %v1183 = vsel %vm1176, %v1167, 0.0
  %v1184 = vsel %vm1177, %v1168, 0.0
  %v1185 = vsel %vm1177, %v1169, 0.0
  %v1186 = vpack.c.bf16 %v1180, %v1178
  %v1187 = vpack.c.bf16 %v1181, %v1179
  %v1188 = vpack.c.bf16 %v1184, %v1182
  %v1189 = vpack.c.bf16 %v1185, %v1183
  %v1194 = vunpack.c.l.b16 %v1186
  %v1195 = vunpack.c.l.b16 %v1187
  %v1196 = vunpack.c.h.b16 %v1186
  %v1197 = vunpack.c.h.b16 %v1187
  %v1198 = vunpack.c.l.b16 %v1188
  %v1199 = vunpack.c.l.b16 %v1189
  %v1200 = vunpack.c.h.b16 %v1188
  %v1201 = vunpack.c.h.b16 %v1189
  %v1202 = vpack.c.b16 %v1195, %v1194
  %v1203 = vpack.c.b16 %v1197, %v1196
  %v1204 = vpack.c.b16 %v1199, %v1198
  %v1205 = vpack.c.b16 %v1201, %v1200
  %1210 = vst [vmem:[#allocation2 + $0x20] sm:$0xff] %v1202
  %1211 = vst [vmem:[#allocation2 + $0x28] sm:$0xff] %v1203
  %1212 = vst [vmem:[#allocation2 + $0x30] sm:$0xff] %v1204
  %1213 = vst [vmem:[#allocation2 + $0x38] sm:$0xff] %v1205
  %v1214 = vld [vmem:[%s0 + $0x40] sm:$0xff]
  %v1215 = vld [vmem:[%s0 + $0x48] sm:$0xff]
  %v1216 = vld [vmem:[%s0 + $0x50] sm:$0xff]
  %v1217 = vld [vmem:[%s0 + $0x58] sm:$0xff]
  %v1218 = vld [vmem:[%s0 + $0x60] sm:$0xff]
  %v1219 = vld [vmem:[%s0 + $0x68] sm:$0xff]
  %v1220 = vld [vmem:[%s0 + $0x70] sm:$0xff]
  %v1221 = vld [vmem:[%s0 + $0x78] sm:$0xff]
  %v1222 = vld [vmem:[%s1 + $0x40] sm:$0xff]
  %v1223 = vld [vmem:[%s1 + $0x48] sm:$0xff]
  %v1224 = vld [vmem:[%s1 + $0x50] sm:$0xff]
  %v1225 = vld [vmem:[%s1 + $0x58] sm:$0xff]
  %v1226 = vld [vmem:[%s1 + $0x60] sm:$0xff]
  %v1227 = vld [vmem:[%s1 + $0x68] sm:$0xff]
  %v1228 = vld [vmem:[%s1 + $0x70] sm:$0xff]
  %v1229 = vld [vmem:[%s1 + $0x78] sm:$0xff]
  %v1230 = vmul.f32 %v1214, %v1122
  %v1231 = vmul.f32 %v1215, %v1126
  %v1232 = vmul.f32 %v1216, %v1122
  %v1233 = vmul.f32 %v1217, %v1126
  %v1234 = vmul.f32 %v1218, %v1122
  %v1235 = vmul.f32 %v1219, %v1126
  %v1236 = vmul.f32 %v1220, %v1122
  %v1237 = vmul.f32 %v1221, %v1126
  %v1238 = vadd.f32 %v1230, %v1139
  %v1239 = vadd.f32 %v1231, %v1143
  %v1240 = vadd.f32 %v1232, %v1139
  %v1241 = vadd.f32 %v1233, %v1143
  %v1242 = vadd.f32 %v1234, %v1139
  %v1243 = vadd.f32 %v1235, %v1143
  %v1244 = vadd.f32 %v1236, %v1139
  %v1245 = vadd.f32 %v1237, %v1143
  %v1246 = vadd.f32 %v1238, %v1222
  %v1247 = vadd.f32 %v1239, %v1223
  %v1248 = vadd.f32 %v1240, %v1224
  %v1249 = vadd.f32 %v1241, %v1225
  %v1250 = vadd.f32 %v1242, %v1226
  %v1251 = vadd.f32 %v1243, %v1227
  %v1252 = vadd.f32 %v1244, %v1228
  %v1253 = vadd.f32 %v1245, %v1229
  %v1254 = vmax.f32 %v1246, 0.0
  %v1255 = vmax.f32 %v1247, 0.0
  %v1256 = vmax.f32 %v1248, 0.0
  %v1257 = vmax.f32 %v1249, 0.0
  %v1258 = vmax.f32 %v1250, 0.0
  %v1259 = vmax.f32 %v1251, 0.0
  %v1260 = vmax.f32 %v1252, 0.0
  %v1261 = vmax.f32 %v1253, 0.0
  %v1262 = vsel %vm1174, %v1254, 0.0
  %v1263 = vsel %vm1174, %v1255, 0.0
  %v1264 = vsel %vm1175, %v1256, 0.0
  %v1265 = vsel %vm1175, %v1257, 0.0
  %v1266 = vsel %vm1176, %v1258, 0.0
  %v1267 = vsel %vm1176, %v1259, 0.0
  %v1268 = vsel %vm1177, %v1260, 0.0
  %v1269 = vsel %vm1177, %v1261, 0.0
  %v1270 = vpack.c.bf16 %v1264, %v1262
  %v1271 = vpack.c.bf16 %v1265, %v1263
  %v1272 = vpack.c.bf16 %v1268, %v1266
  %v1273 = vpack.c.bf16 %v1269, %v1267
  %v1278 = vunpack.c.l.b16 %v1270
  %v1279 = vunpack.c.l.b16 %v1271
  %v1280 = vunpack.c.h.b16 %v1270
  %v1281 = vunpack.c.h.b16 %v1271
  %v1282 = vunpack.c.l.b16 %v1272
  %v1283 = vunpack.c.l.b16 %v1273
  %v1284 = vunpack.c.h.b16 %v1272
  %v1285 = vunpack.c.h.b16 %v1273
  %v1286 = vpack.c.b16 %v1279, %v1278
  %v1287 = vpack.c.b16 %v1281, %v1280
  %v1288 = vpack.c.b16 %v1283, %v1282
  %v1289 = vpack.c.b16 %v1285, %v1284
  %1294 = vst [vmem:[#allocation2 + $0x40] sm:$0xff] %v1286
  %1295 = vst [vmem:[#allocation2 + $0x48] sm:$0xff] %v1287
  %1296 = vst [vmem:[#allocation2 + $0x50] sm:$0xff] %v1288
  %1297 = vst [vmem:[#allocation2 + $0x58] sm:$0xff] %v1289
  %v1298 = vld [vmem:[%s0 + $0x80] sm:$0xff]
  %v1299 = vld [vmem:[%s0 + $0x88] sm:$0xff]
  %v1300 = vld [vmem:[%s0 + $0x90] sm:$0xff]
  %v1301 = vld [vmem:[%s0 + $0x98] sm:$0xff]
  %v1302 = vld [vmem:[%s0 + $0xa0] sm:$0xff]
  %v1303 = vld [vmem:[%s0 + $0xa8] sm:$0xff]
  %v1304 = vld [vmem:[%s0 + $0xb0] sm:$0xff]
  %v1305 = vld [vmem:[%s0 + $0xb8] sm:$0xff]
  %v1306 = vld [vmem:[%s1 + $0x80] sm:$0xff]
  %v1307 = vld [vmem:[%s1 + $0x88] sm:$0xff]
  %v1308 = vld [vmem:[%s1 + $0x90] sm:$0xff]
  %v1309 = vld [vmem:[%s1 + $0x98] sm:$0xff]
  %v1310 = vld [vmem:[%s1 + $0xa0] sm:$0xff]
  %v1311 = vld [vmem:[%s1 + $0xa8] sm:$0xff]
  %v1312 = vld [vmem:[%s1 + $0xb0] sm:$0xff]
  %v1313 = vld [vmem:[%s1 + $0xb8] sm:$0xff]
  %v1314 = vmul.f32 %v1298, %v1122
  %v1315 = vmul.f32 %v1299, %v1126
  %v1316 = vmul.f32 %v1300, %v1122
  %v1317 = vmul.f32 %v1301, %v1126
  %v1318 = vmul.f32 %v1302, %v1122
  %v1319 = vmul.f32 %v1303, %v1126
  %v1320 = vmul.f32 %v1304, %v1122
  %v1321 = vmul.f32 %v1305, %v1126
  %v1322 = vadd.f32 %v1314, %v1139
  %v1323 = vadd.f32 %v1315, %v1143
  %v1324 = vadd.f32 %v1316, %v1139
  %v1325 = vadd.f32 %v1317, %v1143
  %v1326 = vadd.f32 %v1318, %v1139
  %v1327 = vadd.f32 %v1319, %v1143
  %v1328 = vadd.f32 %v1320, %v1139
  %v1329 = vadd.f32 %v1321, %v1143
  %v1330 = vadd.f32 %v1322, %v1306
  %v1331 = vadd.f32 %v1323, %v1307
  %v1332 = vadd.f32 %v1324, %v1308
  %v1333 = vadd.f32 %v1325, %v1309
  %v1334 = vadd.f32 %v1326, %v1310
  %v1335 = vadd.f32 %v1327, %v1311
  %v1336 = vadd.f32 %v1328, %v1312
  %v1337 = vadd.f32 %v1329, %v1313
  %v1338 = vmax.f32 %v1330, 0.0
  %v1339 = vmax.f32 %v1331, 0.0
  %v1340 = vmax.f32 %v1332, 0.0
  %v1341 = vmax.f32 %v1333, 0.0
  %v1342 = vmax.f32 %v1334, 0.0
  %v1343 = vmax.f32 %v1335, 0.0
  %v1344 = vmax.f32 %v1336, 0.0
  %v1345 = vmax.f32 %v1337, 0.0
  %v1346 = vsel %vm1174, %v1338, 0.0
  %v1347 = vsel %vm1174, %v1339, 0.0
  %v1348 = vsel %vm1175, %v1340, 0.0
  %v1349 = vsel %vm1175, %v1341, 0.0
  %v1350 = vsel %vm1176, %v1342, 0.0
  %v1351 = vsel %vm1176, %v1343, 0.0
  %v1352 = vsel %vm1177, %v1344, 0.0
  %v1353 = vsel %vm1177, %v1345, 0.0
  %v1354 = vpack.c.bf16 %v1348, %v1346
  %v1355 = vpack.c.bf16 %v1349, %v1347
  %v1356 = vpack.c.bf16 %v1352, %v1350
  %v1357 = vpack.c.bf16 %v1353, %v1351
  %v1362 = vunpack.c.l.b16 %v1354
  %v1363 = vunpack.c.l.b16 %v1355
  %v1364 = vunpack.c.h.b16 %v1354
  %v1365 = vunpack.c.h.b16 %v1355
  %v1366 = vunpack.c.l.b16 %v1356
  %v1367 = vunpack.c.l.b16 %v1357
  %v1368 = vunpack.c.h.b16 %v1356
  %v1369 = vunpack.c.h.b16 %v1357
  %v1370 = vpack.c.b16 %v1363, %v1362
  %v1371 = vpack.c.b16 %v1365, %v1364
  %v1372 = vpack.c.b16 %v1367, %v1366
  %v1373 = vpack.c.b16 %v1369, %v1368
  %1378 = vst [vmem:[#allocation2 + $0x60] sm:$0xff] %v1370
  %1379 = vst [vmem:[#allocation2 + $0x68] sm:$0xff] %v1371
  %1380 = vst [vmem:[#allocation2 + $0x70] sm:$0xff] %v1372
  %1381 = vst [vmem:[#allocation2 + $0x78] sm:$0xff] %v1373
  %v1382 = vld [vmem:[%s0 + $0xc0] sm:$0xff]
  %v1383 = vld [vmem:[%s0 + $0xc8] sm:$0xff]
  %v1384 = vld [vmem:[%s0 + $0xd0] sm:$0xff]
  %v1385 = vld [vmem:[%s0 + $0xd8] sm:$0xff]
  %v1386 = vld [vmem:[%s0 + $0xe0] sm:$0xff]
  %v1387 = vld [vmem:[%s0 + $0xe8] sm:$0xff]
  %v1388 = vld [vmem:[%s0 + $0xf0] sm:$0xff]
  %v1389 = vld [vmem:[%s0 + $0xf8] sm:$0xff]
  %v1390 = vld [vmem:[%s1 + $0xc0] sm:$0xff]
  %v1391 = vld [vmem:[%s1 + $0xc8] sm:$0xff]
  %v1392 = vld [vmem:[%s1 + $0xd0] sm:$0xff]
  %v1393 = vld [vmem:[%s1 + $0xd8] sm:$0xff]
  %v1394 = vld [vmem:[%s1 + $0xe0] sm:$0xff]
  %v1395 = vld [vmem:[%s1 + $0xe8] sm:$0xff]
  %v1396 = vld [vmem:[%s1 + $0xf0] sm:$0xff]
  %v1397 = vld [vmem:[%s1 + $0xf8] sm:$0xff]
  %v1398 = vmul.f32 %v1382, %v1122
  %v1399 = vmul.f32 %v1383, %v1126
  %v1400 = vmul.f32 %v1384, %v1122
  %v1401 = vmul.f32 %v1385, %v1126
  %v1402 = vmul.f32 %v1386, %v1122
  %v1403 = vmul.f32 %v1387, %v1126
  %v1404 = vmul.f32 %v1388, %v1122
  %v1405 = vmul.f32 %v1389, %v1126
  %v1406 = vadd.f32 %v1398, %v1139
  %v1407 = vadd.f32 %v1399, %v1143
  %v1408 = vadd.f32 %v1400, %v1139
  %v1409 = vadd.f32 %v1401, %v1143
  %v1410 = vadd.f32 %v1402, %v1139
  %v1411 = vadd.f32 %v1403, %v1143
  %v1412 = vadd.f32 %v1404, %v1139
  %v1413 = vadd.f32 %v1405, %v1143
  %v1414 = vadd.f32 %v1406, %v1390
  %v1415 = vadd.f32 %v1407, %v1391
  %v1416 = vadd.f32 %v1408, %v1392
  %v1417 = vadd.f32 %v1409, %v1393
  %v1418 = vadd.f32 %v1410, %v1394
  %v1419 = vadd.f32 %v1411, %v1395
  %v1420 = vadd.f32 %v1412, %v1396
  %v1421 = vadd.f32 %v1413, %v1397
  %v1422 = vmax.f32 %v1414, 0.0
  %v1423 = vmax.f32 %v1415, 0.0
  %v1424 = vmax.f32 %v1416, 0.0
  %v1425 = vmax.f32 %v1417, 0.0
  %v1426 = vmax.f32 %v1418, 0.0
  %v1427 = vmax.f32 %v1419, 0.0
  %v1428 = vmax.f32 %v1420, 0.0
  %v1429 = vmax.f32 %v1421, 0.0
  %v1430 = vsel %vm1174, %v1422, 0.0
  %v1431 = vsel %vm1174, %v1423, 0.0
  %v1432 = vsel %vm1175, %v1424, 0.0
  %v1433 = vsel %vm1175, %v1425, 0.0
  %v1434 = vsel %vm1176, %v1426, 0.0
  %v1435 = vsel %vm1176, %v1427, 0.0
  %v1436 = vsel %vm1177, %v1428, 0.0
  %v1437 = vsel %vm1177, %v1429, 0.0
  %v1438 = vpack.c.bf16 %v1432, %v1430
  %v1439 = vpack.c.bf16 %v1433, %v1431
  %v1440 = vpack.c.bf16 %v1436, %v1434
  %v1441 = vpack.c.bf16 %v1437, %v1435
  %v1446 = vunpack.c.l.b16 %v1438
  %v1447 = vunpack.c.l.b16 %v1439
  %v1448 = vunpack.c.h.b16 %v1438
  %v1449 = vunpack.c.h.b16 %v1439
  %v1450 = vunpack.c.l.b16 %v1440
  %v1451 = vunpack.c.l.b16 %v1441
  %v1452 = vunpack.c.h.b16 %v1440
  %v1453 = vunpack.c.h.b16 %v1441
  %v1454 = vpack.c.b16 %v1447, %v1446
  %v1455 = vpack.c.b16 %v1449, %v1448
  %v1456 = vpack.c.b16 %v1451, %v1450
  %v1457 = vpack.c.b16 %v1453, %v1452
  %1462 = vst [vmem:[#allocation2 + $0x80] sm:$0xff] %v1454
  %1463 = vst [vmem:[#allocation2 + $0x88] sm:$0xff] %v1455
  %1464 = vst [vmem:[#allocation2 + $0x90] sm:$0xff] %v1456
  %1465 = vst [vmem:[#allocation2 + $0x98] sm:$0xff] %v1457
  %v1466 = vld [vmem:[%s0 + $0x100] sm:$0xff]
  %v1467 = vld [vmem:[%s0 + $0x108] sm:$0xff]
  %v1468 = vld [vmem:[%s0 + $0x110] sm:$0xff]
  %v1469 = vld [vmem:[%s0 + $0x118] sm:$0xff]
  %v1470 = vld [vmem:[%s0 + $0x120] sm:$0xff]
  %v1471 = vld [vmem:[%s0 + $0x128] sm:$0xff]
  %v1472 = vld [vmem:[%s0 + $0x130] sm:$0xff]
  %v1473 = vld [vmem:[%s0 + $0x138] sm:$0xff]
  %v1474 = vld [vmem:[%s1 + $0x100] sm:$0xff]
  %v1475 = vld [vmem:[%s1 + $0x108] sm:$0xff]
  %v1476 = vld [vmem:[%s1 + $0x110] sm:$0xff]
  %v1477 = vld [vmem:[%s1 + $0x118] sm:$0xff]
  %v1478 = vld [vmem:[%s1 + $0x120] sm:$0xff]
  %v1479 = vld [vmem:[%s1 + $0x128] sm:$0xff]
  %v1480 = vld [vmem:[%s1 + $0x130] sm:$0xff]
  %v1481 = vld [vmem:[%s1 + $0x138] sm:$0xff]
  %v1482 = vmul.f32 %v1466, %v1122
  %v1483 = vmul.f32 %v1467, %v1126
  %v1484 = vmul.f32 %v1468, %v1122
  %v1485 = vmul.f32 %v1469, %v1126
  %v1486 = vmul.f32 %v1470, %v1122
  %v1487 = vmul.f32 %v1471, %v1126
  %v1488 = vmul.f32 %v1472, %v1122
  %v1489 = vmul.f32 %v1473, %v1126
  %v1490 = vadd.f32 %v1482, %v1139
  %v1491 = vadd.f32 %v1483, %v1143
  %v1492 = vadd.f32 %v1484, %v1139
  %v1493 = vadd.f32 %v1485, %v1143
  %v1494 = vadd.f32 %v1486, %v1139
  %v1495 = vadd.f32 %v1487, %v1143
  %v1496 = vadd.f32 %v1488, %v1139
  %v1497 = vadd.f32 %v1489, %v1143
  %v1498 = vadd.f32 %v1490, %v1474
  %v1499 = vadd.f32 %v1491, %v1475
  %v1500 = vadd.f32 %v1492, %v1476
  %v1501 = vadd.f32 %v1493, %v1477
  %v1502 = vadd.f32 %v1494, %v1478
  %v1503 = vadd.f32 %v1495, %v1479
  %v1504 = vadd.f32 %v1496, %v1480
  %v1505 = vadd.f32 %v1497, %v1481
  %v1506 = vmax.f32 %v1498, 0.0
  %v1507 = vmax.f32 %v1499, 0.0
  %v1508 = vmax.f32 %v1500, 0.0
  %v1509 = vmax.f32 %v1501, 0.0
  %v1510 = vmax.f32 %v1502, 0.0
  %v1511 = vmax.f32 %v1503, 0.0
  %v1512 = vmax.f32 %v1504, 0.0
  %v1513 = vmax.f32 %v1505, 0.0
  %v1514 = vsel %vm1174, %v1506, 0.0
  %v1515 = vsel %vm1174, %v1507, 0.0
  %v1516 = vsel %vm1175, %v1508, 0.0
  %v1517 = vsel %vm1175, %v1509, 0.0
  %v1518 = vsel %vm1176, %v1510, 0.0
  %v1519 = vsel %vm1176, %v1511, 0.0
  %v1520 = vsel %vm1177, %v1512, 0.0
  %v1521 = vsel %vm1177, %v1513, 0.0
  %v1522 = vpack.c.bf16 %v1516, %v1514
  %v1523 = vpack.c.bf16 %v1517, %v1515
  %v1524 = vpack.c.bf16 %v1520, %v1518
  %v1525 = vpack.c.bf16 %v1521, %v1519
  %v1530 = vunpack.c.l.b16 %v1522
  %v1531 = vunpack.c.l.b16 %v1523
  %v1532 = vunpack.c.h.b16 %v1522
  %v1533 = vunpack.c.h.b16 %v1523
  %v1534 = vunpack.c.l.b16 %v1524
  %v1535 = vunpack.c.l.b16 %v1525
  %v1536 = vunpack.c.h.b16 %v1524
  %v1537 = vunpack.c.h.b16 %v1525
  %v1538 = vpack.c.b16 %v1531, %v1530
  %v1539 = vpack.c.b16 %v1533, %v1532
  %v1540 = vpack.c.b16 %v1535, %v1534
  %v1541 = vpack.c.b16 %v1537, %v1536
  %1546 = vst [vmem:[#allocation2 + $0xa0] sm:$0xff] %v1538
  %1547 = vst [vmem:[#allocation2 + $0xa8] sm:$0xff] %v1539
  %1548 = vst [vmem:[#allocation2 + $0xb0] sm:$0xff] %v1540
  %1549 = vst [vmem:[#allocation2 + $0xb8] sm:$0xff] %v1541
  %v1550 = vld [vmem:[%s0 + $0x140] sm:$0xff]
  %v1551 = vld [vmem:[%s0 + $0x148] sm:$0xff]
  %v1552 = vld [vmem:[%s0 + $0x150] sm:$0xff]
  %v1553 = vld [vmem:[%s0 + $0x158] sm:$0xff]
  %v1554 = vld [vmem:[%s0 + $0x160] sm:$0xff]
  %v1555 = vld [vmem:[%s0 + $0x168] sm:$0xff]
  %v1556 = vld [vmem:[%s0 + $0x170] sm:$0xff]
  %v1557 = vld [vmem:[%s0 + $0x178] sm:$0xff]
  %v1558 = vld [vmem:[%s1 + $0x140] sm:$0xff]
  %v1559 = vld [vmem:[%s1 + $0x148] sm:$0xff]
  %v1560 = vld [vmem:[%s1 + $0x150] sm:$0xff]
  %v1561 = vld [vmem:[%s1 + $0x158] sm:$0xff]
  %v1562 = vld [vmem:[%s1 + $0x160] sm:$0xff]
  %v1563 = vld [vmem:[%s1 + $0x168] sm:$0xff]
  %v1564 = vld [vmem:[%s1 + $0x170] sm:$0xff]
  %v1565 = vld [vmem:[%s1 + $0x178] sm:$0xff]
  %v1566 = vmul.f32 %v1550, %v1122
  %v1567 = vmul.f32 %v1551, %v1126
  %v1568 = vmul.f32 %v1552, %v1122
  %v1569 = vmul.f32 %v1553, %v1126
  %v1570 = vmul.f32 %v1554, %v1122
  %v1571 = vmul.f32 %v1555, %v1126
  %v1572 = vmul.f32 %v1556, %v1122
  %v1573 = vmul.f32 %v1557, %v1126
  %v1574 = vadd.f32 %v1566, %v1139
  %v1575 = vadd.f32 %v1567, %v1143
  %v1576 = vadd.f32 %v1568, %v1139
  %v1577 = vadd.f32 %v1569, %v1143
  %v1578 = vadd.f32 %v1570, %v1139
  %v1579 = vadd.f32 %v1571, %v1143
  %v1580 = vadd.f32 %v1572, %v1139
  %v1581 = vadd.f32 %v1573, %v1143
  %v1582 = vadd.f32 %v1574, %v1558
  %v1583 = vadd.f32 %v1575, %v1559
  %v1584 = vadd.f32 %v1576, %v1560
  %v1585 = vadd.f32 %v1577, %v1561
  %v1586 = vadd.f32 %v1578, %v1562
  %v1587 = vadd.f32 %v1579, %v1563
  %v1588 = vadd.f32 %v1580, %v1564
  %v1589 = vadd.f32 %v1581, %v1565
  %v1590 = vmax.f32 %v1582, 0.0
  %v1591 = vmax.f32 %v1583, 0.0
  %v1592 = vmax.f32 %v1584, 0.0
  %v1593 = vmax.f32 %v1585, 0.0
  %v1594 = vmax.f32 %v1586, 0.0
  %v1595 = vmax.f32 %v1587, 0.0
  %v1596 = vmax.f32 %v1588, 0.0
  %v1597 = vmax.f32 %v1589, 0.0
  %v1598 = vsel %vm1174, %v1590, 0.0
  %v1599 = vsel %vm1174, %v1591, 0.0
  %v1600 = vsel %vm1175, %v1592, 0.0
  %v1601 = vsel %vm1175, %v1593, 0.0
  %v1602 = vsel %vm1176, %v1594, 0.0
  %v1603 = vsel %vm1176, %v1595, 0.0
  %v1604 = vsel %vm1177, %v1596, 0.0
  %v1605 = vsel %vm1177, %v1597, 0.0
  %v1606 = vpack.c.bf16 %v1600, %v1598
  %v1607 = vpack.c.bf16 %v1601, %v1599
  %v1608 = vpack.c.bf16 %v1604, %v1602
  %v1609 = vpack.c.bf16 %v1605, %v1603
  %v1614 = vunpack.c.l.b16 %v1606
  %v1615 = vunpack.c.l.b16 %v1607
  %v1616 = vunpack.c.h.b16 %v1606
  %v1617 = vunpack.c.h.b16 %v1607
  %v1618 = vunpack.c.l.b16 %v1608
  %v1619 = vunpack.c.l.b16 %v1609
  %v1620 = vunpack.c.h.b16 %v1608
  %v1621 = vunpack.c.h.b16 %v1609
  %v1622 = vpack.c.b16 %v1615, %v1614
  %v1623 = vpack.c.b16 %v1617, %v1616
  %v1624 = vpack.c.b16 %v1619, %v1618
  %v1625 = vpack.c.b16 %v1621, %v1620
  %1630 = vst [vmem:[#allocation2 + $0xc0] sm:$0xff] %v1622
  %1631 = vst [vmem:[#allocation2 + $0xc8] sm:$0xff] %v1623
  %1632 = vst [vmem:[#allocation2 + $0xd0] sm:$0xff] %v1624
  %1633 = vst [vmem:[#allocation2 + $0xd8] sm:$0xff] %v1625
  %v1634 = vld [vmem:[%s0 + $0x180] sm:$0xff]
  %v1635 = vld [vmem:[%s0 + $0x188] sm:$0xff]
  %v1636 = vld [vmem:[%s0 + $0x190] sm:$0xff]
  %v1637 = vld [vmem:[%s0 + $0x198] sm:$0xff]
  %v1638 = vld [vmem:[%s0 + $0x1a0] sm:$0xff]
  %v1639 = vld [vmem:[%s0 + $0x1a8] sm:$0xff]
  %v1640 = vld [vmem:[%s0 + $0x1b0] sm:$0xff]
  %v1641 = vld [vmem:[%s0 + $0x1b8] sm:$0xff]
  %v1642 = vld [vmem:[%s1 + $0x180] sm:$0xff]
  %v1643 = vld [vmem:[%s1 + $0x188] sm:$0xff]
  %v1644 = vld [vmem:[%s1 + $0x190] sm:$0xff]
  %v1645 = vld [vmem:[%s1 + $0x198] sm:$0xff]
  %v1646 = vld [vmem:[%s1 + $0x1a0] sm:$0xff]
  %v1647 = vld [vmem:[%s1 + $0x1a8] sm:$0xff]
  %v1648 = vld [vmem:[%s1 + $0x1b0] sm:$0xff]
  %v1649 = vld [vmem:[%s1 + $0x1b8] sm:$0xff]
  %v1650 = vmul.f32 %v1634, %v1122
  %v1651 = vmul.f32 %v1635, %v1126
  %v1652 = vmul.f32 %v1636, %v1122
  %v1653 = vmul.f32 %v1637, %v1126
  %v1654 = vmul.f32 %v1638, %v1122
  %v1655 = vmul.f32 %v1639, %v1126
  %v1656 = vmul.f32 %v1640, %v1122
  %v1657 = vmul.f32 %v1641, %v1126
  %v1658 = vadd.f32 %v1650, %v1139
  %v1659 = vadd.f32 %v1651, %v1143
  %v1660 = vadd.f32 %v1652, %v1139
  %v1661 = vadd.f32 %v1653, %v1143
  %v1662 = vadd.f32 %v1654, %v1139
  %v1663 = vadd.f32 %v1655, %v1143
  %v1664 = vadd.f32 %v1656, %v1139
  %v1665 = vadd.f32 %v1657, %v1143
  %v1666 = vadd.f32 %v1658, %v1642
  %v1667 = vadd.f32 %v1659, %v1643
  %v1668 = vadd.f32 %v1660, %v1644
  %v1669 = vadd.f32 %v1661, %v1645
  %v1670 = vadd.f32 %v1662, %v1646
  %v1671 = vadd.f32 %v1663, %v1647
  %v1672 = vadd.f32 %v1664, %v1648
  %v1673 = vadd.f32 %v1665, %v1649
  %v1674 = vmax.f32 %v1666, 0.0
  %v1675 = vmax.f32 %v1667, 0.0
  %v1676 = vmax.f32 %v1668, 0.0
  %v1677 = vmax.f32 %v1669, 0.0
  %v1678 = vmax.f32 %v1670, 0.0
  %v1679 = vmax.f32 %v1671, 0.0
  %v1680 = vmax.f32 %v1672, 0.0
  %v1681 = vmax.f32 %v1673, 0.0
  %v1682 = vsel %vm1174, %v1674, 0.0
  %v1683 = vsel %vm1174, %v1675, 0.0
  %v1684 = vsel %vm1175, %v1676, 0.0
  %v1685 = vsel %vm1175, %v1677, 0.0
  %v1686 = vsel %vm1176, %v1678, 0.0
  %v1687 = vsel %vm1176, %v1679, 0.0
  %v1688 = vsel %vm1177, %v1680, 0.0
  %v1689 = vsel %vm1177, %v1681, 0.0
  %v1690 = vpack.c.bf16 %v1684, %v1682
  %v1691 = vpack.c.bf16 %v1685, %v1683
  %v1692 = vpack.c.bf16 %v1688, %v1686
  %v1693 = vpack.c.bf16 %v1689, %v1687
  %v1698 = vunpack.c.l.b16 %v1690
  %v1699 = vunpack.c.l.b16 %v1691
  %v1700 = vunpack.c.h.b16 %v1690
  %v1701 = vunpack.c.h.b16 %v1691
  %v1702 = vunpack.c.l.b16 %v1692
  %v1703 = vunpack.c.l.b16 %v1693
  %v1704 = vunpack.c.h.b16 %v1692
  %v1705 = vunpack.c.h.b16 %v1693
  %v1706 = vpack.c.b16 %v1699, %v1698
  %v1707 = vpack.c.b16 %v1701, %v1700
  %v1708 = vpack.c.b16 %v1703, %v1702
  %v1709 = vpack.c.b16 %v1705, %v1704
  %1714 = vst [vmem:[#allocation2 + $0xe0] sm:$0xff] %v1706
  %1715 = vst [vmem:[#allocation2 + $0xe8] sm:$0xff] %v1707
  %1716 = vst [vmem:[#allocation2 + $0xf0] sm:$0xff] %v1708
  %1717 = vst [vmem:[#allocation2 + $0xf8] sm:$0xff] %v1709
  %s1718 = smul.u32 4, 9
  %s1719 = smul.u32 %s1718, 32
  %s1720 = smul.u32 %s1719, 2
  %s1721 = sshll.u32 %s1720, 4
  %1722 = dma.done [#allocation4], %s1721
  %v1723 = vld [vmem:[#allocation2 + $0x8] sm:$0x88]
  %v1724 = vld [vmem:[#allocation2 + $0x10] sm:$0xff]
  %v1725 = vld [vmem:[#allocation2 + $0x18] sm:$0xff]
  %v1726 = vld [vmem:[#allocation2 + $0x20] sm:$0xff]
  %v1727 = vld [vmem:[#allocation2 + $0x28] sm:$0xff]
  %v1728 = vld [vmem:[#allocation2 + $0x30] sm:$0xff]
  %v1729 = vld [vmem:[#allocation2 + $0x38] sm:$0xff]
  %v1730 = vld [vmem:[#allocation2 + $0x40] sm:$0xff]
  %v1731 = vld [vmem:[#allocation2 + $0x48] sm:$0xff]
  %v1732 = vld [vmem:[#allocation2 + $0x50] sm:$0xff]
  %v1733 = vld [vmem:[#allocation2 + $0x58] sm:$0xff]
  %v1734 = vld [vmem:[#allocation2 + $0x60] sm:$0xff]
  %v1735 = vld [vmem:[#allocation2 + $0x68] sm:$0xff]
  %v1736 = vld [vmem:[#allocation2 + $0x70] sm:$0xff]
  %v1737 = vld [vmem:[#allocation2 + $0x78] sm:$0xff]
  %v1738 = vld [vmem:[#allocation2 + $0x80] sm:$0xff]
  %v1739 = vld [vmem:[#allocation2 + $0x88] sm:$0xff]
  %v1740 = vld [vmem:[#allocation2 + $0x90] sm:$0xff]
  %v1741 = vld [vmem:[#allocation2 + $0x98] sm:$0xff]
  %v1742 = vld [vmem:[#allocation2 + $0xa0] sm:$0xff]
  %v1743 = vld [vmem:[#allocation2 + $0xa8] sm:$0xff]
  %v1744 = vld [vmem:[#allocation2 + $0xb0] sm:$0xff]
  %v1745 = vld [vmem:[#allocation2 + $0xb8] sm:$0xff]
  %v1746 = vld [vmem:[#allocation2 + $0xc0] sm:$0xff]
  %v1747 = vld [vmem:[#allocation2 + $0xc8] sm:$0xff]
  %v1748 = vld [vmem:[#allocation2 + $0xd0] sm:$0xff]
  %v1749 = vld [vmem:[#allocation2 + $0xd8] sm:$0xff]
  %v1750 = vld [vmem:[#allocation2 + $0xe0] sm:$0xff]
  %v1751 = vld [vmem:[#allocation2 + $0xe8] sm:$0xff]
  %v1752 = vld [vmem:[#allocation3] sm:$0xff]
  %v1753 = vld [vmem:[#allocation3 + $0x8] sm:$0xff]
  %v1754 = vld [vmem:[#allocation3 + $0x10] sm:$0xff]
  %v1755 = vld [vmem:[#allocation3 + $0x18] sm:$0xff]
  %v1756 = vld [vmem:[#allocation3 + $0x20] sm:$0xff]
  %v1757 = vld [vmem:[#allocation3 + $0x28] sm:$0xff]
  %v1758 = vld [vmem:[#allocation3 + $0x30] sm:$0xff]
  %v1759 = vld [vmem:[#allocation3 + $0x38] sm:$0xff]
  %v1760 = vld [vmem:[#allocation3 + $0x40] sm:$0xff]
  %v1761 = vld [vmem:[#allocation3 + $0x48] sm:$0xff]
  %v1762 = vld [vmem:[#allocation3 + $0x50] sm:$0xff]
  %v1763 = vld [vmem:[#allocation3 + $0x58] sm:$0xff]
  %v1764 = vld [vmem:[#allocation3 + $0x60] sm:$0xff]
  %v1765 = vld [vmem:[#allocation3 + $0x68] sm:$0xff]
  %v1766 = vld [vmem:[#allocation3 + $0x70] sm:$0xff]
  %v1767 = vld [vmem:[#allocation3 + $0x78] sm:$0xff]
  %v1768 = vld [vmem:[#allocation3 + $0x80] sm:$0xff]
  %v1769 = vld [vmem:[#allocation3 + $0x88] sm:$0xff]
  %v1770 = vld [vmem:[#allocation3 + $0x90] sm:$0xff]
  %v1771 = vld [vmem:[#allocation3 + $0x98] sm:$0xff]
  %v1772 = vld [vmem:[#allocation3 + $0xa0] sm:$0xff]
  %v1773 = vld [vmem:[#allocation3 + $0xa8] sm:$0xff]
  %v1774 = vld [vmem:[#allocation3 + $0xb0] sm:$0xff]
  %v1775 = vld [vmem:[#allocation3 + $0xb8] sm:$0xff]
  %v1776 = vld [vmem:[#allocation3 + $0xc0] sm:$0xff]
  %v1777 = vld [vmem:[#allocation3 + $0xc8] sm:$0xff]
  %v1778 = vld [vmem:[#allocation3 + $0xd0] sm:$0xff]
  %v1779 = vld [vmem:[#allocation3 + $0xd8] sm:$0xff]
  %v1780 = vld [vmem:[#allocation3 + $0xe0] sm:$0xff]
  %v1781 = vld [vmem:[#allocation3 + $0xe8] sm:$0xff]
  %v1782 = vld [vmem:[#allocation3 + $0xf0] sm:$0xff]
  %v1783 = vld [vmem:[#allocation3 + $0xf8] sm:$0xff]
  %v1813 = vunpack.c.l.b16 %v1723
  %v1814 = vunpack.c.h.b16 %v1723
  %v1815 = vunpack.c.l.b16 %v1724
  %v1816 = vunpack.c.h.b16 %v1724
  %v1817 = vunpack.c.l.b16 %v1725
  %v1818 = vunpack.c.h.b16 %v1725
  %v1819 = vunpack.c.l.b16 %v1726
  %v1820 = vunpack.c.h.b16 %v1726
  %v1821 = vunpack.c.l.b16 %v1727
  %v1822 = vunpack.c.h.b16 %v1727
  %v1823 = vunpack.c.l.b16 %v1728
  %v1824 = vunpack.c.h.b16 %v1728
  %v1825 = vunpack.c.l.b16 %v1729
  %v1826 = vunpack.c.h.b16 %v1729
  %v1827 = vunpack.c.l.b16 %v1730
  %v1828 = vunpack.c.h.b16 %v1730
  %v1829 = vunpack.c.l.b16 %v1731
  %v1830 = vunpack.c.h.b16 %v1731
  %v1831 = vunpack.c.l.b16 %v1732
  %v1832 = vunpack.c.h.b16 %v1732
  %v1833 = vunpack.c.l.b16 %v1733
  %v1834 = vunpack.c.h.b16 %v1733
  %v1835 = vunpack.c.l.b16 %v1734
  %v1836 = vunpack.c.h.b16 %v1734
  %v1837 = vunpack.c.l.b16 %v1735
  %v1838 = vunpack.c.h.b16 %v1735
  %v1839 = vunpack.c.l.b16 %v1736
  %v1840 = vunpack.c.h.b16 %v1736
  %v1841 = vunpack.c.l.b16 %v1737
  %v1842 = vunpack.c.h.b16 %v1737
  %v1843 = vunpack.c.l.b16 %v1738
  %v1844 = vunpack.c.h.b16 %v1738
  %v1845 = vunpack.c.l.b16 %v1739
  %v1846 = vunpack.c.h.b16 %v1739
  %v1847 = vunpack.c.l.b16 %v1740
  %v1848 = vunpack.c.h.b16 %v1740
  %v1849 = vunpack.c.l.b16 %v1741
  %v1850 = vunpack.c.h.b16 %v1741
  %v1851 = vunpack.c.l.b16 %v1742
  %v1852 = vunpack.c.h.b16 %v1742
  %v1853 = vunpack.c.l.b16 %v1743
  %v1854 = vunpack.c.h.b16 %v1743
  %v1855 = vunpack.c.l.b16 %v1744
  %v1856 = vunpack.c.h.b16 %v1744
  %v1857 = vunpack.c.l.b16 %v1745
  %v1858 = vunpack.c.h.b16 %v1745
  %v1859 = vunpack.c.l.b16 %v1746
  %v1860 = vunpack.c.h.b16 %v1746
  %v1861 = vunpack.c.l.b16 %v1747
  %v1862 = vunpack.c.h.b16 %v1747
  %v1863 = vunpack.c.l.b16 %v1748
  %v1864 = vunpack.c.h.b16 %v1748
  %v1865 = vunpack.c.l.b16 %v1749
  %v1866 = vunpack.c.h.b16 %v1749
  %v1867 = vunpack.c.l.b16 %v1750
  %v1868 = vunpack.c.h.b16 %v1750
  %v1869 = vunpack.c.l.b16 %v1751
  %v1870 = vunpack.c.h.b16 %v1751
  %v1871 = vpack.c.b16 %v1815, %v1813
  %v1872 = vpack.c.b16 %v1816, %v1814
  %v1873 = vpack.c.b16 %v1819, %v1817
  %v1874 = vpack.c.b16 %v1820, %v1818
  %v1875 = vpack.c.b16 %v1823, %v1821
  %v1876 = vpack.c.b16 %v1824, %v1822
  %v1877 = vpack.c.b16 %v1827, %v1825
  %v1878 = vpack.c.b16 %v1828, %v1826
  %v1879 = vpack.c.b16 %v1831, %v1829
  %v1880 = vpack.c.b16 %v1832, %v1830
  %v1881 = vpack.c.b16 %v1835, %v1833
  %v1882 = vpack.c.b16 %v1836, %v1834
  %v1883 = vpack.c.b16 %v1839, %v1837
  %v1884 = vpack.c.b16 %v1840, %v1838
  %v1885 = vpack.c.b16 %v1843, %v1841
  %v1886 = vpack.c.b16 %v1844, %v1842
  %v1887 = vpack.c.b16 %v1847, %v1845
  %v1888 = vpack.c.b16 %v1848, %v1846
  %v1889 = vpack.c.b16 %v1851, %v1849
  %v1890 = vpack.c.b16 %v1852, %v1850
  %v1891 = vpack.c.b16 %v1855, %v1853
  %v1892 = vpack.c.b16 %v1856, %v1854
  %v1893 = vpack.c.b16 %v1859, %v1857
  %v1894 = vpack.c.b16 %v1860, %v1858
  %v1895 = vpack.c.b16 %v1863, %v1861
  %v1896 = vpack.c.b16 %v1864, %v1862
  %v1897 = vpack.c.b16 %v1867, %v1865
  %v1898 = vpack.c.b16 %v1868, %v1866
  %v1899 = vpack.c.b16 %v1869, %v1869
  %v1900 = vpack.c.b16 %v1870, %v1870
  %vm1901 = vsmask.f32 4352
  %v1903 = vshrl.u32 %v1871, 16
  %v1905 = vrot.slane %v1903, 3
  %v1906 = vshll.u32 %v1871, 16
  %v1908 = vrot.slane %v1906, 4
  %v1909 = vor.u32 %v1905, %v1908
  %v1911 = vshrl.u32 %v1873, 16
  %v1913 = vrot.slane %v1911, 3
  %v1914 = vshll.u32 %v1873, 16
  %v1916 = vrot.slane %v1914, 4
  %v1917 = vor.u32 %v1913, %v1916
  %v1918 = vsel %vm1901, %v1909, %v1917
  %v1920 = vshrl.u32 %v1872, 16
  %v1922 = vrot.slane %v1920, 3
  %v1923 = vshll.u32 %v1872, 16
  %v1925 = vrot.slane %v1923, 4
  %v1926 = vor.u32 %v1922, %v1925
  %v1928 = vshrl.u32 %v1874, 16
  %v1930 = vrot.slane %v1928, 3
  %v1931 = vshll.u32 %v1874, 16
  %v1933 = vrot.slane %v1931, 4
  %v1934 = vor.u32 %v1930, %v1933
  %v1935 = vsel %vm1901, %v1926, %v1934
  %v1937 = vshrl.u32 %v1875, 16
  %v1939 = vrot.slane %v1937, 3
  %v1940 = vshll.u32 %v1875, 16
  %v1942 = vrot.slane %v1940, 4
  %v1943 = vor.u32 %v1939, %v1942
  %v1944 = vsel %vm1901, %v1917, %v1943
  %v1946 = vshrl.u32 %v1876, 16
  %v1948 = vrot.slane %v1946, 3
  %v1949 = vshll.u32 %v1876, 16
  %v1951 = vrot.slane %v1949, 4
  %v1952 = vor.u32 %v1948, %v1951
  %v1953 = vsel %vm1901, %v1934, %v1952
  %v1955 = vshrl.u32 %v1877, 16
  %v1957 = vrot.slane %v1955, 3
  %v1958 = vshll.u32 %v1877, 16
  %v1960 = vrot.slane %v1958, 4
  %v1961 = vor.u32 %v1957, %v1960
  %v1962 = vsel %vm1901, %v1943, %v1961
  %v1964 = vshrl.u32 %v1878, 16
  %v1966 = vrot.slane %v1964, 3
  %v1967 = vshll.u32 %v1878, 16
  %v1969 = vrot.slane %v1967, 4
  %v1970 = vor.u32 %v1966, %v1969
  %v1971 = vsel %vm1901, %v1952, %v1970
  %v1973 = vshrl.u32 %v1879, 16
  %v1975 = vrot.slane %v1973, 3
  %v1976 = vshll.u32 %v1879, 16
  %v1978 = vrot.slane %v1976, 4
  %v1979 = vor.u32 %v1975, %v1978
  %v1980 = vsel %vm1901, %v1961, %v1979
  %v1982 = vshrl.u32 %v1880, 16
  %v1984 = vrot.slane %v1982, 3
  %v1985 = vshll.u32 %v1880, 16
  %v1987 = vrot.slane %v1985, 4
  %v1988 = vor.u32 %v1984, %v1987
  %v1989 = vsel %vm1901, %v1970, %v1988
  %v1991 = vshrl.u32 %v1881, 16
  %v1993 = vrot.slane %v1991, 3
  %v1994 = vshll.u32 %v1881, 16
  %v1996 = vrot.slane %v1994, 4
  %v1997 = vor.u32 %v1993, %v1996
  %v1998 = vsel %vm1901, %v1979, %v1997
  %v2000 = vshrl.u32 %v1882, 16
  %v2002 = vrot.slane %v2000, 3
  %v2003 = vshll.u32 %v1882, 16
  %v2005 = vrot.slane %v2003, 4
  %v2006 = vor.u32 %v2002, %v2005
  %v2007 = vsel %vm1901, %v1988, %v2006
  %v2009 = vshrl.u32 %v1883, 16
  %v2011 = vrot.slane %v2009, 3
  %v2012 = vshll.u32 %v1883, 16
  %v2014 = vrot.slane %v2012, 4
  %v2015 = vor.u32 %v2011, %v2014
  %v2016 = vsel %vm1901, %v1997, %v2015
  %v2018 = vshrl.u32 %v1884, 16
  %v2020 = vrot.slane %v2018, 3
  %v2021 = vshll.u32 %v1884, 16
  %v2023 = vrot.slane %v2021, 4
  %v2024 = vor.u32 %v2020, %v2023
  %v2025 = vsel %vm1901, %v2006, %v2024
  %v2027 = vshrl.u32 %v1885, 16
  %v2029 = vrot.slane %v2027, 3
  %v2030 = vshll.u32 %v1885, 16
  %v2032 = vrot.slane %v2030, 4
  %v2033 = vor.u32 %v2029, %v2032
  %v2034 = vsel %vm1901, %v2015, %v2033
  %v2036 = vshrl.u32 %v1886, 16
  %v2038 = vrot.slane %v2036, 3
  %v2039 = vshll.u32 %v1886, 16
  %v2041 = vrot.slane %v2039, 4
  %v2042 = vor.u32 %v2038, %v2041
  %v2043 = vsel %vm1901, %v2024, %v2042
  %v2045 = vshrl.u32 %v1887, 16
  %v2047 = vrot.slane %v2045, 3
  %v2048 = vshll.u32 %v1887, 16
  %v2050 = vrot.slane %v2048, 4
  %v2051 = vor.u32 %v2047, %v2050
  %v2052 = vsel %vm1901, %v2033, %v2051
  %v2054 = vshrl.u32 %v1888, 16
  %v2056 = vrot.slane %v2054, 3
  %v2057 = vshll.u32 %v1888, 16
  %v2059 = vrot.slane %v2057, 4
  %v2060 = vor.u32 %v2056, %v2059
  %v2061 = vsel %vm1901, %v2042, %v2060
  %v2063 = vshrl.u32 %v1889, 16
  %v2065 = vrot.slane %v2063, 3
  %v2066 = vshll.u32 %v1889, 16
  %v2068 = vrot.slane %v2066, 4
  %v2069 = vor.u32 %v2065, %v2068
  %v2070 = vsel %vm1901, %v2051, %v2069
  %v2072 = vshrl.u32 %v1890, 16
  %v2074 = vrot.slane %v2072, 3
  %v2075 = vshll.u32 %v1890, 16
  %v2077 = vrot.slane %v2075, 4
  %v2078 = vor.u32 %v2074, %v2077
  %v2079 = vsel %vm1901, %v2060, %v2078
  %v2081 = vshrl.u32 %v1891, 16
  %v2083 = vrot.slane %v2081, 3
  %v2084 = vshll.u32 %v1891, 16
  %v2086 = vrot.slane %v2084, 4
  %v2087 = vor.u32 %v2083, %v2086
  %v2088 = vsel %vm1901, %v2069, %v2087
  %v2090 = vshrl.u32 %v1892, 16
  %v2092 = vrot.slane %v2090, 3
  %v2093 = vshll.u32 %v1892, 16
  %v2095 = vrot.slane %v2093, 4
  %v2096 = vor.u32 %v2092, %v2095
  %v2097 = vsel %vm1901, %v2078, %v2096
  %v2099 = vshrl.u32 %v1893, 16
  %v2101 = vrot.slane %v2099, 3
  %v2102 = vshll.u32 %v1893, 16
  %v2104 = vrot.slane %v2102, 4
  %v2105 = vor.u32 %v2101, %v2104
  %v2106 = vsel %vm1901, %v2087, %v2105
  %v2108 = vshrl.u32 %v1894, 16
  %v2110 = vrot.slane %v2108, 3
  %v2111 = vshll.u32 %v1894, 16
  %v2113 = vrot.slane %v2111, 4
  %v2114 = vor.u32 %v2110, %v2113
  %v2115 = vsel %vm1901, %v2096, %v2114
  %v2117 = vshrl.u32 %v1895, 16
  %v2119 = vrot.slane %v2117, 3
  %v2120 = vshll.u32 %v1895, 16
  %v2122 = vrot.slane %v2120, 4
  %v2123 = vor.u32 %v2119, %v2122
  %v2124 = vsel %vm1901, %v2105, %v2123
  %v2126 = vshrl.u32 %v1896, 16
  %v2128 = vrot.slane %v2126, 3
  %v2129 = vshll.u32 %v1896, 16
  %v2131 = vrot.slane %v2129, 4
  %v2132 = vor.u32 %v2128, %v2131
  %v2133 = vsel %vm1901, %v2114, %v2132
  %v2135 = vshrl.u32 %v1897, 16
  %v2137 = vrot.slane %v2135, 3
  %v2138 = vshll.u32 %v1897, 16
  %v2140 = vrot.slane %v2138, 4
  %v2141 = vor.u32 %v2137, %v2140
  %v2142 = vsel %vm1901, %v2123, %v2141
  %v2144 = vshrl.u32 %v1898, 16
  %v2146 = vrot.slane %v2144, 3
  %v2147 = vshll.u32 %v1898, 16
  %v2149 = vrot.slane %v2147, 4
  %v2150 = vor.u32 %v2146, %v2149
  %v2151 = vsel %vm1901, %v2132, %v2150
  %v2153 = vshrl.u32 %v1899, 16
  %v2155 = vrot.slane %v2153, 3
  %v2156 = vshll.u32 %v1899, 16
  %v2158 = vrot.slane %v2156, 4
  %v2159 = vor.u32 %v2155, %v2158
  %v2160 = vsel %vm1901, %v2141, %v2159
  %v2162 = vshrl.u32 %v1900, 16
  %v2164 = vrot.slane %v2162, 3
  %v2165 = vshll.u32 %v1900, 16
  %v2167 = vrot.slane %v2165, 4
  %v2168 = vor.u32 %v2164, %v2167
  %v2169 = vsel %vm1901, %v2150, %v2168
  %v2230 = vunpack.c.l.b16 %v1752
  %v2231 = vunpack.c.h.b16 %v1752
  %v2232 = vunpack.c.l.b16 %v1753
  %v2233 = vunpack.c.h.b16 %v1753
  %v2234 = vunpack.c.l.b16 %v1754
  %v2235 = vunpack.c.h.b16 %v1754
  %v2236 = vunpack.c.l.b16 %v1755
  %v2237 = vunpack.c.h.b16 %v1755
  %v2238 = vunpack.c.l.b16 %v1756
  %v2239 = vunpack.c.h.b16 %v1756
  %v2240 = vunpack.c.l.b16 %v1757
  %v2241 = vunpack.c.h.b16 %v1757
  %v2242 = vunpack.c.l.b16 %v1758
  %v2243 = vunpack.c.h.b16 %v1758
  %v2244 = vunpack.c.l.b16 %v1759
  %v2245 = vunpack.c.h.b16 %v1759
  %v2246 = vunpack.c.l.b16 %v1760
  %v2247 = vunpack.c.h.b16 %v1760
  %v2248 = vunpack.c.l.b16 %v1761
  %v2249 = vunpack.c.h.b16 %v1761
  %v2250 = vunpack.c.l.b16 %v1762
  %v2251 = vunpack.c.h.b16 %v1762
  %v2252 = vunpack.c.l.b16 %v1763
  %v2253 = vunpack.c.h.b16 %v1763
  %v2254 = vunpack.c.l.b16 %v1764
  %v2255 = vunpack.c.h.b16 %v1764
  %v2256 = vunpack.c.l.b16 %v1765
  %v2257 = vunpack.c.h.b16 %v1765
  %v2258 = vunpack.c.l.b16 %v1766
  %v2259 = vunpack.c.h.b16 %v1766
  %v2260 = vunpack.c.l.b16 %v1767
  %v2261 = vunpack.c.h.b16 %v1767
  %v2262 = vunpack.c.l.b16 %v1768
  %v2263 = vunpack.c.h.b16 %v1768
  %v2264 = vunpack.c.l.b16 %v1769
  %v2265 = vunpack.c.h.b16 %v1769
  %v2266 = vunpack.c.l.b16 %v1770
  %v2267 = vunpack.c.h.b16 %v1770
  %v2268 = vunpack.c.l.b16 %v1771
  %v2269 = vunpack.c.h.b16 %v1771
  %v2270 = vunpack.c.l.b16 %v1772
  %v2271 = vunpack.c.h.b16 %v1772
  %v2272 = vunpack.c.l.b16 %v1773
  %v2273 = vunpack.c.h.b16 %v1773
  %v2274 = vunpack.c.l.b16 %v1774
  %v2275 = vunpack.c.h.b16 %v1774
  %v2276 = vunpack.c.l.b16 %v1775
  %v2277 = vunpack.c.h.b16 %v1775
  %v2278 = vunpack.c.l.b16 %v1776
  %v2279 = vunpack.c.h.b16 %v1776
  %v2280 = vunpack.c.l.b16 %v1777
  %v2281 = vunpack.c.h.b16 %v1777
  %v2282 = vunpack.c.l.b16 %v1778
  %v2283 = vunpack.c.h.b16 %v1778
  %v2284 = vunpack.c.l.b16 %v1779
  %v2285 = vunpack.c.h.b16 %v1779
  %v2286 = vunpack.c.l.b16 %v1780
  %v2287 = vunpack.c.h.b16 %v1780
  %v2288 = vunpack.c.l.b16 %v1781
  %v2289 = vunpack.c.h.b16 %v1781
  %v2290 = vunpack.c.l.b16 %v1782
  %v2291 = vunpack.c.h.b16 %v1782
  %v2292 = vunpack.c.l.b16 %v1783
  %v2293 = vunpack.c.h.b16 %v1783
  %v2294 = vpack.c.b16 %v2232, %v2230
  %v2295 = vpack.c.b16 %v2233, %v2231
  %v2296 = vpack.c.b16 %v2236, %v2234
  %v2297 = vpack.c.b16 %v2237, %v2235
  %v2298 = vpack.c.b16 %v2240, %v2238
  %v2299 = vpack.c.b16 %v2241, %v2239
  %v2300 = vpack.c.b16 %v2244, %v2242
  %v2301 = vpack.c.b16 %v2245, %v2243
  %v2302 = vpack.c.b16 %v2248, %v2246
  %v2303 = vpack.c.b16 %v2249, %v2247
  %v2304 = vpack.c.b16 %v2252, %v2250
  %v2305 = vpack.c.b16 %v2253, %v2251
  %v2306 = vpack.c.b16 %v2256, %v2254
  %v2307 = vpack.c.b16 %v2257, %v2255
  %v2308 = vpack.c.b16 %v2260, %v2258
  %v2309 = vpack.c.b16 %v2261, %v2259
  %v2310 = vpack.c.b16 %v2264, %v2262
  %v2311 = vpack.c.b16 %v2265, %v2263
  %v2312 = vpack.c.b16 %v2268, %v2266
  %v2313 = vpack.c.b16 %v2269, %v2267
  %v2314 = vpack.c.b16 %v2272, %v2270
  %v2315 = vpack.c.b16 %v2273, %v2271
  %v2316 = vpack.c.b16 %v2276, %v2274
  %v2317 = vpack.c.b16 %v2277, %v2275
  %v2318 = vpack.c.b16 %v2280, %v2278
  %v2319 = vpack.c.b16 %v2281, %v2279
  %v2320 = vpack.c.b16 %v2284, %v2282
  %v2321 = vpack.c.b16 %v2285, %v2283
  %v2322 = vpack.c.b16 %v2288, %v2286
  %v2323 = vpack.c.b16 %v2289, %v2287
  %v2324 = vpack.c.b16 %v2292, %v2290
  %v2325 = vpack.c.b16 %v2293, %v2291
  %2358 = vmatprep.subr.bf16.mxu0 %v2309
  %2359 = vmatpush1.bf16.msra.mxu0 %v2308
  %2360 = vmatprep.subr.bf16.mxu0 %v2307
  %2361 = vmatpush1.bf16.msra.mxu0 %v2306
  %2362 = vmatprep.subr.bf16.mxu0 %v2305
  %2363 = vmatpush1.bf16.msra.mxu0 %v2304
  %2364 = vmatprep.subr.bf16.mxu0 %v2303
  %2365 = vmatpush1.bf16.msra.mxu0 %v2302
  %2366 = vmatprep.subr.bf16.mxu0 %v2301
  %2367 = vmatpush1.bf16.msra.mxu0 %v2300
  %2368 = vmatprep.subr.bf16.mxu0 %v2299
  %2369 = vmatpush1.bf16.msra.mxu0 %v2298
  %2370 = vmatprep.subr.bf16.mxu0 %v2297
  %2371 = vmatpush1.bf16.msra.mxu0 %v2296
  %2372 = vmatprep.subr.bf16.mxu0 %v2295
  %2373 = vmatpush1.bf16.msra.mxu0 %v2294
  %2374 = vmatprep.subr.bf16.mxu0 %v2325
  %2375 = vmatpush2.bf16.msra.mxu0 %v2324
  %2376 = vmatprep.subr.bf16.mxu0 %v2323
  %2377 = vmatpush2.bf16.msra.mxu0 %v2322
  %2378 = vmatprep.subr.bf16.mxu0 %v2321
  %2379 = vmatpush2.bf16.msra.mxu0 %v2320
  %2380 = vmatprep.subr.bf16.mxu0 %v2319
  %2381 = vmatpush2.bf16.msra.mxu0 %v2318
  %2382 = vmatprep.subr.bf16.mxu0 %v2317
  %2383 = vmatpush2.bf16.msra.mxu0 %v2316
  %2384 = vmatprep.subr.bf16.mxu0 %v2315
  %2385 = vmatpush2.bf16.msra.mxu0 %v2314
  %2386 = vmatprep.subr.bf16.mxu0 %v2313
  %2387 = vmatpush2.bf16.msra.mxu0 %v2312
  %2388 = vmatprep.subr.bf16.mxu0 %v2311
  %2389 = vmatpush2.bf16.msra.mxu0 %v2310
  %2390 = vmatprep.mubr.bf16.mxu0 %v1935
  %2391 = vmatmul.mubr.bf16.gmra.mxu0 %v1918
  %v2392 = vpop.f32.mrf.mxu0
  %v2393 = vadd.f32 0.0, %v2392
  %v2394 = vpop.f32.mrf.mxu0
  %v2395 = vadd.f32 0.0, %v2394
  %v2396 = vpop.f32.mrf.mxu0
  %v2397 = vadd.f32 0.0, %v2396
  %v2398 = vpop.f32.mrf.mxu0
  %v2399 = vadd.f32 0.0, %v2398
  %2400 = vmatprep.mubr.bf16.mxu0 %v1953
  %2401 = vmatmul.mubr.bf16.gmra.mxu0 %v1944
  %v2402 = vpop.f32.mrf.mxu0
  %v2403 = vadd.f32 0.0, %v2402
  %v2404 = vpop.f32.mrf.mxu0
  %v2405 = vadd.f32 0.0, %v2404
  %v2406 = vpop.f32.mrf.mxu0
  %v2407 = vadd.f32 0.0, %v2406
  %v2408 = vpop.f32.mrf.mxu0
  %v2409 = vadd.f32 0.0, %v2408
  %2410 = vmatprep.mubr.bf16.mxu0 %v1971
  %2411 = vmatmul.mubr.bf16.gmra.mxu0 %v1962
  %v2412 = vpop.f32.mrf.mxu0
  %v2413 = vadd.f32 0.0, %v2412
  %v2414 = vpop.f32.mrf.mxu0
  %v2415 = vadd.f32 0.0, %v2414
  %v2416 = vpop.f32.mrf.mxu0
  %v2417 = vadd.f32 0.0, %v2416
  %v2418 = vpop.f32.mrf.mxu0
  %v2419 = vadd.f32 0.0, %v2418
  %2420 = vmatprep.mubr.bf16.mxu0 %v1989
  %2421 = vmatmul.mubr.bf16.gmra.mxu0 %v1980
  %v2422 = vpop.f32.mrf.mxu0
  %v2423 = vadd.f32 0.0, %v2422
  %v2424 = vpop.f32.mrf.mxu0
  %v2425 = vadd.f32 0.0, %v2424
  %v2426 = vpop.f32.mrf.mxu0
  %v2427 = vadd.f32 0.0, %v2426
  %v2428 = vpop.f32.mrf.mxu0
  %v2429 = vadd.f32 0.0, %v2428
  %2430 = vmatprep.mubr.bf16.mxu0 %v2007
  %2431 = vmatmul.mubr.bf16.gmra.mxu0 %v1998
  %v2432 = vpop.f32.mrf.mxu0
  %v2433 = vadd.f32 0.0, %v2432
  %v2434 = vpop.f32.mrf.mxu0
  %v2435 = vadd.f32 0.0, %v2434
  %v2436 = vpop.f32.mrf.mxu0
  %v2437 = vadd.f32 0.0, %v2436
  %v2438 = vpop.f32.mrf.mxu0
  %v2439 = vadd.f32 0.0, %v2438
  %2440 = vmatprep.mubr.bf16.mxu0 %v2025
  %2441 = vmatmul.mubr.bf16.gmra.mxu0 %v2016
  %v2442 = vpop.f32.mrf.mxu0
  %v2443 = vadd.f32 0.0, %v2442
  %v2444 = vpop.f32.mrf.mxu0
  %v2445 = vadd.f32 0.0, %v2444
  %v2446 = vpop.f32.mrf.mxu0
  %v2447 = vadd.f32 0.0, %v2446
  %v2448 = vpop.f32.mrf.mxu0
  %v2449 = vadd.f32 0.0, %v2448
  %2450 = vmatprep.mubr.bf16.mxu0 %v2043
  %2451 = vmatmul.mubr.bf16.gmra.mxu0 %v2034
  %v2452 = vpop.f32.mrf.mxu0
  %v2453 = vadd.f32 0.0, %v2452
  %v2454 = vpop.f32.mrf.mxu0
  %v2455 = vadd.f32 0.0, %v2454
  %v2456 = vpop.f32.mrf.mxu0
  %v2457 = vadd.f32 0.0, %v2456
  %v2458 = vpop.f32.mrf.mxu0
  %v2459 = vadd.f32 0.0, %v2458
  %2460 = vmatprep.mubr.bf16.mxu0 %v2061
  %2461 = vmatmul.mubr.bf16.gmra.mxu0 %v2052
  %v2462 = vpop.f32.mrf.mxu0
  %v2463 = vadd.f32 0.0, %v2462
  %v2464 = vpop.f32.mrf.mxu0
  %v2465 = vadd.f32 0.0, %v2464
  %v2466 = vpop.f32.mrf.mxu0
  %v2467 = vadd.f32 0.0, %v2466
  %v2468 = vpop.f32.mrf.mxu0
  %v2469 = vadd.f32 0.0, %v2468
  %2470 = vmatprep.mubr.bf16.mxu0 %v2079
  %2471 = vmatmul.mubr.bf16.gmra.mxu0 %v2070
  %v2472 = vpop.f32.mrf.mxu0
  %v2473 = vadd.f32 0.0, %v2472
  %v2474 = vpop.f32.mrf.mxu0
  %v2475 = vadd.f32 0.0, %v2474
  %v2476 = vpop.f32.mrf.mxu0
  %v2477 = vadd.f32 0.0, %v2476
  %v2478 = vpop.f32.mrf.mxu0
  %v2479 = vadd.f32 0.0, %v2478
  %2480 = vmatprep.mubr.bf16.mxu0 %v2097
  %2481 = vmatmul.mubr.bf16.gmra.mxu0 %v2088
  %v2482 = vpop.f32.mrf.mxu0
  %v2483 = vadd.f32 0.0, %v2482
  %v2484 = vpop.f32.mrf.mxu0
  %v2485 = vadd.f32 0.0, %v2484
  %v2486 = vpop.f32.mrf.mxu0
  %v2487 = vadd.f32 0.0, %v2486
  %v2488 = vpop.f32.mrf.mxu0
  %v2489 = vadd.f32 0.0, %v2488
  %2490 = vmatprep.mubr.bf16.mxu0 %v2115
  %2491 = vmatmul.mubr.bf16.gmra.mxu0 %v2106
  %v2492 = vpop.f32.mrf.mxu0
  %v2493 = vadd.f32 0.0, %v2492
  %v2494 = vpop.f32.mrf.mxu0
  %v2495 = vadd.f32 0.0, %v2494
  %v2496 = vpop.f32.mrf.mxu0
  %v2497 = vadd.f32 0.0, %v2496
  %v2498 = vpop.f32.mrf.mxu0
  %v2499 = vadd.f32 0.0, %v2498
  %2500 = vmatprep.mubr.bf16.mxu0 %v2133
  %2501 = vmatmul.mubr.bf16.gmra.mxu0 %v2124
  %v2502 = vpop.f32.mrf.mxu0
  %v2503 = vadd.f32 0.0, %v2502
  %v2504 = vpop.f32.mrf.mxu0
  %v2505 = vadd.f32 0.0, %v2504
  %v2506 = vpop.f32.mrf.mxu0
  %v2507 = vadd.f32 0.0, %v2506
  %v2508 = vpop.f32.mrf.mxu0
  %v2509 = vadd.f32 0.0, %v2508
  %2510 = vmatprep.mubr.bf16.mxu0 %v2151
  %2511 = vmatmul.mubr.bf16.gmra.mxu0 %v2142
  %v2512 = vpop.f32.mrf.mxu0
  %v2513 = vadd.f32 0.0, %v2512
  %v2514 = vpop.f32.mrf.mxu0
  %v2515 = vadd.f32 0.0, %v2514
  %v2516 = vpop.f32.mrf.mxu0
  %v2517 = vadd.f32 0.0, %v2516
  %v2518 = vpop.f32.mrf.mxu0
  %v2519 = vadd.f32 0.0, %v2518
  %2520 = vmatprep.mubr.bf16.mxu0 %v2169
  %2521 = vmatmul.mubr.bf16.gmra.mxu0 %v2160
  %v2522 = vpop.f32.mrf.mxu0
  %v2523 = vadd.f32 0.0, %v2522
  %v2524 = vpop.f32.mrf.mxu0
  %v2525 = vadd.f32 0.0, %v2524
  %v2526 = vpop.f32.mrf.mxu0
  %v2527 = vadd.f32 0.0, %v2526
  %v2528 = vpop.f32.mrf.mxu0
  %v2529 = vadd.f32 0.0, %v2528
  %2530 = vdwg.mxu0
  %2531 = vst [vmem:[%s7] sm:$0xff] %v2393
  %2532 = vst [vmem:[%s7 + $0x8] sm:$0xff] %v2395
  %2533 = vst [vmem:[%s7 + $0x10] sm:$0xff] %v2397
  %2534 = vst [vmem:[%s7 + $0x18] sm:$0xff] %v2399
  %2535 = vst [vmem:[%s7 + $0x20] sm:$0xff] %v2403
  %2536 = vst [vmem:[%s7 + $0x28] sm:$0xff] %v2405
  %2537 = vst [vmem:[%s7 + $0x30] sm:$0xff] %v2407
  %2538 = vst [vmem:[%s7 + $0x38] sm:$0xff] %v2409
  %2539 = vst [vmem:[%s7 + $0x40] sm:$0xff] %v2413
  %2540 = vst [vmem:[%s7 + $0x48] sm:$0xff] %v2415
  %2541 = vst [vmem:[%s7 + $0x50] sm:$0xff] %v2417
  %2542 = vst [vmem:[%s7 + $0x58] sm:$0xff] %v2419
  %2543 = vst [vmem:[%s7 + $0x60] sm:$0xff] %v2423
  %2544 = vst [vmem:[%s7 + $0x68] sm:$0xff] %v2425
  %2545 = vst [vmem:[%s7 + $0x70] sm:$0xff] %v2427
  %2546 = vst [vmem:[%s7 + $0x78] sm:$0xff] %v2429
  %2547 = vst [vmem:[%s7 + $0x80] sm:$0xff] %v2433
  %2548 = vst [vmem:[%s7 + $0x88] sm:$0xff] %v2435
  %2549 = vst [vmem:[%s7 + $0x90] sm:$0xff] %v2437
  %2550 = vst [vmem:[%s7 + $0x98] sm:$0xff] %v2439
  %2551 = vst [vmem:[%s7 + $0xa0] sm:$0xff] %v2443
  %2552 = vst [vmem:[%s7 + $0xa8] sm:$0xff] %v2445
  %2553 = vst [vmem:[%s7 + $0xb0] sm:$0xff] %v2447
  %2554 = vst [vmem:[%s7 + $0xb8] sm:$0xff] %v2449
  %2555 = vst [vmem:[%s7 + $0xc0] sm:$0xff] %v2453
  %2556 = vst [vmem:[%s7 + $0xc8] sm:$0xff] %v2455
  %2557 = vst [vmem:[%s7 + $0xd0] sm:$0xff] %v2457
  %2558 = vst [vmem:[%s7 + $0xd8] sm:$0xff] %v2459
  %2559 = vst [vmem:[%s7 + $0xe0] sm:$0xff] %v2463
  %2560 = vst [vmem:[%s7 + $0xe8] sm:$0xff] %v2465
  %2561 = vst [vmem:[%s7 + $0xf0] sm:$0xff] %v2467
  %2562 = vst [vmem:[%s7 + $0xf8] sm:$0xff] %v2469
  %2563 = vst [vmem:[%s7 + $0x100] sm:$0xff] %v2473
  %2564 = vst [vmem:[%s7 + $0x108] sm:$0xff] %v2475
  %2565 = vst [vmem:[%s7 + $0x110] sm:$0xff] %v2477
  %2566 = vst [vmem:[%s7 + $0x118] sm:$0xff] %v2479
  %2567 = vst [vmem:[%s7 + $0x120] sm:$0xff] %v2483
  %2568 = vst [vmem:[%s7 + $0x128] sm:$0xff] %v2485
  %2569 = vst [vmem:[%s7 + $0x130] sm:$0xff] %v2487
  %2570 = vst [vmem:[%s7 + $0x138] sm:$0xff] %v2489
  %2571 = vst [vmem:[%s7 + $0x140] sm:$0xff] %v2493
  %2572 = vst [vmem:[%s7 + $0x148] sm:$0xff] %v2495
  %2573 = vst [vmem:[%s7 + $0x150] sm:$0xff] %v2497
  %2574 = vst [vmem:[%s7 + $0x158] sm:$0xff] %v2499
  %2575 = vst [vmem:[%s7 + $0x160] sm:$0xff] %v2503
  %2576 = vst [vmem:[%s7 + $0x168] sm:$0xff] %v2505
  %2577 = vst [vmem:[%s7 + $0x170] sm:$0xff] %v2507
  %2578 = vst [vmem:[%s7 + $0x178] sm:$0xff] %v2509
  %2579 = vst [vmem:[%s7 + $0x180] sm:$0xff] %v2513
  %2580 = vst [vmem:[%s7 + $0x188] sm:$0xff] %v2515
  %2581 = vst [vmem:[%s7 + $0x190] sm:$0xff] %v2517
  %2582 = vst [vmem:[%s7 + $0x198] sm:$0xff] %v2519
  %2583 = vst [vmem:[%s7 + $0x1a0] sm:$0xff] %v2523
  %2584 = vst [vmem:[%s7 + $0x1a8] sm:$0xff] %v2525
  %2585 = vst [vmem:[%s7 + $0x1b0] sm:$0xff] %v2527
  %2586 = vst [vmem:[%s7 + $0x1b8] sm:$0xff] %v2529
  %v2587 = vld [vmem:[#allocation2 + $0x10] sm:$0xff]
  %v2588 = vld [vmem:[#allocation2 + $0x18] sm:$0xff]
  %v2589 = vld [vmem:[#allocation2 + $0x20] sm:$0xff]
  %v2590 = vld [vmem:[#allocation2 + $0x28] sm:$0xff]
  %v2591 = vld [vmem:[#allocation2 + $0x30] sm:$0xff]
  %v2592 = vld [vmem:[#allocation2 + $0x38] sm:$0xff]
  %v2593 = vld [vmem:[#allocation2 + $0x40] sm:$0xff]
  %v2594 = vld [vmem:[#allocation2 + $0x48] sm:$0xff]
  %v2595 = vld [vmem:[#allocation2 + $0x50] sm:$0xff]
  %v2596 = vld [vmem:[#allocation2 + $0x58] sm:$0xff]
  %v2597 = vld [vmem:[#allocation2 + $0x60] sm:$0xff]
  %v2598 = vld [vmem:[#allocation2 + $0x68] sm:$0xff]
  %v2599 = vld [vmem:[#allocation2 + $0x70] sm:$0xff]
  %v2600 = vld [vmem:[#allocation2 + $0x78] sm:$0xff]
  %v2601 = vld [vmem:[#allocation2 + $0x80] sm:$0xff]
  %v2602 = vld [vmem:[#allocation2 + $0x88] sm:$0xff]
  %v2603 = vld [vmem:[#allocation2 + $0x90] sm:$0xff]
  %v2604 = vld [vmem:[#allocation2 + $0x98] sm:$0xff]
  %v2605 = vld [vmem:[#allocation2 + $0xa0] sm:$0xff]
  %v2606 = vld [vmem:[#allocation2 + $0xa8] sm:$0xff]
  %v2607 = vld [vmem:[#allocation2 + $0xb0] sm:$0xff]
  %v2608 = vld [vmem:[#allocation2 + $0xb8] sm:$0xff]
  %v2609 = vld [vmem:[#allocation2 + $0xc0] sm:$0xff]
  %v2610 = vld [vmem:[#allocation2 + $0xc8] sm:$0xff]
  %v2611 = vld [vmem:[#allocation2 + $0xd0] sm:$0xff]
  %v2612 = vld [vmem:[#allocation2 + $0xd8] sm:$0xff]
  %v2613 = vld [vmem:[#allocation2 + $0xe0] sm:$0xff]
  %v2614 = vld [vmem:[#allocation2 + $0xe8] sm:$0xff]
  %s2615 = scalar_lea.vmem [#allocation3], 256
  %v2616 = vld [vmem:[%s2615] sm:$0xff]
  %v2617 = vld [vmem:[%s2615 + $0x8] sm:$0xff]
  %v2618 = vld [vmem:[%s2615 + $0x10] sm:$0xff]
  %v2619 = vld [vmem:[%s2615 + $0x18] sm:$0xff]
  %v2620 = vld [vmem:[%s2615 + $0x20] sm:$0xff]
  %v2621 = vld [vmem:[%s2615 + $0x28] sm:$0xff]
  %v2622 = vld [vmem:[%s2615 + $0x30] sm:$0xff]
  %v2623 = vld [vmem:[%s2615 + $0x38] sm:$0xff]
  %v2624 = vld [vmem:[%s2615 + $0x40] sm:$0xff]
  %v2625 = vld [vmem:[%s2615 + $0x48] sm:$0xff]
  %v2626 = vld [vmem:[%s2615 + $0x50] sm:$0xff]
  %v2627 = vld [vmem:[%s2615 + $0x58] sm:$0xff]
  %v2628 = vld [vmem:[%s2615 + $0x60] sm:$0xff]
  %v2629 = vld [vmem:[%s2615 + $0x68] sm:$0xff]
  %v2630 = vld [vmem:[%s2615 + $0x70] sm:$0xff]
  %v2631 = vld [vmem:[%s2615 + $0x78] sm:$0xff]
  %v2632 = vld [vmem:[%s2615 + $0x80] sm:$0xff]
  %v2633 = vld [vmem:[%s2615 + $0x88] sm:$0xff]
  %v2634 = vld [vmem:[%s2615 + $0x90] sm:$0xff]
  %v2635 = vld [vmem:[%s2615 + $0x98] sm:$0xff]
  %v2636 = vld [vmem:[%s2615 + $0xa0] sm:$0xff]
  %v2637 = vld [vmem:[%s2615 + $0xa8] sm:$0xff]
  %v2638 = vld [vmem:[%s2615 + $0xb0] sm:$0xff]
  %v2639 = vld [vmem:[%s2615 + $0xb8] sm:$0xff]
  %v2640 = vld [vmem:[%s2615 + $0xc0] sm:$0xff]
  %v2641 = vld [vmem:[%s2615 + $0xc8] sm:$0xff]
  %v2642 = vld [vmem:[%s2615 + $0xd0] sm:$0xff]
  %v2643 = vld [vmem:[%s2615 + $0xd8] sm:$0xff]
  %v2644 = vld [vmem:[%s2615 + $0xe0] sm:$0xff]
  %v2645 = vld [vmem:[%s2615 + $0xe8] sm:$0xff]
  %v2646 = vld [vmem:[%s2615 + $0xf0] sm:$0xff]
  %v2647 = vld [vmem:[%s2615 + $0xf8] sm:$0xff]
  %v2676 = vunpack.c.l.b16 %v2587
  %v2677 = vunpack.c.h.b16 %v2587
  %v2678 = vunpack.c.l.b16 %v2588
  %v2679 = vunpack.c.h.b16 %v2588
  %v2680 = vunpack.c.l.b16 %v2589
  %v2681 = vunpack.c.h.b16 %v2589
  %v2682 = vunpack.c.l.b16 %v2590
  %v2683 = vunpack.c.h.b16 %v2590
  %v2684 = vunpack.c.l.b16 %v2591
  %v2685 = vunpack.c.h.b16 %v2591
  %v2686 = vunpack.c.l.b16 %v2592
  %v2687 = vunpack.c.h.b16 %v2592
  %v2688 = vunpack.c.l.b16 %v2593
  %v2689 = vunpack.c.h.b16 %v2593
  %v2690 = vunpack.c.l.b16 %v2594
  %v2691 = vunpack.c.h.b16 %v2594
  %v2692 = vunpack.c.l.b16 %v2595
  %v2693 = vunpack.c.h.b16 %v2595
  %v2694 = vunpack.c.l.b16 %v2596
  %v2695 = vunpack.c.h.b16 %v2596
  %v2696 = vunpack.c.l.b16 %v2597
  %v2697 = vunpack.c.h.b16 %v2597
  %v2698 = vunpack.c.l.b16 %v2598
  %v2699 = vunpack.c.h.b16 %v2598
  %v2700 = vunpack.c.l.b16 %v2599
  %v2701 = vunpack.c.h.b16 %v2599
  %v2702 = vunpack.c.l.b16 %v2600
  %v2703 = vunpack.c.h.b16 %v2600
  %v2704 = vunpack.c.l.b16 %v2601
  %v2705 = vunpack.c.h.b16 %v2601
  %v2706 = vunpack.c.l.b16 %v2602
  %v2707 = vunpack.c.h.b16 %v2602
  %v2708 = vunpack.c.l.b16 %v2603
  %v2709 = vunpack.c.h.b16 %v2603
  %v2710 = vunpack.c.l.b16 %v2604
  %v2711 = vunpack.c.h.b16 %v2604
  %v2712 = vunpack.c.l.b16 %v2605
  %v2713 = vunpack.c.h.b16 %v2605
  %v2714 = vunpack.c.l.b16 %v2606
  %v2715 = vunpack.c.h.b16 %v2606
  %v2716 = vunpack.c.l.b16 %v2607
  %v2717 = vunpack.c.h.b16 %v2607
  %v2718 = vunpack.c.l.b16 %v2608
  %v2719 = vunpack.c.h.b16 %v2608
  %v2720 = vunpack.c.l.b16 %v2609
  %v2721 = vunpack.c.h.b16 %v2609
  %v2722 = vunpack.c.l.b16 %v2610
  %v2723 = vunpack.c.h.b16 %v2610
  %v2724 = vunpack.c.l.b16 %v2611
  %v2725 = vunpack.c.h.b16 %v2611
  %v2726 = vunpack.c.l.b16 %v2612
  %v2727 = vunpack.c.h.b16 %v2612
  %v2728 = vunpack.c.l.b16 %v2613
  %v2729 = vunpack.c.h.b16 %v2613
  %v2730 = vunpack.c.l.b16 %v2614
  %v2731 = vunpack.c.h.b16 %v2614
  %v2732 = vpack.c.b16 %v2678, %v2676
  %v2733 = vpack.c.b16 %v2679, %v2677
  %v2734 = vpack.c.b16 %v2682, %v2680
  %v2735 = vpack.c.b16 %v2683, %v2681
  %v2736 = vpack.c.b16 %v2686, %v2684
  %v2737 = vpack.c.b16 %v2687, %v2685
  %v2738 = vpack.c.b16 %v2690, %v2688
  %v2739 = vpack.c.b16 %v2691, %v2689
  %v2740 = vpack.c.b16 %v2694, %v2692
  %v2741 = vpack.c.b16 %v2695, %v2693
  %v2742 = vpack.c.b16 %v2698, %v2696
  %v2743 = vpack.c.b16 %v2699, %v2697
  %v2744 = vpack.c.b16 %v2702, %v2700
  %v2745 = vpack.c.b16 %v2703, %v2701
  %v2746 = vpack.c.b16 %v2706, %v2704
  %v2747 = vpack.c.b16 %v2707, %v2705
  %v2748 = vpack.c.b16 %v2710, %v2708
  %v2749 = vpack.c.b16 %v2711, %v2709
  %v2750 = vpack.c.b16 %v2714, %v2712
  %v2751 = vpack.c.b16 %v2715, %v2713
  %v2752 = vpack.c.b16 %v2718, %v2716
  %v2753 = vpack.c.b16 %v2719, %v2717
  %v2754 = vpack.c.b16 %v2722, %v2720
  %v2755 = vpack.c.b16 %v2723, %v2721
  %v2756 = vpack.c.b16 %v2726, %v2724
  %v2757 = vpack.c.b16 %v2727, %v2725
  %v2758 = vpack.c.b16 %v2730, %v2728
  %v2759 = vpack.c.b16 %v2731, %v2729
  %v2820 = vunpack.c.l.b16 %v2616
  %v2821 = vunpack.c.h.b16 %v2616
  %v2822 = vunpack.c.l.b16 %v2617
  %v2823 = vunpack.c.h.b16 %v2617
  %v2824 = vunpack.c.l.b16 %v2618
  %v2825 = vunpack.c.h.b16 %v2618
  %v2826 = vunpack.c.l.b16 %v2619
  %v2827 = vunpack.c.h.b16 %v2619
  %v2828 = vunpack.c.l.b16 %v2620
  %v2829 = vunpack.c.h.b16 %v2620
  %v2830 = vunpack.c.l.b16 %v2621
  %v2831 = vunpack.c.h.b16 %v2621
  %v2832 = vunpack.c.l.b16 %v2622
  %v2833 = vunpack.c.h.b16 %v2622
  %v2834 = vunpack.c.l.b16 %v2623
  %v2835 = vunpack.c.h.b16 %v2623
  %v2836 = vunpack.c.l.b16 %v2624
  %v2837 = vunpack.c.h.b16 %v2624
  %v2838 = vunpack.c.l.b16 %v2625
  %v2839 = vunpack.c.h.b16 %v2625
  %v2840 = vunpack.c.l.b16 %v2626
  %v2841 = vunpack.c.h.b16 %v2626
  %v2842 = vunpack.c.l.b16 %v2627
  %v2843 = vunpack.c.h.b16 %v2627
  %v2844 = vunpack.c.l.b16 %v2628
  %v2845 = vunpack.c.h.b16 %v2628
  %v2846 = vunpack.c.l.b16 %v2629
  %v2847 = vunpack.c.h.b16 %v2629
  %v2848 = vunpack.c.l.b16 %v2630
  %v2849 = vunpack.c.h.b16 %v2630
  %v2850 = vunpack.c.l.b16 %v2631
  %v2851 = vunpack.c.h.b16 %v2631
  %v2852 = vunpack.c.l.b16 %v2632
  %v2853 = vunpack.c.h.b16 %v2632
  %v2854 = vunpack.c.l.b16 %v2633
  %v2855 = vunpack.c.h.b16 %v2633
  %v2856 = vunpack.c.l.b16 %v2634
  %v2857 = vunpack.c.h.b16 %v2634
  %v2858 = vunpack.c.l.b16 %v2635
  %v2859 = vunpack.c.h.b16 %v2635
  %v2860 = vunpack.c.l.b16 %v2636
  %v2861 = vunpack.c.h.b16 %v2636
  %v2862 = vunpack.c.l.b16 %v2637
  %v2863 = vunpack.c.h.b16 %v2637
  %v2864 = vunpack.c.l.b16 %v2638
  %v2865 = vunpack.c.h.b16 %v2638
  %v2866 = vunpack.c.l.b16 %v2639
  %v2867 = vunpack.c.h.b16 %v2639
  %v2868 = vunpack.c.l.b16 %v2640
  %v2869 = vunpack.c.h.b16 %v2640
  %v2870 = vunpack.c.l.b16 %v2641
  %v2871 = vunpack.c.h.b16 %v2641
  %v2872 = vunpack.c.l.b16 %v2642
  %v2873 = vunpack.c.h.b16 %v2642
  %v2874 = vunpack.c.l.b16 %v2643
  %v2875 = vunpack.c.h.b16 %v2643
  %v2876 = vunpack.c.l.b16 %v2644
  %v2877 = vunpack.c.h.b16 %v2644
  %v2878 = vunpack.c.l.b16 %v2645
  %v2879 = vunpack.c.h.b16 %v2645
  %v2880 = vunpack.c.l.b16 %v2646
  %v2881 = vunpack.c.h.b16 %v2646
  %v2882 = vunpack.c.l.b16 %v2647
  %v2883 = vunpack.c.h.b16 %v2647
  %v2884 = vpack.c.b16 %v2822, %v2820
  %v2885 = vpack.c.b16 %v2823, %v2821
  %v2886 = vpack.c.b16 %v2826, %v2824
  %v2887 = vpack.c.b16 %v2827, %v2825
  %v2888 = vpack.c.b16 %v2830, %v2828
  %v2889 = vpack.c.b16 %v2831, %v2829
  %v2890 = vpack.c.b16 %v2834, %v2832
  %v2891 = vpack.c.b16 %v2835, %v2833
  %v2892 = vpack.c.b16 %v2838, %v2836
  %v2893 = vpack.c.b16 %v2839, %v2837
  %v2894 = vpack.c.b16 %v2842, %v2840
  %v2895 = vpack.c.b16 %v2843, %v2841
  %v2896 = vpack.c.b16 %v2846, %v2844
  %v2897 = vpack.c.b16 %v2847, %v2845
  %v2898 = vpack.c.b16 %v2850, %v2848
  %v2899 = vpack.c.b16 %v2851, %v2849
  %v2900 = vpack.c.b16 %v2854, %v2852
  %v2901 = vpack.c.b16 %v2855, %v2853
  %v2902 = vpack.c.b16 %v2858, %v2856
  %v2903 = vpack.c.b16 %v2859, %v2857
  %v2904 = vpack.c.b16 %v2862, %v2860
  %v2905 = vpack.c.b16 %v2863, %v2861
  %v2906 = vpack.c.b16 %v2866, %v2864
  %v2907 = vpack.c.b16 %v2867, %v2865
  %v2908 = vpack.c.b16 %v2870, %v2868
  %v2909 = vpack.c.b16 %v2871, %v2869
  %v2910 = vpack.c.b16 %v2874, %v2872
  %v2911 = vpack.c.b16 %v2875, %v2873
  %v2912 = vpack.c.b16 %v2878, %v2876
  %v2913 = vpack.c.b16 %v2879, %v2877
  %v2914 = vpack.c.b16 %v2882, %v2880
  %v2915 = vpack.c.b16 %v2883, %v2881
  %2948 = vmatprep.subr.bf16.mxu0 %v2899
  %2949 = vmatpush1.bf16.msra.mxu0 %v2898
  %2950 = vmatprep.subr.bf16.mxu0 %v2897
  %2951 = vmatpush1.bf16.msra.mxu0 %v2896
  %2952 = vmatprep.subr.bf16.mxu0 %v2895
  %2953 = vmatpush1.bf16.msra.mxu0 %v2894
  %2954 = vmatprep.subr.bf16.mxu0 %v2893
  %2955 = vmatpush1.bf16.msra.mxu0 %v2892
  %2956 = vmatprep.subr.bf16.mxu0 %v2891
  %2957 = vmatpush1.bf16.msra.mxu0 %v2890
  %2958 = vmatprep.subr.bf16.mxu0 %v2889
  %2959 = vmatpush1.bf16.msra.mxu0 %v2888
  %2960 = vmatprep.subr.bf16.mxu0 %v2887
  %2961 = vmatpush1.bf16.msra.mxu0 %v2886
  %2962 = vmatprep.subr.bf16.mxu0 %v2885
  %2963 = vmatpush1.bf16.msra.mxu0 %v2884
  %2964 = vmatprep.subr.bf16.mxu0 %v2915
  %2965 = vmatpush2.bf16.msra.mxu0 %v2914
  %2966 = vmatprep.subr.bf16.mxu0 %v2913
  %2967 = vmatpush2.bf16.msra.mxu0 %v2912
  %2968 = vmatprep.subr.bf16.mxu0 %v2911
  %2969 = vmatpush2.bf16.msra.mxu0 %v2910
  %2970 = vmatprep.subr.bf16.mxu0 %v2909
  %2971 = vmatpush2.bf16.msra.mxu0 %v2908
  %2972 = vmatprep.subr.bf16.mxu0 %v2907
  %2973 = vmatpush2.bf16.msra.mxu0 %v2906
  %2974 = vmatprep.subr.bf16.mxu0 %v2905
  %2975 = vmatpush2.bf16.msra.mxu0 %v2904
  %2976 = vmatprep.subr.bf16.mxu0 %v2903
  %2977 = vmatpush2.bf16.msra.mxu0 %v2902
  %2978 = vmatprep.subr.bf16.mxu0 %v2901
  %2979 = vmatpush2.bf16.msra.mxu0 %v2900
  %2980 = vmatprep.mubr.bf16.mxu0 %v2733
  %2981 = vmatmul.mubr.bf16.gmra.mxu0 %v2732
  %v2982 = vpop.f32.mrf.mxu0
  %v2983 = vadd.f32 0.0, %v2982
  %v2984 = vpop.f32.mrf.mxu0
  %v2985 = vadd.f32 0.0, %v2984
  %v2986 = vpop.f32.mrf.mxu0
  %v2987 = vadd.f32 0.0, %v2986
  %v2988 = vpop.f32.mrf.mxu0
  %v2989 = vadd.f32 0.0, %v2988
  %2990 = vmatprep.mubr.bf16.mxu0 %v2735
  %2991 = vmatmul.mubr.bf16.gmra.mxu0 %v2734
  %v2992 = vpop.f32.mrf.mxu0
  %v2993 = vadd.f32 0.0, %v2992
  %v2994 = vpop.f32.mrf.mxu0
  %v2995 = vadd.f32 0.0, %v2994
  %v2996 = vpop.f32.mrf.mxu0
  %v2997 = vadd.f32 0.0, %v2996
  %v2998 = vpop.f32.mrf.mxu0
  %v2999 = vadd.f32 0.0, %v2998
  %3000 = vmatprep.mubr.bf16.mxu0 %v2737
  %3001 = vmatmul.mubr.bf16.gmra.mxu0 %v2736
  %v3002 = vpop.f32.mrf.mxu0
  %v3003 = vadd.f32 0.0, %v3002
  %v3004 = vpop.f32.mrf.mxu0
  %v3005 = vadd.f32 0.0, %v3004
  %v3006 = vpop.f32.mrf.mxu0
  %v3007 = vadd.f32 0.0, %v3006
  %v3008 = vpop.f32.mrf.mxu0
  %v3009 = vadd.f32 0.0, %v3008
  %3010 = vmatprep.mubr.bf16.mxu0 %v2739
  %3011 = vmatmul.mubr.bf16.gmra.mxu0 %v2738
  %v3012 = vpop.f32.mrf.mxu0
  %v3013 = vadd.f32 0.0, %v3012
  %v3014 = vpop.f32.mrf.mxu0
  %v3015 = vadd.f32 0.0, %v3014
  %v3016 = vpop.f32.mrf.mxu0
  %v3017 = vadd.f32 0.0, %v3016
  %v3018 = vpop.f32.mrf.mxu0
  %v3019 = vadd.f32 0.0, %v3018
  %3020 = vmatprep.mubr.bf16.mxu0 %v2741
  %3021 = vmatmul.mubr.bf16.gmra.mxu0 %v2740
  %v3022 = vpop.f32.mrf.mxu0
  %v3023 = vadd.f32 0.0, %v3022
  %v3024 = vpop.f32.mrf.mxu0
  %v3025 = vadd.f32 0.0, %v3024
  %v3026 = vpop.f32.mrf.mxu0
  %v3027 = vadd.f32 0.0, %v3026
  %v3028 = vpop.f32.mrf.mxu0
  %v3029 = vadd.f32 0.0, %v3028
  %3030 = vmatprep.mubr.bf16.mxu0 %v2743
  %3031 = vmatmul.mubr.bf16.gmra.mxu0 %v2742
  %v3032 = vpop.f32.mrf.mxu0
  %v3033 = vadd.f32 0.0, %v3032
  %v3034 = vpop.f32.mrf.mxu0
  %v3035 = vadd.f32 0.0, %v3034
  %v3036 = vpop.f32.mrf.mxu0
  %v3037 = vadd.f32 0.0, %v3036
  %v3038 = vpop.f32.mrf.mxu0
  %v3039 = vadd.f32 0.0, %v3038
  %3040 = vmatprep.mubr.bf16.mxu0 %v2745
  %3041 = vmatmul.mubr.bf16.gmra.mxu0 %v2744
  %v3042 = vpop.f32.mrf.mxu0
  %v3043 = vadd.f32 0.0, %v3042
  %v3044 = vpop.f32.mrf.mxu0
  %v3045 = vadd.f32 0.0, %v3044
  %v3046 = vpop.f32.mrf.mxu0
  %v3047 = vadd.f32 0.0, %v3046
  %v3048 = vpop.f32.mrf.mxu0
  %v3049 = vadd.f32 0.0, %v3048
  %3050 = vmatprep.mubr.bf16.mxu0 %v2747
  %3051 = vmatmul.mubr.bf16.gmra.mxu0 %v2746
  %v3052 = vpop.f32.mrf.mxu0
  %v3053 = vadd.f32 0.0, %v3052
  %v3054 = vpop.f32.mrf.mxu0
  %v3055 = vadd.f32 0.0, %v3054
  %v3056 = vpop.f32.mrf.mxu0
  %v3057 = vadd.f32 0.0, %v3056
  %v3058 = vpop.f32.mrf.mxu0
  %v3059 = vadd.f32 0.0, %v3058
  %3060 = vmatprep.mubr.bf16.mxu0 %v2749
  %3061 = vmatmul.mubr.bf16.gmra.mxu0 %v2748
  %v3062 = vpop.f32.mrf.mxu0
  %v3063 = vadd.f32 0.0, %v3062
  %v3064 = vpop.f32.mrf.mxu0
  %v3065 = vadd.f32 0.0, %v3064
  %v3066 = vpop.f32.mrf.mxu0
  %v3067 = vadd.f32 0.0, %v3066
  %v3068 = vpop.f32.mrf.mxu0
  %v3069 = vadd.f32 0.0, %v3068
  %3070 = vmatprep.mubr.bf16.mxu0 %v2751
  %3071 = vmatmul.mubr.bf16.gmra.mxu0 %v2750
  %v3072 = vpop.f32.mrf.mxu0
  %v3073 = vadd.f32 0.0, %v3072
  %v3074 = vpop.f32.mrf.mxu0
  %v3075 = vadd.f32 0.0, %v3074
  %v3076 = vpop.f32.mrf.mxu0
  %v3077 = vadd.f32 0.0, %v3076
  %v3078 = vpop.f32.mrf.mxu0
  %v3079 = vadd.f32 0.0, %v3078
  %3080 = vmatprep.mubr.bf16.mxu0 %v2753
  %3081 = vmatmul.mubr.bf16.gmra.mxu0 %v2752
  %v3082 = vpop.f32.mrf.mxu0
  %v3083 = vadd.f32 0.0, %v3082
  %v3084 = vpop.f32.mrf.mxu0
  %v3085 = vadd.f32 0.0, %v3084
  %v3086 = vpop.f32.mrf.mxu0
  %v3087 = vadd.f32 0.0, %v3086
  %v3088 = vpop.f32.mrf.mxu0
  %v3089 = vadd.f32 0.0, %v3088
  %3090 = vmatprep.mubr.bf16.mxu0 %v2755
  %3091 = vmatmul.mubr.bf16.gmra.mxu0 %v2754
  %v3092 = vpop.f32.mrf.mxu0
  %v3093 = vadd.f32 0.0, %v3092
  %v3094 = vpop.f32.mrf.mxu0
  %v3095 = vadd.f32 0.0, %v3094
  %v3096 = vpop.f32.mrf.mxu0
  %v3097 = vadd.f32 0.0, %v3096
  %v3098 = vpop.f32.mrf.mxu0
  %v3099 = vadd.f32 0.0, %v3098
  %3100 = vmatprep.mubr.bf16.mxu0 %v2757
  %3101 = vmatmul.mubr.bf16.gmra.mxu0 %v2756
  %v3102 = vpop.f32.mrf.mxu0
  %v3103 = vadd.f32 0.0, %v3102
  %v3104 = vpop.f32.mrf.mxu0
  %v3105 = vadd.f32 0.0, %v3104
  %v3106 = vpop.f32.mrf.mxu0
  %v3107 = vadd.f32 0.0, %v3106
  %v3108 = vpop.f32.mrf.mxu0
  %v3109 = vadd.f32 0.0, %v3108
  %3110 = vmatprep.mubr.bf16.mxu0 %v2759
  %3111 = vmatmul.mubr.bf16.gmra.mxu0 %v2758
  %v3112 = vpop.f32.mrf.mxu0
  %v3113 = vadd.f32 0.0, %v3112
  %v3114 = vpop.f32.mrf.mxu0
  %v3115 = vadd.f32 0.0, %v3114
  %v3116 = vpop.f32.mrf.mxu0
  %v3117 = vadd.f32 0.0, %v3116
  %v3118 = vpop.f32.mrf.mxu0
  %v3119 = vadd.f32 0.0, %v3118
  %3120 = vdwg.mxu0
  %v3121 = vld [vmem:[%s7] sm:$0xff]
  %v3122 = vld [vmem:[%s7 + $0x8] sm:$0xff]
  %v3123 = vld [vmem:[%s7 + $0x10] sm:$0xff]
  %v3124 = vld [vmem:[%s7 + $0x18] sm:$0xff]
  %v3125 = vld [vmem:[%s7 + $0x20] sm:$0xff]
  %v3126 = vld [vmem:[%s7 + $0x28] sm:$0xff]
  %v3127 = vld [vmem:[%s7 + $0x30] sm:$0xff]
  %v3128 = vld [vmem:[%s7 + $0x38] sm:$0xff]
  %v3129 = vld [vmem:[%s7 + $0x40] sm:$0xff]
  %v3130 = vld [vmem:[%s7 + $0x48] sm:$0xff]
  %v3131 = vld [vmem:[%s7 + $0x50] sm:$0xff]
  %v3132 = vld [vmem:[%s7 + $0x58] sm:$0xff]
  %v3133 = vld [vmem:[%s7 + $0x60] sm:$0xff]
  %v3134 = vld [vmem:[%s7 + $0x68] sm:$0xff]
  %v3135 = vld [vmem:[%s7 + $0x70] sm:$0xff]
  %v3136 = vld [vmem:[%s7 + $0x78] sm:$0xff]
  %v3137 = vld [vmem:[%s7 + $0x80] sm:$0xff]
  %v3138 = vld [vmem:[%s7 + $0x88] sm:$0xff]
  %v3139 = vld [vmem:[%s7 + $0x90] sm:$0xff]
  %v3140 = vld [vmem:[%s7 + $0x98] sm:$0xff]
  %v3141 = vld [vmem:[%s7 + $0xa0] sm:$0xff]
  %v3142 = vld [vmem:[%s7 + $0xa8] sm:$0xff]
  %v3143 = vld [vmem:[%s7 + $0xb0] sm:$0xff]
  %v3144 = vld [vmem:[%s7 + $0xb8] sm:$0xff]
  %v3145 = vld [vmem:[%s7 + $0xc0] sm:$0xff]
  %v3146 = vld [vmem:[%s7 + $0xc8] sm:$0xff]
  %v3147 = vld [vmem:[%s7 + $0xd0] sm:$0xff]
  %v3148 = vld [vmem:[%s7 + $0xd8] sm:$0xff]
  %v3149 = vld [vmem:[%s7 + $0xe0] sm:$0xff]
  %v3150 = vld [vmem:[%s7 + $0xe8] sm:$0xff]
  %v3151 = vld [vmem:[%s7 + $0xf0] sm:$0xff]
  %v3152 = vld [vmem:[%s7 + $0xf8] sm:$0xff]
  %v3153 = vld [vmem:[%s7 + $0x100] sm:$0xff]
  %v3154 = vld [vmem:[%s7 + $0x108] sm:$0xff]
  %v3155 = vld [vmem:[%s7 + $0x110] sm:$0xff]
  %v3156 = vld [vmem:[%s7 + $0x118] sm:$0xff]
  %v3157 = vld [vmem:[%s7 + $0x120] sm:$0xff]
  %v3158 = vld [vmem:[%s7 + $0x128] sm:$0xff]
  %v3159 = vld [vmem:[%s7 + $0x130] sm:$0xff]
  %v3160 = vld [vmem:[%s7 + $0x138] sm:$0xff]
  %v3161 = vld [vmem:[%s7 + $0x140] sm:$0xff]
  %v3162 = vld [vmem:[%s7 + $0x148] sm:$0xff]
  %v3163 = vld [vmem:[%s7 + $0x150] sm:$0xff]
  %v3164 = vld [vmem:[%s7 + $0x158] sm:$0xff]
  %v3165 = vld [vmem:[%s7 + $0x160] sm:$0xff]
  %v3166 = vld [vmem:[%s7 + $0x168] sm:$0xff]
  %v3167 = vld [vmem:[%s7 + $0x170] sm:$0xff]
  %v3168 = vld [vmem:[%s7 + $0x178] sm:$0xff]
  %v3169 = vld [vmem:[%s7 + $0x180] sm:$0xff]
  %v3170 = vld [vmem:[%s7 + $0x188] sm:$0xff]
  %v3171 = vld [vmem:[%s7 + $0x190] sm:$0xff]
  %v3172 = vld [vmem:[%s7 + $0x198] sm:$0xff]
  %v3173 = vld [vmem:[%s7 + $0x1a0] sm:$0xff]
  %v3174 = vld [vmem:[%s7 + $0x1a8] sm:$0xff]
  %v3175 = vld [vmem:[%s7 + $0x1b0] sm:$0xff]
  %v3176 = vld [vmem:[%s7 + $0x1b8] sm:$0xff]
  %v3177 = vadd.f32 %v3121, %v2983
  %v3178 = vadd.f32 %v3122, %v2985
  %v3179 = vadd.f32 %v3123, %v2987
  %v3180 = vadd.f32 %v3124, %v2989
  %v3181 = vadd.f32 %v3125, %v2993
  %v3182 = vadd.f32 %v3126, %v2995
  %v3183 = vadd.f32 %v3127, %v2997
  %v3184 = vadd.f32 %v3128, %v2999
  %v3185 = vadd.f32 %v3129, %v3003
  %v3186 = vadd.f32 %v3130, %v3005
  %v3187 = vadd.f32 %v3131, %v3007
  %v3188 = vadd.f32 %v3132, %v3009
  %v3189 = vadd.f32 %v3133, %v3013
  %v3190 = vadd.f32 %v3134, %v3015
  %v3191 = vadd.f32 %v3135, %v3017
  %v3192 = vadd.f32 %v3136, %v3019
  %v3193 = vadd.f32 %v3137, %v3023
  %v3194 = vadd.f32 %v3138, %v3025
  %v3195 = vadd.f32 %v3139, %v3027
  %v3196 = vadd.f32 %v3140, %v3029
  %v3197 = vadd.f32 %v3141, %v3033
  %v3198 = vadd.f32 %v3142, %v3035
  %v3199 = vadd.f32 %v3143, %v3037
  %v3200 = vadd.f32 %v3144, %v3039
  %v3201 = vadd.f32 %v3145, %v3043
  %v3202 = vadd.f32 %v3146, %v3045
  %v3203 = vadd.f32 %v3147, %v3047
  %v3204 = vadd.f32 %v3148, %v3049
  %v3205 = vadd.f32 %v3149, %v3053
  %v3206 = vadd.f32 %v3150, %v3055
  %v3207 = vadd.f32 %v3151, %v3057
  %v3208 = vadd.f32 %v3152, %v3059
  %v3209 = vadd.f32 %v3153, %v3063
  %v3210 = vadd.f32 %v3154, %v3065
  %v3211 = vadd.f32 %v3155, %v3067
  %v3212 = vadd.f32 %v3156, %v3069
  %v3213 = vadd.f32 %v3157, %v3073
  %v3214 = vadd.f32 %v3158, %v3075
  %v3215 = vadd.f32 %v3159, %v3077
  %v3216 = vadd.f32 %v3160, %v3079
  %v3217 = vadd.f32 %v3161, %v3083
  %v3218 = vadd.f32 %v3162, %v3085
  %v3219 = vadd.f32 %v3163, %v3087
  %v3220 = vadd.f32 %v3164, %v3089
  %v3221 = vadd.f32 %v3165, %v3093
  %v3222 = vadd.f32 %v3166, %v3095
  %v3223 = vadd.f32 %v3167, %v3097
  %v3224 = vadd.f32 %v3168, %v3099
  %v3225 = vadd.f32 %v3169, %v3103
  %v3226 = vadd.f32 %v3170, %v3105
  %v3227 = vadd.f32 %v3171, %v3107
  %v3228 = vadd.f32 %v3172, %v3109
  %v3229 = vadd.f32 %v3173, %v3113
  %v3230 = vadd.f32 %v3174, %v3115
  %v3231 = vadd.f32 %v3175, %v3117
  %v3232 = vadd.f32 %v3176, %v3119
  %3233 = vst [vmem:[%s7] sm:$0xff] %v3177
  %3234 = vst [vmem:[%s7 + $0x8] sm:$0xff] %v3178
  %3235 = vst [vmem:[%s7 + $0x10] sm:$0xff] %v3179
  %3236 = vst [vmem:[%s7 + $0x18] sm:$0xff] %v3180
  %3237 = vst [vmem:[%s7 + $0x20] sm:$0xff] %v3181
  %3238 = vst [vmem:[%s7 + $0x28] sm:$0xff] %v3182
  %3239 = vst [vmem:[%s7 + $0x30] sm:$0xff] %v3183
  %3240 = vst [vmem:[%s7 + $0x38] sm:$0xff] %v3184
  %3241 = vst [vmem:[%s7 + $0x40] sm:$0xff] %v3185
  %3242 = vst [vmem:[%s7 + $0x48] sm:$0xff] %v3186
  %3243 = vst [vmem:[%s7 + $0x50] sm:$0xff] %v3187
  %3244 = vst [vmem:[%s7 + $0x58] sm:$0xff] %v3188
  %3245 = vst [vmem:[%s7 + $0x60] sm:$0xff] %v3189
  %3246 = vst [vmem:[%s7 + $0x68] sm:$0xff] %v3190
  %3247 = vst [vmem:[%s7 + $0x70] sm:$0xff] %v3191
  %3248 = vst [vmem:[%s7 + $0x78] sm:$0xff] %v3192
  %3249 = vst [vmem:[%s7 + $0x80] sm:$0xff] %v3193
  %3250 = vst [vmem:[%s7 + $0x88] sm:$0xff] %v3194
  %3251 = vst [vmem:[%s7 + $0x90] sm:$0xff] %v3195
  %3252 = vst [vmem:[%s7 + $0x98] sm:$0xff] %v3196
  %3253 = vst [vmem:[%s7 + $0xa0] sm:$0xff] %v3197
  %3254 = vst [vmem:[%s7 + $0xa8] sm:$0xff] %v3198
  %3255 = vst [vmem:[%s7 + $0xb0] sm:$0xff] %v3199
  %3256 = vst [vmem:[%s7 + $0xb8] sm:$0xff] %v3200
  %3257 = vst [vmem:[%s7 + $0xc0] sm:$0xff] %v3201
  %3258 = vst [vmem:[%s7 + $0xc8] sm:$0xff] %v3202
  %3259 = vst [vmem:[%s7 + $0xd0] sm:$0xff] %v3203
  %3260 = vst [vmem:[%s7 + $0xd8] sm:$0xff] %v3204
  %3261 = vst [vmem:[%s7 + $0xe0] sm:$0xff] %v3205
  %3262 = vst [vmem:[%s7 + $0xe8] sm:$0xff] %v3206
  %3263 = vst [vmem:[%s7 + $0xf0] sm:$0xff] %v3207
  %3264 = vst [vmem:[%s7 + $0xf8] sm:$0xff] %v3208
  %3265 = vst [vmem:[%s7 + $0x100] sm:$0xff] %v3209
  %3266 = vst [vmem:[%s7 + $0x108] sm:$0xff] %v3210
  %3267 = vst [vmem:[%s7 + $0x110] sm:$0xff] %v3211
  %3268 = vst [vmem:[%s7 + $0x118] sm:$0xff] %v3212
  %3269 = vst [vmem:[%s7 + $0x120] sm:$0xff] %v3213
  %3270 = vst [vmem:[%s7 + $0x128] sm:$0xff] %v3214
  %3271 = vst [vmem:[%s7 + $0x130] sm:$0xff] %v3215
  %3272 = vst [vmem:[%s7 + $0x138] sm:$0xff] %v3216
  %3273 = vst [vmem:[%s7 + $0x140] sm:$0xff] %v3217
  %3274 = vst [vmem:[%s7 + $0x148] sm:$0xff] %v3218
  %3275 = vst [vmem:[%s7 + $0x150] sm:$0xff] %v3219
  %3276 = vst [vmem:[%s7 + $0x158] sm:$0xff] %v3220
  %3277 = vst [vmem:[%s7 + $0x160] sm:$0xff] %v3221
  %3278 = vst [vmem:[%s7 + $0x168] sm:$0xff] %v3222
  %3279 = vst [vmem:[%s7 + $0x170] sm:$0xff] %v3223
  %3280 = vst [vmem:[%s7 + $0x178] sm:$0xff] %v3224
  %3281 = vst [vmem:[%s7 + $0x180] sm:$0xff] %v3225
  %3282 = vst [vmem:[%s7 + $0x188] sm:$0xff] %v3226
  %3283 = vst [vmem:[%s7 + $0x190] sm:$0xff] %v3227
  %3284 = vst [vmem:[%s7 + $0x198] sm:$0xff] %v3228
  %3285 = vst [vmem:[%s7 + $0x1a0] sm:$0xff] %v3229
  %3286 = vst [vmem:[%s7 + $0x1a8] sm:$0xff] %v3230
  %3287 = vst [vmem:[%s7 + $0x1b0] sm:$0xff] %v3231
  %3288 = vst [vmem:[%s7 + $0x1b8] sm:$0xff] %v3232
  %v3289 = vld [vmem:[#allocation2 + $0x10] sm:$0xff]
  %v3290 = vld [vmem:[#allocation2 + $0x18] sm:$0xff]
  %v3291 = vld [vmem:[#allocation2 + $0x20] sm:$0xff]
  %v3292 = vld [vmem:[#allocation2 + $0x28] sm:$0xff]
  %v3293 = vld [vmem:[#allocation2 + $0x30] sm:$0xff]
  %v3294 = vld [vmem:[#allocation2 + $0x38] sm:$0xff]
  %v3295 = vld [vmem:[#allocation2 + $0x40] sm:$0xff]
  %v3296 = vld [vmem:[#allocation2 + $0x48] sm:$0xff]
  %v3297 = vld [vmem:[#allocation2 + $0x50] sm:$0xff]
  %v3298 = vld [vmem:[#allocation2 + $0x58] sm:$0xff]
  %v3299 = vld [vmem:[#allocation2 + $0x60] sm:$0xff]
  %v3300 = vld [vmem:[#allocation2 + $0x68] sm:$0xff]
  %v3301 = vld [vmem:[#allocation2 + $0x70] sm:$0xff]
  %v3302 = vld [vmem:[#allocation2 + $0x78] sm:$0xff]
  %v3303 = vld [vmem:[#allocation2 + $0x80] sm:$0xff]
  %v3304 = vld [vmem:[#allocation2 + $0x88] sm:$0xff]
  %v3305 = vld [vmem:[#allocation2 + $0x90] sm:$0xff]
  %v3306 = vld [vmem:[#allocation2 + $0x98] sm:$0xff]
  %v3307 = vld [vmem:[#allocation2 + $0xa0] sm:$0xff]
  %v3308 = vld [vmem:[#allocation2 + $0xa8] sm:$0xff]
  %v3309 = vld [vmem:[#allocation2 + $0xb0] sm:$0xff]
  %v3310 = vld [vmem:[#allocation2 + $0xb8] sm:$0xff]
  %v3311 = vld [vmem:[#allocation2 + $0xc0] sm:$0xff]
  %v3312 = vld [vmem:[#allocation2 + $0xc8] sm:$0xff]
  %v3313 = vld [vmem:[#allocation2 + $0xd0] sm:$0xff]
  %v3314 = vld [vmem:[#allocation2 + $0xd8] sm:$0xff]
  %v3315 = vld [vmem:[#allocation2 + $0xe0] sm:$0xff]
  %v3316 = vld [vmem:[#allocation2 + $0xe8] sm:$0xff]
  %v3317 = vld [vmem:[#allocation2 + $0xf0] sm:$0x11]
  %s3318 = scalar_lea.vmem [#allocation3], 512
  %v3319 = vld [vmem:[%s3318] sm:$0xff]
  %v3320 = vld [vmem:[%s3318 + $0x8] sm:$0xff]
  %v3321 = vld [vmem:[%s3318 + $0x10] sm:$0xff]
  %v3322 = vld [vmem:[%s3318 + $0x18] sm:$0xff]
  %v3323 = vld [vmem:[%s3318 + $0x20] sm:$0xff]
  %v3324 = vld [vmem:[%s3318 + $0x28] sm:$0xff]
  %v3325 = vld [vmem:[%s3318 + $0x30] sm:$0xff]
  %v3326 = vld [vmem:[%s3318 + $0x38] sm:$0xff]
  %v3327 = vld [vmem:[%s3318 + $0x40] sm:$0xff]
  %v3328 = vld [vmem:[%s3318 + $0x48] sm:$0xff]
  %v3329 = vld [vmem:[%s3318 + $0x50] sm:$0xff]
  %v3330 = vld [vmem:[%s3318 + $0x58] sm:$0xff]
  %v3331 = vld [vmem:[%s3318 + $0x60] sm:$0xff]
  %v3332 = vld [vmem:[%s3318 + $0x68] sm:$0xff]
  %v3333 = vld [vmem:[%s3318 + $0x70] sm:$0xff]
  %v3334 = vld [vmem:[%s3318 + $0x78] sm:$0xff]
  %v3335 = vld [vmem:[%s3318 + $0x80] sm:$0xff]
  %v3336 = vld [vmem:[%s3318 + $0x88] sm:$0xff]
  %v3337 = vld [vmem:[%s3318 + $0x90] sm:$0xff]
  %v3338 = vld [vmem:[%s3318 + $0x98] sm:$0xff]
  %v3339 = vld [vmem:[%s3318 + $0xa0] sm:$0xff]
  %v3340 = vld [vmem:[%s3318 + $0xa8] sm:$0xff]
  %v3341 = vld [vmem:[%s3318 + $0xb0] sm:$0xff]
  %v3342 = vld [vmem:[%s3318 + $0xb8] sm:$0xff]
  %v3343 = vld [vmem:[%s3318 + $0xc0] sm:$0xff]
  %v3344 = vld [vmem:[%s3318 + $0xc8] sm:$0xff]
  %v3345 = vld [vmem:[%s3318 + $0xd0] sm:$0xff]
  %v3346 = vld [vmem:[%s3318 + $0xd8] sm:$0xff]
  %v3347 = vld [vmem:[%s3318 + $0xe0] sm:$0xff]
  %v3348 = vld [vmem:[%s3318 + $0xe8] sm:$0xff]
  %v3349 = vld [vmem:[%s3318 + $0xf0] sm:$0xff]
  %v3350 = vld [vmem:[%s3318 + $0xf8] sm:$0xff]
  %v3380 = vunpack.c.l.b16 %v3289
  %v3381 = vunpack.c.h.b16 %v3289
  %v3382 = vunpack.c.l.b16 %v3290
  %v3383 = vunpack.c.h.b16 %v3290
  %v3384 = vunpack.c.l.b16 %v3291
  %v3385 = vunpack.c.h.b16 %v3291
  %v3386 = vunpack.c.l.b16 %v3292
  %v3387 = vunpack.c.h.b16 %v3292
  %v3388 = vunpack.c.l.b16 %v3293
  %v3389 = vunpack.c.h.b16 %v3293
  %v3390 = vunpack.c.l.b16 %v3294
  %v3391 = vunpack.c.h.b16 %v3294
  %v3392 = vunpack.c.l.b16 %v3295
  %v3393 = vunpack.c.h.b16 %v3295
  %v3394 = vunpack.c.l.b16 %v3296
  %v3395 = vunpack.c.h.b16 %v3296
  %v3396 = vunpack.c.l.b16 %v3297
  %v3397 = vunpack.c.h.b16 %v3297
  %v3398 = vunpack.c.l.b16 %v3298
  %v3399 = vunpack.c.h.b16 %v3298
  %v3400 = vunpack.c.l.b16 %v3299
  %v3401 = vunpack.c.h.b16 %v3299
  %v3402 = vunpack.c.l.b16 %v3300
  %v3403 = vunpack.c.h.b16 %v3300
  %v3404 = vunpack.c.l.b16 %v3301
  %v3405 = vunpack.c.h.b16 %v3301
  %v3406 = vunpack.c.l.b16 %v3302
  %v3407 = vunpack.c.h.b16 %v3302
  %v3408 = vunpack.c.l.b16 %v3303
  %v3409 = vunpack.c.h.b16 %v3303
  %v3410 = vunpack.c.l.b16 %v3304
  %v3411 = vunpack.c.h.b16 %v3304
  %v3412 = vunpack.c.l.b16 %v3305
  %v3413 = vunpack.c.h.b16 %v3305
  %v3414 = vunpack.c.l.b16 %v3306
  %v3415 = vunpack.c.h.b16 %v3306
  %v3416 = vunpack.c.l.b16 %v3307
  %v3417 = vunpack.c.h.b16 %v3307
  %v3418 = vunpack.c.l.b16 %v3308
  %v3419 = vunpack.c.h.b16 %v3308
  %v3420 = vunpack.c.l.b16 %v3309
  %v3421 = vunpack.c.h.b16 %v3309
  %v3422 = vunpack.c.l.b16 %v3310
  %v3423 = vunpack.c.h.b16 %v3310
  %v3424 = vunpack.c.l.b16 %v3311
  %v3425 = vunpack.c.h.b16 %v3311
  %v3426 = vunpack.c.l.b16 %v3312
  %v3427 = vunpack.c.h.b16 %v3312
  %v3428 = vunpack.c.l.b16 %v3313
  %v3429 = vunpack.c.h.b16 %v3313
  %v3430 = vunpack.c.l.b16 %v3314
  %v3431 = vunpack.c.h.b16 %v3314
  %v3432 = vunpack.c.l.b16 %v3315
  %v3433 = vunpack.c.h.b16 %v3315
  %v3434 = vunpack.c.l.b16 %v3316
  %v3435 = vunpack.c.h.b16 %v3316
  %v3436 = vunpack.c.l.b16 %v3317
  %v3437 = vunpack.c.h.b16 %v3317
  %v3438 = vpack.c.b16 %v3382, %v3380
  %v3439 = vpack.c.b16 %v3383, %v3381
  %v3440 = vpack.c.b16 %v3386, %v3384
  %v3441 = vpack.c.b16 %v3387, %v3385
  %v3442 = vpack.c.b16 %v3390, %v3388
  %v3443 = vpack.c.b16 %v3391, %v3389
  %v3444 = vpack.c.b16 %v3394, %v3392
  %v3445 = vpack.c.b16 %v3395, %v3393
  %v3446 = vpack.c.b16 %v3398, %v3396
  %v3447 = vpack.c.b16 %v3399, %v3397
  %v3448 = vpack.c.b16 %v3402, %v3400
  %v3449 = vpack.c.b16 %v3403, %v3401
  %v3450 = vpack.c.b16 %v3406, %v3404
  %v3451 = vpack.c.b16 %v3407, %v3405
  %v3452 = vpack.c.b16 %v3410, %v3408
  %v3453 = vpack.c.b16 %v3411, %v3409
  %v3454 = vpack.c.b16 %v3414, %v3412
  %v3455 = vpack.c.b16 %v3415, %v3413
  %v3456 = vpack.c.b16 %v3418, %v3416
  %v3457 = vpack.c.b16 %v3419, %v3417
  %v3458 = vpack.c.b16 %v3422, %v3420
  %v3459 = vpack.c.b16 %v3423, %v3421
  %v3460 = vpack.c.b16 %v3426, %v3424
  %v3461 = vpack.c.b16 %v3427, %v3425
  %v3462 = vpack.c.b16 %v3430, %v3428
  %v3463 = vpack.c.b16 %v3431, %v3429
  %v3464 = vpack.c.b16 %v3434, %v3432
  %v3465 = vpack.c.b16 %v3435, %v3433
  %v3466 = vpack.c.b16 %v3436, %v3436
  %v3467 = vpack.c.b16 %v3437, %v3437
  %vm3468 = vsmask.f32 7424
  %v3470 = vshrl.u32 %v3438, 16
  %v3472 = vshll.u32 %v3438, 16
  %v3474 = vrot.slane %v3472, 1
  %v3475 = vor.u32 %v3470, %v3474
  %v3477 = vshll.u32 %v3440, 16
  %v3479 = vrot.slane %v3477, 1
  %v3480 = vsel %vm3468, %v3475, %v3479
  %v3482 = vshrl.u32 %v3439, 16
  %v3484 = vshll.u32 %v3439, 16
  %v3486 = vrot.slane %v3484, 1
  %v3487 = vor.u32 %v3482, %v3486
  %v3489 = vshll.u32 %v3441, 16
  %v3491 = vrot.slane %v3489, 1
  %v3492 = vsel %vm3468, %v3487, %v3491
  %v3493 = vshrl.u32 %v3440, 16
  %v3495 = vor.u32 %v3493, %v3479
  %v3497 = vshll.u32 %v3442, 16
  %v3499 = vrot.slane %v3497, 1
  %v3500 = vsel %vm3468, %v3495, %v3499
  %v3501 = vshrl.u32 %v3441, 16
  %v3503 = vor.u32 %v3501, %v3491
  %v3505 = vshll.u32 %v3443, 16
  %v3507 = vrot.slane %v3505, 1
  %v3508 = vsel %vm3468, %v3503, %v3507
  %v3509 = vshrl.u32 %v3442, 16
  %v3511 = vor.u32 %v3509, %v3499
  %v3513 = vshll.u32 %v3444, 16
  %v3515 = vrot.slane %v3513, 1
  %v3516 = vsel %vm3468, %v3511, %v3515
  %v3517 = vshrl.u32 %v3443, 16
  %v3519 = vor.u32 %v3517, %v3507
  %v3521 = vshll.u32 %v3445, 16
  %v3523 = vrot.slane %v3521, 1
  %v3524 = vsel %vm3468, %v3519, %v3523
  %v3525 = vshrl.u32 %v3444, 16
  %v3527 = vor.u32 %v3525, %v3515
  %v3529 = vshll.u32 %v3446, 16
  %v3531 = vrot.slane %v3529, 1
  %v3532 = vsel %vm3468, %v3527, %v3531
  %v3533 = vshrl.u32 %v3445, 16
  %v3535 = vor.u32 %v3533, %v3523
  %v3537 = vshll.u32 %v3447, 16
  %v3539 = vrot.slane %v3537, 1
  %v3540 = vsel %vm3468, %v3535, %v3539
  %v3541 = vshrl.u32 %v3446, 16
  %v3543 = vor.u32 %v3541, %v3531
  %v3545 = vshll.u32 %v3448, 16
  %v3547 = vrot.slane %v3545, 1
  %v3548 = vsel %vm3468, %v3543, %v3547
  %v3549 = vshrl.u32 %v3447, 16
  %v3551 = vor.u32 %v3549, %v3539
  %v3553 = vshll.u32 %v3449, 16
  %v3555 = vrot.slane %v3553, 1
  %v3556 = vsel %vm3468, %v3551, %v3555
  %v3557 = vshrl.u32 %v3448, 16
  %v3559 = vor.u32 %v3557, %v3547
  %v3561 = vshll.u32 %v3450, 16
  %v3563 = vrot.slane %v3561, 1
  %v3564 = vsel %vm3468, %v3559, %v3563
  %v3565 = vshrl.u32 %v3449, 16
  %v3567 = vor.u32 %v3565, %v3555
  %v3569 = vshll.u32 %v3451, 16
  %v3571 = vrot.slane %v3569, 1
  %v3572 = vsel %vm3468, %v3567, %v3571
  %v3573 = vshrl.u32 %v3450, 16
  %v3575 = vor.u32 %v3573, %v3563
  %v3577 = vshll.u32 %v3452, 16
  %v3579 = vrot.slane %v3577, 1
  %v3580 = vsel %vm3468, %v3575, %v3579
  %v3581 = vshrl.u32 %v3451, 16
  %v3583 = vor.u32 %v3581, %v3571
  %v3585 = vshll.u32 %v3453, 16
  %v3587 = vrot.slane %v3585, 1
  %v3588 = vsel %vm3468, %v3583, %v3587
  %v3589 = vshrl.u32 %v3452, 16
  %v3591 = vor.u32 %v3589, %v3579
  %v3593 = vshll.u32 %v3454, 16
  %v3595 = vrot.slane %v3593, 1
  %v3596 = vsel %vm3468, %v3591, %v3595
  %v3597 = vshrl.u32 %v3453, 16
  %v3599 = vor.u32 %v3597, %v3587
  %v3601 = vshll.u32 %v3455, 16
  %v3603 = vrot.slane %v3601, 1
  %v3604 = vsel %vm3468, %v3599, %v3603
  %v3605 = vshrl.u32 %v3454, 16
  %v3607 = vor.u32 %v3605, %v3595
  %v3609 = vshll.u32 %v3456, 16
  %v3611 = vrot.slane %v3609, 1
  %v3612 = vsel %vm3468, %v3607, %v3611
  %v3613 = vshrl.u32 %v3455, 16
  %v3615 = vor.u32 %v3613, %v3603
  %v3617 = vshll.u32 %v3457, 16
  %v3619 = vrot.slane %v3617, 1
  %v3620 = vsel %vm3468, %v3615, %v3619
  %v3621 = vshrl.u32 %v3456, 16
  %v3623 = vor.u32 %v3621, %v3611
  %v3625 = vshll.u32 %v3458, 16
  %v3627 = vrot.slane %v3625, 1
  %v3628 = vsel %vm3468, %v3623, %v3627
  %v3629 = vshrl.u32 %v3457, 16
  %v3631 = vor.u32 %v3629, %v3619
  %v3633 = vshll.u32 %v3459, 16
  %v3635 = vrot.slane %v3633, 1
  %v3636 = vsel %vm3468, %v3631, %v3635
  %v3637 = vshrl.u32 %v3458, 16
  %v3639 = vor.u32 %v3637, %v3627
  %v3641 = vshll.u32 %v3460, 16
  %v3643 = vrot.slane %v3641, 1
  %v3644 = vsel %vm3468, %v3639, %v3643
  %v3645 = vshrl.u32 %v3459, 16
  %v3647 = vor.u32 %v3645, %v3635
  %v3649 = vshll.u32 %v3461, 16
  %v3651 = vrot.slane %v3649, 1
  %v3652 = vsel %vm3468, %v3647, %v3651
  %v3653 = vshrl.u32 %v3460, 16
  %v3655 = vor.u32 %v3653, %v3643
  %v3657 = vshll.u32 %v3462, 16
  %v3659 = vrot.slane %v3657, 1
  %v3660 = vsel %vm3468, %v3655, %v3659
  %v3661 = vshrl.u32 %v3461, 16
  %v3663 = vor.u32 %v3661, %v3651
  %v3665 = vshll.u32 %v3463, 16
  %v3667 = vrot.slane %v3665, 1
  %v3668 = vsel %vm3468, %v3663, %v3667
  %v3669 = vshrl.u32 %v3462, 16
  %v3671 = vor.u32 %v3669, %v3659
  %v3673 = vshll.u32 %v3464, 16
  %v3675 = vrot.slane %v3673, 1
  %v3676 = vsel %vm3468, %v3671, %v3675
  %v3677 = vshrl.u32 %v3463, 16
  %v3679 = vor.u32 %v3677, %v3667
  %v3681 = vshll.u32 %v3465, 16
  %v3683 = vrot.slane %v3681, 1
  %v3684 = vsel %vm3468, %v3679, %v3683
  %v3685 = vshrl.u32 %v3464, 16
  %v3687 = vor.u32 %v3685, %v3675
  %v3689 = vshll.u32 %v3466, 16
  %v3691 = vrot.slane %v3689, 1
  %v3692 = vsel %vm3468, %v3687, %v3691
  %v3693 = vshrl.u32 %v3465, 16
  %v3695 = vor.u32 %v3693, %v3683
  %v3697 = vshll.u32 %v3467, 16
  %v3699 = vrot.slane %v3697, 1
  %v3700 = vsel %vm3468, %v3695, %v3699
  %v3761 = vunpack.c.l.b16 %v3319
  %v3762 = vunpack.c.h.b16 %v3319
  %v3763 = vunpack.c.l.b16 %v3320
  %v3764 = vunpack.c.h.b16 %v3320
  %v3765 = vunpack.c.l.b16 %v3321
  %v3766 = vunpack.c.h.b16 %v3321
  %v3767 = vunpack.c.l.b16 %v3322
  %v3768 = vunpack.c.h.b16 %v3322
  %v3769 = vunpack.c.l.b16 %v3323
  %v3770 = vunpack.c.h.b16 %v3323
  %v3771 = vunpack.c.l.b16 %v3324
  %v3772 = vunpack.c.h.b16 %v3324
  %v3773 = vunpack.c.l.b16 %v3325
  %v3774 = vunpack.c.h.b16 %v3325
  %v3775 = vunpack.c.l.b16 %v3326
  %v3776 = vunpack.c.h.b16 %v3326
  %v3777 = vunpack.c.l.b16 %v3327
  %v3778 = vunpack.c.h.b16 %v3327
  %v3779 = vunpack.c.l.b16 %v3328
  %v3780 = vunpack.c.h.b16 %v3328
  %v3781 = vunpack.c.l.b16 %v3329
  %v3782 = vunpack.c.h.b16 %v3329
  %v3783 = vunpack.c.l.b16 %v3330
  %v3784 = vunpack.c.h.b16 %v3330
  %v3785 = vunpack.c.l.b16 %v3331
  %v3786 = vunpack.c.h.b16 %v3331
  %v3787 = vunpack.c.l.b16 %v3332
  %v3788 = vunpack.c.h.b16 %v3332
  %v3789 = vunpack.c.l.b16 %v3333
  %v3790 = vunpack.c.h.b16 %v3333
  %v3791 = vunpack.c.l.b16 %v3334
  %v3792 = vunpack.c.h.b16 %v3334
  %v3793 = vunpack.c.l.b16 %v3335
  %v3794 = vunpack.c.h.b16 %v3335
  %v3795 = vunpack.c.l.b16 %v3336
  %v3796 = vunpack.c.h.b16 %v3336
  %v3797 = vunpack.c.l.b16 %v3337
  %v3798 = vunpack.c.h.b16 %v3337
  %v3799 = vunpack.c.l.b16 %v3338
  %v3800 = vunpack.c.h.b16 %v3338
  %v3801 = vunpack.c.l.b16 %v3339
  %v3802 = vunpack.c.h.b16 %v3339
  %v3803 = vunpack.c.l.b16 %v3340
  %v3804 = vunpack.c.h.b16 %v3340
  %v3805 = vunpack.c.l.b16 %v3341
  %v3806 = vunpack.c.h.b16 %v3341
  %v3807 = vunpack.c.l.b16 %v3342
  %v3808 = vunpack.c.h.b16 %v3342
  %v3809 = vunpack.c.l.b16 %v3343
  %v3810 = vunpack.c.h.b16 %v3343
  %v3811 = vunpack.c.l.b16 %v3344
  %v3812 = vunpack.c.h.b16 %v3344
  %v3813 = vunpack.c.l.b16 %v3345
  %v3814 = vunpack.c.h.b16 %v3345
  %v3815 = vunpack.c.l.b16 %v3346
  %v3816 = vunpack.c.h.b16 %v3346
  %v3817 = vunpack.c.l.b16 %v3347
  %v3818 = vunpack.c.h.b16 %v3347
  %v3819 = vunpack.c.l.b16 %v3348
  %v3820 = vunpack.c.h.b16 %v3348
  %v3821 = vunpack.c.l.b16 %v3349
  %v3822 = vunpack.c.h.b16 %v3349
  %v3823 = vunpack.c.l.b16 %v3350
  %v3824 = vunpack.c.h.b16 %v3350
  %v3825 = vpack.c.b16 %v3763, %v3761
  %v3826 = vpack.c.b16 %v3764, %v3762
  %v3827 = vpack.c.b16 %v3767, %v3765
  %v3828 = vpack.c.b16 %v3768, %v3766
  %v3829 = vpack.c.b16 %v3771, %v3769
  %v3830 = vpack.c.b16 %v3772, %v3770
  %v3831 = vpack.c.b16 %v3775, %v3773
  %v3832 = vpack.c.b16 %v3776, %v3774
  %v3833 = vpack.c.b16 %v3779, %v3777
  %v3834 = vpack.c.b16 %v3780, %v3778
  %v3835 = vpack.c.b16 %v3783, %v3781
  %v3836 = vpack.c.b16 %v3784, %v3782
  %v3837 = vpack.c.b16 %v3787, %v3785
  %v3838 = vpack.c.b16 %v3788, %v3786
  %v3839 = vpack.c.b16 %v3791, %v3789
  %v3840 = vpack.c.b16 %v3792, %v3790
  %v3841 = vpack.c.b16 %v3795, %v3793
  %v3842 = vpack.c.b16 %v3796, %v3794
  %v3843 = vpack.c.b16 %v3799, %v3797
  %v3844 = vpack.c.b16 %v3800, %v3798
  %v3845 = vpack.c.b16 %v3803, %v3801
  %v3846 = vpack.c.b16 %v3804, %v3802
  %v3847 = vpack.c.b16 %v3807, %v3805
  %v3848 = vpack.c.b16 %v3808, %v3806
  %v3849 = vpack.c.b16 %v3811, %v3809
  %v3850 = vpack.c.b16 %v3812, %v3810
  %v3851 = vpack.c.b16 %v3815, %v3813
  %v3852 = vpack.c.b16 %v3816, %v3814
  %v3853 = vpack.c.b16 %v3819, %v3817
  %v3854 = vpack.c.b16 %v3820, %v3818
  %v3855 = vpack.c.b16 %v3823, %v3821
  %v3856 = vpack.c.b16 %v3824, %v3822
  %3889 = vmatprep.subr.bf16.mxu0 %v3840
  %3890 = vmatpush1.bf16.msra.mxu0 %v3839
  %3891 = vmatprep.subr.bf16.mxu0 %v3838
  %3892 = vmatpush1.bf16.msra.mxu0 %v3837
  %3893 = vmatprep.subr.bf16.mxu0 %v3836
  %3894 = vmatpush1.bf16.msra.mxu0 %v3835
  %3895 = vmatprep.subr.bf16.mxu0 %v3834
  %3896 = vmatpush1.bf16.msra.mxu0 %v3833
  %3897 = vmatprep.subr.bf16.mxu0 %v3832
  %3898 = vmatpush1.bf16.msra.mxu0 %v3831
  %3899 = vmatprep.subr.bf16.mxu0 %v3830
  %3900 = vmatpush1.bf16.msra.mxu0 %v3829
  %3901 = vmatprep.subr.bf16.mxu0 %v3828
  %3902 = vmatpush1.bf16.msra.mxu0 %v3827
  %3903 = vmatprep.subr.bf16.mxu0 %v3826
  %3904 = vmatpush1.bf16.msra.mxu0 %v3825
  %3905 = vmatprep.subr.bf16.mxu0 %v3856
  %3906 = vmatpush2.bf16.msra.mxu0 %v3855
  %3907 = vmatprep.subr.bf16.mxu0 %v3854
  %3908 = vmatpush2.bf16.msra.mxu0 %v3853
  %3909 = vmatprep.subr.bf16.mxu0 %v3852
  %3910 = vmatpush2.bf16.msra.mxu0 %v3851
  %3911 = vmatprep.subr.bf16.mxu0 %v3850
  %3912 = vmatpush2.bf16.msra.mxu0 %v3849
  %3913 = vmatprep.subr.bf16.mxu0 %v3848
  %3914 = vmatpush2.bf16.msra.mxu0 %v3847
  %3915 = vmatprep.subr.bf16.mxu0 %v3846
  %3916 = vmatpush2.bf16.msra.mxu0 %v3845
  %3917 = vmatprep.subr.bf16.mxu0 %v3844
  %3918 = vmatpush2.bf16.msra.mxu0 %v3843
  %3919 = vmatprep.subr.bf16.mxu0 %v3842
  %3920 = vmatpush2.bf16.msra.mxu0 %v3841
  %3921 = vmatprep.mubr.bf16.mxu0 %v3492
  %3922 = vmatmul.mubr.bf16.gmra.mxu0 %v3480
  %v3923 = vpop.f32.mrf.mxu0
  %v3924 = vadd.f32 0.0, %v3923
  %v3925 = vpop.f32.mrf.mxu0
  %v3926 = vadd.f32 0.0, %v3925
  %v3927 = vpop.f32.mrf.mxu0
  %v3928 = vadd.f32 0.0, %v3927
  %v3929 = vpop.f32.mrf.mxu0
  %v3930 = vadd.f32 0.0, %v3929
  %3931 = vmatprep.mubr.bf16.mxu0 %v3508
  %3932 = vmatmul.mubr.bf16.gmra.mxu0 %v3500
  %v3933 = vpop.f32.mrf.mxu0
  %v3934 = vadd.f32 0.0, %v3933
  %v3935 = vpop.f32.mrf.mxu0
  %v3936 = vadd.f32 0.0, %v3935
  %v3937 = vpop.f32.mrf.mxu0
  %v3938 = vadd.f32 0.0, %v3937
  %v3939 = vpop.f32.mrf.mxu0
  %v3940 = vadd.f32 0.0, %v3939
  %3941 = vmatprep.mubr.bf16.mxu0 %v3524
  %3942 = vmatmul.mubr.bf16.gmra.mxu0 %v3516
  %v3943 = vpop.f32.mrf.mxu0
  %v3944 = vadd.f32 0.0, %v3943
  %v3945 = vpop.f32.mrf.mxu0
  %v3946 = vadd.f32 0.0, %v3945
  %v3947 = vpop.f32.mrf.mxu0
  %v3948 = vadd.f32 0.0, %v3947
  %v3949 = vpop.f32.mrf.mxu0
  %v3950 = vadd.f32 0.0, %v3949
  %3951 = vmatprep.mubr.bf16.mxu0 %v3540
  %3952 = vmatmul.mubr.bf16.gmra.mxu0 %v3532
  %v3953 = vpop.f32.mrf.mxu0
  %v3954 = vadd.f32 0.0, %v3953
  %v3955 = vpop.f32.mrf.mxu0
  %v3956 = vadd.f32 0.0, %v3955
  %v3957 = vpop.f32.mrf.mxu0
  %v3958 = vadd.f32 0.0, %v3957
  %v3959 = vpop.f32.mrf.mxu0
  %v3960 = vadd.f32 0.0, %v3959
  %3961 = vmatprep.mubr.bf16.mxu0 %v3556
  %3962 = vmatmul.mubr.bf16.gmra.mxu0 %v3548
  %v3963 = vpop.f32.mrf.mxu0
  %v3964 = vadd.f32 0.0, %v3963
  %v3965 = vpop.f32.mrf.mxu0
  %v3966 = vadd.f32 0.0, %v3965
  %v3967 = vpop.f32.mrf.mxu0
  %v3968 = vadd.f32 0.0, %v3967
  %v3969 = vpop.f32.mrf.mxu0
  %v3970 = vadd.f32 0.0, %v3969
  %3971 = vmatprep.mubr.bf16.mxu0 %v3572
  %3972 = vmatmul.mubr.bf16.gmra.mxu0 %v3564
  %v3973 = vpop.f32.mrf.mxu0
  %v3974 = vadd.f32 0.0, %v3973
  %v3975 = vpop.f32.mrf.mxu0
  %v3976 = vadd.f32 0.0, %v3975
  %v3977 = vpop.f32.mrf.mxu0
  %v3978 = vadd.f32 0.0, %v3977
  %v3979 = vpop.f32.mrf.mxu0
  %v3980 = vadd.f32 0.0, %v3979
  %3981 = vmatprep.mubr.bf16.mxu0 %v3588
  %3982 = vmatmul.mubr.bf16.gmra.mxu0 %v3580
  %v3983 = vpop.f32.mrf.mxu0
  %v3984 = vadd.f32 0.0, %v3983
  %v3985 = vpop.f32.mrf.mxu0
  %v3986 = vadd.f32 0.0, %v3985
  %v3987 = vpop.f32.mrf.mxu0
  %v3988 = vadd.f32 0.0, %v3987
  %v3989 = vpop.f32.mrf.mxu0
  %v3990 = vadd.f32 0.0, %v3989
  %3991 = vmatprep.mubr.bf16.mxu0 %v3604
  %3992 = vmatmul.mubr.bf16.gmra.mxu0 %v3596
  %v3993 = vpop.f32.mrf.mxu0
  %v3994 = vadd.f32 0.0, %v3993
  %v3995 = vpop.f32.mrf.mxu0
  %v3996 = vadd.f32 0.0, %v3995
  %v3997 = vpop.f32.mrf.mxu0
  %v3998 = vadd.f32 0.0, %v3997
  %v3999 = vpop.f32.mrf.mxu0
  %v4000 = vadd.f32 0.0, %v3999
  %4001 = vmatprep.mubr.bf16.mxu0 %v3620
  %4002 = vmatmul.mubr.bf16.gmra.mxu0 %v3612
  %v4003 = vpop.f32.mrf.mxu0
  %v4004 = vadd.f32 0.0, %v4003
  %v4005 = vpop.f32.mrf.mxu0
  %v4006 = vadd.f32 0.0, %v4005
  %v4007 = vpop.f32.mrf.mxu0
  %v4008 = vadd.f32 0.0, %v4007
  %v4009 = vpop.f32.mrf.mxu0
  %v4010 = vadd.f32 0.0, %v4009
  %4011 = vmatprep.mubr.bf16.mxu0 %v3636
  %4012 = vmatmul.mubr.bf16.gmra.mxu0 %v3628
  %v4013 = vpop.f32.mrf.mxu0
  %v4014 = vadd.f32 0.0, %v4013
  %v4015 = vpop.f32.mrf.mxu0
  %v4016 = vadd.f32 0.0, %v4015
  %v4017 = vpop.f32.mrf.mxu0
  %v4018 = vadd.f32 0.0, %v4017
  %v4019 = vpop.f32.mrf.mxu0
  %v4020 = vadd.f32 0.0, %v4019
  %4021 = vmatprep.mubr.bf16.mxu0 %v3652
  %4022 = vmatmul.mubr.bf16.gmra.mxu0 %v3644
  %v4023 = vpop.f32.mrf.mxu0
  %v4024 = vadd.f32 0.0, %v4023
  %v4025 = vpop.f32.mrf.mxu0
  %v4026 = vadd.f32 0.0, %v4025
  %v4027 = vpop.f32.mrf.mxu0
  %v4028 = vadd.f32 0.0, %v4027
  %v4029 = vpop.f32.mrf.mxu0
  %v4030 = vadd.f32 0.0, %v4029
  %4031 = vmatprep.mubr.bf16.mxu0 %v3668
  %4032 = vmatmul.mubr.bf16.gmra.mxu0 %v3660
  %v4033 = vpop.f32.mrf.mxu0
  %v4034 = vadd.f32 0.0, %v4033
  %v4035 = vpop.f32.mrf.mxu0
  %v4036 = vadd.f32 0.0, %v4035
  %v4037 = vpop.f32.mrf.mxu0
  %v4038 = vadd.f32 0.0, %v4037
  %v4039 = vpop.f32.mrf.mxu0
  %v4040 = vadd.f32 0.0, %v4039
  %4041 = vmatprep.mubr.bf16.mxu0 %v3684
  %4042 = vmatmul.mubr.bf16.gmra.mxu0 %v3676
  %v4043 = vpop.f32.mrf.mxu0
  %v4044 = vadd.f32 0.0, %v4043
  %v4045 = vpop.f32.mrf.mxu0
  %v4046 = vadd.f32 0.0, %v4045
  %v4047 = vpop.f32.mrf.mxu0
  %v4048 = vadd.f32 0.0, %v4047
  %v4049 = vpop.f32.mrf.mxu0
  %v4050 = vadd.f32 0.0, %v4049
  %4051 = vmatprep.mubr.bf16.mxu0 %v3700
  %4052 = vmatmul.mubr.bf16.gmra.mxu0 %v3692
  %v4053 = vpop.f32.mrf.mxu0
  %v4054 = vadd.f32 0.0, %v4053
  %v4055 = vpop.f32.mrf.mxu0
  %v4056 = vadd.f32 0.0, %v4055
  %v4057 = vpop.f32.mrf.mxu0
  %v4058 = vadd.f32 0.0, %v4057
  %v4059 = vpop.f32.mrf.mxu0
  %v4060 = vadd.f32 0.0, %v4059
  %4061 = vdwg.mxu0
  %v4062 = vld [vmem:[%s7] sm:$0xff]
  %v4063 = vld [vmem:[%s7 + $0x8] sm:$0xff]
  %v4064 = vld [vmem:[%s7 + $0x10] sm:$0xff]
  %v4065 = vld [vmem:[%s7 + $0x18] sm:$0xff]
  %v4066 = vld [vmem:[%s7 + $0x20] sm:$0xff]
  %v4067 = vld [vmem:[%s7 + $0x28] sm:$0xff]
  %v4068 = vld [vmem:[%s7 + $0x30] sm:$0xff]
  %v4069 = vld [vmem:[%s7 + $0x38] sm:$0xff]
  %v4070 = vld [vmem:[%s7 + $0x40] sm:$0xff]
  %v4071 = vld [vmem:[%s7 + $0x48] sm:$0xff]
  %v4072 = vld [vmem:[%s7 + $0x50] sm:$0xff]
  %v4073 = vld [vmem:[%s7 + $0x58] sm:$0xff]
  %v4074 = vld [vmem:[%s7 + $0x60] sm:$0xff]
  %v4075 = vld [vmem:[%s7 + $0x68] sm:$0xff]
  %v4076 = vld [vmem:[%s7 + $0x70] sm:$0xff]
  %v4077 = vld [vmem:[%s7 + $0x78] sm:$0xff]
  %v4078 = vld [vmem:[%s7 + $0x80] sm:$0xff]
  %v4079 = vld [vmem:[%s7 + $0x88] sm:$0xff]
  %v4080 = vld [vmem:[%s7 + $0x90] sm:$0xff]
  %v4081 = vld [vmem:[%s7 + $0x98] sm:$0xff]
  %v4082 = vld [vmem:[%s7 + $0xa0] sm:$0xff]
  %v4083 = vld [vmem:[%s7 + $0xa8] sm:$0xff]
  %v4084 = vld [vmem:[%s7 + $0xb0] sm:$0xff]
  %v4085 = vld [vmem:[%s7 + $0xb8] sm:$0xff]
  %v4086 = vld [vmem:[%s7 + $0xc0] sm:$0xff]
  %v4087 = vld [vmem:[%s7 + $0xc8] sm:$0xff]
  %v4088 = vld [vmem:[%s7 + $0xd0] sm:$0xff]
  %v4089 = vld [vmem:[%s7 + $0xd8] sm:$0xff]
  %v4090 = vld [vmem:[%s7 + $0xe0] sm:$0xff]
  %v4091 = vld [vmem:[%s7 + $0xe8] sm:$0xff]
  %v4092 = vld [vmem:[%s7 + $0xf0] sm:$0xff]
  %v4093 = vld [vmem:[%s7 + $0xf8] sm:$0xff]
  %v4094 = vld [vmem:[%s7 + $0x100] sm:$0xff]
  %v4095 = vld [vmem:[%s7 + $0x108] sm:$0xff]
  %v4096 = vld [vmem:[%s7 + $0x110] sm:$0xff]
  %v4097 = vld [vmem:[%s7 + $0x118] sm:$0xff]
  %v4098 = vld [vmem:[%s7 + $0x120] sm:$0xff]
  %v4099 = vld [vmem:[%s7 + $0x128] sm:$0xff]
  %v4100 = vld [vmem:[%s7 + $0x130] sm:$0xff]
  %v4101 = vld [vmem:[%s7 + $0x138] sm:$0xff]
  %v4102 = vld [vmem:[%s7 + $0x140] sm:$0xff]
  %v4103 = vld [vmem:[%s7 + $0x148] sm:$0xff]
  %v4104 = vld [vmem:[%s7 + $0x150] sm:$0xff]
  %v4105 = vld [vmem:[%s7 + $0x158] sm:$0xff]
  %v4106 = vld [vmem:[%s7 + $0x160] sm:$0xff]
  %v4107 = vld [vmem:[%s7 + $0x168] sm:$0xff]
  %v4108 = vld [vmem:[%s7 + $0x170] sm:$0xff]
  %v4109 = vld [vmem:[%s7 + $0x178] sm:$0xff]
  %v4110 = vld [vmem:[%s7 + $0x180] sm:$0xff]
  %v4111 = vld [vmem:[%s7 + $0x188] sm:$0xff]
  %v4112 = vld [vmem:[%s7 + $0x190] sm:$0xff]
  %v4113 = vld [vmem:[%s7 + $0x198] sm:$0xff]
  %v4114 = vld [vmem:[%s7 + $0x1a0] sm:$0xff]
  %v4115 = vld [vmem:[%s7 + $0x1a8] sm:$0xff]
  %v4116 = vld [vmem:[%s7 + $0x1b0] sm:$0xff]
  %v4117 = vld [vmem:[%s7 + $0x1b8] sm:$0xff]
  %v4118 = vadd.f32 %v4062, %v3924
  %v4119 = vadd.f32 %v4063, %v3926
  %v4120 = vadd.f32 %v4064, %v3928
  %v4121 = vadd.f32 %v4065, %v3930
  %v4122 = vadd.f32 %v4066, %v3934
  %v4123 = vadd.f32 %v4067, %v3936
  %v4124 = vadd.f32 %v4068, %v3938
  %v4125 = vadd.f32 %v4069, %v3940
  %v4126 = vadd.f32 %v4070, %v3944
  %v4127 = vadd.f32 %v4071, %v3946
  %v4128 = vadd.f32 %v4072, %v3948
  %v4129 = vadd.f32 %v4073, %v3950
  %v4130 = vadd.f32 %v4074, %v3954
  %v4131 = vadd.f32 %v4075, %v3956
  %v4132 = vadd.f32 %v4076, %v3958
  %v4133 = vadd.f32 %v4077, %v3960
  %v4134 = vadd.f32 %v4078, %v3964
  %v4135 = vadd.f32 %v4079, %v3966
  %v4136 = vadd.f32 %v4080, %v3968
  %v4137 = vadd.f32 %v4081, %v3970
  %v4138 = vadd.f32 %v4082, %v3974
  %v4139 = vadd.f32 %v4083, %v3976
  %v4140 = vadd.f32 %v4084, %v3978
  %v4141 = vadd.f32 %v4085, %v3980
  %v4142 = vadd.f32 %v4086, %v3984
  %v4143 = vadd.f32 %v4087, %v3986
  %v4144 = vadd.f32 %v4088, %v3988
  %v4145 = vadd.f32 %v4089, %v3990
  %v4146 = vadd.f32 %v4090, %v3994
  %v4147 = vadd.f32 %v4091, %v3996
  %v4148 = vadd.f32 %v4092, %v3998
  %v4149 = vadd.f32 %v4093, %v4000
  %v4150 = vadd.f32 %v4094, %v4004
  %v4151 = vadd.f32 %v4095, %v4006
  %v4152 = vadd.f32 %v4096, %v4008
  %v4153 = vadd.f32 %v4097, %v4010
  %v4154 = vadd.f32 %v4098, %v4014
  %v4155 = vadd.f32 %v4099, %v4016
  %v4156 = vadd.f32 %v4100, %v4018
  %v4157 = vadd.f32 %v4101, %v4020
  %v4158 = vadd.f32 %v4102, %v4024
  %v4159 = vadd.f32 %v4103, %v4026
  %v4160 = vadd.f32 %v4104, %v4028
  %v4161 = vadd.f32 %v4105, %v4030
  %v4162 = vadd.f32 %v4106, %v4034
  %v4163 = vadd.f32 %v4107, %v4036
  %v4164 = vadd.f32 %v4108, %v4038
  %v4165 = vadd.f32 %v4109, %v4040
  %v4166 = vadd.f32 %v4110, %v4044
  %v4167 = vadd.f32 %v4111, %v4046
  %v4168 = vadd.f32 %v4112, %v4048
  %v4169 = vadd.f32 %v4113, %v4050
  %v4170 = vadd.f32 %v4114, %v4054
  %v4171 = vadd.f32 %v4115, %v4056
  %v4172 = vadd.f32 %v4116, %v4058
  %v4173 = vadd.f32 %v4117, %v4060
  %4174 = vst [vmem:[%s7] sm:$0xff] %v4118
  %4175 = vst [vmem:[%s7 + $0x8] sm:$0xff] %v4119
  %4176 = vst [vmem:[%s7 + $0x10] sm:$0xff] %v4120
  %4177 = vst [vmem:[%s7 + $0x18] sm:$0xff] %v4121
  %4178 = vst [vmem:[%s7 + $0x20] sm:$0xff] %v4122
  %4179 = vst [vmem:[%s7 + $0x28] sm:$0xff] %v4123
  %4180 = vst [vmem:[%s7 + $0x30] sm:$0xff] %v4124
  %4181 = vst [vmem:[%s7 + $0x38] sm:$0xff] %v4125
  %4182 = vst [vmem:[%s7 + $0x40] sm:$0xff] %v4126
  %4183 = vst [vmem:[%s7 + $0x48] sm:$0xff] %v4127
  %4184 = vst [vmem:[%s7 + $0x50] sm:$0xff] %v4128
  %4185 = vst [vmem:[%s7 + $0x58] sm:$0xff] %v4129
  %4186 = vst [vmem:[%s7 + $0x60] sm:$0xff] %v4130
  %4187 = vst [vmem:[%s7 + $0x68] sm:$0xff] %v4131
  %4188 = vst [vmem:[%s7 + $0x70] sm:$0xff] %v4132
  %4189 = vst [vmem:[%s7 + $0x78] sm:$0xff] %v4133
  %4190 = vst [vmem:[%s7 + $0x80] sm:$0xff] %v4134
  %4191 = vst [vmem:[%s7 + $0x88] sm:$0xff] %v4135
  %4192 = vst [vmem:[%s7 + $0x90] sm:$0xff] %v4136
  %4193 = vst [vmem:[%s7 + $0x98] sm:$0xff] %v4137
  %4194 = vst [vmem:[%s7 + $0xa0] sm:$0xff] %v4138
  %4195 = vst [vmem:[%s7 + $0xa8] sm:$0xff] %v4139
  %4196 = vst [vmem:[%s7 + $0xb0] sm:$0xff] %v4140
  %4197 = vst [vmem:[%s7 + $0xb8] sm:$0xff] %v4141
  %4198 = vst [vmem:[%s7 + $0xc0] sm:$0xff] %v4142
  %4199 = vst [vmem:[%s7 + $0xc8] sm:$0xff] %v4143
  %4200 = vst [vmem:[%s7 + $0xd0] sm:$0xff] %v4144
  %4201 = vst [vmem:[%s7 + $0xd8] sm:$0xff] %v4145
  %4202 = vst [vmem:[%s7 + $0xe0] sm:$0xff] %v4146
  %4203 = vst [vmem:[%s7 + $0xe8] sm:$0xff] %v4147
  %4204 = vst [vmem:[%s7 + $0xf0] sm:$0xff] %v4148
  %4205 = vst [vmem:[%s7 + $0xf8] sm:$0xff] %v4149
  %4206 = vst [vmem:[%s7 + $0x100] sm:$0xff] %v4150
  %4207 = vst [vmem:[%s7 + $0x108] sm:$0xff] %v4151
  %4208 = vst [vmem:[%s7 + $0x110] sm:$0xff] %v4152
  %4209 = vst [vmem:[%s7 + $0x118] sm:$0xff] %v4153
  %4210 = vst [vmem:[%s7 + $0x120] sm:$0xff] %v4154
  %4211 = vst [vmem:[%s7 + $0x128] sm:$0xff] %v4155
  %4212 = vst [vmem:[%s7 + $0x130] sm:$0xff] %v4156
  %4213 = vst [vmem:[%s7 + $0x138] sm:$0xff] %v4157
  %4214 = vst [vmem:[%s7 + $0x140] sm:$0xff] %v4158
  %4215 = vst [vmem:[%s7 + $0x148] sm:$0xff] %v4159
  %4216 = vst [vmem:[%s7 + $0x150] sm:$0xff] %v4160
  %4217 = vst [vmem:[%s7 + $0x158] sm:$0xff] %v4161
  %4218 = vst [vmem:[%s7 + $0x160] sm:$0xff] %v4162
  %4219 = vst [vmem:[%s7 + $0x168] sm:$0xff] %v4163
  %4220 = vst [vmem:[%s7 + $0x170] sm:$0xff] %v4164
  %4221 = vst [vmem:[%s7 + $0x178] sm:$0xff] %v4165
  %4222 = vst [vmem:[%s7 + $0x180] sm:$0xff] %v4166
  %4223 = vst [vmem:[%s7 + $0x188] sm:$0xff] %v4167
  %4224 = vst [vmem:[%s7 + $0x190] sm:$0xff] %v4168
  %4225 = vst [vmem:[%s7 + $0x198] sm:$0xff] %v4169
  %4226 = vst [vmem:[%s7 + $0x1a0] sm:$0xff] %v4170
  %4227 = vst [vmem:[%s7 + $0x1a8] sm:$0xff] %v4171
  %4228 = vst [vmem:[%s7 + $0x1b0] sm:$0xff] %v4172
  %4229 = vst [vmem:[%s7 + $0x1b8] sm:$0xff] %v4173
  %v4230 = vld [vmem:[#allocation2 + $0x18] sm:$0x88]
  %v4231 = vld [vmem:[#allocation2 + $0x20] sm:$0xff]
  %v4232 = vld [vmem:[#allocation2 + $0x28] sm:$0xff]
  %v4233 = vld [vmem:[#allocation2 + $0x30] sm:$0xff]
  %v4234 = vld [vmem:[#allocation2 + $0x38] sm:$0xff]
  %v4235 = vld [vmem:[#allocation2 + $0x40] sm:$0xff]
  %v4236 = vld [vmem:[#allocation2 + $0x48] sm:$0xff]
  %v4237 = vld [vmem:[#allocation2 + $0x50] sm:$0xff]
  %v4238 = vld [vmem:[#allocation2 + $0x58] sm:$0xff]
  %v4239 = vld [vmem:[#allocation2 + $0x60] sm:$0xff]
  %v4240 = vld [vmem:[#allocation2 + $0x68] sm:$0xff]
  %v4241 = vld [vmem:[#allocation2 + $0x70] sm:$0xff]
  %v4242 = vld [vmem:[#allocation2 + $0x78] sm:$0xff]
  %v4243 = vld [vmem:[#allocation2 + $0x80] sm:$0xff]
  %v4244 = vld [vmem:[#allocation2 + $0x88] sm:$0xff]
  %v4245 = vld [vmem:[#allocation2 + $0x90] sm:$0xff]
  %v4246 = vld [vmem:[#allocation2 + $0x98] sm:$0xff]
  %v4247 = vld [vmem:[#allocation2 + $0xa0] sm:$0xff]
  %v4248 = vld [vmem:[#allocation2 + $0xa8] sm:$0xff]
  %v4249 = vld [vmem:[#allocation2 + $0xb0] sm:$0xff]
  %v4250 = vld [vmem:[#allocation2 + $0xb8] sm:$0xff]
  %v4251 = vld [vmem:[#allocation2 + $0xc0] sm:$0xff]
  %v4252 = vld [vmem:[#allocation2 + $0xc8] sm:$0xff]
  %v4253 = vld [vmem:[#allocation2 + $0xd0] sm:$0xff]
  %v4254 = vld [vmem:[#allocation2 + $0xd8] sm:$0xff]
  %v4255 = vld [vmem:[#allocation2 + $0xe0] sm:$0xff]
  %v4256 = vld [vmem:[#allocation2 + $0xe8] sm:$0xff]
  %v4257 = vld [vmem:[#allocation2 + $0xf0] sm:$0xff]
  %v4258 = vld [vmem:[#allocation2 + $0xf8] sm:$0xff]
  %s4259 = scalar_lea.vmem [#allocation3], 768
  %v4260 = vld [vmem:[%s4259] sm:$0xff]
  %v4261 = vld [vmem:[%s4259 + $0x8] sm:$0xff]
  %v4262 = vld [vmem:[%s4259 + $0x10] sm:$0xff]
  %v4263 = vld [vmem:[%s4259 + $0x18] sm:$0xff]
  %v4264 = vld [vmem:[%s4259 + $0x20] sm:$0xff]
  %v4265 = vld [vmem:[%s4259 + $0x28] sm:$0xff]
  %v4266 = vld [vmem:[%s4259 + $0x30] sm:$0xff]
  %v4267 = vld [vmem:[%s4259 + $0x38] sm:$0xff]
  %v4268 = vld [vmem:[%s4259 + $0x40] sm:$0xff]
  %v4269 = vld [vmem:[%s4259 + $0x48] sm:$0xff]
  %v4270 = vld [vmem:[%s4259 + $0x50] sm:$0xff]
  %v4271 = vld [vmem:[%s4259 + $0x58] sm:$0xff]
  %v4272 = vld [vmem:[%s4259 + $0x60] sm:$0xff]
  %v4273 = vld [vmem:[%s4259 + $0x68] sm:$0xff]
  %v4274 = vld [vmem:[%s4259 + $0x70] sm:$0xff]
  %v4275 = vld [vmem:[%s4259 + $0x78] sm:$0xff]
  %v4276 = vld [vmem:[%s4259 + $0x80] sm:$0xff]
  %v4277 = vld [vmem:[%s4259 + $0x88] sm:$0xff]
  %v4278 = vld [vmem:[%s4259 + $0x90] sm:$0xff]
  %v4279 = vld [vmem:[%s4259 + $0x98] sm:$0xff]
  %v4280 = vld [vmem:[%s4259 + $0xa0] sm:$0xff]
  %v4281 = vld [vmem:[%s4259 + $0xa8] sm:$0xff]
  %v4282 = vld [vmem:[%s4259 + $0xb0] sm:$0xff]
  %v4283 = vld [vmem:[%s4259 + $0xb8] sm:$0xff]
  %v4284 = vld [vmem:[%s4259 + $0xc0] sm:$0xff]
  %v4285 = vld [vmem:[%s4259 + $0xc8] sm:$0xff]
  %v4286 = vld [vmem:[%s4259 + $0xd0] sm:$0xff]
  %v4287 = vld [vmem:[%s4259 + $0xd8] sm:$0xff]
  %v4288 = vld [vmem:[%s4259 + $0xe0] sm:$0xff]
  %v4289 = vld [vmem:[%s4259 + $0xe8] sm:$0xff]
  %v4290 = vld [vmem:[%s4259 + $0xf0] sm:$0xff]
  %v4291 = vld [vmem:[%s4259 + $0xf8] sm:$0xff]
  %v4321 = vunpack.c.l.b16 %v4230
  %v4322 = vunpack.c.h.b16 %v4230
  %v4323 = vunpack.c.l.b16 %v4231
  %v4324 = vunpack.c.h.b16 %v4231
  %v4325 = vunpack.c.l.b16 %v4232
  %v4326 = vunpack.c.h.b16 %v4232
  %v4327 = vunpack.c.l.b16 %v4233
  %v4328 = vunpack.c.h.b16 %v4233
  %v4329 = vunpack.c.l.b16 %v4234
  %v4330 = vunpack.c.h.b16 %v4234
  %v4331 = vunpack.c.l.b16 %v4235
  %v4332 = vunpack.c.h.b16 %v4235
  %v4333 = vunpack.c.l.b16 %v4236
  %v4334 = vunpack.c.h.b16 %v4236
  %v4335 = vunpack.c.l.b16 %v4237
  %v4336 = vunpack.c.h.b16 %v4237
  %v4337 = vunpack.c.l.b16 %v4238
  %v4338 = vunpack.c.h.b16 %v4238
  %v4339 = vunpack.c.l.b16 %v4239
  %v4340 = vunpack.c.h.b16 %v4239
  %v4341 = vunpack.c.l.b16 %v4240
  %v4342 = vunpack.c.h.b16 %v4240
  %v4343 = vunpack.c.l.b16 %v4241
  %v4344 = vunpack.c.h.b16 %v4241
  %v4345 = vunpack.c.l.b16 %v4242
  %v4346 = vunpack.c.h.b16 %v4242
  %v4347 = vunpack.c.l.b16 %v4243
  %v4348 = vunpack.c.h.b16 %v4243
  %v4349 = vunpack.c.l.b16 %v4244
  %v4350 = vunpack.c.h.b16 %v4244
  %v4351 = vunpack.c.l.b16 %v4245
  %v4352 = vunpack.c.h.b16 %v4245
  %v4353 = vunpack.c.l.b16 %v4246
  %v4354 = vunpack.c.h.b16 %v4246
  %v4355 = vunpack.c.l.b16 %v4247
  %v4356 = vunpack.c.h.b16 %v4247
  %v4357 = vunpack.c.l.b16 %v4248
  %v4358 = vunpack.c.h.b16 %v4248
  %v4359 = vunpack.c.l.b16 %v4249
  %v4360 = vunpack.c.h.b16 %v4249
  %v4361 = vunpack.c.l.b16 %v4250
  %v4362 = vunpack.c.h.b16 %v4250
  %v4363 = vunpack.c.l.b16 %v4251
  %v4364 = vunpack.c.h.b16 %v4251
  %v4365 = vunpack.c.l.b16 %v4252
  %v4366 = vunpack.c.h.b16 %v4252
  %v4367 = vunpack.c.l.b16 %v4253
  %v4368 = vunpack.c.h.b16 %v4253
  %v4369 = vunpack.c.l.b16 %v4254
  %v4370 = vunpack.c.h.b16 %v4254
  %v4371 = vunpack.c.l.b16 %v4255
  %v4372 = vunpack.c.h.b16 %v4255
  %v4373 = vunpack.c.l.b16 %v4256
  %v4374 = vunpack.c.h.b16 %v4256
  %v4375 = vunpack.c.l.b16 %v4257
  %v4376 = vunpack.c.h.b16 %v4257
  %v4377 = vunpack.c.l.b16 %v4258
  %v4378 = vunpack.c.h.b16 %v4258
  %v4379 = vpack.c.b16 %v4323, %v4321
  %v4380 = vpack.c.b16 %v4324, %v4322
  %v4381 = vpack.c.b16 %v4327, %v4325
  %v4382 = vpack.c.b16 %v4328, %v4326
  %v4383 = vpack.c.b16 %v4331, %v4329
  %v4384 = vpack.c.b16 %v4332, %v4330
  %v4385 = vpack.c.b16 %v4335, %v4333
  %v4386 = vpack.c.b16 %v4336, %v4334
  %v4387 = vpack.c.b16 %v4339, %v4337
  %v4388 = vpack.c.b16 %v4340, %v4338
  %v4389 = vpack.c.b16 %v4343, %v4341
  %v4390 = vpack.c.b16 %v4344, %v4342
  %v4391 = vpack.c.b16 %v4347, %v4345
  %v4392 = vpack.c.b16 %v4348, %v4346
  %v4393 = vpack.c.b16 %v4351, %v4349
  %v4394 = vpack.c.b16 %v4352, %v4350
  %v4395 = vpack.c.b16 %v4355, %v4353
  %v4396 = vpack.c.b16 %v4356, %v4354
  %v4397 = vpack.c.b16 %v4359, %v4357
  %v4398 = vpack.c.b16 %v4360, %v4358
  %v4399 = vpack.c.b16 %v4363, %v4361
  %v4400 = vpack.c.b16 %v4364, %v4362
  %v4401 = vpack.c.b16 %v4367, %v4365
  %v4402 = vpack.c.b16 %v4368, %v4366
  %v4403 = vpack.c.b16 %v4371, %v4369
  %v4404 = vpack.c.b16 %v4372, %v4370
  %v4405 = vpack.c.b16 %v4375, %v4373
  %v4406 = vpack.c.b16 %v4376, %v4374
  %v4407 = vpack.c.b16 %v4377, %v4377
  %v4408 = vpack.c.b16 %v4378, %v4378
  %v4410 = vshrl.u32 %v4379, 16
  %v4412 = vrot.slane %v4410, 3
  %v4413 = vshll.u32 %v4379, 16
  %v4415 = vrot.slane %v4413, 4
  %v4416 = vor.u32 %v4412, %v4415
  %v4418 = vshrl.u32 %v4381, 16
  %v4420 = vrot.slane %v4418, 3
  %v4421 = vshll.u32 %v4381, 16
  %v4423 = vrot.slane %v4421, 4
  %v4424 = vor.u32 %v4420, %v4423
  %v4425 = vsel %vm1901, %v4416, %v4424
  %v4427 = vshrl.u32 %v4380, 16
  %v4429 = vrot.slane %v4427, 3
  %v4430 = vshll.u32 %v4380, 16
  %v4432 = vrot.slane %v4430, 4
  %v4433 = vor.u32 %v4429, %v4432
  %v4435 = vshrl.u32 %v4382, 16
  %v4437 = vrot.slane %v4435, 3
  %v4438 = vshll.u32 %v4382, 16
  %v4440 = vrot.slane %v4438, 4
  %v4441 = vor.u32 %v4437, %v4440
  %v4442 = vsel %vm1901, %v4433, %v4441
  %v4444 = vshrl.u32 %v4383, 16
  %v4446 = vrot.slane %v4444, 3
  %v4447 = vshll.u32 %v4383, 16
  %v4449 = vrot.slane %v4447, 4
  %v4450 = vor.u32 %v4446, %v4449
  %v4451 = vsel %vm1901, %v4424, %v4450
  %v4453 = vshrl.u32 %v4384, 16
  %v4455 = vrot.slane %v4453, 3
  %v4456 = vshll.u32 %v4384, 16
  %v4458 = vrot.slane %v4456, 4
  %v4459 = vor.u32 %v4455, %v4458
  %v4460 = vsel %vm1901, %v4441, %v4459
  %v4462 = vshrl.u32 %v4385, 16
  %v4464 = vrot.slane %v4462, 3
  %v4465 = vshll.u32 %v4385, 16
  %v4467 = vrot.slane %v4465, 4
  %v4468 = vor.u32 %v4464, %v4467
  %v4469 = vsel %vm1901, %v4450, %v4468
  %v4471 = vshrl.u32 %v4386, 16
  %v4473 = vrot.slane %v4471, 3
  %v4474 = vshll.u32 %v4386, 16
  %v4476 = vrot.slane %v4474, 4
  %v4477 = vor.u32 %v4473, %v4476
  %v4478 = vsel %vm1901, %v4459, %v4477
  %v4480 = vshrl.u32 %v4387, 16
  %v4482 = vrot.slane %v4480, 3
  %v4483 = vshll.u32 %v4387, 16
  %v4485 = vrot.slane %v4483, 4
  %v4486 = vor.u32 %v4482, %v4485
  %v4487 = vsel %vm1901, %v4468, %v4486
  %v4489 = vshrl.u32 %v4388, 16
  %v4491 = vrot.slane %v4489, 3
  %v4492 = vshll.u32 %v4388, 16
  %v4494 = vrot.slane %v4492, 4
  %v4495 = vor.u32 %v4491, %v4494
  %v4496 = vsel %vm1901, %v4477, %v4495
  %v4498 = vshrl.u32 %v4389, 16
  %v4500 = vrot.slane %v4498, 3
  %v4501 = vshll.u32 %v4389, 16
  %v4503 = vrot.slane %v4501, 4
  %v4504 = vor.u32 %v4500, %v4503
  %v4505 = vsel %vm1901, %v4486, %v4504
  %v4507 = vshrl.u32 %v4390, 16
  %v4509 = vrot.slane %v4507, 3
  %v4510 = vshll.u32 %v4390, 16
  %v4512 = vrot.slane %v4510, 4
  %v4513 = vor.u32 %v4509, %v4512
  %v4514 = vsel %vm1901, %v4495, %v4513
  %v4516 = vshrl.u32 %v4391, 16
  %v4518 = vrot.slane %v4516, 3
  %v4519 = vshll.u32 %v4391, 16
  %v4521 = vrot.slane %v4519, 4
  %v4522 = vor.u32 %v4518, %v4521
  %v4523 = vsel %vm1901, %v4504, %v4522
  %v4525 = vshrl.u32 %v4392, 16
  %v4527 = vrot.slane %v4525, 3
  %v4528 = vshll.u32 %v4392, 16
  %v4530 = vrot.slane %v4528, 4
  %v4531 = vor.u32 %v4527, %v4530
  %v4532 = vsel %vm1901, %v4513, %v4531
  %v4534 = vshrl.u32 %v4393, 16
  %v4536 = vrot.slane %v4534, 3
  %v4537 = vshll.u32 %v4393, 16
  %v4539 = vrot.slane %v4537, 4
  %v4540 = vor.u32 %v4536, %v4539
  %v4541 = vsel %vm1901, %v4522, %v4540
  %v4543 = vshrl.u32 %v4394, 16
  %v4545 = vrot.slane %v4543, 3
  %v4546 = vshll.u32 %v4394, 16
  %v4548 = vrot.slane %v4546, 4
  %v4549 = vor.u32 %v4545, %v4548
  %v4550 = vsel %vm1901, %v4531, %v4549
  %v4552 = vshrl.u32 %v4395, 16
  %v4554 = vrot.slane %v4552, 3
  %v4555 = vshll.u32 %v4395, 16
  %v4557 = vrot.slane %v4555, 4
  %v4558 = vor.u32 %v4554, %v4557
  %v4559 = vsel %vm1901, %v4540, %v4558
  %v4561 = vshrl.u32 %v4396, 16
  %v4563 = vrot.slane %v4561, 3
  %v4564 = vshll.u32 %v4396, 16
  %v4566 = vrot.slane %v4564, 4
  %v4567 = vor.u32 %v4563, %v4566
  %v4568 = vsel %vm1901, %v4549, %v4567
  %v4570 = vshrl.u32 %v4397, 16
  %v4572 = vrot.slane %v4570, 3
  %v4573 = vshll.u32 %v4397, 16
  %v4575 = vrot.slane %v4573, 4
  %v4576 = vor.u32 %v4572, %v4575
  %v4577 = vsel %vm1901, %v4558, %v4576
  %v4579 = vshrl.u32 %v4398, 16
  %v4581 = vrot.slane %v4579, 3
  %v4582 = vshll.u32 %v4398, 16
  %v4584 = vrot.slane %v4582, 4
  %v4585 = vor.u32 %v4581, %v4584
  %v4586 = vsel %vm1901, %v4567, %v4585
  %v4588 = vshrl.u32 %v4399, 16
  %v4590 = vrot.slane %v4588, 3
  %v4591 = vshll.u32 %v4399, 16
  %v4593 = vrot.slane %v4591, 4
  %v4594 = vor.u32 %v4590, %v4593
  %v4595 = vsel %vm1901, %v4576, %v4594
  %v4597 = vshrl.u32 %v4400, 16
  %v4599 = vrot.slane %v4597, 3
  %v4600 = vshll.u32 %v4400, 16
  %v4602 = vrot.slane %v4600, 4
  %v4603 = vor.u32 %v4599, %v4602
  %v4604 = vsel %vm1901, %v4585, %v4603
  %v4606 = vshrl.u32 %v4401, 16
  %v4608 = vrot.slane %v4606, 3
  %v4609 = vshll.u32 %v4401, 16
  %v4611 = vrot.slane %v4609, 4
  %v4612 = vor.u32 %v4608, %v4611
  %v4613 = vsel %vm1901, %v4594, %v4612
  %v4615 = vshrl.u32 %v4402, 16
  %v4617 = vrot.slane %v4615, 3
  %v4618 = vshll.u32 %v4402, 16
  %v4620 = vrot.slane %v4618, 4
  %v4621 = vor.u32 %v4617, %v4620
  %v4622 = vsel %vm1901, %v4603, %v4621
  %v4624 = vshrl.u32 %v4403, 16
  %v4626 = vrot.slane %v4624, 3
  %v4627 = vshll.u32 %v4403, 16
  %v4629 = vrot.slane %v4627, 4
  %v4630 = vor.u32 %v4626, %v4629
  %v4631 = vsel %vm1901, %v4612, %v4630
  %v4633 = vshrl.u32 %v4404, 16
  %v4635 = vrot.slane %v4633, 3
  %v4636 = vshll.u32 %v4404, 16
  %v4638 = vrot.slane %v4636, 4
  %v4639 = vor.u32 %v4635, %v4638
  %v4640 = vsel %vm1901, %v4621, %v4639
  %v4642 = vshrl.u32 %v4405, 16
  %v4644 = vrot.slane %v4642, 3
  %v4645 = vshll.u32 %v4405, 16
  %v4647 = vrot.slane %v4645, 4
  %v4648 = vor.u32 %v4644, %v4647
  %v4649 = vsel %vm1901, %v4630, %v4648
  %v4651 = vshrl.u32 %v4406, 16
  %v4653 = vrot.slane %v4651, 3
  %v4654 = vshll.u32 %v4406, 16
  %v4656 = vrot.slane %v4654, 4
  %v4657 = vor.u32 %v4653, %v4656
  %v4658 = vsel %vm1901, %v4639, %v4657
  %v4660 = vshrl.u32 %v4407, 16
  %v4662 = vrot.slane %v4660, 3
  %v4663 = vshll.u32 %v4407, 16
  %v4665 = vrot.slane %v4663, 4
  %v4666 = vor.u32 %v4662, %v4665
  %v4667 = vsel %vm1901, %v4648, %v4666
  %v4669 = vshrl.u32 %v4408, 16
  %v4671 = vrot.slane %v4669, 3
  %v4672 = vshll.u32 %v4408, 16
  %v4674 = vrot.slane %v4672, 4
  %v4675 = vor.u32 %v4671, %v4674
  %v4676 = vsel %vm1901, %v4657, %v4675
  %v4737 = vunpack.c.l.b16 %v4260
  %v4738 = vunpack.c.h.b16 %v4260
  %v4739 = vunpack.c.l.b16 %v4261
  %v4740 = vunpack.c.h.b16 %v4261
  %v4741 = vunpack.c.l.b16 %v4262
  %v4742 = vunpack.c.h.b16 %v4262
  %v4743 = vunpack.c.l.b16 %v4263
  %v4744 = vunpack.c.h.b16 %v4263
  %v4745 = vunpack.c.l.b16 %v4264
  %v4746 = vunpack.c.h.b16 %v4264
  %v4747 = vunpack.c.l.b16 %v4265
  %v4748 = vunpack.c.h.b16 %v4265
  %v4749 = vunpack.c.l.b16 %v4266
  %v4750 = vunpack.c.h.b16 %v4266
  %v4751 = vunpack.c.l.b16 %v4267
  %v4752 = vunpack.c.h.b16 %v4267
  %v4753 = vunpack.c.l.b16 %v4268
  %v4754 = vunpack.c.h.b16 %v4268
  %v4755 = vunpack.c.l.b16 %v4269
  %v4756 = vunpack.c.h.b16 %v4269
  %v4757 = vunpack.c.l.b16 %v4270
  %v4758 = vunpack.c.h.b16 %v4270
  %v4759 = vunpack.c.l.b16 %v4271
  %v4760 = vunpack.c.h.b16 %v4271
  %v4761 = vunpack.c.l.b16 %v4272
  %v4762 = vunpack.c.h.b16 %v4272
  %v4763 = vunpack.c.l.b16 %v4273
  %v4764 = vunpack.c.h.b16 %v4273
  %v4765 = vunpack.c.l.b16 %v4274
  %v4766 = vunpack.c.h.b16 %v4274
  %v4767 = vunpack.c.l.b16 %v4275
  %v4768 = vunpack.c.h.b16 %v4275
  %v4769 = vunpack.c.l.b16 %v4276
  %v4770 = vunpack.c.h.b16 %v4276
  %v4771 = vunpack.c.l.b16 %v4277
  %v4772 = vunpack.c.h.b16 %v4277
  %v4773 = vunpack.c.l.b16 %v4278
  %v4774 = vunpack.c.h.b16 %v4278
  %v4775 = vunpack.c.l.b16 %v4279
  %v4776 = vunpack.c.h.b16 %v4279
  %v4777 = vunpack.c.l.b16 %v4280
  %v4778 = vunpack.c.h.b16 %v4280
  %v4779 = vunpack.c.l.b16 %v4281
  %v4780 = vunpack.c.h.b16 %v4281
  %v4781 = vunpack.c.l.b16 %v4282
  %v4782 = vunpack.c.h.b16 %v4282
  %v4783 = vunpack.c.l.b16 %v4283
  %v4784 = vunpack.c.h.b16 %v4283
  %v4785 = vunpack.c.l.b16 %v4284
  %v4786 = vunpack.c.h.b16 %v4284
  %v4787 = vunpack.c.l.b16 %v4285
  %v4788 = vunpack.c.h.b16 %v4285
  %v4789 = vunpack.c.l.b16 %v4286
  %v4790 = vunpack.c.h.b16 %v4286
  %v4791 = vunpack.c.l.b16 %v4287
  %v4792 = vunpack.c.h.b16 %v4287
  %v4793 = vunpack.c.l.b16 %v4288
  %v4794 = vunpack.c.h.b16 %v4288
  %v4795 = vunpack.c.l.b16 %v4289
  %v4796 = vunpack.c.h.b16 %v4289
  %v4797 = vunpack.c.l.b16 %v4290
  %v4798 = vunpack.c.h.b16 %v4290
  %v4799 = vunpack.c.l.b16 %v4291
  %v4800 = vunpack.c.h.b16 %v4291
  %v4801 = vpack.c.b16 %v4739, %v4737
  %v4802 = vpack.c.b16 %v4740, %v4738
  %v4803 = vpack.c.b16 %v4743, %v4741
  %v4804 = vpack.c.b16 %v4744, %v4742
  %v4805 = vpack.c.b16 %v4747, %v4745
  %v4806 = vpack.c.b16 %v4748, %v4746
  %v4807 = vpack.c.b16 %v4751, %v4749
  %v4808 = vpack.c.b16 %v4752, %v4750
  %v4809 = vpack.c.b16 %v4755, %v4753
  %v4810 = vpack.c.b16 %v4756, %v4754
  %v4811 = vpack.c.b16 %v4759, %v4757
  %v4812 = vpack.c.b16 %v4760, %v4758
  %v4813 = vpack.c.b16 %v4763, %v4761
  %v4814 = vpack.c.b16 %v4764, %v4762
  %v4815 = vpack.c.b16 %v4767, %v4765
  %v4816 = vpack.c.b16 %v4768, %v4766
  %v4817 = vpack.c.b16 %v4771, %v4769
  %v4818 = vpack.c.b16 %v4772, %v4770
  %v4819 = vpack.c.b16 %v4775, %v4773
  %v4820 = vpack.c.b16 %v4776, %v4774
  %v4821 = vpack.c.b16 %v4779, %v4777
  %v4822 = vpack.c.b16 %v4780, %v4778
  %v4823 = vpack.c.b16 %v4783, %v4781
  %v4824 = vpack.c.b16 %v4784, %v4782
  %v4825 = vpack.c.b16 %v4787, %v4785
  %v4826 = vpack.c.b16 %v4788, %v4786
  %v4827 = vpack.c.b16 %v4791, %v4789
  %v4828 = vpack.c.b16 %v4792, %v4790
  %v4829 = vpack.c.b16 %v4795, %v4793
  %v4830 = vpack.c.b16 %v4796, %v4794
  %v4831 = vpack.c.b16 %v4799, %v4797
  %v4832 = vpack.c.b16 %v4800, %v4798
  %4865 = vmatprep.subr.bf16.mxu0 %v4816
  %4866 = vmatpush1.bf16.msra.mxu0 %v4815
  %4867 = vmatprep.subr.bf16.mxu0 %v4814
  %4868 = vmatpush1.bf16.msra.mxu0 %v4813
  %4869 = vmatprep.subr.bf16.mxu0 %v4812
  %4870 = vmatpush1.bf16.msra.mxu0 %v4811
  %4871 = vmatprep.subr.bf16.mxu0 %v4810
  %4872 = vmatpush1.bf16.msra.mxu0 %v4809
  %4873 = vmatprep.subr.bf16.mxu0 %v4808
  %4874 = vmatpush1.bf16.msra.mxu0 %v4807
  %4875 = vmatprep.subr.bf16.mxu0 %v4806
  %4876 = vmatpush1.bf16.msra.mxu0 %v4805
  %4877 = vmatprep.subr.bf16.mxu0 %v4804
  %4878 = vmatpush1.bf16.msra.mxu0 %v4803
  %4879 = vmatprep.subr.bf16.mxu0 %v4802
  %4880 = vmatpush1.bf16.msra.mxu0 %v4801
  %4881 = vmatprep.subr.bf16.mxu0 %v4832
  %4882 = vmatpush2.bf16.msra.mxu0 %v4831
  %4883 = vmatprep.subr.bf16.mxu0 %v4830
  %4884 = vmatpush2.bf16.msra.mxu0 %v4829
  %4885 = vmatprep.subr.bf16.mxu0 %v4828
  %4886 = vmatpush2.bf16.msra.mxu0 %v4827
  %4887 = vmatprep.subr.bf16.mxu0 %v4826
  %4888 = vmatpush2.bf16.msra.mxu0 %v4825
  %4889 = vmatprep.subr.bf16.mxu0 %v4824
  %4890 = vmatpush2.bf16.msra.mxu0 %v4823
  %4891 = vmatprep.subr.bf16.mxu0 %v4822
  %4892 = vmatpush2.bf16.msra.mxu0 %v4821
  %4893 = vmatprep.subr.bf16.mxu0 %v4820
  %4894 = vmatpush2.bf16.msra.mxu0 %v4819
  %4895 = vmatprep.subr.bf16.mxu0 %v4818
  %4896 = vmatpush2.bf16.msra.mxu0 %v4817
  %4897 = vmatprep.mubr.bf16.mxu0 %v4442
  %4898 = vmatmul.mubr.bf16.gmra.mxu0 %v4425
  %v4899 = vpop.f32.mrf.mxu0
  %v4900 = vadd.f32 0.0, %v4899
  %v4901 = vpop.f32.mrf.mxu0
  %v4902 = vadd.f32 0.0, %v4901
  %v4903 = vpop.f32.mrf.mxu0
  %v4904 = vadd.f32 0.0, %v4903
  %v4905 = vpop.f32.mrf.mxu0
  %v4906 = vadd.f32 0.0, %v4905
  %4907 = vmatprep.mubr.bf16.mxu0 %v4460
  %4908 = vmatmul.mubr.bf16.gmra.mxu0 %v4451
  %v4909 = vpop.f32.mrf.mxu0
  %v4910 = vadd.f32 0.0, %v4909
  %v4911 = vpop.f32.mrf.mxu0
  %v4912 = vadd.f32 0.0, %v4911
  %v4913 = vpop.f32.mrf.mxu0
  %v4914 = vadd.f32 0.0, %v4913
  %v4915 = vpop.f32.mrf.mxu0
  %v4916 = vadd.f32 0.0, %v4915
  %4917 = vmatprep.mubr.bf16.mxu0 %v4478
  %4918 = vmatmul.mubr.bf16.gmra.mxu0 %v4469
  %v4919 = vpop.f32.mrf.mxu0
  %v4920 = vadd.f32 0.0, %v4919
  %v4921 = vpop.f32.mrf.mxu0
  %v4922 = vadd.f32 0.0, %v4921
  %v4923 = vpop.f32.mrf.mxu0
  %v4924 = vadd.f32 0.0, %v4923
  %v4925 = vpop.f32.mrf.mxu0
  %v4926 = vadd.f32 0.0, %v4925
  %4927 = vmatprep.mubr.bf16.mxu0 %v4496
  %4928 = vmatmul.mubr.bf16.gmra.mxu0 %v4487
  %v4929 = vpop.f32.mrf.mxu0
  %v4930 = vadd.f32 0.0, %v4929
  %v4931 = vpop.f32.mrf.mxu0
  %v4932 = vadd.f32 0.0, %v4931
  %v4933 = vpop.f32.mrf.mxu0
  %v4934 = vadd.f32 0.0, %v4933
  %v4935 = vpop.f32.mrf.mxu0
  %v4936 = vadd.f32 0.0, %v4935
  %4937 = vmatprep.mubr.bf16.mxu0 %v4514
  %4938 = vmatmul.mubr.bf16.gmra.mxu0 %v4505
  %v4939 = vpop.f32.mrf.mxu0
  %v4940 = vadd.f32 0.0, %v4939
  %v4941 = vpop.f32.mrf.mxu0
  %v4942 = vadd.f32 0.0, %v4941
  %v4943 = vpop.f32.mrf.mxu0
  %v4944 = vadd.f32 0.0, %v4943
  %v4945 = vpop.f32.mrf.mxu0
  %v4946 = vadd.f32 0.0, %v4945
  %4947 = vmatprep.mubr.bf16.mxu0 %v4532
  %4948 = vmatmul.mubr.bf16.gmra.mxu0 %v4523
  %v4949 = vpop.f32.mrf.mxu0
  %v4950 = vadd.f32 0.0, %v4949
  %v4951 = vpop.f32.mrf.mxu0
  %v4952 = vadd.f32 0.0, %v4951
  %v4953 = vpop.f32.mrf.mxu0
  %v4954 = vadd.f32 0.0, %v4953
  %v4955 = vpop.f32.mrf.mxu0
  %v4956 = vadd.f32 0.0, %v4955
  %4957 = vmatprep.mubr.bf16.mxu0 %v4550
  %4958 = vmatmul.mubr.bf16.gmra.mxu0 %v4541
  %v4959 = vpop.f32.mrf.mxu0
  %v4960 = vadd.f32 0.0, %v4959
  %v4961 = vpop.f32.mrf.mxu0
  %v4962 = vadd.f32 0.0, %v4961
  %v4963 = vpop.f32.mrf.mxu0
  %v4964 = vadd.f32 0.0, %v4963
  %v4965 = vpop.f32.mrf.mxu0
  %v4966 = vadd.f32 0.0, %v4965
  %4967 = vmatprep.mubr.bf16.mxu0 %v4568
  %4968 = vmatmul.mubr.bf16.gmra.mxu0 %v4559
  %v4969 = vpop.f32.mrf.mxu0
  %v4970 = vadd.f32 0.0, %v4969
  %v4971 = vpop.f32.mrf.mxu0
  %v4972 = vadd.f32 0.0, %v4971
  %v4973 = vpop.f32.mrf.mxu0
  %v4974 = vadd.f32 0.0, %v4973
  %v4975 = vpop.f32.mrf.mxu0
  %v4976 = vadd.f32 0.0, %v4975
  %4977 = vmatprep.mubr.bf16.mxu0 %v4586
  %4978 = vmatmul.mubr.bf16.gmra.mxu0 %v4577
  %v4979 = vpop.f32.mrf.mxu0
  %v4980 = vadd.f32 0.0, %v4979
  %v4981 = vpop.f32.mrf.mxu0
  %v4982 = vadd.f32 0.0, %v4981
  %v4983 = vpop.f32.mrf.mxu0
  %v4984 = vadd.f32 0.0, %v4983
  %v4985 = vpop.f32.mrf.mxu0
  %v4986 = vadd.f32 0.0, %v4985
  %4987 = vmatprep.mubr.bf16.mxu0 %v4604
  %4988 = vmatmul.mubr.bf16.gmra.mxu0 %v4595
  %v4989 = vpop.f32.mrf.mxu0
  %v4990 = vadd.f32 0.0, %v4989
  %v4991 = vpop.f32.mrf.mxu0
  %v4992 = vadd.f32 0.0, %v4991
  %v4993 = vpop.f32.mrf.mxu0
  %v4994 = vadd.f32 0.0, %v4993
  %v4995 = vpop.f32.mrf.mxu0
  %v4996 = vadd.f32 0.0, %v4995
  %4997 = vmatprep.mubr.bf16.mxu0 %v4622
  %4998 = vmatmul.mubr.bf16.gmra.mxu0 %v4613
  %v4999 = vpop.f32.mrf.mxu0
  %v5000 = vadd.f32 0.0, %v4999
  %v5001 = vpop.f32.mrf.mxu0
  %v5002 = vadd.f32 0.0, %v5001
  %v5003 = vpop.f32.mrf.mxu0
  %v5004 = vadd.f32 0.0, %v5003
  %v5005 = vpop.f32.mrf.mxu0
  %v5006 = vadd.f32 0.0, %v5005
  %5007 = vmatprep.mubr.bf16.mxu0 %v4640
  %5008 = vmatmul.mubr.bf16.gmra.mxu0 %v4631
  %v5009 = vpop.f32.mrf.mxu0
  %v5010 = vadd.f32 0.0, %v5009
  %v5011 = vpop.f32.mrf.mxu0
  %v5012 = vadd.f32 0.0, %v5011
  %v5013 = vpop.f32.mrf.mxu0
  %v5014 = vadd.f32 0.0, %v5013
  %v5015 = vpop.f32.mrf.mxu0
  %v5016 = vadd.f32 0.0, %v5015
  %5017 = vmatprep.mubr.bf16.mxu0 %v4658
  %5018 = vmatmul.mubr.bf16.gmra.mxu0 %v4649
  %v5019 = vpop.f32.mrf.mxu0
  %v5020 = vadd.f32 0.0, %v5019
  %v5021 = vpop.f32.mrf.mxu0
  %v5022 = vadd.f32 0.0, %v5021
  %v5023 = vpop.f32.mrf.mxu0
  %v5024 = vadd.f32 0.0, %v5023
  %v5025 = vpop.f32.mrf.mxu0
  %v5026 = vadd.f32 0.0, %v5025
  %5027 = vmatprep.mubr.bf16.mxu0 %v4676
  %5028 = vmatmul.mubr.bf16.gmra.mxu0 %v4667
  %v5029 = vpop.f32.mrf.mxu0
  %v5030 = vadd.f32 0.0, %v5029
  %v5031 = vpop.f32.mrf.mxu0
  %v5032 = vadd.f32 0.0, %v5031
  %v5033 = vpop.f32.mrf.mxu0
  %v5034 = vadd.f32 0.0, %v5033
  %v5035 = vpop.f32.mrf.mxu0
  %v5036 = vadd.f32 0.0, %v5035
  %5037 = vdwg.mxu0
  %v5038 = vld [vmem:[%s7] sm:$0xff]
  %v5039 = vld [vmem:[%s7 + $0x8] sm:$0xff]
  %v5040 = vld [vmem:[%s7 + $0x10] sm:$0xff]
  %v5041 = vld [vmem:[%s7 + $0x18] sm:$0xff]
  %v5042 = vld [vmem:[%s7 + $0x20] sm:$0xff]
  %v5043 = vld [vmem:[%s7 + $0x28] sm:$0xff]
  %v5044 = vld [vmem:[%s7 + $0x30] sm:$0xff]
  %v5045 = vld [vmem:[%s7 + $0x38] sm:$0xff]
  %v5046 = vld [vmem:[%s7 + $0x40] sm:$0xff]
  %v5047 = vld [vmem:[%s7 + $0x48] sm:$0xff]
  %v5048 = vld [vmem:[%s7 + $0x50] sm:$0xff]
  %v5049 = vld [vmem:[%s7 + $0x58] sm:$0xff]
  %v5050 = vld [vmem:[%s7 + $0x60] sm:$0xff]
  %v5051 = vld [vmem:[%s7 + $0x68] sm:$0xff]
  %v5052 = vld [vmem:[%s7 + $0x70] sm:$0xff]
  %v5053 = vld [vmem:[%s7 + $0x78] sm:$0xff]
  %v5054 = vld [vmem:[%s7 + $0x80] sm:$0xff]
  %v5055 = vld [vmem:[%s7 + $0x88] sm:$0xff]
  %v5056 = vld [vmem:[%s7 + $0x90] sm:$0xff]
  %v5057 = vld [vmem:[%s7 + $0x98] sm:$0xff]
  %v5058 = vld [vmem:[%s7 + $0xa0] sm:$0xff]
  %v5059 = vld [vmem:[%s7 + $0xa8] sm:$0xff]
  %v5060 = vld [vmem:[%s7 + $0xb0] sm:$0xff]
  %v5061 = vld [vmem:[%s7 + $0xb8] sm:$0xff]
  %v5062 = vld [vmem:[%s7 + $0xc0] sm:$0xff]
  %v5063 = vld [vmem:[%s7 + $0xc8] sm:$0xff]
  %v5064 = vld [vmem:[%s7 + $0xd0] sm:$0xff]
  %v5065 = vld [vmem:[%s7 + $0xd8] sm:$0xff]
  %v5066 = vld [vmem:[%s7 + $0xe0] sm:$0xff]
  %v5067 = vld [vmem:[%s7 + $0xe8] sm:$0xff]
  %v5068 = vld [vmem:[%s7 + $0xf0] sm:$0xff]
  %v5069 = vld [vmem:[%s7 + $0xf8] sm:$0xff]
  %v5070 = vld [vmem:[%s7 + $0x100] sm:$0xff]
  %v5071 = vld [vmem:[%s7 + $0x108] sm:$0xff]
  %v5072 = vld [vmem:[%s7 + $0x110] sm:$0xff]
  %v5073 = vld [vmem:[%s7 + $0x118] sm:$0xff]
  %v5074 = vld [vmem:[%s7 + $0x120] sm:$0xff]
  %v5075 = vld [vmem:[%s7 + $0x128] sm:$0xff]
  %v5076 = vld [vmem:[%s7 + $0x130] sm:$0xff]
  %v5077 = vld [vmem:[%s7 + $0x138] sm:$0xff]
  %v5078 = vld [vmem:[%s7 + $0x140] sm:$0xff]
  %v5079 = vld [vmem:[%s7 + $0x148] sm:$0xff]
  %v5080 = vld [vmem:[%s7 + $0x150] sm:$0xff]
  %v5081 = vld [vmem:[%s7 + $0x158] sm:$0xff]
  %v5082 = vld [vmem:[%s7 + $0x160] sm:$0xff]
  %v5083 = vld [vmem:[%s7 + $0x168] sm:$0xff]
  %v5084 = vld [vmem:[%s7 + $0x170] sm:$0xff]
  %v5085 = vld [vmem:[%s7 + $0x178] sm:$0xff]
  %v5086 = vld [vmem:[%s7 + $0x180] sm:$0xff]
  %v5087 = vld [vmem:[%s7 + $0x188] sm:$0xff]
  %v5088 = vld [vmem:[%s7 + $0x190] sm:$0xff]
  %v5089 = vld [vmem:[%s7 + $0x198] sm:$0xff]
  %v5090 = vld [vmem:[%s7 + $0x1a0] sm:$0xff]
  %v5091 = vld [vmem:[%s7 + $0x1a8] sm:$0xff]
  %v5092 = vld [vmem:[%s7 + $0x1b0] sm:$0xff]
  %v5093 = vld [vmem:[%s7 + $0x1b8] sm:$0xff]
  %v5094 = vadd.f32 %v5038, %v4900
  %v5095 = vadd.f32 %v5039, %v4902
  %v5096 = vadd.f32 %v5040, %v4904
  %v5097 = vadd.f32 %v5041, %v4906
  %v5098 = vadd.f32 %v5042, %v4910
  %v5099 = vadd.f32 %v5043, %v4912
  %v5100 = vadd.f32 %v5044, %v4914
  %v5101 = vadd.f32 %v5045, %v4916
  %v5102 = vadd.f32 %v5046, %v4920
  %v5103 = vadd.f32 %v5047, %v4922
  %v5104 = vadd.f32 %v5048, %v4924
  %v5105 = vadd.f32 %v5049, %v4926
  %v5106 = vadd.f32 %v5050, %v4930
  %v5107 = vadd.f32 %v5051, %v4932
  %v5108 = vadd.f32 %v5052, %v4934
  %v5109 = vadd.f32 %v5053, %v4936
  %v5110 = vadd.f32 %v5054, %v4940
  %v5111 = vadd.f32 %v5055, %v4942
  %v5112 = vadd.f32 %v5056, %v4944
  %v5113 = vadd.f32 %v5057, %v4946
  %v5114 = vadd.f32 %v5058, %v4950
  %v5115 = vadd.f32 %v5059, %v4952
  %v5116 = vadd.f32 %v5060, %v4954
  %v5117 = vadd.f32 %v5061, %v4956
  %v5118 = vadd.f32 %v5062, %v4960
  %v5119 = vadd.f32 %v5063, %v4962
  %v5120 = vadd.f32 %v5064, %v4964
  %v5121 = vadd.f32 %v5065, %v4966
  %v5122 = vadd.f32 %v5066, %v4970
  %v5123 = vadd.f32 %v5067, %v4972
  %v5124 = vadd.f32 %v5068, %v4974
  %v5125 = vadd.f32 %v5069, %v4976
  %v5126 = vadd.f32 %v5070, %v4980
  %v5127 = vadd.f32 %v5071, %v4982
  %v5128 = vadd.f32 %v5072, %v4984
  %v5129 = vadd.f32 %v5073, %v4986
  %v5130 = vadd.f32 %v5074, %v4990
  %v5131 = vadd.f32 %v5075, %v4992
  %v5132 = vadd.f32 %v5076, %v4994
  %v5133 = vadd.f32 %v5077, %v4996
  %v5134 = vadd.f32 %v5078, %v5000
  %v5135 = vadd.f32 %v5079, %v5002
  %v5136 = vadd.f32 %v5080, %v5004
  %v5137 = vadd.f32 %v5081, %v5006
  %v5138 = vadd.f32 %v5082, %v5010
  %v5139 = vadd.f32 %v5083, %v5012
  %v5140 = vadd.f32 %v5084, %v5014
  %v5141 = vadd.f32 %v5085, %v5016
  %v5142 = vadd.f32 %v5086, %v5020
  %v5143 = vadd.f32 %v5087, %v5022
  %v5144 = vadd.f32 %v5088, %v5024
  %v5145 = vadd.f32 %v5089, %v5026
  %v5146 = vadd.f32 %v5090, %v5030
  %v5147 = vadd.f32 %v5091, %v5032
  %v5148 = vadd.f32 %v5092, %v5034
  %v5149 = vadd.f32 %v5093, %v5036
  %5150 = vst [vmem:[%s7] sm:$0xff] %v5094
  %5151 = vst [vmem:[%s7 + $0x8] sm:$0xff] %v5095
  %5152 = vst [vmem:[%s7 + $0x10] sm:$0xff] %v5096
  %5153 = vst [vmem:[%s7 + $0x18] sm:$0xff] %v5097
  %5154 = vst [vmem:[%s7 + $0x20] sm:$0xff] %v5098
  %5155 = vst [vmem:[%s7 + $0x28] sm:$0xff] %v5099
  %5156 = vst [vmem:[%s7 + $0x30] sm:$0xff] %v5100
  %5157 = vst [vmem:[%s7 + $0x38] sm:$0xff] %v5101
  %5158 = vst [vmem:[%s7 + $0x40] sm:$0xff] %v5102
  %5159 = vst [vmem:[%s7 + $0x48] sm:$0xff] %v5103
  %5160 = vst [vmem:[%s7 + $0x50] sm:$0xff] %v5104
  %5161 = vst [vmem:[%s7 + $0x58] sm:$0xff] %v5105
  %5162 = vst [vmem:[%s7 + $0x60] sm:$0xff] %v5106
  %5163 = vst [vmem:[%s7 + $0x68] sm:$0xff] %v5107
  %5164 = vst [vmem:[%s7 + $0x70] sm:$0xff] %v5108
  %5165 = vst [vmem:[%s7 + $0x78] sm:$0xff] %v5109
  %5166 = vst [vmem:[%s7 + $0x80] sm:$0xff] %v5110
  %5167 = vst [vmem:[%s7 + $0x88] sm:$0xff] %v5111
  %5168 = vst [vmem:[%s7 + $0x90] sm:$0xff] %v5112
  %5169 = vst [vmem:[%s7 + $0x98] sm:$0xff] %v5113
  %5170 = vst [vmem:[%s7 + $0xa0] sm:$0xff] %v5114
  %5171 = vst [vmem:[%s7 + $0xa8] sm:$0xff] %v5115
  %5172 = vst [vmem:[%s7 + $0xb0] sm:$0xff] %v5116
  %5173 = vst [vmem:[%s7 + $0xb8] sm:$0xff] %v5117
  %5174 = vst [vmem:[%s7 + $0xc0] sm:$0xff] %v5118
  %5175 = vst [vmem:[%s7 + $0xc8] sm:$0xff] %v5119
  %5176 = vst [vmem:[%s7 + $0xd0] sm:$0xff] %v5120
  %5177 = vst [vmem:[%s7 + $0xd8] sm:$0xff] %v5121
  %5178 = vst [vmem:[%s7 + $0xe0] sm:$0xff] %v5122
  %5179 = vst [vmem:[%s7 + $0xe8] sm:$0xff] %v5123
  %5180 = vst [vmem:[%s7 + $0xf0] sm:$0xff] %v5124
  %5181 = vst [vmem:[%s7 + $0xf8] sm:$0xff] %v5125
  %5182 = vst [vmem:[%s7 + $0x100] sm:$0xff] %v5126
  %5183 = vst [vmem:[%s7 + $0x108] sm:$0xff] %v5127
  %5184 = vst [vmem:[%s7 + $0x110] sm:$0xff] %v5128
  %5185 = vst [vmem:[%s7 + $0x118] sm:$0xff] %v5129
  %5186 = vst [vmem:[%s7 + $0x120] sm:$0xff] %v5130
  %5187 = vst [vmem:[%s7 + $0x128] sm:$0xff] %v5131
  %5188 = vst [vmem:[%s7 + $0x130] sm:$0xff] %v5132
  %5189 = vst [vmem:[%s7 + $0x138] sm:$0xff] %v5133
  %5190 = vst [vmem:[%s7 + $0x140] sm:$0xff] %v5134
  %5191 = vst [vmem:[%s7 + $0x148] sm:$0xff] %v5135
  %5192 = vst [vmem:[%s7 + $0x150] sm:$0xff] %v5136
  %5193 = vst [vmem:[%s7 + $0x158] sm:$0xff] %v5137
  %5194 = vst [vmem:[%s7 + $0x160] sm:$0xff] %v5138
  %5195 = vst [vmem:[%s7 + $0x168] sm:$0xff] %v5139
  %5196 = vst [vmem:[%s7 + $0x170] sm:$0xff] %v5140
  %5197 = vst [vmem:[%s7 + $0x178] sm:$0xff] %v5141
  %5198 = vst [vmem:[%s7 + $0x180] sm:$0xff] %v5142
  %5199 = vst [vmem:[%s7 + $0x188] sm:$0xff] %v5143
  %5200 = vst [vmem:[%s7 + $0x190] sm:$0xff] %v5144
  %5201 = vst [vmem:[%s7 + $0x198] sm:$0xff] %v5145
  %5202 = vst [vmem:[%s7 + $0x1a0] sm:$0xff] %v5146
  %5203 = vst [vmem:[%s7 + $0x1a8] sm:$0xff] %v5147
  %5204 = vst [vmem:[%s7 + $0x1b0] sm:$0xff] %v5148
  %5205 = vst [vmem:[%s7 + $0x1b8] sm:$0xff] %v5149
  %v5206 = vld [vmem:[#allocation2 + $0x20] sm:$0xff]
  %v5207 = vld [vmem:[#allocation2 + $0x28] sm:$0xff]
  %v5208 = vld [vmem:[#allocation2 + $0x30] sm:$0xff]
  %v5209 = vld [vmem:[#allocation2 + $0x38] sm:$0xff]
  %v5210 = vld [vmem:[#allocation2 + $0x40] sm:$0xff]
  %v5211 = vld [vmem:[#allocation2 + $0x48] sm:$0xff]
  %v5212 = vld [vmem:[#allocation2 + $0x50] sm:$0xff]
  %v5213 = vld [vmem:[#allocation2 + $0x58] sm:$0xff]
  %v5214 = vld [vmem:[#allocation2 + $0x60] sm:$0xff]
  %v5215 = vld [vmem:[#allocation2 + $0x68] sm:$0xff]
  %v5216 = vld [vmem:[#allocation2 + $0x70] sm:$0xff]
  %v5217 = vld [vmem:[#allocation2 + $0x78] sm:$0xff]
  %v5218 = vld [vmem:[#allocation2 + $0x80] sm:$0xff]
  %v5219 = vld [vmem:[#allocation2 + $0x88] sm:$0xff]
  %v5220 = vld [vmem:[#allocation2 + $0x90] sm:$0xff]
  %v5221 = vld [vmem:[#allocation2 + $0x98] sm:$0xff]
  %v5222 = vld [vmem:[#allocation2 + $0xa0] sm:$0xff]
  %v5223 = vld [vmem:[#allocation2 + $0xa8] sm:$0xff]
  %v5224 = vld [vmem:[#allocation2 + $0xb0] sm:$0xff]
  %v5225 = vld [vmem:[#allocation2 + $0xb8] sm:$0xff]
  %v5226 = vld [vmem:[#allocation2 + $0xc0] sm:$0xff]
  %v5227 = vld [vmem:[#allocation2 + $0xc8] sm:$0xff]
  %v5228 = vld [vmem:[#allocation2 + $0xd0] sm:$0xff]
  %v5229 = vld [vmem:[#allocation2 + $0xd8] sm:$0xff]
  %v5230 = vld [vmem:[#allocation2 + $0xe0] sm:$0xff]
  %v5231 = vld [vmem:[#allocation2 + $0xe8] sm:$0xff]
  %v5232 = vld [vmem:[#allocation2 + $0xf0] sm:$0xff]
  %v5233 = vld [vmem:[#allocation2 + $0xf8] sm:$0xff]
  %s5234 = scalar_lea.vmem [#allocation3], 1024
  %v5235 = vld [vmem:[%s5234] sm:$0xff]
  %v5236 = vld [vmem:[%s5234 + $0x8] sm:$0xff]
  %v5237 = vld [vmem:[%s5234 + $0x10] sm:$0xff]
  %v5238 = vld [vmem:[%s5234 + $0x18] sm:$0xff]
  %v5239 = vld [vmem:[%s5234 + $0x20] sm:$0xff]
  %v5240 = vld [vmem:[%s5234 + $0x28] sm:$0xff]
  %v5241 = vld [vmem:[%s5234 + $0x30] sm:$0xff]
  %v5242 = vld [vmem:[%s5234 + $0x38] sm:$0xff]
  %v5243 = vld [vmem:[%s5234 + $0x40] sm:$0xff]
  %v5244 = vld [vmem:[%s5234 + $0x48] sm:$0xff]
  %v5245 = vld [vmem:[%s5234 + $0x50] sm:$0xff]
  %v5246 = vld [vmem:[%s5234 + $0x58] sm:$0xff]
  %v5247 = vld [vmem:[%s5234 + $0x60] sm:$0xff]
  %v5248 = vld [vmem:[%s5234 + $0x68] sm:$0xff]
  %v5249 = vld [vmem:[%s5234 + $0x70] sm:$0xff]
  %v5250 = vld [vmem:[%s5234 + $0x78] sm:$0xff]
  %v5251 = vld [vmem:[%s5234 + $0x80] sm:$0xff]
  %v5252 = vld [vmem:[%s5234 + $0x88] sm:$0xff]
  %v5253 = vld [vmem:[%s5234 + $0x90] sm:$0xff]
  %v5254 = vld [vmem:[%s5234 + $0x98] sm:$0xff]
  %v5255 = vld [vmem:[%s5234 + $0xa0] sm:$0xff]
  %v5256 = vld [vmem:[%s5234 + $0xa8] sm:$0xff]
  %v5257 = vld [vmem:[%s5234 + $0xb0] sm:$0xff]
  %v5258 = vld [vmem:[%s5234 + $0xb8] sm:$0xff]
  %v5259 = vld [vmem:[%s5234 + $0xc0] sm:$0xff]
  %v5260 = vld [vmem:[%s5234 + $0xc8] sm:$0xff]
  %v5261 = vld [vmem:[%s5234 + $0xd0] sm:$0xff]
  %v5262 = vld [vmem:[%s5234 + $0xd8] sm:$0xff]
  %v5263 = vld [vmem:[%s5234 + $0xe0] sm:$0xff]
  %v5264 = vld [vmem:[%s5234 + $0xe8] sm:$0xff]
  %v5265 = vld [vmem:[%s5234 + $0xf0] sm:$0xff]
  %v5266 = vld [vmem:[%s5234 + $0xf8] sm:$0xff]
  %v5295 = vunpack.c.l.b16 %v5206
  %v5296 = vunpack.c.h.b16 %v5206
  %v5297 = vunpack.c.l.b16 %v5207
  %v5298 = vunpack.c.h.b16 %v5207
  %v5299 = vunpack.c.l.b16 %v5208
  %v5300 = vunpack.c.h.b16 %v5208
  %v5301 = vunpack.c.l.b16 %v5209
  %v5302 = vunpack.c.h.b16 %v5209
  %v5303 = vunpack.c.l.b16 %v5210
  %v5304 = vunpack.c.h.b16 %v5210
  %v5305 = vunpack.c.l.b16 %v5211
  %v5306 = vunpack.c.h.b16 %v5211
  %v5307 = vunpack.c.l.b16 %v5212
  %v5308 = vunpack.c.h.b16 %v5212
  %v5309 = vunpack.c.l.b16 %v5213
  %v5310 = vunpack.c.h.b16 %v5213
  %v5311 = vunpack.c.l.b16 %v5214
  %v5312 = vunpack.c.h.b16 %v5214
  %v5313 = vunpack.c.l.b16 %v5215
  %v5314 = vunpack.c.h.b16 %v5215
  %v5315 = vunpack.c.l.b16 %v5216
  %v5316 = vunpack.c.h.b16 %v5216
  %v5317 = vunpack.c.l.b16 %v5217
  %v5318 = vunpack.c.h.b16 %v5217
  %v5319 = vunpack.c.l.b16 %v5218
  %v5320 = vunpack.c.h.b16 %v5218
  %v5321 = vunpack.c.l.b16 %v5219
  %v5322 = vunpack.c.h.b16 %v5219
  %v5323 = vunpack.c.l.b16 %v5220
  %v5324 = vunpack.c.h.b16 %v5220
  %v5325 = vunpack.c.l.b16 %v5221
  %v5326 = vunpack.c.h.b16 %v5221
  %v5327 = vunpack.c.l.b16 %v5222
  %v5328 = vunpack.c.h.b16 %v5222
  %v5329 = vunpack.c.l.b16 %v5223
  %v5330 = vunpack.c.h.b16 %v5223
  %v5331 = vunpack.c.l.b16 %v5224
  %v5332 = vunpack.c.h.b16 %v5224
  %v5333 = vunpack.c.l.b16 %v5225
  %v5334 = vunpack.c.h.b16 %v5225
  %v5335 = vunpack.c.l.b16 %v5226
  %v5336 = vunpack.c.h.b16 %v5226
  %v5337 = vunpack.c.l.b16 %v5227
  %v5338 = vunpack.c.h.b16 %v5227
  %v5339 = vunpack.c.l.b16 %v5228
  %v5340 = vunpack.c.h.b16 %v5228
  %v5341 = vunpack.c.l.b16 %v5229
  %v5342 = vunpack.c.h.b16 %v5229
  %v5343 = vunpack.c.l.b16 %v5230
  %v5344 = vunpack.c.h.b16 %v5230
  %v5345 = vunpack.c.l.b16 %v5231
  %v5346 = vunpack.c.h.b16 %v5231
  %v5347 = vunpack.c.l.b16 %v5232
  %v5348 = vunpack.c.h.b16 %v5232
  %v5349 = vunpack.c.l.b16 %v5233
  %v5350 = vunpack.c.h.b16 %v5233
  %v5351 = vpack.c.b16 %v5297, %v5295
  %v5352 = vpack.c.b16 %v5298, %v5296
  %v5353 = vpack.c.b16 %v5301, %v5299
  %v5354 = vpack.c.b16 %v5302, %v5300
  %v5355 = vpack.c.b16 %v5305, %v5303
  %v5356 = vpack.c.b16 %v5306, %v5304
  %v5357 = vpack.c.b16 %v5309, %v5307
  %v5358 = vpack.c.b16 %v5310, %v5308
  %v5359 = vpack.c.b16 %v5313, %v5311
  %v5360 = vpack.c.b16 %v5314, %v5312
  %v5361 = vpack.c.b16 %v5317, %v5315
  %v5362 = vpack.c.b16 %v5318, %v5316
  %v5363 = vpack.c.b16 %v5321, %v5319
  %v5364 = vpack.c.b16 %v5322, %v5320
  %v5365 = vpack.c.b16 %v5325, %v5323
  %v5366 = vpack.c.b16 %v5326, %v5324
  %v5367 = vpack.c.b16 %v5329, %v5327
  %v5368 = vpack.c.b16 %v5330, %v5328
  %v5369 = vpack.c.b16 %v5333, %v5331
  %v5370 = vpack.c.b16 %v5334, %v5332
  %v5371 = vpack.c.b16 %v5337, %v5335
  %v5372 = vpack.c.b16 %v5338, %v5336
  %v5373 = vpack.c.b16 %v5341, %v5339
  %v5374 = vpack.c.b16 %v5342, %v5340
  %v5375 = vpack.c.b16 %v5345, %v5343
  %v5376 = vpack.c.b16 %v5346, %v5344
  %v5377 = vpack.c.b16 %v5349, %v5347
  %v5378 = vpack.c.b16 %v5350, %v5348
  %v5439 = vunpack.c.l.b16 %v5235
  %v5440 = vunpack.c.h.b16 %v5235
  %v5441 = vunpack.c.l.b16 %v5236
  %v5442 = vunpack.c.h.b16 %v5236
  %v5443 = vunpack.c.l.b16 %v5237
  %v5444 = vunpack.c.h.b16 %v5237
  %v5445 = vunpack.c.l.b16 %v5238
  %v5446 = vunpack.c.h.b16 %v5238
  %v5447 = vunpack.c.l.b16 %v5239
  %v5448 = vunpack.c.h.b16 %v5239
  %v5449 = vunpack.c.l.b16 %v5240
  %v5450 = vunpack.c.h.b16 %v5240
  %v5451 = vunpack.c.l.b16 %v5241
  %v5452 = vunpack.c.h.b16 %v5241
  %v5453 = vunpack.c.l.b16 %v5242
  %v5454 = vunpack.c.h.b16 %v5242
  %v5455 = vunpack.c.l.b16 %v5243
  %v5456 = vunpack.c.h.b16 %v5243
  %v5457 = vunpack.c.l.b16 %v5244
  %v5458 = vunpack.c.h.b16 %v5244
  %v5459 = vunpack.c.l.b16 %v5245
  %v5460 = vunpack.c.h.b16 %v5245
  %v5461 = vunpack.c.l.b16 %v5246
  %v5462 = vunpack.c.h.b16 %v5246
  %v5463 = vunpack.c.l.b16 %v5247
  %v5464 = vunpack.c.h.b16 %v5247
  %v5465 = vunpack.c.l.b16 %v5248
  %v5466 = vunpack.c.h.b16 %v5248
  %v5467 = vunpack.c.l.b16 %v5249
  %v5468 = vunpack.c.h.b16 %v5249
  %v5469 = vunpack.c.l.b16 %v5250
  %v5470 = vunpack.c.h.b16 %v5250
  %v5471 = vunpack.c.l.b16 %v5251
  %v5472 = vunpack.c.h.b16 %v5251
  %v5473 = vunpack.c.l.b16 %v5252
  %v5474 = vunpack.c.h.b16 %v5252
  %v5475 = vunpack.c.l.b16 %v5253
  %v5476 = vunpack.c.h.b16 %v5253
  %v5477 = vunpack.c.l.b16 %v5254
  %v5478 = vunpack.c.h.b16 %v5254
  %v5479 = vunpack.c.l.b16 %v5255
  %v5480 = vunpack.c.h.b16 %v5255
  %v5481 = vunpack.c.l.b16 %v5256
  %v5482 = vunpack.c.h.b16 %v5256
  %v5483 = vunpack.c.l.b16 %v5257
  %v5484 = vunpack.c.h.b16 %v5257
  %v5485 = vunpack.c.l.b16 %v5258
  %v5486 = vunpack.c.h.b16 %v5258
  %v5487 = vunpack.c.l.b16 %v5259
  %v5488 = vunpack.c.h.b16 %v5259
  %v5489 = vunpack.c.l.b16 %v5260
  %v5490 = vunpack.c.h.b16 %v5260
  %v5491 = vunpack.c.l.b16 %v5261
  %v5492 = vunpack.c.h.b16 %v5261
  %v5493 = vunpack.c.l.b16 %v5262
  %v5494 = vunpack.c.h.b16 %v5262
  %v5495 = vunpack.c.l.b16 %v5263
  %v5496 = vunpack.c.h.b16 %v5263
  %v5497 = vunpack.c.l.b16 %v5264
  %v5498 = vunpack.c.h.b16 %v5264
  %v5499 = vunpack.c.l.b16 %v5265
  %v5500 = vunpack.c.h.b16 %v5265
  %v5501 = vunpack.c.l.b16 %v5266
  %v5502 = vunpack.c.h.b16 %v5266
  %v5503 = vpack.c.b16 %v5441, %v5439
  %v5504 = vpack.c.b16 %v5442, %v5440
  %v5505 = vpack.c.b16 %v5445, %v5443
  %v5506 = vpack.c.b16 %v5446, %v5444
  %v5507 = vpack.c.b16 %v5449, %v5447
  %v5508 = vpack.c.b16 %v5450, %v5448
  %v5509 = vpack.c.b16 %v5453, %v5451
  %v5510 = vpack.c.b16 %v5454, %v5452
  %v5511 = vpack.c.b16 %v5457, %v5455
  %v5512 = vpack.c.b16 %v5458, %v5456
  %v5513 = vpack.c.b16 %v5461, %v5459
  %v5514 = vpack.c.b16 %v5462, %v5460
  %v5515 = vpack.c.b16 %v5465, %v5463
  %v5516 = vpack.c.b16 %v5466, %v5464
  %v5517 = vpack.c.b16 %v5469, %v5467
  %v5518 = vpack.c.b16 %v5470, %v5468
  %v5519 = vpack.c.b16 %v5473, %v5471
  %v5520 = vpack.c.b16 %v5474, %v5472
  %v5521 = vpack.c.b16 %v5477, %v5475
  %v5522 = vpack.c.b16 %v5478, %v5476
  %v5523 = vpack.c.b16 %v5481, %v5479
  %v5524 = vpack.c.b16 %v5482, %v5480
  %v5525 = vpack.c.b16 %v5485, %v5483
  %v5526 = vpack.c.b16 %v5486, %v5484
  %v5527 = vpack.c.b16 %v5489, %v5487
  %v5528 = vpack.c.b16 %v5490, %v5488
  %v5529 = vpack.c.b16 %v5493, %v5491
  %v5530 = vpack.c.b16 %v5494, %v5492
  %v5531 = vpack.c.b16 %v5497, %v5495
  %v5532 = vpack.c.b16 %v5498, %v5496
  %v5533 = vpack.c.b16 %v5501, %v5499
  %v5534 = vpack.c.b16 %v5502, %v5500
  %5567 = vmatprep.subr.bf16.mxu0 %v5518
  %5568 = vmatpush1.bf16.msra.mxu0 %v5517
  %5569 = vmatprep.subr.bf16.mxu0 %v5516
  %5570 = vmatpush1.bf16.msra.mxu0 %v5515
  %5571 = vmatprep.subr.bf16.mxu0 %v5514
  %5572 = vmatpush1.bf16.msra.mxu0 %v5513
  %5573 = vmatprep.subr.bf16.mxu0 %v5512
  %5574 = vmatpush1.bf16.msra.mxu0 %v5511
  %5575 = vmatprep.subr.bf16.mxu0 %v5510
  %5576 = vmatpush1.bf16.msra.mxu0 %v5509
  %5577 = vmatprep.subr.bf16.mxu0 %v5508
  %5578 = vmatpush1.bf16.msra.mxu0 %v5507
  %5579 = vmatprep.subr.bf16.mxu0 %v5506
  %5580 = vmatpush1.bf16.msra.mxu0 %v5505
  %5581 = vmatprep.subr.bf16.mxu0 %v5504
  %5582 = vmatpush1.bf16.msra.mxu0 %v5503
  %5583 = vmatprep.subr.bf16.mxu0 %v5534
  %5584 = vmatpush2.bf16.msra.mxu0 %v5533
  %5585 = vmatprep.subr.bf16.mxu0 %v5532
  %5586 = vmatpush2.bf16.msra.mxu0 %v5531
  %5587 = vmatprep.subr.bf16.mxu0 %v5530
  %5588 = vmatpush2.bf16.msra.mxu0 %v5529
  %5589 = vmatprep.subr.bf16.mxu0 %v5528
  %5590 = vmatpush2.bf16.msra.mxu0 %v5527
  %5591 = vmatprep.subr.bf16.mxu0 %v5526
  %5592 = vmatpush2.bf16.msra.mxu0 %v5525
  %5593 = vmatprep.subr.bf16.mxu0 %v5524
  %5594 = vmatpush2.bf16.msra.mxu0 %v5523
  %5595 = vmatprep.subr.bf16.mxu0 %v5522
  %5596 = vmatpush2.bf16.msra.mxu0 %v5521
  %5597 = vmatprep.subr.bf16.mxu0 %v5520
  %5598 = vmatpush2.bf16.msra.mxu0 %v5519
  %5599 = vmatprep.mubr.bf16.mxu0 %v5352
  %5600 = vmatmul.mubr.bf16.gmra.mxu0 %v5351
  %v5601 = vpop.f32.mrf.mxu0
  %v5602 = vadd.f32 0.0, %v5601
  %v5603 = vpop.f32.mrf.mxu0
  %v5604 = vadd.f32 0.0, %v5603
  %v5605 = vpop.f32.mrf.mxu0
  %v5606 = vadd.f32 0.0, %v5605
  %v5607 = vpop.f32.mrf.mxu0
  %v5608 = vadd.f32 0.0, %v5607
  %5609 = vmatprep.mubr.bf16.mxu0 %v5354
  %5610 = vmatmul.mubr.bf16.gmra.mxu0 %v5353
  %v5611 = vpop.f32.mrf.mxu0
  %v5612 = vadd.f32 0.0, %v5611
  %v5613 = vpop.f32.mrf.mxu0
  %v5614 = vadd.f32 0.0, %v5613
  %v5615 = vpop.f32.mrf.mxu0
  %v5616 = vadd.f32 0.0, %v5615
  %v5617 = vpop.f32.mrf.mxu0
  %v5618 = vadd.f32 0.0, %v5617
  %5619 = vmatprep.mubr.bf16.mxu0 %v5356
  %5620 = vmatmul.mubr.bf16.gmra.mxu0 %v5355
  %v5621 = vpop.f32.mrf.mxu0
  %v5622 = vadd.f32 0.0, %v5621
  %v5623 = vpop.f32.mrf.mxu0
  %v5624 = vadd.f32 0.0, %v5623
  %v5625 = vpop.f32.mrf.mxu0
  %v5626 = vadd.f32 0.0, %v5625
  %v5627 = vpop.f32.mrf.mxu0
  %v5628 = vadd.f32 0.0, %v5627
  %5629 = vmatprep.mubr.bf16.mxu0 %v5358
  %5630 = vmatmul.mubr.bf16.gmra.mxu0 %v5357
  %v5631 = vpop.f32.mrf.mxu0
  %v5632 = vadd.f32 0.0, %v5631
  %v5633 = vpop.f32.mrf.mxu0
  %v5634 = vadd.f32 0.0, %v5633
  %v5635 = vpop.f32.mrf.mxu0
  %v5636 = vadd.f32 0.0, %v5635
  %v5637 = vpop.f32.mrf.mxu0
  %v5638 = vadd.f32 0.0, %v5637
  %5639 = vmatprep.mubr.bf16.mxu0 %v5360
  %5640 = vmatmul.mubr.bf16.gmra.mxu0 %v5359
  %v5641 = vpop.f32.mrf.mxu0
  %v5642 = vadd.f32 0.0, %v5641
  %v5643 = vpop.f32.mrf.mxu0
  %v5644 = vadd.f32 0.0, %v5643
  %v5645 = vpop.f32.mrf.mxu0
  %v5646 = vadd.f32 0.0, %v5645
  %v5647 = vpop.f32.mrf.mxu0
  %v5648 = vadd.f32 0.0, %v5647
  %5649 = vmatprep.mubr.bf16.mxu0 %v5362
  %5650 = vmatmul.mubr.bf16.gmra.mxu0 %v5361
  %v5651 = vpop.f32.mrf.mxu0
  %v5652 = vadd.f32 0.0, %v5651
  %v5653 = vpop.f32.mrf.mxu0
  %v5654 = vadd.f32 0.0, %v5653
  %v5655 = vpop.f32.mrf.mxu0
  %v5656 = vadd.f32 0.0, %v5655
  %v5657 = vpop.f32.mrf.mxu0
  %v5658 = vadd.f32 0.0, %v5657
  %5659 = vmatprep.mubr.bf16.mxu0 %v5364
  %5660 = vmatmul.mubr.bf16.gmra.mxu0 %v5363
  %v5661 = vpop.f32.mrf.mxu0
  %v5662 = vadd.f32 0.0, %v5661
  %v5663 = vpop.f32.mrf.mxu0
  %v5664 = vadd.f32 0.0, %v5663
  %v5665 = vpop.f32.mrf.mxu0
  %v5666 = vadd.f32 0.0, %v5665
  %v5667 = vpop.f32.mrf.mxu0
  %v5668 = vadd.f32 0.0, %v5667
  %5669 = vmatprep.mubr.bf16.mxu0 %v5366
  %5670 = vmatmul.mubr.bf16.gmra.mxu0 %v5365
  %v5671 = vpop.f32.mrf.mxu0
  %v5672 = vadd.f32 0.0, %v5671
  %v5673 = vpop.f32.mrf.mxu0
  %v5674 = vadd.f32 0.0, %v5673
  %v5675 = vpop.f32.mrf.mxu0
  %v5676 = vadd.f32 0.0, %v5675
  %v5677 = vpop.f32.mrf.mxu0
  %v5678 = vadd.f32 0.0, %v5677
  %5679 = vmatprep.mubr.bf16.mxu0 %v5368
  %5680 = vmatmul.mubr.bf16.gmra.mxu0 %v5367
  %v5681 = vpop.f32.mrf.mxu0
  %v5682 = vadd.f32 0.0, %v5681
  %v5683 = vpop.f32.mrf.mxu0
  %v5684 = vadd.f32 0.0, %v5683
  %v5685 = vpop.f32.mrf.mxu0
  %v5686 = vadd.f32 0.0, %v5685
  %v5687 = vpop.f32.mrf.mxu0
  %v5688 = vadd.f32 0.0, %v5687
  %5689 = vmatprep.mubr.bf16.mxu0 %v5370
  %5690 = vmatmul.mubr.bf16.gmra.mxu0 %v5369
  %v5691 = vpop.f32.mrf.mxu0
  %v5692 = vadd.f32 0.0, %v5691
  %v5693 = vpop.f32.mrf.mxu0
  %v5694 = vadd.f32 0.0, %v5693
  %v5695 = vpop.f32.mrf.mxu0
  %v5696 = vadd.f32 0.0, %v5695
  %v5697 = vpop.f32.mrf.mxu0
  %v5698 = vadd.f32 0.0, %v5697
  %5699 = vmatprep.mubr.bf16.mxu0 %v5372
  %5700 = vmatmul.mubr.bf16.gmra.mxu0 %v5371
  %v5701 = vpop.f32.mrf.mxu0
  %v5702 = vadd.f32 0.0, %v5701
  %v5703 = vpop.f32.mrf.mxu0
  %v5704 = vadd.f32 0.0, %v5703
  %v5705 = vpop.f32.mrf.mxu0
  %v5706 = vadd.f32 0.0, %v5705
  %v5707 = vpop.f32.mrf.mxu0
  %v5708 = vadd.f32 0.0, %v5707
  %5709 = vmatprep.mubr.bf16.mxu0 %v5374
  %5710 = vmatmul.mubr.bf16.gmra.mxu0 %v5373
  %v5711 = vpop.f32.mrf.mxu0
  %v5712 = vadd.f32 0.0, %v5711
  %v5713 = vpop.f32.mrf.mxu0
  %v5714 = vadd.f32 0.0, %v5713
  %v5715 = vpop.f32.mrf.mxu0
  %v5716 = vadd.f32 0.0, %v5715
  %v5717 = vpop.f32.mrf.mxu0
  %v5718 = vadd.f32 0.0, %v5717
  %5719 = vmatprep.mubr.bf16.mxu0 %v5376
  %5720 = vmatmul.mubr.bf16.gmra.mxu0 %v5375
  %v5721 = vpop.f32.mrf.mxu0
  %v5722 = vadd.f32 0.0, %v5721
  %v5723 = vpop.f32.mrf.mxu0
  %v5724 = vadd.f32 0.0, %v5723
  %v5725 = vpop.f32.mrf.mxu0
  %v5726 = vadd.f32 0.0, %v5725
  %v5727 = vpop.f32.mrf.mxu0
  %v5728 = vadd.f32 0.0, %v5727
  %5729 = vmatprep.mubr.bf16.mxu0 %v5378
  %5730 = vmatmul.mubr.bf16.gmra.mxu0 %v5377
  %v5731 = vpop.f32.mrf.mxu0
  %v5732 = vadd.f32 0.0, %v5731
  %v5733 = vpop.f32.mrf.mxu0
  %v5734 = vadd.f32 0.0, %v5733
  %v5735 = vpop.f32.mrf.mxu0
  %v5736 = vadd.f32 0.0, %v5735
  %v5737 = vpop.f32.mrf.mxu0
  %v5738 = vadd.f32 0.0, %v5737
  %5739 = vdwg.mxu0
  %v5740 = vld [vmem:[%s7] sm:$0xff]
  %v5741 = vld [vmem:[%s7 + $0x8] sm:$0xff]
  %v5742 = vld [vmem:[%s7 + $0x10] sm:$0xff]
  %v5743 = vld [vmem:[%s7 + $0x18] sm:$0xff]
  %v5744 = vld [vmem:[%s7 + $0x20] sm:$0xff]
  %v5745 = vld [vmem:[%s7 + $0x28] sm:$0xff]
  %v5746 = vld [vmem:[%s7 + $0x30] sm:$0xff]
  %v5747 = vld [vmem:[%s7 + $0x38] sm:$0xff]
  %v5748 = vld [vmem:[%s7 + $0x40] sm:$0xff]
  %v5749 = vld [vmem:[%s7 + $0x48] sm:$0xff]
  %v5750 = vld [vmem:[%s7 + $0x50] sm:$0xff]
  %v5751 = vld [vmem:[%s7 + $0x58] sm:$0xff]
  %v5752 = vld [vmem:[%s7 + $0x60] sm:$0xff]
  %v5753 = vld [vmem:[%s7 + $0x68] sm:$0xff]
  %v5754 = vld [vmem:[%s7 + $0x70] sm:$0xff]
  %v5755 = vld [vmem:[%s7 + $0x78] sm:$0xff]
  %v5756 = vld [vmem:[%s7 + $0x80] sm:$0xff]
  %v5757 = vld [vmem:[%s7 + $0x88] sm:$0xff]
  %v5758 = vld [vmem:[%s7 + $0x90] sm:$0xff]
  %v5759 = vld [vmem:[%s7 + $0x98] sm:$0xff]
  %v5760 = vld [vmem:[%s7 + $0xa0] sm:$0xff]
  %v5761 = vld [vmem:[%s7 + $0xa8] sm:$0xff]
  %v5762 = vld [vmem:[%s7 + $0xb0] sm:$0xff]
  %v5763 = vld [vmem:[%s7 + $0xb8] sm:$0xff]
  %v5764 = vld [vmem:[%s7 + $0xc0] sm:$0xff]
  %v5765 = vld [vmem:[%s7 + $0xc8] sm:$0xff]
  %v5766 = vld [vmem:[%s7 + $0xd0] sm:$0xff]
  %v5767 = vld [vmem:[%s7 + $0xd8] sm:$0xff]
  %v5768 = vld [vmem:[%s7 + $0xe0] sm:$0xff]
  %v5769 = vld [vmem:[%s7 + $0xe8] sm:$0xff]
  %v5770 = vld [vmem:[%s7 + $0xf0] sm:$0xff]
  %v5771 = vld [vmem:[%s7 + $0xf8] sm:$0xff]
  %v5772 = vld [vmem:[%s7 + $0x100] sm:$0xff]
  %v5773 = vld [vmem:[%s7 + $0x108] sm:$0xff]
  %v5774 = vld [vmem:[%s7 + $0x110] sm:$0xff]
  %v5775 = vld [vmem:[%s7 + $0x118] sm:$0xff]
  %v5776 = vld [vmem:[%s7 + $0x120] sm:$0xff]
  %v5777 = vld [vmem:[%s7 + $0x128] sm:$0xff]
  %v5778 = vld [vmem:[%s7 + $0x130] sm:$0xff]
  %v5779 = vld [vmem:[%s7 + $0x138] sm:$0xff]
  %v5780 = vld [vmem:[%s7 + $0x140] sm:$0xff]
  %v5781 = vld [vmem:[%s7 + $0x148] sm:$0xff]
  %v5782 = vld [vmem:[%s7 + $0x150] sm:$0xff]
  %v5783 = vld [vmem:[%s7 + $0x158] sm:$0xff]
  %v5784 = vld [vmem:[%s7 + $0x160] sm:$0xff]
  %v5785 = vld [vmem:[%s7 + $0x168] sm:$0xff]
  %v5786 = vld [vmem:[%s7 + $0x170] sm:$0xff]
  %v5787 = vld [vmem:[%s7 + $0x178] sm:$0xff]
  %v5788 = vld [vmem:[%s7 + $0x180] sm:$0xff]
  %v5789 = vld [vmem:[%s7 + $0x188] sm:$0xff]
  %v5790 = vld [vmem:[%s7 + $0x190] sm:$0xff]
  %v5791 = vld [vmem:[%s7 + $0x198] sm:$0xff]
  %v5792 = vld [vmem:[%s7 + $0x1a0] sm:$0xff]
  %v5793 = vld [vmem:[%s7 + $0x1a8] sm:$0xff]
  %v5794 = vld [vmem:[%s7 + $0x1b0] sm:$0xff]
  %v5795 = vld [vmem:[%s7 + $0x1b8] sm:$0xff]
  %v5796 = vadd.f32 %v5740, %v5602
  %v5797 = vadd.f32 %v5741, %v5604
  %v5798 = vadd.f32 %v5742, %v5606
  %v5799 = vadd.f32 %v5743, %v5608
  %v5800 = vadd.f32 %v5744, %v5612
  %v5801 = vadd.f32 %v5745, %v5614
  %v5802 = vadd.f32 %v5746, %v5616
  %v5803 = vadd.f32 %v5747, %v5618
  %v5804 = vadd.f32 %v5748, %v5622
  %v5805 = vadd.f32 %v5749, %v5624
  %v5806 = vadd.f32 %v5750, %v5626
  %v5807 = vadd.f32 %v5751, %v5628
  %v5808 = vadd.f32 %v5752, %v5632
  %v5809 = vadd.f32 %v5753, %v5634
  %v5810 = vadd.f32 %v5754, %v5636
  %v5811 = vadd.f32 %v5755, %v5638
  %v5812 = vadd.f32 %v5756, %v5642
  %v5813 = vadd.f32 %v5757, %v5644
  %v5814 = vadd.f32 %v5758, %v5646
  %v5815 = vadd.f32 %v5759, %v5648
  %v5816 = vadd.f32 %v5760, %v5652
  %v5817 = vadd.f32 %v5761, %v5654
  %v5818 = vadd.f32 %v5762, %v5656
  %v5819 = vadd.f32 %v5763, %v5658
  %v5820 = vadd.f32 %v5764, %v5662
  %v5821 = vadd.f32 %v5765, %v5664
  %v5822 = vadd.f32 %v5766, %v5666
  %v5823 = vadd.f32 %v5767, %v5668
  %v5824 = vadd.f32 %v5768, %v5672
  %v5825 = vadd.f32 %v5769, %v5674
  %v5826 = vadd.f32 %v5770, %v5676
  %v5827 = vadd.f32 %v5771, %v5678
  %v5828 = vadd.f32 %v5772, %v5682
  %v5829 = vadd.f32 %v5773, %v5684
  %v5830 = vadd.f32 %v5774, %v5686
  %v5831 = vadd.f32 %v5775, %v5688
  %v5832 = vadd.f32 %v5776, %v5692
  %v5833 = vadd.f32 %v5777, %v5694
  %v5834 = vadd.f32 %v5778, %v5696
  %v5835 = vadd.f32 %v5779, %v5698
  %v5836 = vadd.f32 %v5780, %v5702
  %v5837 = vadd.f32 %v5781, %v5704
  %v5838 = vadd.f32 %v5782, %v5706
  %v5839 = vadd.f32 %v5783, %v5708
  %v5840 = vadd.f32 %v5784, %v5712
  %v5841 = vadd.f32 %v5785, %v5714
  %v5842 = vadd.f32 %v5786, %v5716
  %v5843 = vadd.f32 %v5787, %v5718
  %v5844 = vadd.f32 %v5788, %v5722
  %v5845 = vadd.f32 %v5789, %v5724
  %v5846 = vadd.f32 %v5790, %v5726
  %v5847 = vadd.f32 %v5791, %v5728
  %v5848 = vadd.f32 %v5792, %v5732
  %v5849 = vadd.f32 %v5793, %v5734
  %v5850 = vadd.f32 %v5794, %v5736
  %v5851 = vadd.f32 %v5795, %v5738
  %5852 = vst [vmem:[%s7] sm:$0xff] %v5796
  %5853 = vst [vmem:[%s7 + $0x8] sm:$0xff] %v5797
  %5854 = vst [vmem:[%s7 + $0x10] sm:$0xff] %v5798
  %5855 = vst [vmem:[%s7 + $0x18] sm:$0xff] %v5799
  %5856 = vst [vmem:[%s7 + $0x20] sm:$0xff] %v5800
  %5857 = vst [vmem:[%s7 + $0x28] sm:$0xff] %v5801
  %5858 = vst [vmem:[%s7 + $0x30] sm:$0xff] %v5802
  %5859 = vst [vmem:[%s7 + $0x38] sm:$0xff] %v5803
  %5860 = vst [vmem:[%s7 + $0x40] sm:$0xff] %v5804
  %5861 = vst [vmem:[%s7 + $0x48] sm:$0xff] %v5805
  %5862 = vst [vmem:[%s7 + $0x50] sm:$0xff] %v5806
  %5863 = vst [vmem:[%s7 + $0x58] sm:$0xff] %v5807
  %5864 = vst [vmem:[%s7 + $0x60] sm:$0xff] %v5808
  %5865 = vst [vmem:[%s7 + $0x68] sm:$0xff] %v5809
  %5866 = vst [vmem:[%s7 + $0x70] sm:$0xff] %v5810
  %5867 = vst [vmem:[%s7 + $0x78] sm:$0xff] %v5811
  %5868 = vst [vmem:[%s7 + $0x80] sm:$0xff] %v5812
  %5869 = vst [vmem:[%s7 + $0x88] sm:$0xff] %v5813
  %5870 = vst [vmem:[%s7 + $0x90] sm:$0xff] %v5814
  %5871 = vst [vmem:[%s7 + $0x98] sm:$0xff] %v5815
  %5872 = vst [vmem:[%s7 + $0xa0] sm:$0xff] %v5816
  %5873 = vst [vmem:[%s7 + $0xa8] sm:$0xff] %v5817
  %5874 = vst [vmem:[%s7 + $0xb0] sm:$0xff] %v5818
  %5875 = vst [vmem:[%s7 + $0xb8] sm:$0xff] %v5819
  %5876 = vst [vmem:[%s7 + $0xc0] sm:$0xff] %v5820
  %5877 = vst [vmem:[%s7 + $0xc8] sm:$0xff] %v5821
  %5878 = vst [vmem:[%s7 + $0xd0] sm:$0xff] %v5822
  %5879 = vst [vmem:[%s7 + $0xd8] sm:$0xff] %v5823
  %5880 = vst [vmem:[%s7 + $0xe0] sm:$0xff] %v5824
  %5881 = vst [vmem:[%s7 + $0xe8] sm:$0xff] %v5825
  %5882 = vst [vmem:[%s7 + $0xf0] sm:$0xff] %v5826
  %5883 = vst [vmem:[%s7 + $0xf8] sm:$0xff] %v5827
  %5884 = vst [vmem:[%s7 + $0x100] sm:$0xff] %v5828
  %5885 = vst [vmem:[%s7 + $0x108] sm:$0xff] %v5829
  %5886 = vst [vmem:[%s7 + $0x110] sm:$0xff] %v5830
  %5887 = vst [vmem:[%s7 + $0x118] sm:$0xff] %v5831
  %5888 = vst [vmem:[%s7 + $0x120] sm:$0xff] %v5832
  %5889 = vst [vmem:[%s7 + $0x128] sm:$0xff] %v5833
  %5890 = vst [vmem:[%s7 + $0x130] sm:$0xff] %v5834
  %5891 = vst [vmem:[%s7 + $0x138] sm:$0xff] %v5835
  %5892 = vst [vmem:[%s7 + $0x140] sm:$0xff] %v5836
  %5893 = vst [vmem:[%s7 + $0x148] sm:$0xff] %v5837
  %5894 = vst [vmem:[%s7 + $0x150] sm:$0xff] %v5838
  %5895 = vst [vmem:[%s7 + $0x158] sm:$0xff] %v5839
  %5896 = vst [vmem:[%s7 + $0x160] sm:$0xff] %v5840
  %5897 = vst [vmem:[%s7 + $0x168] sm:$0xff] %v5841
  %5898 = vst [vmem:[%s7 + $0x170] sm:$0xff] %v5842
  %5899 = vst [vmem:[%s7 + $0x178] sm:$0xff] %v5843
  %5900 = vst [vmem:[%s7 + $0x180] sm:$0xff] %v5844
  %5901 = vst [vmem:[%s7 + $0x188] sm:$0xff] %v5845
  %5902 = vst [vmem:[%s7 + $0x190] sm:$0xff] %v5846
  %5903 = vst [vmem:[%s7 + $0x198] sm:$0xff] %v5847
  %5904 = vst [vmem:[%s7 + $0x1a0] sm:$0xff] %v5848
  %5905 = vst [vmem:[%s7 + $0x1a8] sm:$0xff] %v5849
  %5906 = vst [vmem:[%s7 + $0x1b0] sm:$0xff] %v5850
  %5907 = vst [vmem:[%s7 + $0x1b8] sm:$0xff] %v5851
  %v5908 = vld [vmem:[#allocation2 + $0x20] sm:$0xff]
  %v5909 = vld [vmem:[#allocation2 + $0x28] sm:$0xff]
  %v5910 = vld [vmem:[#allocation2 + $0x30] sm:$0xff]
  %v5911 = vld [vmem:[#allocation2 + $0x38] sm:$0xff]
  %v5912 = vld [vmem:[#allocation2 + $0x40] sm:$0xff]
  %v5913 = vld [vmem:[#allocation2 + $0x48] sm:$0xff]
  %v5914 = vld [vmem:[#allocation2 + $0x50] sm:$0xff]
  %v5915 = vld [vmem:[#allocation2 + $0x58] sm:$0xff]
  %v5916 = vld [vmem:[#allocation2 + $0x60] sm:$0xff]
  %v5917 = vld [vmem:[#allocation2 + $0x68] sm:$0xff]
  %v5918 = vld [vmem:[#allocation2 + $0x70] sm:$0xff]
  %v5919 = vld [vmem:[#allocation2 + $0x78] sm:$0xff]
  %v5920 = vld [vmem:[#allocation2 + $0x80] sm:$0xff]
  %v5921 = vld [vmem:[#allocation2 + $0x88] sm:$0xff]
  %v5922 = vld [vmem:[#allocation2 + $0x90] sm:$0xff]
  %v5923 = vld [vmem:[#allocation2 + $0x98] sm:$0xff]
  %v5924 = vld [vmem:[#allocation2 + $0xa0] sm:$0xff]
  %v5925 = vld [vmem:[#allocation2 + $0xa8] sm:$0xff]
  %v5926 = vld [vmem:[#allocation2 + $0xb0] sm:$0xff]
  %v5927 = vld [vmem:[#allocation2 + $0xb8] sm:$0xff]
  %v5928 = vld [vmem:[#allocation2 + $0xc0] sm:$0xff]
  %v5929 = vld [vmem:[#allocation2 + $0xc8] sm:$0xff]
  %v5930 = vld [vmem:[#allocation2 + $0xd0] sm:$0xff]
  %v5931 = vld [vmem:[#allocation2 + $0xd8] sm:$0xff]
  %v5932 = vld [vmem:[#allocation2 + $0xe0] sm:$0xff]
  %v5933 = vld [vmem:[#allocation2 + $0xe8] sm:$0xff]
  %v5934 = vld [vmem:[#allocation2 + $0xf0] sm:$0xff]
  %v5935 = vld [vmem:[#allocation2 + $0xf8] sm:$0xff]
  %v5936 = vld [vmem:[#allocation2 + $0x100] sm:$0x11]
  %s5937 = scalar_lea.vmem [#allocation3], 1280
  %v5938 = vld [vmem:[%s5937] sm:$0xff]
  %v5939 = vld [vmem:[%s5937 + $0x8] sm:$0xff]
  %v5940 = vld [vmem:[%s5937 + $0x10] sm:$0xff]
  %v5941 = vld [vmem:[%s5937 + $0x18] sm:$0xff]
  %v5942 = vld [vmem:[%s5937 + $0x20] sm:$0xff]
  %v5943 = vld [vmem:[%s5937 + $0x28] sm:$0xff]
  %v5944 = vld [vmem:[%s5937 + $0x30] sm:$0xff]
  %v5945 = vld [vmem:[%s5937 + $0x38] sm:$0xff]
  %v5946 = vld [vmem:[%s5937 + $0x40] sm:$0xff]
  %v5947 = vld [vmem:[%s5937 + $0x48] sm:$0xff]
  %v5948 = vld [vmem:[%s5937 + $0x50] sm:$0xff]
  %v5949 = vld [vmem:[%s5937 + $0x58] sm:$0xff]
  %v5950 = vld [vmem:[%s5937 + $0x60] sm:$0xff]
  %v5951 = vld [vmem:[%s5937 + $0x68] sm:$0xff]
  %v5952 = vld [vmem:[%s5937 + $0x70] sm:$0xff]
  %v5953 = vld [vmem:[%s5937 + $0x78] sm:$0xff]
  %v5954 = vld [vmem:[%s5937 + $0x80] sm:$0xff]
  %v5955 = vld [vmem:[%s5937 + $0x88] sm:$0xff]
  %v5956 = vld [vmem:[%s5937 + $0x90] sm:$0xff]
  %v5957 = vld [vmem:[%s5937 + $0x98] sm:$0xff]
  %v5958 = vld [vmem:[%s5937 + $0xa0] sm:$0xff]
  %v5959 = vld [vmem:[%s5937 + $0xa8] sm:$0xff]
  %v5960 = vld [vmem:[%s5937 + $0xb0] sm:$0xff]
  %v5961 = vld [vmem:[%s5937 + $0xb8] sm:$0xff]
  %v5962 = vld [vmem:[%s5937 + $0xc0] sm:$0xff]
  %v5963 = vld [vmem:[%s5937 + $0xc8] sm:$0xff]
  %v5964 = vld [vmem:[%s5937 + $0xd0] sm:$0xff]
  %v5965 = vld [vmem:[%s5937 + $0xd8] sm:$0xff]
  %v5966 = vld [vmem:[%s5937 + $0xe0] sm:$0xff]
  %v5967 = vld [vmem:[%s5937 + $0xe8] sm:$0xff]
  %v5968 = vld [vmem:[%s5937 + $0xf0] sm:$0xff]
  %v5969 = vld [vmem:[%s5937 + $0xf8] sm:$0xff]
  %v5999 = vunpack.c.l.b16 %v5908
  %v6000 = vunpack.c.h.b16 %v5908
  %v6001 = vunpack.c.l.b16 %v5909
  %v6002 = vunpack.c.h.b16 %v5909
  %v6003 = vunpack.c.l.b16 %v5910
  %v6004 = vunpack.c.h.b16 %v5910
  %v6005 = vunpack.c.l.b16 %v5911
  %v6006 = vunpack.c.h.b16 %v5911
  %v6007 = vunpack.c.l.b16 %v5912
  %v6008 = vunpack.c.h.b16 %v5912
  %v6009 = vunpack.c.l.b16 %v5913
  %v6010 = vunpack.c.h.b16 %v5913
  %v6011 = vunpack.c.l.b16 %v5914
  %v6012 = vunpack.c.h.b16 %v5914
  %v6013 = vunpack.c.l.b16 %v5915
  %v6014 = vunpack.c.h.b16 %v5915
  %v6015 = vunpack.c.l.b16 %v5916
  %v6016 = vunpack.c.h.b16 %v5916
  %v6017 = vunpack.c.l.b16 %v5917
  %v6018 = vunpack.c.h.b16 %v5917
  %v6019 = vunpack.c.l.b16 %v5918
  %v6020 = vunpack.c.h.b16 %v5918
  %v6021 = vunpack.c.l.b16 %v5919
  %v6022 = vunpack.c.h.b16 %v5919
  %v6023 = vunpack.c.l.b16 %v5920
  %v6024 = vunpack.c.h.b16 %v5920
  %v6025 = vunpack.c.l.b16 %v5921
  %v6026 = vunpack.c.h.b16 %v5921
  %v6027 = vunpack.c.l.b16 %v5922
  %v6028 = vunpack.c.h.b16 %v5922
  %v6029 = vunpack.c.l.b16 %v5923
  %v6030 = vunpack.c.h.b16 %v5923
  %v6031 = vunpack.c.l.b16 %v5924
  %v6032 = vunpack.c.h.b16 %v5924
  %v6033 = vunpack.c.l.b16 %v5925
  %v6034 = vunpack.c.h.b16 %v5925
  %v6035 = vunpack.c.l.b16 %v5926
  %v6036 = vunpack.c.h.b16 %v5926
  %v6037 = vunpack.c.l.b16 %v5927
  %v6038 = vunpack.c.h.b16 %v5927
  %v6039 = vunpack.c.l.b16 %v5928
  %v6040 = vunpack.c.h.b16 %v5928
  %v6041 = vunpack.c.l.b16 %v5929
  %v6042 = vunpack.c.h.b16 %v5929
  %v6043 = vunpack.c.l.b16 %v5930
  %v6044 = vunpack.c.h.b16 %v5930
  %v6045 = vunpack.c.l.b16 %v5931
  %v6046 = vunpack.c.h.b16 %v5931
  %v6047 = vunpack.c.l.b16 %v5932
  %v6048 = vunpack.c.h.b16 %v5932
  %v6049 = vunpack.c.l.b16 %v5933
  %v6050 = vunpack.c.h.b16 %v5933
  %v6051 = vunpack.c.l.b16 %v5934
  %v6052 = vunpack.c.h.b16 %v5934
  %v6053 = vunpack.c.l.b16 %v5935
  %v6054 = vunpack.c.h.b16 %v5935
  %v6055 = vunpack.c.l.b16 %v5936
  %v6056 = vunpack.c.h.b16 %v5936
  %v6057 = vpack.c.b16 %v6001, %v5999
  %v6058 = vpack.c.b16 %v6002, %v6000
  %v6059 = vpack.c.b16 %v6005, %v6003
  %v6060 = vpack.c.b16 %v6006, %v6004
  %v6061 = vpack.c.b16 %v6009, %v6007
  %v6062 = vpack.c.b16 %v6010, %v6008
  %v6063 = vpack.c.b16 %v6013, %v6011
  %v6064 = vpack.c.b16 %v6014, %v6012
  %v6065 = vpack.c.b16 %v6017, %v6015
  %v6066 = vpack.c.b16 %v6018, %v6016
  %v6067 = vpack.c.b16 %v6021, %v6019
  %v6068 = vpack.c.b16 %v6022, %v6020
  %v6069 = vpack.c.b16 %v6025, %v6023
  %v6070 = vpack.c.b16 %v6026, %v6024
  %v6071 = vpack.c.b16 %v6029, %v6027
  %v6072 = vpack.c.b16 %v6030, %v6028
  %v6073 = vpack.c.b16 %v6033, %v6031
  %v6074 = vpack.c.b16 %v6034, %v6032
  %v6075 = vpack.c.b16 %v6037, %v6035
  %v6076 = vpack.c.b16 %v6038, %v6036
  %v6077 = vpack.c.b16 %v6041, %v6039
  %v6078 = vpack.c.b16 %v6042, %v6040
  %v6079 = vpack.c.b16 %v6045, %v6043
  %v6080 = vpack.c.b16 %v6046, %v6044
  %v6081 = vpack.c.b16 %v6049, %v6047
  %v6082 = vpack.c.b16 %v6050, %v6048
  %v6083 = vpack.c.b16 %v6053, %v6051
  %v6084 = vpack.c.b16 %v6054, %v6052
  %v6085 = vpack.c.b16 %v6055, %v6055
  %v6086 = vpack.c.b16 %v6056, %v6056
  %v6088 = vshrl.u32 %v6057, 16
  %v6090 = vshll.u32 %v6057, 16
  %v6092 = vrot.slane %v6090, 1
  %v6093 = vor.u32 %v6088, %v6092
  %v6095 = vshll.u32 %v6059, 16
  %v6097 = vrot.slane %v6095, 1
  %v6098 = vsel %vm3468, %v6093, %v6097
  %v6100 = vshrl.u32 %v6058, 16
  %v6102 = vshll.u32 %v6058, 16
  %v6104 = vrot.slane %v6102, 1
  %v6105 = vor.u32 %v6100, %v6104
  %v6107 = vshll.u32 %v6060, 16
  %v6109 = vrot.slane %v6107, 1
  %v6110 = vsel %vm3468, %v6105, %v6109
  %v6111 = vshrl.u32 %v6059, 16
  %v6113 = vor.u32 %v6111, %v6097
  %v6115 = vshll.u32 %v6061, 16
  %v6117 = vrot.slane %v6115, 1
  %v6118 = vsel %vm3468, %v6113, %v6117
  %v6119 = vshrl.u32 %v6060, 16
  %v6121 = vor.u32 %v6119, %v6109
  %v6123 = vshll.u32 %v6062, 16
  %v6125 = vrot.slane %v6123, 1
  %v6126 = vsel %vm3468, %v6121, %v6125
  %v6127 = vshrl.u32 %v6061, 16
  %v6129 = vor.u32 %v6127, %v6117
  %v6131 = vshll.u32 %v6063, 16
  %v6133 = vrot.slane %v6131, 1
  %v6134 = vsel %vm3468, %v6129, %v6133
  %v6135 = vshrl.u32 %v6062, 16
  %v6137 = vor.u32 %v6135, %v6125
  %v6139 = vshll.u32 %v6064, 16
  %v6141 = vrot.slane %v6139, 1
  %v6142 = vsel %vm3468, %v6137, %v6141
  %v6143 = vshrl.u32 %v6063, 16
  %v6145 = vor.u32 %v6143, %v6133
  %v6147 = vshll.u32 %v6065, 16
  %v6149 = vrot.slane %v6147, 1
  %v6150 = vsel %vm3468, %v6145, %v6149
  %v6151 = vshrl.u32 %v6064, 16
  %v6153 = vor.u32 %v6151, %v6141
  %v6155 = vshll.u32 %v6066, 16
  %v6157 = vrot.slane %v6155, 1
  %v6158 = vsel %vm3468, %v6153, %v6157
  %v6159 = vshrl.u32 %v6065, 16
  %v6161 = vor.u32 %v6159, %v6149
  %v6163 = vshll.u32 %v6067, 16
  %v6165 = vrot.slane %v6163, 1
  %v6166 = vsel %vm3468, %v6161, %v6165
  %v6167 = vshrl.u32 %v6066, 16
  %v6169 = vor.u32 %v6167, %v6157
  %v6171 = vshll.u32 %v6068, 16
  %v6173 = vrot.slane %v6171, 1
  %v6174 = vsel %vm3468, %v6169, %v6173
  %v6175 = vshrl.u32 %v6067, 16
  %v6177 = vor.u32 %v6175, %v6165
  %v6179 = vshll.u32 %v6069, 16
  %v6181 = vrot.slane %v6179, 1
  %v6182 = vsel %vm3468, %v6177, %v6181
  %v6183 = vshrl.u32 %v6068, 16
  %v6185 = vor.u32 %v6183, %v6173
  %v6187 = vshll.u32 %v6070, 16
  %v6189 = vrot.slane %v6187, 1
  %v6190 = vsel %vm3468, %v6185, %v6189
  %v6191 = vshrl.u32 %v6069, 16
  %v6193 = vor.u32 %v6191, %v6181
  %v6195 = vshll.u32 %v6071, 16
  %v6197 = vrot.slane %v6195, 1
  %v6198 = vsel %vm3468, %v6193, %v6197
  %v6199 = vshrl.u32 %v6070, 16
  %v6201 = vor.u32 %v6199, %v6189
  %v6203 = vshll.u32 %v6072, 16
  %v6205 = vrot.slane %v6203, 1
  %v6206 = vsel %vm3468, %v6201, %v6205
  %v6207 = vshrl.u32 %v6071, 16
  %v6209 = vor.u32 %v6207, %v6197
  %v6211 = vshll.u32 %v6073, 16
  %v6213 = vrot.slane %v6211, 1
  %v6214 = vsel %vm3468, %v6209, %v6213
  %v6215 = vshrl.u32 %v6072, 16
  %v6217 = vor.u32 %v6215, %v6205
  %v6219 = vshll.u32 %v6074, 16
  %v6221 = vrot.slane %v6219, 1
  %v6222 = vsel %vm3468, %v6217, %v6221
  %v6223 = vshrl.u32 %v6073, 16
  %v6225 = vor.u32 %v6223, %v6213
  %v6227 = vshll.u32 %v6075, 16
  %v6229 = vrot.slane %v6227, 1
  %v6230 = vsel %vm3468, %v6225, %v6229
  %v6231 = vshrl.u32 %v6074, 16
  %v6233 = vor.u32 %v6231, %v6221
  %v6235 = vshll.u32 %v6076, 16
  %v6237 = vrot.slane %v6235, 1
  %v6238 = vsel %vm3468, %v6233, %v6237
  %v6239 = vshrl.u32 %v6075, 16
  %v6241 = vor.u32 %v6239, %v6229
  %v6243 = vshll.u32 %v6077, 16
  %v6245 = vrot.slane %v6243, 1
  %v6246 = vsel %vm3468, %v6241, %v6245
  %v6247 = vshrl.u32 %v6076, 16
  %v6249 = vor.u32 %v6247, %v6237
  %v6251 = vshll.u32 %v6078, 16
  %v6253 = vrot.slane %v6251, 1
  %v6254 = vsel %vm3468, %v6249, %v6253
  %v6255 = vshrl.u32 %v6077, 16
  %v6257 = vor.u32 %v6255, %v6245
  %v6259 = vshll.u32 %v6079, 16
  %v6261 = vrot.slane %v6259, 1
  %v6262 = vsel %vm3468, %v6257, %v6261
  %v6263 = vshrl.u32 %v6078, 16
  %v6265 = vor.u32 %v6263, %v6253
  %v6267 = vshll.u32 %v6080, 16
  %v6269 = vrot.slane %v6267, 1
  %v6270 = vsel %vm3468, %v6265, %v6269
  %v6271 = vshrl.u32 %v6079, 16
  %v6273 = vor.u32 %v6271, %v6261
  %v6275 = vshll.u32 %v6081, 16
  %v6277 = vrot.slane %v6275, 1
  %v6278 = vsel %vm3468, %v6273, %v6277
  %v6279 = vshrl.u32 %v6080, 16
  %v6281 = vor.u32 %v6279, %v6269
  %v6283 = vshll.u32 %v6082, 16
  %v6285 = vrot.slane %v6283, 1
  %v6286 = vsel %vm3468, %v6281, %v6285
  %v6287 = vshrl.u32 %v6081, 16
  %v6289 = vor.u32 %v6287, %v6277
  %v6291 = vshll.u32 %v6083, 16
  %v6293 = vrot.slane %v6291, 1
  %v6294 = vsel %vm3468, %v6289, %v6293
  %v6295 = vshrl.u32 %v6082, 16
  %v6297 = vor.u32 %v6295, %v6285
  %v6299 = vshll.u32 %v6084, 16
  %v6301 = vrot.slane %v6299, 1
  %v6302 = vsel %vm3468, %v6297, %v6301
  %v6303 = vshrl.u32 %v6083, 16
  %v6305 = vor.u32 %v6303, %v6293
  %v6307 = vshll.u32 %v6085, 16
  %v6309 = vrot.slane %v6307, 1
  %v6310 = vsel %vm3468, %v6305, %v6309
  %v6311 = vshrl.u32 %v6084, 16
  %v6313 = vor.u32 %v6311, %v6301
  %v6315 = vshll.u32 %v6086, 16
  %v6317 = vrot.slane %v6315, 1
  %v6318 = vsel %vm3468, %v6313, %v6317
  %v6379 = vunpack.c.l.b16 %v5938
  %v6380 = vunpack.c.h.b16 %v5938
  %v6381 = vunpack.c.l.b16 %v5939
  %v6382 = vunpack.c.h.b16 %v5939
  %v6383 = vunpack.c.l.b16 %v5940
  %v6384 = vunpack.c.h.b16 %v5940
  %v6385 = vunpack.c.l.b16 %v5941
  %v6386 = vunpack.c.h.b16 %v5941
  %v6387 = vunpack.c.l.b16 %v5942
  %v6388 = vunpack.c.h.b16 %v5942
  %v6389 = vunpack.c.l.b16 %v5943
  %v6390 = vunpack.c.h.b16 %v5943
  %v6391 = vunpack.c.l.b16 %v5944
  %v6392 = vunpack.c.h.b16 %v5944
  %v6393 = vunpack.c.l.b16 %v5945
  %v6394 = vunpack.c.h.b16 %v5945
  %v6395 = vunpack.c.l.b16 %v5946
  %v6396 = vunpack.c.h.b16 %v5946
  %v6397 = vunpack.c.l.b16 %v5947
  %v6398 = vunpack.c.h.b16 %v5947
  %v6399 = vunpack.c.l.b16 %v5948
  %v6400 = vunpack.c.h.b16 %v5948
  %v6401 = vunpack.c.l.b16 %v5949
  %v6402 = vunpack.c.h.b16 %v5949
  %v6403 = vunpack.c.l.b16 %v5950
  %v6404 = vunpack.c.h.b16 %v5950
  %v6405 = vunpack.c.l.b16 %v5951
  %v6406 = vunpack.c.h.b16 %v5951
  %v6407 = vunpack.c.l.b16 %v5952
  %v6408 = vunpack.c.h.b16 %v5952
  %v6409 = vunpack.c.l.b16 %v5953
  %v6410 = vunpack.c.h.b16 %v5953
  %v6411 = vunpack.c.l.b16 %v5954
  %v6412 = vunpack.c.h.b16 %v5954
  %v6413 = vunpack.c.l.b16 %v5955
  %v6414 = vunpack.c.h.b16 %v5955
  %v6415 = vunpack.c.l.b16 %v5956
  %v6416 = vunpack.c.h.b16 %v5956
  %v6417 = vunpack.c.l.b16 %v5957
  %v6418 = vunpack.c.h.b16 %v5957
  %v6419 = vunpack.c.l.b16 %v5958
  %v6420 = vunpack.c.h.b16 %v5958
  %v6421 = vunpack.c.l.b16 %v5959
  %v6422 = vunpack.c.h.b16 %v5959
  %v6423 = vunpack.c.l.b16 %v5960
  %v6424 = vunpack.c.h.b16 %v5960
  %v6425 = vunpack.c.l.b16 %v5961
  %v6426 = vunpack.c.h.b16 %v5961
  %v6427 = vunpack.c.l.b16 %v5962
  %v6428 = vunpack.c.h.b16 %v5962
  %v6429 = vunpack.c.l.b16 %v5963
  %v6430 = vunpack.c.h.b16 %v5963
  %v6431 = vunpack.c.l.b16 %v5964
  %v6432 = vunpack.c.h.b16 %v5964
  %v6433 = vunpack.c.l.b16 %v5965
  %v6434 = vunpack.c.h.b16 %v5965
  %v6435 = vunpack.c.l.b16 %v5966
  %v6436 = vunpack.c.h.b16 %v5966
  %v6437 = vunpack.c.l.b16 %v5967
  %v6438 = vunpack.c.h.b16 %v5967
  %v6439 = vunpack.c.l.b16 %v5968
  %v6440 = vunpack.c.h.b16 %v5968
  %v6441 = vunpack.c.l.b16 %v5969
  %v6442 = vunpack.c.h.b16 %v5969
  %v6443 = vpack.c.b16 %v6381, %v6379
  %v6444 = vpack.c.b16 %v6382, %v6380
  %v6445 = vpack.c.b16 %v6385, %v6383
  %v6446 = vpack.c.b16 %v6386, %v6384
  %v6447 = vpack.c.b16 %v6389, %v6387
  %v6448 = vpack.c.b16 %v6390, %v6388
  %v6449 = vpack.c.b16 %v6393, %v6391
  %v6450 = vpack.c.b16 %v6394, %v6392
  %v6451 = vpack.c.b16 %v6397, %v6395
  %v6452 = vpack.c.b16 %v6398, %v6396
  %v6453 = vpack.c.b16 %v6401, %v6399
  %v6454 = vpack.c.b16 %v6402, %v6400
  %v6455 = vpack.c.b16 %v6405, %v6403
  %v6456 = vpack.c.b16 %v6406, %v6404
  %v6457 = vpack.c.b16 %v6409, %v6407
  %v6458 = vpack.c.b16 %v6410, %v6408
  %v6459 = vpack.c.b16 %v6413, %v6411
  %v6460 = vpack.c.b16 %v6414, %v6412
  %v6461 = vpack.c.b16 %v6417, %v6415
  %v6462 = vpack.c.b16 %v6418, %v6416
  %v6463 = vpack.c.b16 %v6421, %v6419
  %v6464 = vpack.c.b16 %v6422, %v6420
  %v6465 = vpack.c.b16 %v6425, %v6423
  %v6466 = vpack.c.b16 %v6426, %v6424
  %v6467 = vpack.c.b16 %v6429, %v6427
  %v6468 = vpack.c.b16 %v6430, %v6428
  %v6469 = vpack.c.b16 %v6433, %v6431
  %v6470 = vpack.c.b16 %v6434, %v6432
  %v6471 = vpack.c.b16 %v6437, %v6435
  %v6472 = vpack.c.b16 %v6438, %v6436
  %v6473 = vpack.c.b16 %v6441, %v6439
  %v6474 = vpack.c.b16 %v6442, %v6440
  %6507 = vmatprep.subr.bf16.mxu0 %v6458
  %6508 = vmatpush1.bf16.msra.mxu0 %v6457
  %6509 = vmatprep.subr.bf16.mxu0 %v6456
  %6510 = vmatpush1.bf16.msra.mxu0 %v6455
  %6511 = vmatprep.subr.bf16.mxu0 %v6454
  %6512 = vmatpush1.bf16.msra.mxu0 %v6453
  %6513 = vmatprep.subr.bf16.mxu0 %v6452
  %6514 = vmatpush1.bf16.msra.mxu0 %v6451
  %6515 = vmatprep.subr.bf16.mxu0 %v6450
  %6516 = vmatpush1.bf16.msra.mxu0 %v6449
  %6517 = vmatprep.subr.bf16.mxu0 %v6448
  %6518 = vmatpush1.bf16.msra.mxu0 %v6447
  %6519 = vmatprep.subr.bf16.mxu0 %v6446
  %6520 = vmatpush1.bf16.msra.mxu0 %v6445
  %6521 = vmatprep.subr.bf16.mxu0 %v6444
  %6522 = vmatpush1.bf16.msra.mxu0 %v6443
  %6523 = vmatprep.subr.bf16.mxu0 %v6474
  %6524 = vmatpush2.bf16.msra.mxu0 %v6473
  %6525 = vmatprep.subr.bf16.mxu0 %v6472
  %6526 = vmatpush2.bf16.msra.mxu0 %v6471
  %6527 = vmatprep.subr.bf16.mxu0 %v6470
  %6528 = vmatpush2.bf16.msra.mxu0 %v6469
  %6529 = vmatprep.subr.bf16.mxu0 %v6468
  %6530 = vmatpush2.bf16.msra.mxu0 %v6467
  %6531 = vmatprep.subr.bf16.mxu0 %v6466
  %6532 = vmatpush2.bf16.msra.mxu0 %v6465
  %6533 = vmatprep.subr.bf16.mxu0 %v6464
  %6534 = vmatpush2.bf16.msra.mxu0 %v6463
  %6535 = vmatprep.subr.bf16.mxu0 %v6462
  %6536 = vmatpush2.bf16.msra.mxu0 %v6461
  %6537 = vmatprep.subr.bf16.mxu0 %v6460
  %6538 = vmatpush2.bf16.msra.mxu0 %v6459
  %6539 = vmatprep.mubr.bf16.mxu0 %v6110
  %6540 = vmatmul.mubr.bf16.gmra.mxu0 %v6098
  %v6541 = vpop.f32.mrf.mxu0
  %v6542 = vadd.f32 0.0, %v6541
  %v6543 = vpop.f32.mrf.mxu0
  %v6544 = vadd.f32 0.0, %v6543
  %v6545 = vpop.f32.mrf.mxu0
  %v6546 = vadd.f32 0.0, %v6545
  %v6547 = vpop.f32.mrf.mxu0
  %v6548 = vadd.f32 0.0, %v6547
  %6549 = vmatprep.mubr.bf16.mxu0 %v6126
  %6550 = vmatmul.mubr.bf16.gmra.mxu0 %v6118
  %v6551 = vpop.f32.mrf.mxu0
  %v6552 = vadd.f32 0.0, %v6551
  %v6553 = vpop.f32.mrf.mxu0
  %v6554 = vadd.f32 0.0, %v6553
  %v6555 = vpop.f32.mrf.mxu0
  %v6556 = vadd.f32 0.0, %v6555
  %v6557 = vpop.f32.mrf.mxu0
  %v6558 = vadd.f32 0.0, %v6557
  %6559 = vmatprep.mubr.bf16.mxu0 %v6142
  %6560 = vmatmul.mubr.bf16.gmra.mxu0 %v6134
  %v6561 = vpop.f32.mrf.mxu0
  %v6562 = vadd.f32 0.0, %v6561
  %v6563 = vpop.f32.mrf.mxu0
  %v6564 = vadd.f32 0.0, %v6563
  %v6565 = vpop.f32.mrf.mxu0
  %v6566 = vadd.f32 0.0, %v6565
  %v6567 = vpop.f32.mrf.mxu0
  %v6568 = vadd.f32 0.0, %v6567
  %6569 = vmatprep.mubr.bf16.mxu0 %v6158
  %6570 = vmatmul.mubr.bf16.gmra.mxu0 %v6150
  %v6571 = vpop.f32.mrf.mxu0
  %v6572 = vadd.f32 0.0, %v6571
  %v6573 = vpop.f32.mrf.mxu0
  %v6574 = vadd.f32 0.0, %v6573
  %v6575 = vpop.f32.mrf.mxu0
  %v6576 = vadd.f32 0.0, %v6575
  %v6577 = vpop.f32.mrf.mxu0
  %v6578 = vadd.f32 0.0, %v6577
  %6579 = vmatprep.mubr.bf16.mxu0 %v6174
  %6580 = vmatmul.mubr.bf16.gmra.mxu0 %v6166
  %v6581 = vpop.f32.mrf.mxu0
  %v6582 = vadd.f32 0.0, %v6581
  %v6583 = vpop.f32.mrf.mxu0
  %v6584 = vadd.f32 0.0, %v6583
  %v6585 = vpop.f32.mrf.mxu0
  %v6586 = vadd.f32 0.0, %v6585
  %v6587 = vpop.f32.mrf.mxu0
  %v6588 = vadd.f32 0.0, %v6587
  %6589 = vmatprep.mubr.bf16.mxu0 %v6190
  %6590 = vmatmul.mubr.bf16.gmra.mxu0 %v6182
  %v6591 = vpop.f32.mrf.mxu0
  %v6592 = vadd.f32 0.0, %v6591
  %v6593 = vpop.f32.mrf.mxu0
  %v6594 = vadd.f32 0.0, %v6593
  %v6595 = vpop.f32.mrf.mxu0
  %v6596 = vadd.f32 0.0, %v6595
  %v6597 = vpop.f32.mrf.mxu0
  %v6598 = vadd.f32 0.0, %v6597
  %6599 = vmatprep.mubr.bf16.mxu0 %v6206
  %6600 = vmatmul.mubr.bf16.gmra.mxu0 %v6198
  %v6601 = vpop.f32.mrf.mxu0
  %v6602 = vadd.f32 0.0, %v6601
  %v6603 = vpop.f32.mrf.mxu0
  %v6604 = vadd.f32 0.0, %v6603
  %v6605 = vpop.f32.mrf.mxu0
  %v6606 = vadd.f32 0.0, %v6605
  %v6607 = vpop.f32.mrf.mxu0
  %v6608 = vadd.f32 0.0, %v6607
  %6609 = vmatprep.mubr.bf16.mxu0 %v6222
  %6610 = vmatmul.mubr.bf16.gmra.mxu0 %v6214
  %v6611 = vpop.f32.mrf.mxu0
  %v6612 = vadd.f32 0.0, %v6611
  %v6613 = vpop.f32.mrf.mxu0
  %v6614 = vadd.f32 0.0, %v6613
  %v6615 = vpop.f32.mrf.mxu0
  %v6616 = vadd.f32 0.0, %v6615
  %v6617 = vpop.f32.mrf.mxu0
  %v6618 = vadd.f32 0.0, %v6617
  %6619 = vmatprep.mubr.bf16.mxu0 %v6238
  %6620 = vmatmul.mubr.bf16.gmra.mxu0 %v6230
  %v6621 = vpop.f32.mrf.mxu0
  %v6622 = vadd.f32 0.0, %v6621
  %v6623 = vpop.f32.mrf.mxu0
  %v6624 = vadd.f32 0.0, %v6623
  %v6625 = vpop.f32.mrf.mxu0
  %v6626 = vadd.f32 0.0, %v6625
  %v6627 = vpop.f32.mrf.mxu0
  %v6628 = vadd.f32 0.0, %v6627
  %6629 = vmatprep.mubr.bf16.mxu0 %v6254
  %6630 = vmatmul.mubr.bf16.gmra.mxu0 %v6246
  %v6631 = vpop.f32.mrf.mxu0
  %v6632 = vadd.f32 0.0, %v6631
  %v6633 = vpop.f32.mrf.mxu0
  %v6634 = vadd.f32 0.0, %v6633
  %v6635 = vpop.f32.mrf.mxu0
  %v6636 = vadd.f32 0.0, %v6635
  %v6637 = vpop.f32.mrf.mxu0
  %v6638 = vadd.f32 0.0, %v6637
  %6639 = vmatprep.mubr.bf16.mxu0 %v6270
  %6640 = vmatmul.mubr.bf16.gmra.mxu0 %v6262
  %v6641 = vpop.f32.mrf.mxu0
  %v6642 = vadd.f32 0.0, %v6641
  %v6643 = vpop.f32.mrf.mxu0
  %v6644 = vadd.f32 0.0, %v6643
  %v6645 = vpop.f32.mrf.mxu0
  %v6646 = vadd.f32 0.0, %v6645
  %v6647 = vpop.f32.mrf.mxu0
  %v6648 = vadd.f32 0.0, %v6647
  %6649 = vmatprep.mubr.bf16.mxu0 %v6286
  %6650 = vmatmul.mubr.bf16.gmra.mxu0 %v6278
  %v6651 = vpop.f32.mrf.mxu0
  %v6652 = vadd.f32 0.0, %v6651
  %v6653 = vpop.f32.mrf.mxu0
  %v6654 = vadd.f32 0.0, %v6653
  %v6655 = vpop.f32.mrf.mxu0
  %v6656 = vadd.f32 0.0, %v6655
  %v6657 = vpop.f32.mrf.mxu0
  %v6658 = vadd.f32 0.0, %v6657
  %6659 = vmatprep.mubr.bf16.mxu0 %v6302
  %6660 = vmatmul.mubr.bf16.gmra.mxu0 %v6294
  %v6661 = vpop.f32.mrf.mxu0
  %v6662 = vadd.f32 0.0, %v6661
  %v6663 = vpop.f32.mrf.mxu0
  %v6664 = vadd.f32 0.0, %v6663
  %v6665 = vpop.f32.mrf.mxu0
  %v6666 = vadd.f32 0.0, %v6665
  %v6667 = vpop.f32.mrf.mxu0
  %v6668 = vadd.f32 0.0, %v6667
  %6669 = vmatprep.mubr.bf16.mxu0 %v6318
  %6670 = vmatmul.mubr.bf16.gmra.mxu0 %v6310
  %v6671 = vpop.f32.mrf.mxu0
  %v6672 = vadd.f32 0.0, %v6671
  %v6673 = vpop.f32.mrf.mxu0
  %v6674 = vadd.f32 0.0, %v6673
  %v6675 = vpop.f32.mrf.mxu0
  %v6676 = vadd.f32 0.0, %v6675
  %v6677 = vpop.f32.mrf.mxu0
  %v6678 = vadd.f32 0.0, %v6677
  %6679 = vdwg.mxu0
  %v6680 = vld [vmem:[%s7] sm:$0xff]
  %v6681 = vld [vmem:[%s7 + $0x8] sm:$0xff]
  %v6682 = vld [vmem:[%s7 + $0x10] sm:$0xff]
  %v6683 = vld [vmem:[%s7 + $0x18] sm:$0xff]
  %v6684 = vld [vmem:[%s7 + $0x20] sm:$0xff]
  %v6685 = vld [vmem:[%s7 + $0x28] sm:$0xff]
  %v6686 = vld [vmem:[%s7 + $0x30] sm:$0xff]
  %v6687 = vld [vmem:[%s7 + $0x38] sm:$0xff]
  %v6688 = vld [vmem:[%s7 + $0x40] sm:$0xff]
  %v6689 = vld [vmem:[%s7 + $0x48] sm:$0xff]
  %v6690 = vld [vmem:[%s7 + $0x50] sm:$0xff]
  %v6691 = vld [vmem:[%s7 + $0x58] sm:$0xff]
  %v6692 = vld [vmem:[%s7 + $0x60] sm:$0xff]
  %v6693 = vld [vmem:[%s7 + $0x68] sm:$0xff]
  %v6694 = vld [vmem:[%s7 + $0x70] sm:$0xff]
  %v6695 = vld [vmem:[%s7 + $0x78] sm:$0xff]
  %v6696 = vld [vmem:[%s7 + $0x80] sm:$0xff]
  %v6697 = vld [vmem:[%s7 + $0x88] sm:$0xff]
  %v6698 = vld [vmem:[%s7 + $0x90] sm:$0xff]
  %v6699 = vld [vmem:[%s7 + $0x98] sm:$0xff]
  %v6700 = vld [vmem:[%s7 + $0xa0] sm:$0xff]
  %v6701 = vld [vmem:[%s7 + $0xa8] sm:$0xff]
  %v6702 = vld [vmem:[%s7 + $0xb0] sm:$0xff]
  %v6703 = vld [vmem:[%s7 + $0xb8] sm:$0xff]
  %v6704 = vld [vmem:[%s7 + $0xc0] sm:$0xff]
  %v6705 = vld [vmem:[%s7 + $0xc8] sm:$0xff]
  %v6706 = vld [vmem:[%s7 + $0xd0] sm:$0xff]
  %v6707 = vld [vmem:[%s7 + $0xd8] sm:$0xff]
  %v6708 = vld [vmem:[%s7 + $0xe0] sm:$0xff]
  %v6709 = vld [vmem:[%s7 + $0xe8] sm:$0xff]
  %v6710 = vld [vmem:[%s7 + $0xf0] sm:$0xff]
  %v6711 = vld [vmem:[%s7 + $0xf8] sm:$0xff]
  %v6712 = vld [vmem:[%s7 + $0x100] sm:$0xff]
  %v6713 = vld [vmem:[%s7 + $0x108] sm:$0xff]
  %v6714 = vld [vmem:[%s7 + $0x110] sm:$0xff]
  %v6715 = vld [vmem:[%s7 + $0x118] sm:$0xff]
  %v6716 = vld [vmem:[%s7 + $0x120] sm:$0xff]
  %v6717 = vld [vmem:[%s7 + $0x128] sm:$0xff]
  %v6718 = vld [vmem:[%s7 + $0x130] sm:$0xff]
  %v6719 = vld [vmem:[%s7 + $0x138] sm:$0xff]
  %v6720 = vld [vmem:[%s7 + $0x140] sm:$0xff]
  %v6721 = vld [vmem:[%s7 + $0x148] sm:$0xff]
  %v6722 = vld [vmem:[%s7 + $0x150] sm:$0xff]
  %v6723 = vld [vmem:[%s7 + $0x158] sm:$0xff]
  %v6724 = vld [vmem:[%s7 + $0x160] sm:$0xff]
  %v6725 = vld [vmem:[%s7 + $0x168] sm:$0xff]
  %v6726 = vld [vmem:[%s7 + $0x170] sm:$0xff]
  %v6727 = vld [vmem:[%s7 + $0x178] sm:$0xff]
  %v6728 = vld [vmem:[%s7 + $0x180] sm:$0xff]
  %v6729 = vld [vmem:[%s7 + $0x188] sm:$0xff]
  %v6730 = vld [vmem:[%s7 + $0x190] sm:$0xff]
  %v6731 = vld [vmem:[%s7 + $0x198] sm:$0xff]
  %v6732 = vld [vmem:[%s7 + $0x1a0] sm:$0xff]
  %v6733 = vld [vmem:[%s7 + $0x1a8] sm:$0xff]
  %v6734 = vld [vmem:[%s7 + $0x1b0] sm:$0xff]
  %v6735 = vld [vmem:[%s7 + $0x1b8] sm:$0xff]
  %v6736 = vadd.f32 %v6680, %v6542
  %v6737 = vadd.f32 %v6681, %v6544
  %v6738 = vadd.f32 %v6682, %v6546
  %v6739 = vadd.f32 %v6683, %v6548
  %v6740 = vadd.f32 %v6684, %v6552
  %v6741 = vadd.f32 %v6685, %v6554
  %v6742 = vadd.f32 %v6686, %v6556
  %v6743 = vadd.f32 %v6687, %v6558
  %v6744 = vadd.f32 %v6688, %v6562
  %v6745 = vadd.f32 %v6689, %v6564
  %v6746 = vadd.f32 %v6690, %v6566
  %v6747 = vadd.f32 %v6691, %v6568
  %v6748 = vadd.f32 %v6692, %v6572
  %v6749 = vadd.f32 %v6693, %v6574
  %v6750 = vadd.f32 %v6694, %v6576
  %v6751 = vadd.f32 %v6695, %v6578
  %v6752 = vadd.f32 %v6696, %v6582
  %v6753 = vadd.f32 %v6697, %v6584
  %v6754 = vadd.f32 %v6698, %v6586
  %v6755 = vadd.f32 %v6699, %v6588
  %v6756 = vadd.f32 %v6700, %v6592
  %v6757 = vadd.f32 %v6701, %v6594
  %v6758 = vadd.f32 %v6702, %v6596
  %v6759 = vadd.f32 %v6703, %v6598
  %v6760 = vadd.f32 %v6704, %v6602
  %v6761 = vadd.f32 %v6705, %v6604
  %v6762 = vadd.f32 %v6706, %v6606
  %v6763 = vadd.f32 %v6707, %v6608
  %v6764 = vadd.f32 %v6708, %v6612
  %v6765 = vadd.f32 %v6709, %v6614
  %v6766 = vadd.f32 %v6710, %v6616
  %v6767 = vadd.f32 %v6711, %v6618
  %v6768 = vadd.f32 %v6712, %v6622
  %v6769 = vadd.f32 %v6713, %v6624
  %v6770 = vadd.f32 %v6714, %v6626
  %v6771 = vadd.f32 %v6715, %v6628
  %v6772 = vadd.f32 %v6716, %v6632
  %v6773 = vadd.f32 %v6717, %v6634
  %v6774 = vadd.f32 %v6718, %v6636
  %v6775 = vadd.f32 %v6719, %v6638
  %v6776 = vadd.f32 %v6720, %v6642
  %v6777 = vadd.f32 %v6721, %v6644
  %v6778 = vadd.f32 %v6722, %v6646
  %v6779 = vadd.f32 %v6723, %v6648
  %v6780 = vadd.f32 %v6724, %v6652
  %v6781 = vadd.f32 %v6725, %v6654
  %v6782 = vadd.f32 %v6726, %v6656
  %v6783 = vadd.f32 %v6727, %v6658
  %v6784 = vadd.f32 %v6728, %v6662
  %v6785 = vadd.f32 %v6729, %v6664
  %v6786 = vadd.f32 %v6730, %v6666
  %v6787 = vadd.f32 %v6731, %v6668
  %v6788 = vadd.f32 %v6732, %v6672
  %v6789 = vadd.f32 %v6733, %v6674
  %v6790 = vadd.f32 %v6734, %v6676
  %v6791 = vadd.f32 %v6735, %v6678
  %6792 = vst [vmem:[%s7] sm:$0xff] %v6736
  %6793 = vst [vmem:[%s7 + $0x8] sm:$0xff] %v6737
  %6794 = vst [vmem:[%s7 + $0x10] sm:$0xff] %v6738
  %6795 = vst [vmem:[%s7 + $0x18] sm:$0xff] %v6739
  %6796 = vst [vmem:[%s7 + $0x20] sm:$0xff] %v6740
  %6797 = vst [vmem:[%s7 + $0x28] sm:$0xff] %v6741
  %6798 = vst [vmem:[%s7 + $0x30] sm:$0xff] %v6742
  %6799 = vst [vmem:[%s7 + $0x38] sm:$0xff] %v6743
  %6800 = vst [vmem:[%s7 + $0x40] sm:$0xff] %v6744
  %6801 = vst [vmem:[%s7 + $0x48] sm:$0xff] %v6745
  %6802 = vst [vmem:[%s7 + $0x50] sm:$0xff] %v6746
  %6803 = vst [vmem:[%s7 + $0x58] sm:$0xff] %v6747
  %6804 = vst [vmem:[%s7 + $0x60] sm:$0xff] %v6748
  %6805 = vst [vmem:[%s7 + $0x68] sm:$0xff] %v6749
  %6806 = vst [vmem:[%s7 + $0x70] sm:$0xff] %v6750
  %6807 = vst [vmem:[%s7 + $0x78] sm:$0xff] %v6751
  %6808 = vst [vmem:[%s7 + $0x80] sm:$0xff] %v6752
  %6809 = vst [vmem:[%s7 + $0x88] sm:$0xff] %v6753
  %6810 = vst [vmem:[%s7 + $0x90] sm:$0xff] %v6754
  %6811 = vst [vmem:[%s7 + $0x98] sm:$0xff] %v6755
  %6812 = vst [vmem:[%s7 + $0xa0] sm:$0xff] %v6756
  %6813 = vst [vmem:[%s7 + $0xa8] sm:$0xff] %v6757
  %6814 = vst [vmem:[%s7 + $0xb0] sm:$0xff] %v6758
  %6815 = vst [vmem:[%s7 + $0xb8] sm:$0xff] %v6759
  %6816 = vst [vmem:[%s7 + $0xc0] sm:$0xff] %v6760
  %6817 = vst [vmem:[%s7 + $0xc8] sm:$0xff] %v6761
  %6818 = vst [vmem:[%s7 + $0xd0] sm:$0xff] %v6762
  %6819 = vst [vmem:[%s7 + $0xd8] sm:$0xff] %v6763
  %6820 = vst [vmem:[%s7 + $0xe0] sm:$0xff] %v6764
  %6821 = vst [vmem:[%s7 + $0xe8] sm:$0xff] %v6765
  %6822 = vst [vmem:[%s7 + $0xf0] sm:$0xff] %v6766
  %6823 = vst [vmem:[%s7 + $0xf8] sm:$0xff] %v6767
  %6824 = vst [vmem:[%s7 + $0x100] sm:$0xff] %v6768
  %6825 = vst [vmem:[%s7 + $0x108] sm:$0xff] %v6769
  %6826 = vst [vmem:[%s7 + $0x110] sm:$0xff] %v6770
  %6827 = vst [vmem:[%s7 + $0x118] sm:$0xff] %v6771
  %6828 = vst [vmem:[%s7 + $0x120] sm:$0xff] %v6772
  %6829 = vst [vmem:[%s7 + $0x128] sm:$0xff] %v6773
  %6830 = vst [vmem:[%s7 + $0x130] sm:$0xff] %v6774
  %6831 = vst [vmem:[%s7 + $0x138] sm:$0xff] %v6775
  %6832 = vst [vmem:[%s7 + $0x140] sm:$0xff] %v6776
  %6833 = vst [vmem:[%s7 + $0x148] sm:$0xff] %v6777
  %6834 = vst [vmem:[%s7 + $0x150] sm:$0xff] %v6778
  %6835 = vst [vmem:[%s7 + $0x158] sm:$0xff] %v6779
  %6836 = vst [vmem:[%s7 + $0x160] sm:$0xff] %v6780
  %6837 = vst [vmem:[%s7 + $0x168] sm:$0xff] %v6781
  %6838 = vst [vmem:[%s7 + $0x170] sm:$0xff] %v6782
  %6839 = vst [vmem:[%s7 + $0x178] sm:$0xff] %v6783
  %6840 = vst [vmem:[%s7 + $0x180] sm:$0xff] %v6784
  %6841 = vst [vmem:[%s7 + $0x188] sm:$0xff] %v6785
  %6842 = vst [vmem:[%s7 + $0x190] sm:$0xff] %v6786
  %6843 = vst [vmem:[%s7 + $0x198] sm:$0xff] %v6787
  %6844 = vst [vmem:[%s7 + $0x1a0] sm:$0xff] %v6788
  %6845 = vst [vmem:[%s7 + $0x1a8] sm:$0xff] %v6789
  %6846 = vst [vmem:[%s7 + $0x1b0] sm:$0xff] %v6790
  %6847 = vst [vmem:[%s7 + $0x1b8] sm:$0xff] %v6791
  %v6848 = vld [vmem:[#allocation2 + $0x28] sm:$0x88]
  %v6849 = vld [vmem:[#allocation2 + $0x30] sm:$0xff]
  %v6850 = vld [vmem:[#allocation2 + $0x38] sm:$0xff]
  %v6851 = vld [vmem:[#allocation2 + $0x40] sm:$0xff]
  %v6852 = vld [vmem:[#allocation2 + $0x48] sm:$0xff]
  %v6853 = vld [vmem:[#allocation2 + $0x50] sm:$0xff]
  %v6854 = vld [vmem:[#allocation2 + $0x58] sm:$0xff]
  %v6855 = vld [vmem:[#allocation2 + $0x60] sm:$0xff]
  %v6856 = vld [vmem:[#allocation2 + $0x68] sm:$0xff]
  %v6857 = vld [vmem:[#allocation2 + $0x70] sm:$0xff]
  %v6858 = vld [vmem:[#allocation2 + $0x78] sm:$0xff]
  %v6859 = vld [vmem:[#allocation2 + $0x80] sm:$0xff]
  %v6860 = vld [vmem:[#allocation2 + $0x88] sm:$0xff]
  %v6861 = vld [vmem:[#allocation2 + $0x90] sm:$0xff]
  %v6862 = vld [vmem:[#allocation2 + $0x98] sm:$0xff]
  %v6863 = vld [vmem:[#allocation2 + $0xa0] sm:$0xff]
  %v6864 = vld [vmem:[#allocation2 + $0xa8] sm:$0xff]
  %v6865 = vld [vmem:[#allocation2 + $0xb0] sm:$0xff]
  %v6866 = vld [vmem:[#allocation2 + $0xb8] sm:$0xff]
  %v6867 = vld [vmem:[#allocation2 + $0xc0] sm:$0xff]
  %v6868 = vld [vmem:[#allocation2 + $0xc8] sm:$0xff]
  %v6869 = vld [vmem:[#allocation2 + $0xd0] sm:$0xff]
  %v6870 = vld [vmem:[#allocation2 + $0xd8] sm:$0xff]
  %v6871 = vld [vmem:[#allocation2 + $0xe0] sm:$0xff]
  %v6872 = vld [vmem:[#allocation2 + $0xe8] sm:$0xff]
  %v6873 = vld [vmem:[#allocation2 + $0xf0] sm:$0xff]
  %v6874 = vld [vmem:[#allocation2 + $0xf8] sm:$0xff]
  %v6875 = vld [vmem:[#allocation2 + $0x100] sm:$0xff]
  %v6876 = vld [vmem:[#allocation2 + $0x108] sm:$0xff]
  %s6877 = scalar_lea.vmem [#allocation3], 1536
  %v6878 = vld [vmem:[%s6877] sm:$0xff]
  %v6879 = vld [vmem:[%s6877 + $0x8] sm:$0xff]
  %v6880 = vld [vmem:[%s6877 + $0x10] sm:$0xff]
  %v6881 = vld [vmem:[%s6877 + $0x18] sm:$0xff]
  %v6882 = vld [vmem:[%s6877 + $0x20] sm:$0xff]
  %v6883 = vld [vmem:[%s6877 + $0x28] sm:$0xff]
  %v6884 = vld [vmem:[%s6877 + $0x30] sm:$0xff]
  %v6885 = vld [vmem:[%s6877 + $0x38] sm:$0xff]
  %v6886 = vld [vmem:[%s6877 + $0x40] sm:$0xff]
  %v6887 = vld [vmem:[%s6877 + $0x48] sm:$0xff]
  %v6888 = vld [vmem:[%s6877 + $0x50] sm:$0xff]
  %v6889 = vld [vmem:[%s6877 + $0x58] sm:$0xff]
  %v6890 = vld [vmem:[%s6877 + $0x60] sm:$0xff]
  %v6891 = vld [vmem:[%s6877 + $0x68] sm:$0xff]
  %v6892 = vld [vmem:[%s6877 + $0x70] sm:$0xff]
  %v6893 = vld [vmem:[%s6877 + $0x78] sm:$0xff]
  %v6894 = vld [vmem:[%s6877 + $0x80] sm:$0xff]
  %v6895 = vld [vmem:[%s6877 + $0x88] sm:$0xff]
  %v6896 = vld [vmem:[%s6877 + $0x90] sm:$0xff]
  %v6897 = vld [vmem:[%s6877 + $0x98] sm:$0xff]
  %v6898 = vld [vmem:[%s6877 + $0xa0] sm:$0xff]
  %v6899 = vld [vmem:[%s6877 + $0xa8] sm:$0xff]
  %v6900 = vld [vmem:[%s6877 + $0xb0] sm:$0xff]
  %v6901 = vld [vmem:[%s6877 + $0xb8] sm:$0xff]
  %v6902 = vld [vmem:[%s6877 + $0xc0] sm:$0xff]
  %v6903 = vld [vmem:[%s6877 + $0xc8] sm:$0xff]
  %v6904 = vld [vmem:[%s6877 + $0xd0] sm:$0xff]
  %v6905 = vld [vmem:[%s6877 + $0xd8] sm:$0xff]
  %v6906 = vld [vmem:[%s6877 + $0xe0] sm:$0xff]
  %v6907 = vld [vmem:[%s6877 + $0xe8] sm:$0xff]
  %v6908 = vld [vmem:[%s6877 + $0xf0] sm:$0xff]
  %v6909 = vld [vmem:[%s6877 + $0xf8] sm:$0xff]
  %v6939 = vunpack.c.l.b16 %v6848
  %v6940 = vunpack.c.h.b16 %v6848
  %v6941 = vunpack.c.l.b16 %v6849
  %v6942 = vunpack.c.h.b16 %v6849
  %v6943 = vunpack.c.l.b16 %v6850
  %v6944 = vunpack.c.h.b16 %v6850
  %v6945 = vunpack.c.l.b16 %v6851
  %v6946 = vunpack.c.h.b16 %v6851
  %v6947 = vunpack.c.l.b16 %v6852
  %v6948 = vunpack.c.h.b16 %v6852
  %v6949 = vunpack.c.l.b16 %v6853
  %v6950 = vunpack.c.h.b16 %v6853
  %v6951 = vunpack.c.l.b16 %v6854
  %v6952 = vunpack.c.h.b16 %v6854
  %v6953 = vunpack.c.l.b16 %v6855
  %v6954 = vunpack.c.h.b16 %v6855
  %v6955 = vunpack.c.l.b16 %v6856
  %v6956 = vunpack.c.h.b16 %v6856
  %v6957 = vunpack.c.l.b16 %v6857
  %v6958 = vunpack.c.h.b16 %v6857
  %v6959 = vunpack.c.l.b16 %v6858
  %v6960 = vunpack.c.h.b16 %v6858
  %v6961 = vunpack.c.l.b16 %v6859
  %v6962 = vunpack.c.h.b16 %v6859
  %v6963 = vunpack.c.l.b16 %v6860
  %v6964 = vunpack.c.h.b16 %v6860
  %v6965 = vunpack.c.l.b16 %v6861
  %v6966 = vunpack.c.h.b16 %v6861
  %v6967 = vunpack.c.l.b16 %v6862
  %v6968 = vunpack.c.h.b16 %v6862
  %v6969 = vunpack.c.l.b16 %v6863
  %v6970 = vunpack.c.h.b16 %v6863
  %v6971 = vunpack.c.l.b16 %v6864
  %v6972 = vunpack.c.h.b16 %v6864
  %v6973 = vunpack.c.l.b16 %v6865
  %v6974 = vunpack.c.h.b16 %v6865
  %v6975 = vunpack.c.l.b16 %v6866
  %v6976 = vunpack.c.h.b16 %v6866
  %v6977 = vunpack.c.l.b16 %v6867
  %v6978 = vunpack.c.h.b16 %v6867
  %v6979 = vunpack.c.l.b16 %v6868
  %v6980 = vunpack.c.h.b16 %v6868
  %v6981 = vunpack.c.l.b16 %v6869
  %v6982 = vunpack.c.h.b16 %v6869
  %v6983 = vunpack.c.l.b16 %v6870
  %v6984 = vunpack.c.h.b16 %v6870
  %v6985 = vunpack.c.l.b16 %v6871
  %v6986 = vunpack.c.h.b16 %v6871
  %v6987 = vunpack.c.l.b16 %v6872
  %v6988 = vunpack.c.h.b16 %v6872
  %v6989 = vunpack.c.l.b16 %v6873
  %v6990 = vunpack.c.h.b16 %v6873
  %v6991 = vunpack.c.l.b16 %v6874
  %v6992 = vunpack.c.h.b16 %v6874
  %v6993 = vunpack.c.l.b16 %v6875
  %v6994 = vunpack.c.h.b16 %v6875
  %v6995 = vunpack.c.l.b16 %v6876
  %v6996 = vunpack.c.h.b16 %v6876
  %v6997 = vpack.c.b16 %v6941, %v6939
  %v6998 = vpack.c.b16 %v6942, %v6940
  %v6999 = vpack.c.b16 %v6945, %v6943
  %v7000 = vpack.c.b16 %v6946, %v6944
  %v7001 = vpack.c.b16 %v6949, %v6947
  %v7002 = vpack.c.b16 %v6950, %v6948
  %v7003 = vpack.c.b16 %v6953, %v6951
  %v7004 = vpack.c.b16 %v6954, %v6952
  %v7005 = vpack.c.b16 %v6957, %v6955
  %v7006 = vpack.c.b16 %v6958, %v6956
  %v7007 = vpack.c.b16 %v6961, %v6959
  %v7008 = vpack.c.b16 %v6962, %v6960
  %v7009 = vpack.c.b16 %v6965, %v6963
  %v7010 = vpack.c.b16 %v6966, %v6964
  %v7011 = vpack.c.b16 %v6969, %v6967
  %v7012 = vpack.c.b16 %v6970, %v6968
  %v7013 = vpack.c.b16 %v6973, %v6971
  %v7014 = vpack.c.b16 %v6974, %v6972
  %v7015 = vpack.c.b16 %v6977, %v6975
  %v7016 = vpack.c.b16 %v6978, %v6976
  %v7017 = vpack.c.b16 %v6981, %v6979
  %v7018 = vpack.c.b16 %v6982, %v6980
  %v7019 = vpack.c.b16 %v6985, %v6983
  %v7020 = vpack.c.b16 %v6986, %v6984
  %v7021 = vpack.c.b16 %v6989, %v6987
  %v7022 = vpack.c.b16 %v6990, %v6988
  %v7023 = vpack.c.b16 %v6993, %v6991
  %v7024 = vpack.c.b16 %v6994, %v6992
  %v7025 = vpack.c.b16 %v6995, %v6995
  %v7026 = vpack.c.b16 %v6996, %v6996
  %v7028 = vshrl.u32 %v6997, 16
  %v7030 = vrot.slane %v7028, 3
  %v7031 = vshll.u32 %v6997, 16
  %v7033 = vrot.slane %v7031, 4
  %v7034 = vor.u32 %v7030, %v7033
  %v7036 = vshrl.u32 %v6999, 16
  %v7038 = vrot.slane %v7036, 3
  %v7039 = vshll.u32 %v6999, 16
  %v7041 = vrot.slane %v7039, 4
  %v7042 = vor.u32 %v7038, %v7041
  %v7043 = vsel %vm1901, %v7034, %v7042
  %v7045 = vshrl.u32 %v6998, 16
  %v7047 = vrot.slane %v7045, 3
  %v7048 = vshll.u32 %v6998, 16
  %v7050 = vrot.slane %v7048, 4
  %v7051 = vor.u32 %v7047, %v7050
  %v7053 = vshrl.u32 %v7000, 16
  %v7055 = vrot.slane %v7053, 3
  %v7056 = vshll.u32 %v7000, 16
  %v7058 = vrot.slane %v7056, 4
  %v7059 = vor.u32 %v7055, %v7058
  %v7060 = vsel %vm1901, %v7051, %v7059
  %v7062 = vshrl.u32 %v7001, 16
  %v7064 = vrot.slane %v7062, 3
  %v7065 = vshll.u32 %v7001, 16
  %v7067 = vrot.slane %v7065, 4
  %v7068 = vor.u32 %v7064, %v7067
  %v7069 = vsel %vm1901, %v7042, %v7068
  %v7071 = vshrl.u32 %v7002, 16
  %v7073 = vrot.slane %v7071, 3
  %v7074 = vshll.u32 %v7002, 16
  %v7076 = vrot.slane %v7074, 4
  %v7077 = vor.u32 %v7073, %v7076
  %v7078 = vsel %vm1901, %v7059, %v7077
  %v7080 = vshrl.u32 %v7003, 16
  %v7082 = vrot.slane %v7080, 3
  %v7083 = vshll.u32 %v7003, 16
  %v7085 = vrot.slane %v7083, 4
  %v7086 = vor.u32 %v7082, %v7085
  %v7087 = vsel %vm1901, %v7068, %v7086
  %v7089 = vshrl.u32 %v7004, 16
  %v7091 = vrot.slane %v7089, 3
  %v7092 = vshll.u32 %v7004, 16
  %v7094 = vrot.slane %v7092, 4
  %v7095 = vor.u32 %v7091, %v7094
  %v7096 = vsel %vm1901, %v7077, %v7095
  %v7098 = vshrl.u32 %v7005, 16
  %v7100 = vrot.slane %v7098, 3
  %v7101 = vshll.u32 %v7005, 16
  %v7103 = vrot.slane %v7101, 4
  %v7104 = vor.u32 %v7100, %v7103
  %v7105 = vsel %vm1901, %v7086, %v7104
  %v7107 = vshrl.u32 %v7006, 16
  %v7109 = vrot.slane %v7107, 3
  %v7110 = vshll.u32 %v7006, 16
  %v7112 = vrot.slane %v7110, 4
  %v7113 = vor.u32 %v7109, %v7112
  %v7114 = vsel %vm1901, %v7095, %v7113
  %v7116 = vshrl.u32 %v7007, 16
  %v7118 = vrot.slane %v7116, 3
  %v7119 = vshll.u32 %v7007, 16
  %v7121 = vrot.slane %v7119, 4
  %v7122 = vor.u32 %v7118, %v7121
  %v7123 = vsel %vm1901, %v7104, %v7122
  %v7125 = vshrl.u32 %v7008, 16
  %v7127 = vrot.slane %v7125, 3
  %v7128 = vshll.u32 %v7008, 16
  %v7130 = vrot.slane %v7128, 4
  %v7131 = vor.u32 %v7127, %v7130
  %v7132 = vsel %vm1901, %v7113, %v7131
  %v7134 = vshrl.u32 %v7009, 16
  %v7136 = vrot.slane %v7134, 3
  %v7137 = vshll.u32 %v7009, 16
  %v7139 = vrot.slane %v7137, 4
  %v7140 = vor.u32 %v7136, %v7139
  %v7141 = vsel %vm1901, %v7122, %v7140
  %v7143 = vshrl.u32 %v7010, 16
  %v7145 = vrot.slane %v7143, 3
  %v7146 = vshll.u32 %v7010, 16
  %v7148 = vrot.slane %v7146, 4
  %v7149 = vor.u32 %v7145, %v7148
  %v7150 = vsel %vm1901, %v7131, %v7149
  %v7152 = vshrl.u32 %v7011, 16
  %v7154 = vrot.slane %v7152, 3
  %v7155 = vshll.u32 %v7011, 16
  %v7157 = vrot.slane %v7155, 4
  %v7158 = vor.u32 %v7154, %v7157
  %v7159 = vsel %vm1901, %v7140, %v7158
  %v7161 = vshrl.u32 %v7012, 16
  %v7163 = vrot.slane %v7161, 3
  %v7164 = vshll.u32 %v7012, 16
  %v7166 = vrot.slane %v7164, 4
  %v7167 = vor.u32 %v7163, %v7166
  %v7168 = vsel %vm1901, %v7149, %v7167
  %v7170 = vshrl.u32 %v7013, 16
  %v7172 = vrot.slane %v7170, 3
  %v7173 = vshll.u32 %v7013, 16
  %v7175 = vrot.slane %v7173, 4
  %v7176 = vor.u32 %v7172, %v7175
  %v7177 = vsel %vm1901, %v7158, %v7176
  %v7179 = vshrl.u32 %v7014, 16
  %v7181 = vrot.slane %v7179, 3
  %v7182 = vshll.u32 %v7014, 16
  %v7184 = vrot.slane %v7182, 4
  %v7185 = vor.u32 %v7181, %v7184
  %v7186 = vsel %vm1901, %v7167, %v7185
  %v7188 = vshrl.u32 %v7015, 16
  %v7190 = vrot.slane %v7188, 3
  %v7191 = vshll.u32 %v7015, 16
  %v7193 = vrot.slane %v7191, 4
  %v7194 = vor.u32 %v7190, %v7193
  %v7195 = vsel %vm1901, %v7176, %v7194
  %v7197 = vshrl.u32 %v7016, 16
  %v7199 = vrot.slane %v7197, 3
  %v7200 = vshll.u32 %v7016, 16
  %v7202 = vrot.slane %v7200, 4
  %v7203 = vor.u32 %v7199, %v7202
  %v7204 = vsel %vm1901, %v7185, %v7203
  %v7206 = vshrl.u32 %v7017, 16
  %v7208 = vrot.slane %v7206, 3
  %v7209 = vshll.u32 %v7017, 16
  %v7211 = vrot.slane %v7209, 4
  %v7212 = vor.u32 %v7208, %v7211
  %v7213 = vsel %vm1901, %v7194, %v7212
  %v7215 = vshrl.u32 %v7018, 16
  %v7217 = vrot.slane %v7215, 3
  %v7218 = vshll.u32 %v7018, 16
  %v7220 = vrot.slane %v7218, 4
  %v7221 = vor.u32 %v7217, %v7220
  %v7222 = vsel %vm1901, %v7203, %v7221
  %v7224 = vshrl.u32 %v7019, 16
  %v7226 = vrot.slane %v7224, 3
  %v7227 = vshll.u32 %v7019, 16
  %v7229 = vrot.slane %v7227, 4
  %v7230 = vor.u32 %v7226, %v7229
  %v7231 = vsel %vm1901, %v7212, %v7230
  %v7233 = vshrl.u32 %v7020, 16
  %v7235 = vrot.slane %v7233, 3
  %v7236 = vshll.u32 %v7020, 16
  %v7238 = vrot.slane %v7236, 4
  %v7239 = vor.u32 %v7235, %v7238
  %v7240 = vsel %vm1901, %v7221, %v7239
  %v7242 = vshrl.u32 %v7021, 16
  %v7244 = vrot.slane %v7242, 3
  %v7245 = vshll.u32 %v7021, 16
  %v7247 = vrot.slane %v7245, 4
  %v7248 = vor.u32 %v7244, %v7247
  %v7249 = vsel %vm1901, %v7230, %v7248
  %v7251 = vshrl.u32 %v7022, 16
  %v7253 = vrot.slane %v7251, 3
  %v7254 = vshll.u32 %v7022, 16
  %v7256 = vrot.slane %v7254, 4
  %v7257 = vor.u32 %v7253, %v7256
  %v7258 = vsel %vm1901, %v7239, %v7257
  %v7260 = vshrl.u32 %v7023, 16
  %v7262 = vrot.slane %v7260, 3
  %v7263 = vshll.u32 %v7023, 16
  %v7265 = vrot.slane %v7263, 4
  %v7266 = vor.u32 %v7262, %v7265
  %v7267 = vsel %vm1901, %v7248, %v7266
  %v7269 = vshrl.u32 %v7024, 16
  %v7271 = vrot.slane %v7269, 3
  %v7272 = vshll.u32 %v7024, 16
  %v7274 = vrot.slane %v7272, 4
  %v7275 = vor.u32 %v7271, %v7274
  %v7276 = vsel %vm1901, %v7257, %v7275
  %v7278 = vshrl.u32 %v7025, 16
  %v7280 = vrot.slane %v7278, 3
  %v7281 = vshll.u32 %v7025, 16
  %v7283 = vrot.slane %v7281, 4
  %v7284 = vor.u32 %v7280, %v7283
  %v7285 = vsel %vm1901, %v7266, %v7284
  %v7287 = vshrl.u32 %v7026, 16
  %v7289 = vrot.slane %v7287, 3
  %v7290 = vshll.u32 %v7026, 16
  %v7292 = vrot.slane %v7290, 4
  %v7293 = vor.u32 %v7289, %v7292
  %v7294 = vsel %vm1901, %v7275, %v7293
  %v7355 = vunpack.c.l.b16 %v6878
  %v7356 = vunpack.c.h.b16 %v6878
  %v7357 = vunpack.c.l.b16 %v6879
  %v7358 = vunpack.c.h.b16 %v6879
  %v7359 = vunpack.c.l.b16 %v6880
  %v7360 = vunpack.c.h.b16 %v6880
  %v7361 = vunpack.c.l.b16 %v6881
  %v7362 = vunpack.c.h.b16 %v6881
  %v7363 = vunpack.c.l.b16 %v6882
  %v7364 = vunpack.c.h.b16 %v6882
  %v7365 = vunpack.c.l.b16 %v6883
  %v7366 = vunpack.c.h.b16 %v6883
  %v7367 = vunpack.c.l.b16 %v6884
  %v7368 = vunpack.c.h.b16 %v6884
  %v7369 = vunpack.c.l.b16 %v6885
  %v7370 = vunpack.c.h.b16 %v6885
  %v7371 = vunpack.c.l.b16 %v6886
  %v7372 = vunpack.c.h.b16 %v6886
  %v7373 = vunpack.c.l.b16 %v6887
  %v7374 = vunpack.c.h.b16 %v6887
  %v7375 = vunpack.c.l.b16 %v6888
  %v7376 = vunpack.c.h.b16 %v6888
  %v7377 = vunpack.c.l.b16 %v6889
  %v7378 = vunpack.c.h.b16 %v6889
  %v7379 = vunpack.c.l.b16 %v6890
  %v7380 = vunpack.c.h.b16 %v6890
  %v7381 = vunpack.c.l.b16 %v6891
  %v7382 = vunpack.c.h.b16 %v6891
  %v7383 = vunpack.c.l.b16 %v6892
  %v7384 = vunpack.c.h.b16 %v6892
  %v7385 = vunpack.c.l.b16 %v6893
  %v7386 = vunpack.c.h.b16 %v6893
  %v7387 = vunpack.c.l.b16 %v6894
  %v7388 = vunpack.c.h.b16 %v6894
  %v7389 = vunpack.c.l.b16 %v6895
  %v7390 = vunpack.c.h.b16 %v6895
  %v7391 = vunpack.c.l.b16 %v6896
  %v7392 = vunpack.c.h.b16 %v6896
  %v7393 = vunpack.c.l.b16 %v6897
  %v7394 = vunpack.c.h.b16 %v6897
  %v7395 = vunpack.c.l.b16 %v6898
  %v7396 = vunpack.c.h.b16 %v6898
  %v7397 = vunpack.c.l.b16 %v6899
  %v7398 = vunpack.c.h.b16 %v6899
  %v7399 = vunpack.c.l.b16 %v6900
  %v7400 = vunpack.c.h.b16 %v6900
  %v7401 = vunpack.c.l.b16 %v6901
  %v7402 = vunpack.c.h.b16 %v6901
  %v7403 = vunpack.c.l.b16 %v6902
  %v7404 = vunpack.c.h.b16 %v6902
  %v7405 = vunpack.c.l.b16 %v6903
  %v7406 = vunpack.c.h.b16 %v6903
  %v7407 = vunpack.c.l.b16 %v6904
  %v7408 = vunpack.c.h.b16 %v6904
  %v7409 = vunpack.c.l.b16 %v6905
  %v7410 = vunpack.c.h.b16 %v6905
  %v7411 = vunpack.c.l.b16 %v6906
  %v7412 = vunpack.c.h.b16 %v6906
  %v7413 = vunpack.c.l.b16 %v6907
  %v7414 = vunpack.c.h.b16 %v6907
  %v7415 = vunpack.c.l.b16 %v6908
  %v7416 = vunpack.c.h.b16 %v6908
  %v7417 = vunpack.c.l.b16 %v6909
  %v7418 = vunpack.c.h.b16 %v6909
  %v7419 = vpack.c.b16 %v7357, %v7355
  %v7420 = vpack.c.b16 %v7358, %v7356
  %v7421 = vpack.c.b16 %v7361, %v7359
  %v7422 = vpack.c.b16 %v7362, %v7360
  %v7423 = vpack.c.b16 %v7365, %v7363
  %v7424 = vpack.c.b16 %v7366, %v7364
  %v7425 = vpack.c.b16 %v7369, %v7367
  %v7426 = vpack.c.b16 %v7370, %v7368
  %v7427 = vpack.c.b16 %v7373, %v7371
  %v7428 = vpack.c.b16 %v7374, %v7372
  %v7429 = vpack.c.b16 %v7377, %v7375
  %v7430 = vpack.c.b16 %v7378, %v7376
  %v7431 = vpack.c.b16 %v7381, %v7379
  %v7432 = vpack.c.b16 %v7382, %v7380
  %v7433 = vpack.c.b16 %v7385, %v7383
  %v7434 = vpack.c.b16 %v7386, %v7384
  %v7435 = vpack.c.b16 %v7389, %v7387
  %v7436 = vpack.c.b16 %v7390, %v7388
  %v7437 = vpack.c.b16 %v7393, %v7391
  %v7438 = vpack.c.b16 %v7394, %v7392
  %v7439 = vpack.c.b16 %v7397, %v7395
  %v7440 = vpack.c.b16 %v7398, %v7396
  %v7441 = vpack.c.b16 %v7401, %v7399
  %v7442 = vpack.c.b16 %v7402, %v7400
  %v7443 = vpack.c.b16 %v7405, %v7403
  %v7444 = vpack.c.b16 %v7406, %v7404
  %v7445 = vpack.c.b16 %v7409, %v7407
  %v7446 = vpack.c.b16 %v7410, %v7408
  %v7447 = vpack.c.b16 %v7413, %v7411
  %v7448 = vpack.c.b16 %v7414, %v7412
  %v7449 = vpack.c.b16 %v7417, %v7415
  %v7450 = vpack.c.b16 %v7418, %v7416
  %7483 = vmatprep.subr.bf16.mxu0 %v7434
  %7484 = vmatpush1.bf16.msra.mxu0 %v7433
  %7485 = vmatprep.subr.bf16.mxu0 %v7432
  %7486 = vmatpush1.bf16.msra.mxu0 %v7431
  %7487 = vmatprep.subr.bf16.mxu0 %v7430
  %7488 = vmatpush1.bf16.msra.mxu0 %v7429
  %7489 = vmatprep.subr.bf16.mxu0 %v7428
  %7490 = vmatpush1.bf16.msra.mxu0 %v7427
  %7491 = vmatprep.subr.bf16.mxu0 %v7426
  %7492 = vmatpush1.bf16.msra.mxu0 %v7425
  %7493 = vmatprep.subr.bf16.mxu0 %v7424
  %7494 = vmatpush1.bf16.msra.mxu0 %v7423
  %7495 = vmatprep.subr.bf16.mxu0 %v7422
  %7496 = vmatpush1.bf16.msra.mxu0 %v7421
  %7497 = vmatprep.subr.bf16.mxu0 %v7420
  %7498 = vmatpush1.bf16.msra.mxu0 %v7419
  %7499 = vmatprep.subr.bf16.mxu0 %v7450
  %7500 = vmatpush2.bf16.msra.mxu0 %v7449
  %7501 = vmatprep.subr.bf16.mxu0 %v7448
  %7502 = vmatpush2.bf16.msra.mxu0 %v7447
  %7503 = vmatprep.subr.bf16.mxu0 %v7446
  %7504 = vmatpush2.bf16.msra.mxu0 %v7445
  %7505 = vmatprep.subr.bf16.mxu0 %v7444
  %7506 = vmatpush2.bf16.msra.mxu0 %v7443
  %7507 = vmatprep.subr.bf16.mxu0 %v7442
  %7508 = vmatpush2.bf16.msra.mxu0 %v7441
  %7509 = vmatprep.subr.bf16.mxu0 %v7440
  %7510 = vmatpush2.bf16.msra.mxu0 %v7439
  %7511 = vmatprep.subr.bf16.mxu0 %v7438
  %7512 = vmatpush2.bf16.msra.mxu0 %v7437
  %7513 = vmatprep.subr.bf16.mxu0 %v7436
  %7514 = vmatpush2.bf16.msra.mxu0 %v7435
  %7515 = vmatprep.mubr.bf16.mxu0 %v7060
  %7516 = vmatmul.mubr.bf16.gmra.mxu0 %v7043
  %v7517 = vpop.f32.mrf.mxu0
  %v7518 = vadd.f32 0.0, %v7517
  %v7519 = vpop.f32.mrf.mxu0
  %v7520 = vadd.f32 0.0, %v7519
  %v7521 = vpop.f32.mrf.mxu0
  %v7522 = vadd.f32 0.0, %v7521
  %v7523 = vpop.f32.mrf.mxu0
  %v7524 = vadd.f32 0.0, %v7523
  %7525 = vmatprep.mubr.bf16.mxu0 %v7078
  %7526 = vmatmul.mubr.bf16.gmra.mxu0 %v7069
  %v7527 = vpop.f32.mrf.mxu0
  %v7528 = vadd.f32 0.0, %v7527
  %v7529 = vpop.f32.mrf.mxu0
  %v7530 = vadd.f32 0.0, %v7529
  %v7531 = vpop.f32.mrf.mxu0
  %v7532 = vadd.f32 0.0, %v7531
  %v7533 = vpop.f32.mrf.mxu0
  %v7534 = vadd.f32 0.0, %v7533
  %7535 = vmatprep.mubr.bf16.mxu0 %v7096
  %7536 = vmatmul.mubr.bf16.gmra.mxu0 %v7087
  %v7537 = vpop.f32.mrf.mxu0
  %v7538 = vadd.f32 0.0, %v7537
  %v7539 = vpop.f32.mrf.mxu0
  %v7540 = vadd.f32 0.0, %v7539
  %v7541 = vpop.f32.mrf.mxu0
  %v7542 = vadd.f32 0.0, %v7541
  %v7543 = vpop.f32.mrf.mxu0
  %v7544 = vadd.f32 0.0, %v7543
  %7545 = vmatprep.mubr.bf16.mxu0 %v7114
  %7546 = vmatmul.mubr.bf16.gmra.mxu0 %v7105
  %v7547 = vpop.f32.mrf.mxu0
  %v7548 = vadd.f32 0.0, %v7547
  %v7549 = vpop.f32.mrf.mxu0
  %v7550 = vadd.f32 0.0, %v7549
  %v7551 = vpop.f32.mrf.mxu0
  %v7552 = vadd.f32 0.0, %v7551
  %v7553 = vpop.f32.mrf.mxu0
  %v7554 = vadd.f32 0.0, %v7553
  %7555 = vmatprep.mubr.bf16.mxu0 %v7132
  %7556 = vmatmul.mubr.bf16.gmra.mxu0 %v7123
  %v7557 = vpop.f32.mrf.mxu0
  %v7558 = vadd.f32 0.0, %v7557
  %v7559 = vpop.f32.mrf.mxu0
  %v7560 = vadd.f32 0.0, %v7559
  %v7561 = vpop.f32.mrf.mxu0
  %v7562 = vadd.f32 0.0, %v7561
  %v7563 = vpop.f32.mrf.mxu0
  %v7564 = vadd.f32 0.0, %v7563
  %7565 = vmatprep.mubr.bf16.mxu0 %v7150
  %7566 = vmatmul.mubr.bf16.gmra.mxu0 %v7141
  %v7567 = vpop.f32.mrf.mxu0
  %v7568 = vadd.f32 0.0, %v7567
  %v7569 = vpop.f32.mrf.mxu0
  %v7570 = vadd.f32 0.0, %v7569
  %v7571 = vpop.f32.mrf.mxu0
  %v7572 = vadd.f32 0.0, %v7571
  %v7573 = vpop.f32.mrf.mxu0
  %v7574 = vadd.f32 0.0, %v7573
  %7575 = vmatprep.mubr.bf16.mxu0 %v7168
  %7576 = vmatmul.mubr.bf16.gmra.mxu0 %v7159
  %v7577 = vpop.f32.mrf.mxu0
  %v7578 = vadd.f32 0.0, %v7577
  %v7579 = vpop.f32.mrf.mxu0
  %v7580 = vadd.f32 0.0, %v7579
  %v7581 = vpop.f32.mrf.mxu0
  %v7582 = vadd.f32 0.0, %v7581
  %v7583 = vpop.f32.mrf.mxu0
  %v7584 = vadd.f32 0.0, %v7583
  %7585 = vmatprep.mubr.bf16.mxu0 %v7186
  %7586 = vmatmul.mubr.bf16.gmra.mxu0 %v7177
  %v7587 = vpop.f32.mrf.mxu0
  %v7588 = vadd.f32 0.0, %v7587
  %v7589 = vpop.f32.mrf.mxu0
  %v7590 = vadd.f32 0.0, %v7589
  %v7591 = vpop.f32.mrf.mxu0
  %v7592 = vadd.f32 0.0, %v7591
  %v7593 = vpop.f32.mrf.mxu0
  %v7594 = vadd.f32 0.0, %v7593
  %7595 = vmatprep.mubr.bf16.mxu0 %v7204
  %7596 = vmatmul.mubr.bf16.gmra.mxu0 %v7195
  %v7597 = vpop.f32.mrf.mxu0
  %v7598 = vadd.f32 0.0, %v7597
  %v7599 = vpop.f32.mrf.mxu0
  %v7600 = vadd.f32 0.0, %v7599
  %v7601 = vpop.f32.mrf.mxu0
  %v7602 = vadd.f32 0.0, %v7601
  %v7603 = vpop.f32.mrf.mxu0
  %v7604 = vadd.f32 0.0, %v7603
  %7605 = vmatprep.mubr.bf16.mxu0 %v7222
  %7606 = vmatmul.mubr.bf16.gmra.mxu0 %v7213
  %v7607 = vpop.f32.mrf.mxu0
  %v7608 = vadd.f32 0.0, %v7607
  %v7609 = vpop.f32.mrf.mxu0
  %v7610 = vadd.f32 0.0, %v7609
  %v7611 = vpop.f32.mrf.mxu0
  %v7612 = vadd.f32 0.0, %v7611
  %v7613 = vpop.f32.mrf.mxu0
  %v7614 = vadd.f32 0.0, %v7613
  %7615 = vmatprep.mubr.bf16.mxu0 %v7240
  %7616 = vmatmul.mubr.bf16.gmra.mxu0 %v7231
  %v7617 = vpop.f32.mrf.mxu0
  %v7618 = vadd.f32 0.0, %v7617
  %v7619 = vpop.f32.mrf.mxu0
  %v7620 = vadd.f32 0.0, %v7619
  %v7621 = vpop.f32.mrf.mxu0
  %v7622 = vadd.f32 0.0, %v7621
  %v7623 = vpop.f32.mrf.mxu0
  %v7624 = vadd.f32 0.0, %v7623
  %7625 = vmatprep.mubr.bf16.mxu0 %v7258
  %7626 = vmatmul.mubr.bf16.gmra.mxu0 %v7249
  %v7627 = vpop.f32.mrf.mxu0
  %v7628 = vadd.f32 0.0, %v7627
  %v7629 = vpop.f32.mrf.mxu0
  %v7630 = vadd.f32 0.0, %v7629
  %v7631 = vpop.f32.mrf.mxu0
  %v7632 = vadd.f32 0.0, %v7631
  %v7633 = vpop.f32.mrf.mxu0
  %v7634 = vadd.f32 0.0, %v7633
  %7635 = vmatprep.mubr.bf16.mxu0 %v7276
  %7636 = vmatmul.mubr.bf16.gmra.mxu0 %v7267
  %v7637 = vpop.f32.mrf.mxu0
  %v7638 = vadd.f32 0.0, %v7637
  %v7639 = vpop.f32.mrf.mxu0
  %v7640 = vadd.f32 0.0, %v7639
  %v7641 = vpop.f32.mrf.mxu0
  %v7642 = vadd.f32 0.0, %v7641
  %v7643 = vpop.f32.mrf.mxu0
  %v7644 = vadd.f32 0.0, %v7643
  %7645 = vmatprep.mubr.bf16.mxu0 %v7294
  %7646 = vmatmul.mubr.bf16.gmra.mxu0 %v7285
  %v7647 = vpop.f32.mrf.mxu0
  %v7648 = vadd.f32 0.0, %v7647
  %v7649 = vpop.f32.mrf.mxu0
  %v7650 = vadd.f32 0.0, %v7649
  %v7651 = vpop.f32.mrf.mxu0
  %v7652 = vadd.f32 0.0, %v7651
  %v7653 = vpop.f32.mrf.mxu0
  %v7654 = vadd.f32 0.0, %v7653
  %7655 = vdwg.mxu0
  %v7656 = vld [vmem:[%s7] sm:$0xff]
  %v7657 = vld [vmem:[%s7 + $0x8] sm:$0xff]
  %v7658 = vld [vmem:[%s7 + $0x10] sm:$0xff]
  %v7659 = vld [vmem:[%s7 + $0x18] sm:$0xff]
  %v7660 = vld [vmem:[%s7 + $0x20] sm:$0xff]
  %v7661 = vld [vmem:[%s7 + $0x28] sm:$0xff]
  %v7662 = vld [vmem:[%s7 + $0x30] sm:$0xff]
  %v7663 = vld [vmem:[%s7 + $0x38] sm:$0xff]
  %v7664 = vld [vmem:[%s7 + $0x40] sm:$0xff]
  %v7665 = vld [vmem:[%s7 + $0x48] sm:$0xff]
  %v7666 = vld [vmem:[%s7 + $0x50] sm:$0xff]
  %v7667 = vld [vmem:[%s7 + $0x58] sm:$0xff]
  %v7668 = vld [vmem:[%s7 + $0x60] sm:$0xff]
  %v7669 = vld [vmem:[%s7 + $0x68] sm:$0xff]
  %v7670 = vld [vmem:[%s7 + $0x70] sm:$0xff]
  %v7671 = vld [vmem:[%s7 + $0x78] sm:$0xff]
  %v7672 = vld [vmem:[%s7 + $0x80] sm:$0xff]
  %v7673 = vld [vmem:[%s7 + $0x88] sm:$0xff]
  %v7674 = vld [vmem:[%s7 + $0x90] sm:$0xff]
  %v7675 = vld [vmem:[%s7 + $0x98] sm:$0xff]
  %v7676 = vld [vmem:[%s7 + $0xa0] sm:$0xff]
  %v7677 = vld [vmem:[%s7 + $0xa8] sm:$0xff]
  %v7678 = vld [vmem:[%s7 + $0xb0] sm:$0xff]
  %v7679 = vld [vmem:[%s7 + $0xb8] sm:$0xff]
  %v7680 = vld [vmem:[%s7 + $0xc0] sm:$0xff]
  %v7681 = vld [vmem:[%s7 + $0xc8] sm:$0xff]
  %v7682 = vld [vmem:[%s7 + $0xd0] sm:$0xff]
  %v7683 = vld [vmem:[%s7 + $0xd8] sm:$0xff]
  %v7684 = vld [vmem:[%s7 + $0xe0] sm:$0xff]
  %v7685 = vld [vmem:[%s7 + $0xe8] sm:$0xff]
  %v7686 = vld [vmem:[%s7 + $0xf0] sm:$0xff]
  %v7687 = vld [vmem:[%s7 + $0xf8] sm:$0xff]
  %v7688 = vld [vmem:[%s7 + $0x100] sm:$0xff]
  %v7689 = vld [vmem:[%s7 + $0x108] sm:$0xff]
  %v7690 = vld [vmem:[%s7 + $0x110] sm:$0xff]
  %v7691 = vld [vmem:[%s7 + $0x118] sm:$0xff]
  %v7692 = vld [vmem:[%s7 + $0x120] sm:$0xff]
  %v7693 = vld [vmem:[%s7 + $0x128] sm:$0xff]
  %v7694 = vld [vmem:[%s7 + $0x130] sm:$0xff]
  %v7695 = vld [vmem:[%s7 + $0x138] sm:$0xff]
  %v7696 = vld [vmem:[%s7 + $0x140] sm:$0xff]
  %v7697 = vld [vmem:[%s7 + $0x148] sm:$0xff]
  %v7698 = vld [vmem:[%s7 + $0x150] sm:$0xff]
  %v7699 = vld [vmem:[%s7 + $0x158] sm:$0xff]
  %v7700 = vld [vmem:[%s7 + $0x160] sm:$0xff]
  %v7701 = vld [vmem:[%s7 + $0x168] sm:$0xff]
  %v7702 = vld [vmem:[%s7 + $0x170] sm:$0xff]
  %v7703 = vld [vmem:[%s7 + $0x178] sm:$0xff]
  %v7704 = vld [vmem:[%s7 + $0x180] sm:$0xff]
  %v7705 = vld [vmem:[%s7 + $0x188] sm:$0xff]
  %v7706 = vld [vmem:[%s7 + $0x190] sm:$0xff]
  %v7707 = vld [vmem:[%s7 + $0x198] sm:$0xff]
  %v7708 = vld [vmem:[%s7 + $0x1a0] sm:$0xff]
  %v7709 = vld [vmem:[%s7 + $0x1a8] sm:$0xff]
  %v7710 = vld [vmem:[%s7 + $0x1b0] sm:$0xff]
  %v7711 = vld [vmem:[%s7 + $0x1b8] sm:$0xff]
  %v7712 = vadd.f32 %v7656, %v7518
  %v7713 = vadd.f32 %v7657, %v7520
  %v7714 = vadd.f32 %v7658, %v7522
  %v7715 = vadd.f32 %v7659, %v7524
  %v7716 = vadd.f32 %v7660, %v7528
  %v7717 = vadd.f32 %v7661, %v7530
  %v7718 = vadd.f32 %v7662, %v7532
  %v7719 = vadd.f32 %v7663, %v7534
  %v7720 = vadd.f32 %v7664, %v7538
  %v7721 = vadd.f32 %v7665, %v7540
  %v7722 = vadd.f32 %v7666, %v7542
  %v7723 = vadd.f32 %v7667, %v7544
  %v7724 = vadd.f32 %v7668, %v7548
  %v7725 = vadd.f32 %v7669, %v7550
  %v7726 = vadd.f32 %v7670, %v7552
  %v7727 = vadd.f32 %v7671, %v7554
  %v7728 = vadd.f32 %v7672, %v7558
  %v7729 = vadd.f32 %v7673, %v7560
  %v7730 = vadd.f32 %v7674, %v7562
  %v7731 = vadd.f32 %v7675, %v7564
  %v7732 = vadd.f32 %v7676, %v7568
  %v7733 = vadd.f32 %v7677, %v7570
  %v7734 = vadd.f32 %v7678, %v7572
  %v7735 = vadd.f32 %v7679, %v7574
  %v7736 = vadd.f32 %v7680, %v7578
  %v7737 = vadd.f32 %v7681, %v7580
  %v7738 = vadd.f32 %v7682, %v7582
  %v7739 = vadd.f32 %v7683, %v7584
  %v7740 = vadd.f32 %v7684, %v7588
  %v7741 = vadd.f32 %v7685, %v7590
  %v7742 = vadd.f32 %v7686, %v7592
  %v7743 = vadd.f32 %v7687, %v7594
  %v7744 = vadd.f32 %v7688, %v7598
  %v7745 = vadd.f32 %v7689, %v7600
  %v7746 = vadd.f32 %v7690, %v7602
  %v7747 = vadd.f32 %v7691, %v7604
  %v7748 = vadd.f32 %v7692, %v7608
  %v7749 = vadd.f32 %v7693, %v7610
  %v7750 = vadd.f32 %v7694, %v7612
  %v7751 = vadd.f32 %v7695, %v7614
  %v7752 = vadd.f32 %v7696, %v7618
  %v7753 = vadd.f32 %v7697, %v7620
  %v7754 = vadd.f32 %v7698, %v7622
  %v7755 = vadd.f32 %v7699, %v7624
  %v7756 = vadd.f32 %v7700, %v7628
  %v7757 = vadd.f32 %v7701, %v7630
  %v7758 = vadd.f32 %v7702, %v7632
  %v7759 = vadd.f32 %v7703, %v7634
  %v7760 = vadd.f32 %v7704, %v7638
  %v7761 = vadd.f32 %v7705, %v7640
  %v7762 = vadd.f32 %v7706, %v7642
  %v7763 = vadd.f32 %v7707, %v7644
  %v7764 = vadd.f32 %v7708, %v7648
  %v7765 = vadd.f32 %v7709, %v7650
  %v7766 = vadd.f32 %v7710, %v7652
  %v7767 = vadd.f32 %v7711, %v7654
  %7768 = vst [vmem:[%s7] sm:$0xff] %v7712
  %7769 = vst [vmem:[%s7 + $0x8] sm:$0xff] %v7713
  %7770 = vst [vmem:[%s7 + $0x10] sm:$0xff] %v7714
  %7771 = vst [vmem:[%s7 + $0x18] sm:$0xff] %v7715
  %7772 = vst [vmem:[%s7 + $0x20] sm:$0xff] %v7716
  %7773 = vst [vmem:[%s7 + $0x28] sm:$0xff] %v7717
  %7774 = vst [vmem:[%s7 + $0x30] sm:$0xff] %v7718
  %7775 = vst [vmem:[%s7 + $0x38] sm:$0xff] %v7719
  %7776 = vst [vmem:[%s7 + $0x40] sm:$0xff] %v7720
  %7777 = vst [vmem:[%s7 + $0x48] sm:$0xff] %v7721
  %7778 = vst [vmem:[%s7 + $0x50] sm:$0xff] %v7722
  %7779 = vst [vmem:[%s7 + $0x58] sm:$0xff] %v7723
  %7780 = vst [vmem:[%s7 + $0x60] sm:$0xff] %v7724
  %7781 = vst [vmem:[%s7 + $0x68] sm:$0xff] %v7725
  %7782 = vst [vmem:[%s7 + $0x70] sm:$0xff] %v7726
  %7783 = vst [vmem:[%s7 + $0x78] sm:$0xff] %v7727
  %7784 = vst [vmem:[%s7 + $0x80] sm:$0xff] %v7728
  %7785 = vst [vmem:[%s7 + $0x88] sm:$0xff] %v7729
  %7786 = vst [vmem:[%s7 + $0x90] sm:$0xff] %v7730
  %7787 = vst [vmem:[%s7 + $0x98] sm:$0xff] %v7731
  %7788 = vst [vmem:[%s7 + $0xa0] sm:$0xff] %v7732
  %7789 = vst [vmem:[%s7 + $0xa8] sm:$0xff] %v7733
  %7790 = vst [vmem:[%s7 + $0xb0] sm:$0xff] %v7734
  %7791 = vst [vmem:[%s7 + $0xb8] sm:$0xff] %v7735
  %7792 = vst [vmem:[%s7 + $0xc0] sm:$0xff] %v7736
  %7793 = vst [vmem:[%s7 + $0xc8] sm:$0xff] %v7737
  %7794 = vst [vmem:[%s7 + $0xd0] sm:$0xff] %v7738
  %7795 = vst [vmem:[%s7 + $0xd8] sm:$0xff] %v7739
  %7796 = vst [vmem:[%s7 + $0xe0] sm:$0xff] %v7740
  %7797 = vst [vmem:[%s7 + $0xe8] sm:$0xff] %v7741
  %7798 = vst [vmem:[%s7 + $0xf0] sm:$0xff] %v7742
  %7799 = vst [vmem:[%s7 + $0xf8] sm:$0xff] %v7743
  %7800 = vst [vmem:[%s7 + $0x100] sm:$0xff] %v7744
  %7801 = vst [vmem:[%s7 + $0x108] sm:$0xff] %v7745
  %7802 = vst [vmem:[%s7 + $0x110] sm:$0xff] %v7746
  %7803 = vst [vmem:[%s7 + $0x118] sm:$0xff] %v7747
  %7804 = vst [vmem:[%s7 + $0x120] sm:$0xff] %v7748
  %7805 = vst [vmem:[%s7 + $0x128] sm:$0xff] %v7749
  %7806 = vst [vmem:[%s7 + $0x130] sm:$0xff] %v7750
  %7807 = vst [vmem:[%s7 + $0x138] sm:$0xff] %v7751
  %7808 = vst [vmem:[%s7 + $0x140] sm:$0xff] %v7752
  %7809 = vst [vmem:[%s7 + $0x148] sm:$0xff] %v7753
  %7810 = vst [vmem:[%s7 + $0x150] sm:$0xff] %v7754
  %7811 = vst [vmem:[%s7 + $0x158] sm:$0xff] %v7755
  %7812 = vst [vmem:[%s7 + $0x160] sm:$0xff] %v7756
  %7813 = vst [vmem:[%s7 + $0x168] sm:$0xff] %v7757
  %7814 = vst [vmem:[%s7 + $0x170] sm:$0xff] %v7758
  %7815 = vst [vmem:[%s7 + $0x178] sm:$0xff] %v7759
  %7816 = vst [vmem:[%s7 + $0x180] sm:$0xff] %v7760
  %7817 = vst [vmem:[%s7 + $0x188] sm:$0xff] %v7761
  %7818 = vst [vmem:[%s7 + $0x190] sm:$0xff] %v7762
  %7819 = vst [vmem:[%s7 + $0x198] sm:$0xff] %v7763
  %7820 = vst [vmem:[%s7 + $0x1a0] sm:$0xff] %v7764
  %7821 = vst [vmem:[%s7 + $0x1a8] sm:$0xff] %v7765
  %7822 = vst [vmem:[%s7 + $0x1b0] sm:$0xff] %v7766
  %7823 = vst [vmem:[%s7 + $0x1b8] sm:$0xff] %v7767
  %v7824 = vld [vmem:[#allocation2 + $0x30] sm:$0xff]
  %v7825 = vld [vmem:[#allocation2 + $0x38] sm:$0xff]
  %v7826 = vld [vmem:[#allocation2 + $0x40] sm:$0xff]
  %v7827 = vld [vmem:[#allocation2 + $0x48] sm:$0xff]
  %v7828 = vld [vmem:[#allocation2 + $0x50] sm:$0xff]
  %v7829 = vld [vmem:[#allocation2 + $0x58] sm:$0xff]
  %v7830 = vld [vmem:[#allocation2 + $0x60] sm:$0xff]
  %v7831 = vld [vmem:[#allocation2 + $0x68] sm:$0xff]
  %v7832 = vld [vmem:[#allocation2 + $0x70] sm:$0xff]
  %v7833 = vld [vmem:[#allocation2 + $0x78] sm:$0xff]
  %v7834 = vld [vmem:[#allocation2 + $0x80] sm:$0xff]
  %v7835 = vld [vmem:[#allocation2 + $0x88] sm:$0xff]
  %v7836 = vld [vmem:[#allocation2 + $0x90] sm:$0xff]
  %v7837 = vld [vmem:[#allocation2 + $0x98] sm:$0xff]
  %v7838 = vld [vmem:[#allocation2 + $0xa0] sm:$0xff]
  %v7839 = vld [vmem:[#allocation2 + $0xa8] sm:$0xff]
  %v7840 = vld [vmem:[#allocation2 + $0xb0] sm:$0xff]
  %v7841 = vld [vmem:[#allocation2 + $0xb8] sm:$0xff]
  %v7842 = vld [vmem:[#allocation2 + $0xc0] sm:$0xff]
  %v7843 = vld [vmem:[#allocation2 + $0xc8] sm:$0xff]
  %v7844 = vld [vmem:[#allocation2 + $0xd0] sm:$0xff]
  %v7845 = vld [vmem:[#allocation2 + $0xd8] sm:$0xff]
  %v7846 = vld [vmem:[#allocation2 + $0xe0] sm:$0xff]
  %v7847 = vld [vmem:[#allocation2 + $0xe8] sm:$0xff]
  %v7848 = vld [vmem:[#allocation2 + $0xf0] sm:$0xff]
  %v7849 = vld [vmem:[#allocation2 + $0xf8] sm:$0xff]
  %v7850 = vld [vmem:[#allocation2 + $0x100] sm:$0xff]
  %v7851 = vld [vmem:[#allocation2 + $0x108] sm:$0xff]
  %s7852 = scalar_lea.vmem [#allocation3], 1792
  %v7853 = vld [vmem:[%s7852] sm:$0xff]
  %v7854 = vld [vmem:[%s7852 + $0x8] sm:$0xff]
  %v7855 = vld [vmem:[%s7852 + $0x10] sm:$0xff]
  %v7856 = vld [vmem:[%s7852 + $0x18] sm:$0xff]
  %v7857 = vld [vmem:[%s7852 + $0x20] sm:$0xff]
  %v7858 = vld [vmem:[%s7852 + $0x28] sm:$0xff]
  %v7859 = vld [vmem:[%s7852 + $0x30] sm:$0xff]
  %v7860 = vld [vmem:[%s7852 + $0x38] sm:$0xff]
  %v7861 = vld [vmem:[%s7852 + $0x40] sm:$0xff]
  %v7862 = vld [vmem:[%s7852 + $0x48] sm:$0xff]
  %v7863 = vld [vmem:[%s7852 + $0x50] sm:$0xff]
  %v7864 = vld [vmem:[%s7852 + $0x58] sm:$0xff]
  %v7865 = vld [vmem:[%s7852 + $0x60] sm:$0xff]
  %v7866 = vld [vmem:[%s7852 + $0x68] sm:$0xff]
  %v7867 = vld [vmem:[%s7852 + $0x70] sm:$0xff]
  %v7868 = vld [vmem:[%s7852 + $0x78] sm:$0xff]
  %v7869 = vld [vmem:[%s7852 + $0x80] sm:$0xff]
  %v7870 = vld [vmem:[%s7852 + $0x88] sm:$0xff]
  %v7871 = vld [vmem:[%s7852 + $0x90] sm:$0xff]
  %v7872 = vld [vmem:[%s7852 + $0x98] sm:$0xff]
  %v7873 = vld [vmem:[%s7852 + $0xa0] sm:$0xff]
  %v7874 = vld [vmem:[%s7852 + $0xa8] sm:$0xff]
  %v7875 = vld [vmem:[%s7852 + $0xb0] sm:$0xff]
  %v7876 = vld [vmem:[%s7852 + $0xb8] sm:$0xff]
  %v7877 = vld [vmem:[%s7852 + $0xc0] sm:$0xff]
  %v7878 = vld [vmem:[%s7852 + $0xc8] sm:$0xff]
  %v7879 = vld [vmem:[%s7852 + $0xd0] sm:$0xff]
  %v7880 = vld [vmem:[%s7852 + $0xd8] sm:$0xff]
  %v7881 = vld [vmem:[%s7852 + $0xe0] sm:$0xff]
  %v7882 = vld [vmem:[%s7852 + $0xe8] sm:$0xff]
  %v7883 = vld [vmem:[%s7852 + $0xf0] sm:$0xff]
  %v7884 = vld [vmem:[%s7852 + $0xf8] sm:$0xff]
  %v7913 = vunpack.c.l.b16 %v7824
  %v7914 = vunpack.c.h.b16 %v7824
  %v7915 = vunpack.c.l.b16 %v7825
  %v7916 = vunpack.c.h.b16 %v7825
  %v7917 = vunpack.c.l.b16 %v7826
  %v7918 = vunpack.c.h.b16 %v7826
  %v7919 = vunpack.c.l.b16 %v7827
  %v7920 = vunpack.c.h.b16 %v7827
  %v7921 = vunpack.c.l.b16 %v7828
  %v7922 = vunpack.c.h.b16 %v7828
  %v7923 = vunpack.c.l.b16 %v7829
  %v7924 = vunpack.c.h.b16 %v7829
  %v7925 = vunpack.c.l.b16 %v7830
  %v7926 = vunpack.c.h.b16 %v7830
  %v7927 = vunpack.c.l.b16 %v7831
  %v7928 = vunpack.c.h.b16 %v7831
  %v7929 = vunpack.c.l.b16 %v7832
  %v7930 = vunpack.c.h.b16 %v7832
  %v7931 = vunpack.c.l.b16 %v7833
  %v7932 = vunpack.c.h.b16 %v7833
  %v7933 = vunpack.c.l.b16 %v7834
  %v7934 = vunpack.c.h.b16 %v7834
  %v7935 = vunpack.c.l.b16 %v7835
  %v7936 = vunpack.c.h.b16 %v7835
  %v7937 = vunpack.c.l.b16 %v7836
  %v7938 = vunpack.c.h.b16 %v7836
  %v7939 = vunpack.c.l.b16 %v7837
  %v7940 = vunpack.c.h.b16 %v7837
  %v7941 = vunpack.c.l.b16 %v7838
  %v7942 = vunpack.c.h.b16 %v7838
  %v7943 = vunpack.c.l.b16 %v7839
  %v7944 = vunpack.c.h.b16 %v7839
  %v7945 = vunpack.c.l.b16 %v7840
  %v7946 = vunpack.c.h.b16 %v7840
  %v7947 = vunpack.c.l.b16 %v7841
  %v7948 = vunpack.c.h.b16 %v7841
  %v7949 = vunpack.c.l.b16 %v7842
  %v7950 = vunpack.c.h.b16 %v7842
  %v7951 = vunpack.c.l.b16 %v7843
  %v7952 = vunpack.c.h.b16 %v7843
  %v7953 = vunpack.c.l.b16 %v7844
  %v7954 = vunpack.c.h.b16 %v7844
  %v7955 = vunpack.c.l.b16 %v7845
  %v7956 = vunpack.c.h.b16 %v7845
  %v7957 = vunpack.c.l.b16 %v7846
  %v7958 = vunpack.c.h.b16 %v7846
  %v7959 = vunpack.c.l.b16 %v7847
  %v7960 = vunpack.c.h.b16 %v7847
  %v7961 = vunpack.c.l.b16 %v7848
  %v7962 = vunpack.c.h.b16 %v7848
  %v7963 = vunpack.c.l.b16 %v7849
  %v7964 = vunpack.c.h.b16 %v7849
  %v7965 = vunpack.c.l.b16 %v7850
  %v7966 = vunpack.c.h.b16 %v7850
  %v7967 = vunpack.c.l.b16 %v7851
  %v7968 = vunpack.c.h.b16 %v7851
  %v7969 = vpack.c.b16 %v7915, %v7913
  %v7970 = vpack.c.b16 %v7916, %v7914
  %v7971 = vpack.c.b16 %v7919, %v7917
  %v7972 = vpack.c.b16 %v7920, %v7918
  %v7973 = vpack.c.b16 %v7923, %v7921
  %v7974 = vpack.c.b16 %v7924, %v7922
  %v7975 = vpack.c.b16 %v7927, %v7925
  %v7976 = vpack.c.b16 %v7928, %v7926
  %v7977 = vpack.c.b16 %v7931, %v7929
  %v7978 = vpack.c.b16 %v7932, %v7930
  %v7979 = vpack.c.b16 %v7935, %v7933
  %v7980 = vpack.c.b16 %v7936, %v7934
  %v7981 = vpack.c.b16 %v7939, %v7937
  %v7982 = vpack.c.b16 %v7940, %v7938
  %v7983 = vpack.c.b16 %v7943, %v7941
  %v7984 = vpack.c.b16 %v7944, %v7942
  %v7985 = vpack.c.b16 %v7947, %v7945
  %v7986 = vpack.c.b16 %v7948, %v7946
  %v7987 = vpack.c.b16 %v7951, %v7949
  %v7988 = vpack.c.b16 %v7952, %v7950
  %v7989 = vpack.c.b16 %v7955, %v7953
  %v7990 = vpack.c.b16 %v7956, %v7954
  %v7991 = vpack.c.b16 %v7959, %v7957
  %v7992 = vpack.c.b16 %v7960, %v7958
  %v7993 = vpack.c.b16 %v7963, %v7961
  %v7994 = vpack.c.b16 %v7964, %v7962
  %v7995 = vpack.c.b16 %v7967, %v7965
  %v7996 = vpack.c.b16 %v7968, %v7966
  %v8057 = vunpack.c.l.b16 %v7853
  %v8058 = vunpack.c.h.b16 %v7853
  %v8059 = vunpack.c.l.b16 %v7854
  %v8060 = vunpack.c.h.b16 %v7854
  %v8061 = vunpack.c.l.b16 %v7855
  %v8062 = vunpack.c.h.b16 %v7855
  %v8063 = vunpack.c.l.b16 %v7856
  %v8064 = vunpack.c.h.b16 %v7856
  %v8065 = vunpack.c.l.b16 %v7857
  %v8066 = vunpack.c.h.b16 %v7857
  %v8067 = vunpack.c.l.b16 %v7858
  %v8068 = vunpack.c.h.b16 %v7858
  %v8069 = vunpack.c.l.b16 %v7859
  %v8070 = vunpack.c.h.b16 %v7859
  %v8071 = vunpack.c.l.b16 %v7860
  %v8072 = vunpack.c.h.b16 %v7860
  %v8073 = vunpack.c.l.b16 %v7861
  %v8074 = vunpack.c.h.b16 %v7861
  %v8075 = vunpack.c.l.b16 %v7862
  %v8076 = vunpack.c.h.b16 %v7862
  %v8077 = vunpack.c.l.b16 %v7863
  %v8078 = vunpack.c.h.b16 %v7863
  %v8079 = vunpack.c.l.b16 %v7864
  %v8080 = vunpack.c.h.b16 %v7864
  %v8081 = vunpack.c.l.b16 %v7865
  %v8082 = vunpack.c.h.b16 %v7865
  %v8083 = vunpack.c.l.b16 %v7866
  %v8084 = vunpack.c.h.b16 %v7866
  %v8085 = vunpack.c.l.b16 %v7867
  %v8086 = vunpack.c.h.b16 %v7867
  %v8087 = vunpack.c.l.b16 %v7868
  %v8088 = vunpack.c.h.b16 %v7868
  %v8089 = vunpack.c.l.b16 %v7869
  %v8090 = vunpack.c.h.b16 %v7869
  %v8091 = vunpack.c.l.b16 %v7870
  %v8092 = vunpack.c.h.b16 %v7870
  %v8093 = vunpack.c.l.b16 %v7871
  %v8094 = vunpack.c.h.b16 %v7871
  %v8095 = vunpack.c.l.b16 %v7872
  %v8096 = vunpack.c.h.b16 %v7872
  %v8097 = vunpack.c.l.b16 %v7873
  %v8098 = vunpack.c.h.b16 %v7873
  %v8099 = vunpack.c.l.b16 %v7874
  %v8100 = vunpack.c.h.b16 %v7874
  %v8101 = vunpack.c.l.b16 %v7875
  %v8102 = vunpack.c.h.b16 %v7875
  %v8103 = vunpack.c.l.b16 %v7876
  %v8104 = vunpack.c.h.b16 %v7876
  %v8105 = vunpack.c.l.b16 %v7877
  %v8106 = vunpack.c.h.b16 %v7877
  %v8107 = vunpack.c.l.b16 %v7878
  %v8108 = vunpack.c.h.b16 %v7878
  %v8109 = vunpack.c.l.b16 %v7879
  %v8110 = vunpack.c.h.b16 %v7879
  %v8111 = vunpack.c.l.b16 %v7880
  %v8112 = vunpack.c.h.b16 %v7880
  %v8113 = vunpack.c.l.b16 %v7881
  %v8114 = vunpack.c.h.b16 %v7881
  %v8115 = vunpack.c.l.b16 %v7882
  %v8116 = vunpack.c.h.b16 %v7882
  %v8117 = vunpack.c.l.b16 %v7883
  %v8118 = vunpack.c.h.b16 %v7883
  %v8119 = vunpack.c.l.b16 %v7884
  %v8120 = vunpack.c.h.b16 %v7884
  %v8121 = vpack.c.b16 %v8059, %v8057
  %v8122 = vpack.c.b16 %v8060, %v8058
  %v8123 = vpack.c.b16 %v8063, %v8061
  %v8124 = vpack.c.b16 %v8064, %v8062
  %v8125 = vpack.c.b16 %v8067, %v8065
  %v8126 = vpack.c.b16 %v8068, %v8066
  %v8127 = vpack.c.b16 %v8071, %v8069
  %v8128 = vpack.c.b16 %v8072, %v8070
  %v8129 = vpack.c.b16 %v8075, %v8073
  %v8130 = vpack.c.b16 %v8076, %v8074
  %v8131 = vpack.c.b16 %v8079, %v8077
  %v8132 = vpack.c.b16 %v8080, %v8078
  %v8133 = vpack.c.b16 %v8083, %v8081
  %v8134 = vpack.c.b16 %v8084, %v8082
  %v8135 = vpack.c.b16 %v8087, %v8085
  %v8136 = vpack.c.b16 %v8088, %v8086
  %v8137 = vpack.c.b16 %v8091, %v8089
  %v8138 = vpack.c.b16 %v8092, %v8090
  %v8139 = vpack.c.b16 %v8095, %v8093
  %v8140 = vpack.c.b16 %v8096, %v8094
  %v8141 = vpack.c.b16 %v8099, %v8097
  %v8142 = vpack.c.b16 %v8100, %v8098
  %v8143 = vpack.c.b16 %v8103, %v8101
  %v8144 = vpack.c.b16 %v8104, %v8102
  %v8145 = vpack.c.b16 %v8107, %v8105
  %v8146 = vpack.c.b16 %v8108, %v8106
  %v8147 = vpack.c.b16 %v8111, %v8109
  %v8148 = vpack.c.b16 %v8112, %v8110
  %v8149 = vpack.c.b16 %v8115, %v8113
  %v8150 = vpack.c.b16 %v8116, %v8114
  %v8151 = vpack.c.b16 %v8119, %v8117
  %v8152 = vpack.c.b16 %v8120, %v8118
  %8185 = vmatprep.subr.bf16.mxu0 %v8136
  %8186 = vmatpush1.bf16.msra.mxu0 %v8135
  %8187 = vmatprep.subr.bf16.mxu0 %v8134
  %8188 = vmatpush1.bf16.msra.mxu0 %v8133
  %8189 = vmatprep.subr.bf16.mxu0 %v8132
  %8190 = vmatpush1.bf16.msra.mxu0 %v8131
  %8191 = vmatprep.subr.bf16.mxu0 %v8130
  %8192 = vmatpush1.bf16.msra.mxu0 %v8129
  %8193 = vmatprep.subr.bf16.mxu0 %v8128
  %8194 = vmatpush1.bf16.msra.mxu0 %v8127
  %8195 = vmatprep.subr.bf16.mxu0 %v8126
  %8196 = vmatpush1.bf16.msra.mxu0 %v8125
  %8197 = vmatprep.subr.bf16.mxu0 %v8124
  %8198 = vmatpush1.bf16.msra.mxu0 %v8123
  %8199 = vmatprep.subr.bf16.mxu0 %v8122
  %8200 = vmatpush1.bf16.msra.mxu0 %v8121
  %8201 = vmatprep.subr.bf16.mxu0 %v8152
  %8202 = vmatpush2.bf16.msra.mxu0 %v8151
  %8203 = vmatprep.subr.bf16.mxu0 %v8150
  %8204 = vmatpush2.bf16.msra.mxu0 %v8149
  %8205 = vmatprep.subr.bf16.mxu0 %v8148
  %8206 = vmatpush2.bf16.msra.mxu0 %v8147
  %8207 = vmatprep.subr.bf16.mxu0 %v8146
  %8208 = vmatpush2.bf16.msra.mxu0 %v8145
  %8209 = vmatprep.subr.bf16.mxu0 %v8144
  %8210 = vmatpush2.bf16.msra.mxu0 %v8143
  %8211 = vmatprep.subr.bf16.mxu0 %v8142
  %8212 = vmatpush2.bf16.msra.mxu0 %v8141
  %8213 = vmatprep.subr.bf16.mxu0 %v8140
  %8214 = vmatpush2.bf16.msra.mxu0 %v8139
  %8215 = vmatprep.subr.bf16.mxu0 %v8138
  %8216 = vmatpush2.bf16.msra.mxu0 %v8137
  %8217 = vmatprep.mubr.bf16.mxu0 %v7970
  %8218 = vmatmul.mubr.bf16.gmra.mxu0 %v7969
  %v8219 = vpop.f32.mrf.mxu0
  %v8220 = vadd.f32 0.0, %v8219
  %v8221 = vpop.f32.mrf.mxu0
  %v8222 = vadd.f32 0.0, %v8221
  %v8223 = vpop.f32.mrf.mxu0
  %v8224 = vadd.f32 0.0, %v8223
  %v8225 = vpop.f32.mrf.mxu0
  %v8226 = vadd.f32 0.0, %v8225
  %8227 = vmatprep.mubr.bf16.mxu0 %v7972
  %8228 = vmatmul.mubr.bf16.gmra.mxu0 %v7971
  %v8229 = vpop.f32.mrf.mxu0
  %v8230 = vadd.f32 0.0, %v8229
  %v8231 = vpop.f32.mrf.mxu0
  %v8232 = vadd.f32 0.0, %v8231
  %v8233 = vpop.f32.mrf.mxu0
  %v8234 = vadd.f32 0.0, %v8233
  %v8235 = vpop.f32.mrf.mxu0
  %v8236 = vadd.f32 0.0, %v8235
  %8237 = vmatprep.mubr.bf16.mxu0 %v7974
  %8238 = vmatmul.mubr.bf16.gmra.mxu0 %v7973
  %v8239 = vpop.f32.mrf.mxu0
  %v8240 = vadd.f32 0.0, %v8239
  %v8241 = vpop.f32.mrf.mxu0
  %v8242 = vadd.f32 0.0, %v8241
  %v8243 = vpop.f32.mrf.mxu0
  %v8244 = vadd.f32 0.0, %v8243
  %v8245 = vpop.f32.mrf.mxu0
  %v8246 = vadd.f32 0.0, %v8245
  %8247 = vmatprep.mubr.bf16.mxu0 %v7976
  %8248 = vmatmul.mubr.bf16.gmra.mxu0 %v7975
  %v8249 = vpop.f32.mrf.mxu0
  %v8250 = vadd.f32 0.0, %v8249
  %v8251 = vpop.f32.mrf.mxu0
  %v8252 = vadd.f32 0.0, %v8251
  %v8253 = vpop.f32.mrf.mxu0
  %v8254 = vadd.f32 0.0, %v8253
  %v8255 = vpop.f32.mrf.mxu0
  %v8256 = vadd.f32 0.0, %v8255
  %8257 = vmatprep.mubr.bf16.mxu0 %v7978
  %8258 = vmatmul.mubr.bf16.gmra.mxu0 %v7977
  %v8259 = vpop.f32.mrf.mxu0
  %v8260 = vadd.f32 0.0, %v8259
  %v8261 = vpop.f32.mrf.mxu0
  %v8262 = vadd.f32 0.0, %v8261
  %v8263 = vpop.f32.mrf.mxu0
  %v8264 = vadd.f32 0.0, %v8263
  %v8265 = vpop.f32.mrf.mxu0
  %v8266 = vadd.f32 0.0, %v8265
  %8267 = vmatprep.mubr.bf16.mxu0 %v7980
  %8268 = vmatmul.mubr.bf16.gmra.mxu0 %v7979
  %v8269 = vpop.f32.mrf.mxu0
  %v8270 = vadd.f32 0.0, %v8269
  %v8271 = vpop.f32.mrf.mxu0
  %v8272 = vadd.f32 0.0, %v8271
  %v8273 = vpop.f32.mrf.mxu0
  %v8274 = vadd.f32 0.0, %v8273
  %v8275 = vpop.f32.mrf.mxu0
  %v8276 = vadd.f32 0.0, %v8275
  %8277 = vmatprep.mubr.bf16.mxu0 %v7982
  %8278 = vmatmul.mubr.bf16.gmra.mxu0 %v7981
  %v8279 = vpop.f32.mrf.mxu0
  %v8280 = vadd.f32 0.0, %v8279
  %v8281 = vpop.f32.mrf.mxu0
  %v8282 = vadd.f32 0.0, %v8281
  %v8283 = vpop.f32.mrf.mxu0
  %v8284 = vadd.f32 0.0, %v8283
  %v8285 = vpop.f32.mrf.mxu0
  %v8286 = vadd.f32 0.0, %v8285
  %8287 = vmatprep.mubr.bf16.mxu0 %v7984
  %8288 = vmatmul.mubr.bf16.gmra.mxu0 %v7983
  %v8289 = vpop.f32.mrf.mxu0
  %v8290 = vadd.f32 0.0, %v8289
  %v8291 = vpop.f32.mrf.mxu0
  %v8292 = vadd.f32 0.0, %v8291
  %v8293 = vpop.f32.mrf.mxu0
  %v8294 = vadd.f32 0.0, %v8293
  %v8295 = vpop.f32.mrf.mxu0
  %v8296 = vadd.f32 0.0, %v8295
  %8297 = vmatprep.mubr.bf16.mxu0 %v7986
  %8298 = vmatmul.mubr.bf16.gmra.mxu0 %v7985
  %v8299 = vpop.f32.mrf.mxu0
  %v8300 = vadd.f32 0.0, %v8299
  %v8301 = vpop.f32.mrf.mxu0
  %v8302 = vadd.f32 0.0, %v8301
  %v8303 = vpop.f32.mrf.mxu0
  %v8304 = vadd.f32 0.0, %v8303
  %v8305 = vpop.f32.mrf.mxu0
  %v8306 = vadd.f32 0.0, %v8305
  %8307 = vmatprep.mubr.bf16.mxu0 %v7988
  %8308 = vmatmul.mubr.bf16.gmra.mxu0 %v7987
  %v8309 = vpop.f32.mrf.mxu0
  %v8310 = vadd.f32 0.0, %v8309
  %v8311 = vpop.f32.mrf.mxu0
  %v8312 = vadd.f32 0.0, %v8311
  %v8313 = vpop.f32.mrf.mxu0
  %v8314 = vadd.f32 0.0, %v8313
  %v8315 = vpop.f32.mrf.mxu0
  %v8316 = vadd.f32 0.0, %v8315
  %8317 = vmatprep.mubr.bf16.mxu0 %v7990
  %8318 = vmatmul.mubr.bf16.gmra.mxu0 %v7989
  %v8319 = vpop.f32.mrf.mxu0
  %v8320 = vadd.f32 0.0, %v8319
  %v8321 = vpop.f32.mrf.mxu0
  %v8322 = vadd.f32 0.0, %v8321
  %v8323 = vpop.f32.mrf.mxu0
  %v8324 = vadd.f32 0.0, %v8323
  %v8325 = vpop.f32.mrf.mxu0
  %v8326 = vadd.f32 0.0, %v8325
  %8327 = vmatprep.mubr.bf16.mxu0 %v7992
  %8328 = vmatmul.mubr.bf16.gmra.mxu0 %v7991
  %v8329 = vpop.f32.mrf.mxu0
  %v8330 = vadd.f32 0.0, %v8329
  %v8331 = vpop.f32.mrf.mxu0
  %v8332 = vadd.f32 0.0, %v8331
  %v8333 = vpop.f32.mrf.mxu0
  %v8334 = vadd.f32 0.0, %v8333
  %v8335 = vpop.f32.mrf.mxu0
  %v8336 = vadd.f32 0.0, %v8335
  %8337 = vmatprep.mubr.bf16.mxu0 %v7994
  %8338 = vmatmul.mubr.bf16.gmra.mxu0 %v7993
  %v8339 = vpop.f32.mrf.mxu0
  %v8340 = vadd.f32 0.0, %v8339
  %v8341 = vpop.f32.mrf.mxu0
  %v8342 = vadd.f32 0.0, %v8341
  %v8343 = vpop.f32.mrf.mxu0
  %v8344 = vadd.f32 0.0, %v8343
  %v8345 = vpop.f32.mrf.mxu0
  %v8346 = vadd.f32 0.0, %v8345
  %8347 = vmatprep.mubr.bf16.mxu0 %v7996
  %8348 = vmatmul.mubr.bf16.gmra.mxu0 %v7995
  %v8349 = vpop.f32.mrf.mxu0
  %v8350 = vadd.f32 0.0, %v8349
  %v8351 = vpop.f32.mrf.mxu0
  %v8352 = vadd.f32 0.0, %v8351
  %v8353 = vpop.f32.mrf.mxu0
  %v8354 = vadd.f32 0.0, %v8353
  %v8355 = vpop.f32.mrf.mxu0
  %v8356 = vadd.f32 0.0, %v8355
  %8357 = vdwg.mxu0
  %v8358 = vld [vmem:[%s7] sm:$0xff]
  %v8359 = vld [vmem:[%s7 + $0x8] sm:$0xff]
  %v8360 = vld [vmem:[%s7 + $0x10] sm:$0xff]
  %v8361 = vld [vmem:[%s7 + $0x18] sm:$0xff]
  %v8362 = vld [vmem:[%s7 + $0x20] sm:$0xff]
  %v8363 = vld [vmem:[%s7 + $0x28] sm:$0xff]
  %v8364 = vld [vmem:[%s7 + $0x30] sm:$0xff]
  %v8365 = vld [vmem:[%s7 + $0x38] sm:$0xff]
  %v8366 = vld [vmem:[%s7 + $0x40] sm:$0xff]
  %v8367 = vld [vmem:[%s7 + $0x48] sm:$0xff]
  %v8368 = vld [vmem:[%s7 + $0x50] sm:$0xff]
  %v8369 = vld [vmem:[%s7 + $0x58] sm:$0xff]
  %v8370 = vld [vmem:[%s7 + $0x60] sm:$0xff]
  %v8371 = vld [vmem:[%s7 + $0x68] sm:$0xff]
  %v8372 = vld [vmem:[%s7 + $0x70] sm:$0xff]
  %v8373 = vld [vmem:[%s7 + $0x78] sm:$0xff]
  %v8374 = vld [vmem:[%s7 + $0x80] sm:$0xff]
  %v8375 = vld [vmem:[%s7 + $0x88] sm:$0xff]
  %v8376 = vld [vmem:[%s7 + $0x90] sm:$0xff]
  %v8377 = vld [vmem:[%s7 + $0x98] sm:$0xff]
  %v8378 = vld [vmem:[%s7 + $0xa0] sm:$0xff]
  %v8379 = vld [vmem:[%s7 + $0xa8] sm:$0xff]
  %v8380 = vld [vmem:[%s7 + $0xb0] sm:$0xff]
  %v8381 = vld [vmem:[%s7 + $0xb8] sm:$0xff]
  %v8382 = vld [vmem:[%s7 + $0xc0] sm:$0xff]
  %v8383 = vld [vmem:[%s7 + $0xc8] sm:$0xff]
  %v8384 = vld [vmem:[%s7 + $0xd0] sm:$0xff]
  %v8385 = vld [vmem:[%s7 + $0xd8] sm:$0xff]
  %v8386 = vld [vmem:[%s7 + $0xe0] sm:$0xff]
  %v8387 = vld [vmem:[%s7 + $0xe8] sm:$0xff]
  %v8388 = vld [vmem:[%s7 + $0xf0] sm:$0xff]
  %v8389 = vld [vmem:[%s7 + $0xf8] sm:$0xff]
  %v8390 = vld [vmem:[%s7 + $0x100] sm:$0xff]
  %v8391 = vld [vmem:[%s7 + $0x108] sm:$0xff]
  %v8392 = vld [vmem:[%s7 + $0x110] sm:$0xff]
  %v8393 = vld [vmem:[%s7 + $0x118] sm:$0xff]
  %v8394 = vld [vmem:[%s7 + $0x120] sm:$0xff]
  %v8395 = vld [vmem:[%s7 + $0x128] sm:$0xff]
  %v8396 = vld [vmem:[%s7 + $0x130] sm:$0xff]
  %v8397 = vld [vmem:[%s7 + $0x138] sm:$0xff]
  %v8398 = vld [vmem:[%s7 + $0x140] sm:$0xff]
  %v8399 = vld [vmem:[%s7 + $0x148] sm:$0xff]
  %v8400 = vld [vmem:[%s7 + $0x150] sm:$0xff]
  %v8401 = vld [vmem:[%s7 + $0x158] sm:$0xff]
  %v8402 = vld [vmem:[%s7 + $0x160] sm:$0xff]
  %v8403 = vld [vmem:[%s7 + $0x168] sm:$0xff]
  %v8404 = vld [vmem:[%s7 + $0x170] sm:$0xff]
  %v8405 = vld [vmem:[%s7 + $0x178] sm:$0xff]
  %v8406 = vld [vmem:[%s7 + $0x180] sm:$0xff]
  %v8407 = vld [vmem:[%s7 + $0x188] sm:$0xff]
  %v8408 = vld [vmem:[%s7 + $0x190] sm:$0xff]
  %v8409 = vld [vmem:[%s7 + $0x198] sm:$0xff]
  %v8410 = vld [vmem:[%s7 + $0x1a0] sm:$0xff]
  %v8411 = vld [vmem:[%s7 + $0x1a8] sm:$0xff]
  %v8412 = vld [vmem:[%s7 + $0x1b0] sm:$0xff]
  %v8413 = vld [vmem:[%s7 + $0x1b8] sm:$0xff]
  %v8414 = vadd.f32 %v8358, %v8220
  %v8415 = vadd.f32 %v8359, %v8222
  %v8416 = vadd.f32 %v8360, %v8224
  %v8417 = vadd.f32 %v8361, %v8226
  %v8418 = vadd.f32 %v8362, %v8230
  %v8419 = vadd.f32 %v8363, %v8232
  %v8420 = vadd.f32 %v8364, %v8234
  %v8421 = vadd.f32 %v8365, %v8236
  %v8422 = vadd.f32 %v8366, %v8240
  %v8423 = vadd.f32 %v8367, %v8242
  %v8424 = vadd.f32 %v8368, %v8244
  %v8425 = vadd.f32 %v8369, %v8246
  %v8426 = vadd.f32 %v8370, %v8250
  %v8427 = vadd.f32 %v8371, %v8252
  %v8428 = vadd.f32 %v8372, %v8254
  %v8429 = vadd.f32 %v8373, %v8256
  %v8430 = vadd.f32 %v8374, %v8260
  %v8431 = vadd.f32 %v8375, %v8262
  %v8432 = vadd.f32 %v8376, %v8264
  %v8433 = vadd.f32 %v8377, %v8266
  %v8434 = vadd.f32 %v8378, %v8270
  %v8435 = vadd.f32 %v8379, %v8272
  %v8436 = vadd.f32 %v8380, %v8274
  %v8437 = vadd.f32 %v8381, %v8276
  %v8438 = vadd.f32 %v8382, %v8280
  %v8439 = vadd.f32 %v8383, %v8282
  %v8440 = vadd.f32 %v8384, %v8284
  %v8441 = vadd.f32 %v8385, %v8286
  %v8442 = vadd.f32 %v8386, %v8290
  %v8443 = vadd.f32 %v8387, %v8292
  %v8444 = vadd.f32 %v8388, %v8294
  %v8445 = vadd.f32 %v8389, %v8296
  %v8446 = vadd.f32 %v8390, %v8300
  %v8447 = vadd.f32 %v8391, %v8302
  %v8448 = vadd.f32 %v8392, %v8304
  %v8449 = vadd.f32 %v8393, %v8306
  %v8450 = vadd.f32 %v8394, %v8310
  %v8451 = vadd.f32 %v8395, %v8312
  %v8452 = vadd.f32 %v8396, %v8314
  %v8453 = vadd.f32 %v8397, %v8316
  %v8454 = vadd.f32 %v8398, %v8320
  %v8455 = vadd.f32 %v8399, %v8322
  %v8456 = vadd.f32 %v8400, %v8324
  %v8457 = vadd.f32 %v8401, %v8326
  %v8458 = vadd.f32 %v8402, %v8330
  %v8459 = vadd.f32 %v8403, %v8332
  %v8460 = vadd.f32 %v8404, %v8334
  %v8461 = vadd.f32 %v8405, %v8336
  %v8462 = vadd.f32 %v8406, %v8340
  %v8463 = vadd.f32 %v8407, %v8342
  %v8464 = vadd.f32 %v8408, %v8344
  %v8465 = vadd.f32 %v8409, %v8346
  %v8466 = vadd.f32 %v8410, %v8350
  %v8467 = vadd.f32 %v8411, %v8352
  %v8468 = vadd.f32 %v8412, %v8354
  %v8469 = vadd.f32 %v8413, %v8356
  %8470 = vst [vmem:[%s7] sm:$0xff] %v8414
  %8471 = vst [vmem:[%s7 + $0x8] sm:$0xff] %v8415
  %8472 = vst [vmem:[%s7 + $0x10] sm:$0xff] %v8416
  %8473 = vst [vmem:[%s7 + $0x18] sm:$0xff] %v8417
  %8474 = vst [vmem:[%s7 + $0x20] sm:$0xff] %v8418
  %8475 = vst [vmem:[%s7 + $0x28] sm:$0xff] %v8419
  %8476 = vst [vmem:[%s7 + $0x30] sm:$0xff] %v8420
  %8477 = vst [vmem:[%s7 + $0x38] sm:$0xff] %v8421
  %8478 = vst [vmem:[%s7 + $0x40] sm:$0xff] %v8422
  %8479 = vst [vmem:[%s7 + $0x48] sm:$0xff] %v8423
  %8480 = vst [vmem:[%s7 + $0x50] sm:$0xff] %v8424
  %8481 = vst [vmem:[%s7 + $0x58] sm:$0xff] %v8425
  %8482 = vst [vmem:[%s7 + $0x60] sm:$0xff] %v8426
  %8483 = vst [vmem:[%s7 + $0x68] sm:$0xff] %v8427
  %8484 = vst [vmem:[%s7 + $0x70] sm:$0xff] %v8428
  %8485 = vst [vmem:[%s7 + $0x78] sm:$0xff] %v8429
  %8486 = vst [vmem:[%s7 + $0x80] sm:$0xff] %v8430
  %8487 = vst [vmem:[%s7 + $0x88] sm:$0xff] %v8431
  %8488 = vst [vmem:[%s7 + $0x90] sm:$0xff] %v8432
  %8489 = vst [vmem:[%s7 + $0x98] sm:$0xff] %v8433
  %8490 = vst [vmem:[%s7 + $0xa0] sm:$0xff] %v8434
  %8491 = vst [vmem:[%s7 + $0xa8] sm:$0xff] %v8435
  %8492 = vst [vmem:[%s7 + $0xb0] sm:$0xff] %v8436
  %8493 = vst [vmem:[%s7 + $0xb8] sm:$0xff] %v8437
  %8494 = vst [vmem:[%s7 + $0xc0] sm:$0xff] %v8438
  %8495 = vst [vmem:[%s7 + $0xc8] sm:$0xff] %v8439
  %8496 = vst [vmem:[%s7 + $0xd0] sm:$0xff] %v8440
  %8497 = vst [vmem:[%s7 + $0xd8] sm:$0xff] %v8441
  %8498 = vst [vmem:[%s7 + $0xe0] sm:$0xff] %v8442
  %8499 = vst [vmem:[%s7 + $0xe8] sm:$0xff] %v8443
  %8500 = vst [vmem:[%s7 + $0xf0] sm:$0xff] %v8444
  %8501 = vst [vmem:[%s7 + $0xf8] sm:$0xff] %v8445
  %8502 = vst [vmem:[%s7 + $0x100] sm:$0xff] %v8446
  %8503 = vst [vmem:[%s7 + $0x108] sm:$0xff] %v8447
  %8504 = vst [vmem:[%s7 + $0x110] sm:$0xff] %v8448
  %8505 = vst [vmem:[%s7 + $0x118] sm:$0xff] %v8449
  %8506 = vst [vmem:[%s7 + $0x120] sm:$0xff] %v8450
  %8507 = vst [vmem:[%s7 + $0x128] sm:$0xff] %v8451
  %8508 = vst [vmem:[%s7 + $0x130] sm:$0xff] %v8452
  %8509 = vst [vmem:[%s7 + $0x138] sm:$0xff] %v8453
  %8510 = vst [vmem:[%s7 + $0x140] sm:$0xff] %v8454
  %8511 = vst [vmem:[%s7 + $0x148] sm:$0xff] %v8455
  %8512 = vst [vmem:[%s7 + $0x150] sm:$0xff] %v8456
  %8513 = vst [vmem:[%s7 + $0x158] sm:$0xff] %v8457
  %8514 = vst [vmem:[%s7 + $0x160] sm:$0xff] %v8458
  %8515 = vst [vmem:[%s7 + $0x168] sm:$0xff] %v8459
  %8516 = vst [vmem:[%s7 + $0x170] sm:$0xff] %v8460
  %8517 = vst [vmem:[%s7 + $0x178] sm:$0xff] %v8461
  %8518 = vst [vmem:[%s7 + $0x180] sm:$0xff] %v8462
  %8519 = vst [vmem:[%s7 + $0x188] sm:$0xff] %v8463
  %8520 = vst [vmem:[%s7 + $0x190] sm:$0xff] %v8464
  %8521 = vst [vmem:[%s7 + $0x198] sm:$0xff] %v8465
  %8522 = vst [vmem:[%s7 + $0x1a0] sm:$0xff] %v8466
  %8523 = vst [vmem:[%s7 + $0x1a8] sm:$0xff] %v8467
  %8524 = vst [vmem:[%s7 + $0x1b0] sm:$0xff] %v8468
  %8525 = vst [vmem:[%s7 + $0x1b8] sm:$0xff] %v8469
  %v8526 = vld [vmem:[#allocation2 + $0x30] sm:$0xff]
  %v8527 = vld [vmem:[#allocation2 + $0x38] sm:$0xff]
  %v8528 = vld [vmem:[#allocation2 + $0x40] sm:$0xff]
  %v8529 = vld [vmem:[#allocation2 + $0x48] sm:$0xff]
  %v8530 = vld [vmem:[#allocation2 + $0x50] sm:$0xff]
  %v8531 = vld [vmem:[#allocation2 + $0x58] sm:$0xff]
  %v8532 = vld [vmem:[#allocation2 + $0x60] sm:$0xff]
  %v8533 = vld [vmem:[#allocation2 + $0x68] sm:$0xff]
  %v8534 = vld [vmem:[#allocation2 + $0x70] sm:$0xff]
  %v8535 = vld [vmem:[#allocation2 + $0x78] sm:$0xff]
  %v8536 = vld [vmem:[#allocation2 + $0x80] sm:$0xff]
  %v8537 = vld [vmem:[#allocation2 + $0x88] sm:$0xff]
  %v8538 = vld [vmem:[#allocation2 + $0x90] sm:$0xff]
  %v8539 = vld [vmem:[#allocation2 + $0x98] sm:$0xff]
  %v8540 = vld [vmem:[#allocation2 + $0xa0] sm:$0xff]
  %v8541 = vld [vmem:[#allocation2 + $0xa8] sm:$0xff]
  %v8542 = vld [vmem:[#allocation2 + $0xb0] sm:$0xff]
  %v8543 = vld [vmem:[#allocation2 + $0xb8] sm:$0xff]
  %v8544 = vld [vmem:[#allocation2 + $0xc0] sm:$0xff]
  %v8545 = vld [vmem:[#allocation2 + $0xc8] sm:$0xff]
  %v8546 = vld [vmem:[#allocation2 + $0xd0] sm:$0xff]
  %v8547 = vld [vmem:[#allocation2 + $0xd8] sm:$0xff]
  %v8548 = vld [vmem:[#allocation2 + $0xe0] sm:$0xff]
  %v8549 = vld [vmem:[#allocation2 + $0xe8] sm:$0xff]
  %v8550 = vld [vmem:[#allocation2 + $0xf0] sm:$0xff]
  %v8551 = vld [vmem:[#allocation2 + $0xf8] sm:$0xff]
  %v8552 = vld [vmem:[#allocation2 + $0x100] sm:$0xff]
  %v8553 = vld [vmem:[#allocation2 + $0x108] sm:$0xff]
  %v8554 = vld [vmem:[#allocation2 + $0x110] sm:$0x11]
  %s8555 = scalar_lea.vmem [#allocation3], 2048
  %v8556 = vld [vmem:[%s8555] sm:$0xff]
  %v8557 = vld [vmem:[%s8555 + $0x8] sm:$0xff]
  %v8558 = vld [vmem:[%s8555 + $0x10] sm:$0xff]
  %v8559 = vld [vmem:[%s8555 + $0x18] sm:$0xff]
  %v8560 = vld [vmem:[%s8555 + $0x20] sm:$0xff]
  %v8561 = vld [vmem:[%s8555 + $0x28] sm:$0xff]
  %v8562 = vld [vmem:[%s8555 + $0x30] sm:$0xff]
  %v8563 = vld [vmem:[%s8555 + $0x38] sm:$0xff]
  %v8564 = vld [vmem:[%s8555 + $0x40] sm:$0xff]
  %v8565 = vld [vmem:[%s8555 + $0x48] sm:$0xff]
  %v8566 = vld [vmem:[%s8555 + $0x50] sm:$0xff]
  %v8567 = vld [vmem:[%s8555 + $0x58] sm:$0xff]
  %v8568 = vld [vmem:[%s8555 + $0x60] sm:$0xff]
  %v8569 = vld [vmem:[%s8555 + $0x68] sm:$0xff]
  %v8570 = vld [vmem:[%s8555 + $0x70] sm:$0xff]
  %v8571 = vld [vmem:[%s8555 + $0x78] sm:$0xff]
  %v8572 = vld [vmem:[%s8555 + $0x80] sm:$0xff]
  %v8573 = vld [vmem:[%s8555 + $0x88] sm:$0xff]
  %v8574 = vld [vmem:[%s8555 + $0x90] sm:$0xff]
  %v8575 = vld [vmem:[%s8555 + $0x98] sm:$0xff]
  %v8576 = vld [vmem:[%s8555 + $0xa0] sm:$0xff]
  %v8577 = vld [vmem:[%s8555 + $0xa8] sm:$0xff]
  %v8578 = vld [vmem:[%s8555 + $0xb0] sm:$0xff]
  %v8579 = vld [vmem:[%s8555 + $0xb8] sm:$0xff]
  %v8580 = vld [vmem:[%s8555 + $0xc0] sm:$0xff]
  %v8581 = vld [vmem:[%s8555 + $0xc8] sm:$0xff]
  %v8582 = vld [vmem:[%s8555 + $0xd0] sm:$0xff]
  %v8583 = vld [vmem:[%s8555 + $0xd8] sm:$0xff]
  %v8584 = vld [vmem:[%s8555 + $0xe0] sm:$0xff]
  %v8585 = vld [vmem:[%s8555 + $0xe8] sm:$0xff]
  %v8586 = vld [vmem:[%s8555 + $0xf0] sm:$0xff]
  %v8587 = vld [vmem:[%s8555 + $0xf8] sm:$0xff]
  %v8617 = vunpack.c.l.b16 %v8526
  %v8618 = vunpack.c.h.b16 %v8526
  %v8619 = vunpack.c.l.b16 %v8527
  %v8620 = vunpack.c.h.b16 %v8527
  %v8621 = vunpack.c.l.b16 %v8528
  %v8622 = vunpack.c.h.b16 %v8528
  %v8623 = vunpack.c.l.b16 %v8529
  %v8624 = vunpack.c.h.b16 %v8529
  %v8625 = vunpack.c.l.b16 %v8530
  %v8626 = vunpack.c.h.b16 %v8530
  %v8627 = vunpack.c.l.b16 %v8531
  %v8628 = vunpack.c.h.b16 %v8531
  %v8629 = vunpack.c.l.b16 %v8532
  %v8630 = vunpack.c.h.b16 %v8532
  %v8631 = vunpack.c.l.b16 %v8533
  %v8632 = vunpack.c.h.b16 %v8533
  %v8633 = vunpack.c.l.b16 %v8534
  %v8634 = vunpack.c.h.b16 %v8534
  %v8635 = vunpack.c.l.b16 %v8535
  %v8636 = vunpack.c.h.b16 %v8535
  %v8637 = vunpack.c.l.b16 %v8536
  %v8638 = vunpack.c.h.b16 %v8536
  %v8639 = vunpack.c.l.b16 %v8537
  %v8640 = vunpack.c.h.b16 %v8537
  %v8641 = vunpack.c.l.b16 %v8538
  %v8642 = vunpack.c.h.b16 %v8538
  %v8643 = vunpack.c.l.b16 %v8539
  %v8644 = vunpack.c.h.b16 %v8539
  %v8645 = vunpack.c.l.b16 %v8540
  %v8646 = vunpack.c.h.b16 %v8540
  %v8647 = vunpack.c.l.b16 %v8541
  %v8648 = vunpack.c.h.b16 %v8541
  %v8649 = vunpack.c.l.b16 %v8542
  %v8650 = vunpack.c.h.b16 %v8542
  %v8651 = vunpack.c.l.b16 %v8543
  %v8652 = vunpack.c.h.b16 %v8543
  %v8653 = vunpack.c.l.b16 %v8544
  %v8654 = vunpack.c.h.b16 %v8544
  %v8655 = vunpack.c.l.b16 %v8545
  %v8656 = vunpack.c.h.b16 %v8545
  %v8657 = vunpack.c.l.b16 %v8546
  %v8658 = vunpack.c.h.b16 %v8546
  %v8659 = vunpack.c.l.b16 %v8547
  %v8660 = vunpack.c.h.b16 %v8547
  %v8661 = vunpack.c.l.b16 %v8548
  %v8662 = vunpack.c.h.b16 %v8548
  %v8663 = vunpack.c.l.b16 %v8549
  %v8664 = vunpack.c.h.b16 %v8549
  %v8665 = vunpack.c.l.b16 %v8550
  %v8666 = vunpack.c.h.b16 %v8550
  %v8667 = vunpack.c.l.b16 %v8551
  %v8668 = vunpack.c.h.b16 %v8551
  %v8669 = vunpack.c.l.b16 %v8552
  %v8670 = vunpack.c.h.b16 %v8552
  %v8671 = vunpack.c.l.b16 %v8553
  %v8672 = vunpack.c.h.b16 %v8553
  %v8673 = vunpack.c.l.b16 %v8554
  %v8674 = vunpack.c.h.b16 %v8554
  %v8675 = vpack.c.b16 %v8619, %v8617
  %v8676 = vpack.c.b16 %v8620, %v8618
  %v8677 = vpack.c.b16 %v8623, %v8621
  %v8678 = vpack.c.b16 %v8624, %v8622
  %v8679 = vpack.c.b16 %v8627, %v8625
  %v8680 = vpack.c.b16 %v8628, %v8626
  %v8681 = vpack.c.b16 %v8631, %v8629
  %v8682 = vpack.c.b16 %v8632, %v8630
  %v8683 = vpack.c.b16 %v8635, %v8633
  %v8684 = vpack.c.b16 %v8636, %v8634
  %v8685 = vpack.c.b16 %v8639, %v8637
  %v8686 = vpack.c.b16 %v8640, %v8638
  %v8687 = vpack.c.b16 %v8643, %v8641
  %v8688 = vpack.c.b16 %v8644, %v8642
  %v8689 = vpack.c.b16 %v8647, %v8645
  %v8690 = vpack.c.b16 %v8648, %v8646
  %v8691 = vpack.c.b16 %v8651, %v8649
  %v8692 = vpack.c.b16 %v8652, %v8650
  %v8693 = vpack.c.b16 %v8655, %v8653
  %v8694 = vpack.c.b16 %v8656, %v8654
  %v8695 = vpack.c.b16 %v8659, %v8657
  %v8696 = vpack.c.b16 %v8660, %v8658
  %v8697 = vpack.c.b16 %v8663, %v8661
  %v8698 = vpack.c.b16 %v8664, %v8662
  %v8699 = vpack.c.b16 %v8667, %v8665
  %v8700 = vpack.c.b16 %v8668, %v8666
  %v8701 = vpack.c.b16 %v8671, %v8669
  %v8702 = vpack.c.b16 %v8672, %v8670
  %v8703 = vpack.c.b16 %v8673, %v8673
  %v8704 = vpack.c.b16 %v8674, %v8674
  %v8706 = vshrl.u32 %v8675, 16
  %v8708 = vshll.u32 %v8675, 16
  %v8710 = vrot.slane %v8708, 1
  %v8711 = vor.u32 %v8706, %v8710
  %v8713 = vshll.u32 %v8677, 16
  %v8715 = vrot.slane %v8713, 1
  %v8716 = vsel %vm3468, %v8711, %v8715
  %v8718 = vshrl.u32 %v8676, 16
  %v8720 = vshll.u32 %v8676, 16
  %v8722 = vrot.slane %v8720, 1
  %v8723 = vor.u32 %v8718, %v8722
  %v8725 = vshll.u32 %v8678, 16
  %v8727 = vrot.slane %v8725, 1
  %v8728 = vsel %vm3468, %v8723, %v8727
  %v8729 = vshrl.u32 %v8677, 16
  %v8731 = vor.u32 %v8729, %v8715
  %v8733 = vshll.u32 %v8679, 16
  %v8735 = vrot.slane %v8733, 1
  %v8736 = vsel %vm3468, %v8731, %v8735
  %v8737 = vshrl.u32 %v8678, 16
  %v8739 = vor.u32 %v8737, %v8727
  %v8741 = vshll.u32 %v8680, 16
  %v8743 = vrot.slane %v8741, 1
  %v8744 = vsel %vm3468, %v8739, %v8743
  %v8745 = vshrl.u32 %v8679, 16
  %v8747 = vor.u32 %v8745, %v8735
  %v8749 = vshll.u32 %v8681, 16
  %v8751 = vrot.slane %v8749, 1
  %v8752 = vsel %vm3468, %v8747, %v8751
  %v8753 = vshrl.u32 %v8680, 16
  %v8755 = vor.u32 %v8753, %v8743
  %v8757 = vshll.u32 %v8682, 16
  %v8759 = vrot.slane %v8757, 1
  %v8760 = vsel %vm3468, %v8755, %v8759
  %v8761 = vshrl.u32 %v8681, 16
  %v8763 = vor.u32 %v8761, %v8751
  %v8765 = vshll.u32 %v8683, 16
  %v8767 = vrot.slane %v8765, 1
  %v8768 = vsel %vm3468, %v8763, %v8767
  %v8769 = vshrl.u32 %v8682, 16
  %v8771 = vor.u32 %v8769, %v8759
  %v8773 = vshll.u32 %v8684, 16
  %v8775 = vrot.slane %v8773, 1
  %v8776 = vsel %vm3468, %v8771, %v8775
  %v8777 = vshrl.u32 %v8683, 16
  %v8779 = vor.u32 %v8777, %v8767
  %v8781 = vshll.u32 %v8685, 16
  %v8783 = vrot.slane %v8781, 1
  %v8784 = vsel %vm3468, %v8779, %v8783
  %v8785 = vshrl.u32 %v8684, 16
  %v8787 = vor.u32 %v8785, %v8775
  %v8789 = vshll.u32 %v8686, 16
  %v8791 = vrot.slane %v8789, 1
  %v8792 = vsel %vm3468, %v8787, %v8791
  %v8793 = vshrl.u32 %v8685, 16
  %v8795 = vor.u32 %v8793, %v8783
  %v8797 = vshll.u32 %v8687, 16
  %v8799 = vrot.slane %v8797, 1
  %v8800 = vsel %vm3468, %v8795, %v8799
  %v8801 = vshrl.u32 %v8686, 16
  %v8803 = vor.u32 %v8801, %v8791
  %v8805 = vshll.u32 %v8688, 16
  %v8807 = vrot.slane %v8805, 1
  %v8808 = vsel %vm3468, %v8803, %v8807
  %v8809 = vshrl.u32 %v8687, 16
  %v8811 = vor.u32 %v8809, %v8799
  %v8813 = vshll.u32 %v8689, 16
  %v8815 = vrot.slane %v8813, 1
  %v8816 = vsel %vm3468, %v8811, %v8815
  %v8817 = vshrl.u32 %v8688, 16
  %v8819 = vor.u32 %v8817, %v8807
  %v8821 = vshll.u32 %v8690, 16
  %v8823 = vrot.slane %v8821, 1
  %v8824 = vsel %vm3468, %v8819, %v8823
  %v8825 = vshrl.u32 %v8689, 16
  %v8827 = vor.u32 %v8825, %v8815
  %v8829 = vshll.u32 %v8691, 16
  %v8831 = vrot.slane %v8829, 1
  %v8832 = vsel %vm3468, %v8827, %v8831
  %v8833 = vshrl.u32 %v8690, 16
  %v8835 = vor.u32 %v8833, %v8823
  %v8837 = vshll.u32 %v8692, 16
  %v8839 = vrot.slane %v8837, 1
  %v8840 = vsel %vm3468, %v8835, %v8839
  %v8841 = vshrl.u32 %v8691, 16
  %v8843 = vor.u32 %v8841, %v8831
  %v8845 = vshll.u32 %v8693, 16
  %v8847 = vrot.slane %v8845, 1
  %v8848 = vsel %vm3468, %v8843, %v8847
  %v8849 = vshrl.u32 %v8692, 16
  %v8851 = vor.u32 %v8849, %v8839
  %v8853 = vshll.u32 %v8694, 16
  %v8855 = vrot.slane %v8853, 1
  %v8856 = vsel %vm3468, %v8851, %v8855
  %v8857 = vshrl.u32 %v8693, 16
  %v8859 = vor.u32 %v8857, %v8847
  %v8861 = vshll.u32 %v8695, 16
  %v8863 = vrot.slane %v8861, 1
  %v8864 = vsel %vm3468, %v8859, %v8863
  %v8865 = vshrl.u32 %v8694, 16
  %v8867 = vor.u32 %v8865, %v8855
  %v8869 = vshll.u32 %v8696, 16
  %v8871 = vrot.slane %v8869, 1
  %v8872 = vsel %vm3468, %v8867, %v8871
  %v8873 = vshrl.u32 %v8695, 16
  %v8875 = vor.u32 %v8873, %v8863
  %v8877 = vshll.u32 %v8697, 16
  %v8879 = vrot.slane %v8877, 1
  %v8880 = vsel %vm3468, %v8875, %v8879
  %v8881 = vshrl.u32 %v8696, 16
  %v8883 = vor.u32 %v8881, %v8871
  %v8885 = vshll.u32 %v8698, 16
  %v8887 = vrot.slane %v8885, 1
  %v8888 = vsel %vm3468, %v8883, %v8887
  %v8889 = vshrl.u32 %v8697, 16
  %v8891 = vor.u32 %v8889, %v8879
  %v8893 = vshll.u32 %v8699, 16
  %v8895 = vrot.slane %v8893, 1
  %v8896 = vsel %vm3468, %v8891, %v8895
  %v8897 = vshrl.u32 %v8698, 16
  %v8899 = vor.u32 %v8897, %v8887
  %v8901 = vshll.u32 %v8700, 16
  %v8903 = vrot.slane %v8901, 1
  %v8904 = vsel %vm3468, %v8899, %v8903
  %v8905 = vshrl.u32 %v8699, 16
  %v8907 = vor.u32 %v8905, %v8895
  %v8909 = vshll.u32 %v8701, 16
  %v8911 = vrot.slane %v8909, 1
  %v8912 = vsel %vm3468, %v8907, %v8911
  %v8913 = vshrl.u32 %v8700, 16
  %v8915 = vor.u32 %v8913, %v8903
  %v8917 = vshll.u32 %v8702, 16
  %v8919 = vrot.slane %v8917, 1
  %v8920 = vsel %vm3468, %v8915, %v8919
  %v8921 = vshrl.u32 %v8701, 16
  %v8923 = vor.u32 %v8921, %v8911
  %v8925 = vshll.u32 %v8703, 16
  %v8927 = vrot.slane %v8925, 1
  %v8928 = vsel %vm3468, %v8923, %v8927
  %v8929 = vshrl.u32 %v8702, 16
  %v8931 = vor.u32 %v8929, %v8919
  %v8933 = vshll.u32 %v8704, 16
  %v8935 = vrot.slane %v8933, 1
  %v8936 = vsel %vm3468, %v8931, %v8935
  %v8997 = vunpack.c.l.b16 %v8556
  %v8998 = vunpack.c.h.b16 %v8556
  %v8999 = vunpack.c.l.b16 %v8557
  %v9000 = vunpack.c.h.b16 %v8557
  %v9001 = vunpack.c.l.b16 %v8558
  %v9002 = vunpack.c.h.b16 %v8558
  %v9003 = vunpack.c.l.b16 %v8559
  %v9004 = vunpack.c.h.b16 %v8559
  %v9005 = vunpack.c.l.b16 %v8560
  %v9006 = vunpack.c.h.b16 %v8560
  %v9007 = vunpack.c.l.b16 %v8561
  %v9008 = vunpack.c.h.b16 %v8561
  %v9009 = vunpack.c.l.b16 %v8562
  %v9010 = vunpack.c.h.b16 %v8562
  %v9011 = vunpack.c.l.b16 %v8563
  %v9012 = vunpack.c.h.b16 %v8563
  %v9013 = vunpack.c.l.b16 %v8564
  %v9014 = vunpack.c.h.b16 %v8564
  %v9015 = vunpack.c.l.b16 %v8565
  %v9016 = vunpack.c.h.b16 %v8565
  %v9017 = vunpack.c.l.b16 %v8566
  %v9018 = vunpack.c.h.b16 %v8566
  %v9019 = vunpack.c.l.b16 %v8567
  %v9020 = vunpack.c.h.b16 %v8567
  %v9021 = vunpack.c.l.b16 %v8568
  %v9022 = vunpack.c.h.b16 %v8568
  %v9023 = vunpack.c.l.b16 %v8569
  %v9024 = vunpack.c.h.b16 %v8569
  %v9025 = vunpack.c.l.b16 %v8570
  %v9026 = vunpack.c.h.b16 %v8570
  %v9027 = vunpack.c.l.b16 %v8571
  %v9028 = vunpack.c.h.b16 %v8571
  %v9029 = vunpack.c.l.b16 %v8572
  %v9030 = vunpack.c.h.b16 %v8572
  %v9031 = vunpack.c.l.b16 %v8573
  %v9032 = vunpack.c.h.b16 %v8573
  %v9033 = vunpack.c.l.b16 %v8574
  %v9034 = vunpack.c.h.b16 %v8574
  %v9035 = vunpack.c.l.b16 %v8575
  %v9036 = vunpack.c.h.b16 %v8575
  %v9037 = vunpack.c.l.b16 %v8576
  %v9038 = vunpack.c.h.b16 %v8576
  %v9039 = vunpack.c.l.b16 %v8577
  %v9040 = vunpack.c.h.b16 %v8577
  %v9041 = vunpack.c.l.b16 %v8578
  %v9042 = vunpack.c.h.b16 %v8578
  %v9043 = vunpack.c.l.b16 %v8579
  %v9044 = vunpack.c.h.b16 %v8579
  %v9045 = vunpack.c.l.b16 %v8580
  %v9046 = vunpack.c.h.b16 %v8580
  %v9047 = vunpack.c.l.b16 %v8581
  %v9048 = vunpack.c.h.b16 %v8581
  %v9049 = vunpack.c.l.b16 %v8582
  %v9050 = vunpack.c.h.b16 %v8582
  %v9051 = vunpack.c.l.b16 %v8583
  %v9052 = vunpack.c.h.b16 %v8583
  %v9053 = vunpack.c.l.b16 %v8584
  %v9054 = vunpack.c.h.b16 %v8584
  %v9055 = vunpack.c.l.b16 %v8585
  %v9056 = vunpack.c.h.b16 %v8585
  %v9057 = vunpack.c.l.b16 %v8586
  %v9058 = vunpack.c.h.b16 %v8586
  %v9059 = vunpack.c.l.b16 %v8587
  %v9060 = vunpack.c.h.b16 %v8587
  %v9061 = vpack.c.b16 %v8999, %v8997
  %v9062 = vpack.c.b16 %v9000, %v8998
  %v9063 = vpack.c.b16 %v9003, %v9001
  %v9064 = vpack.c.b16 %v9004, %v9002
  %v9065 = vpack.c.b16 %v9007, %v9005
  %v9066 = vpack.c.b16 %v9008, %v9006
  %v9067 = vpack.c.b16 %v9011, %v9009
  %v9068 = vpack.c.b16 %v9012, %v9010
  %v9069 = vpack.c.b16 %v9015, %v9013
  %v9070 = vpack.c.b16 %v9016, %v9014
  %v9071 = vpack.c.b16 %v9019, %v9017
  %v9072 = vpack.c.b16 %v9020, %v9018
  %v9073 = vpack.c.b16 %v9023, %v9021
  %v9074 = vpack.c.b16 %v9024, %v9022
  %v9075 = vpack.c.b16 %v9027, %v9025
  %v9076 = vpack.c.b16 %v9028, %v9026
  %v9077 = vpack.c.b16 %v9031, %v9029
  %v9078 = vpack.c.b16 %v9032, %v9030
  %v9079 = vpack.c.b16 %v9035, %v9033
  %v9080 = vpack.c.b16 %v9036, %v9034
  %v9081 = vpack.c.b16 %v9039, %v9037
  %v9082 = vpack.c.b16 %v9040, %v9038
  %v9083 = vpack.c.b16 %v9043, %v9041
  %v9084 = vpack.c.b16 %v9044, %v9042
  %v9085 = vpack.c.b16 %v9047, %v9045
  %v9086 = vpack.c.b16 %v9048, %v9046
  %v9087 = vpack.c.b16 %v9051, %v9049
  %v9088 = vpack.c.b16 %v9052, %v9050
  %v9089 = vpack.c.b16 %v9055, %v9053
  %v9090 = vpack.c.b16 %v9056, %v9054
  %v9091 = vpack.c.b16 %v9059, %v9057
  %v9092 = vpack.c.b16 %v9060, %v9058
  %9125 = vmatprep.subr.bf16.mxu0 %v9076
  %9126 = vmatpush1.bf16.msra.mxu0 %v9075
  %9127 = vmatprep.subr.bf16.mxu0 %v9074
  %9128 = vmatpush1.bf16.msra.mxu0 %v9073
  %9129 = vmatprep.subr.bf16.mxu0 %v9072
  %9130 = vmatpush1.bf16.msra.mxu0 %v9071
  %9131 = vmatprep.subr.bf16.mxu0 %v9070
  %9132 = vmatpush1.bf16.msra.mxu0 %v9069
  %9133 = vmatprep.subr.bf16.mxu0 %v9068
  %9134 = vmatpush1.bf16.msra.mxu0 %v9067
  %9135 = vmatprep.subr.bf16.mxu0 %v9066
  %9136 = vmatpush1.bf16.msra.mxu0 %v9065
  %9137 = vmatprep.subr.bf16.mxu0 %v9064
  %9138 = vmatpush1.bf16.msra.mxu0 %v9063
  %9139 = vmatprep.subr.bf16.mxu0 %v9062
  %9140 = vmatpush1.bf16.msra.mxu0 %v9061
  %9141 = vmatprep.subr.bf16.mxu0 %v9092
  %9142 = vmatpush2.bf16.msra.mxu0 %v9091
  %9143 = vmatprep.subr.bf16.mxu0 %v9090
  %9144 = vmatpush2.bf16.msra.mxu0 %v9089
  %9145 = vmatprep.subr.bf16.mxu0 %v9088
  %9146 = vmatpush2.bf16.msra.mxu0 %v9087
  %9147 = vmatprep.subr.bf16.mxu0 %v9086
  %9148 = vmatpush2.bf16.msra.mxu0 %v9085
  %9149 = vmatprep.subr.bf16.mxu0 %v9084
  %9150 = vmatpush2.bf16.msra.mxu0 %v9083
  %9151 = vmatprep.subr.bf16.mxu0 %v9082
  %9152 = vmatpush2.bf16.msra.mxu0 %v9081
  %9153 = vmatprep.subr.bf16.mxu0 %v9080
  %9154 = vmatpush2.bf16.msra.mxu0 %v9079
  %9155 = vmatprep.subr.bf16.mxu0 %v9078
  %9156 = vmatpush2.bf16.msra.mxu0 %v9077
  %9157 = vmatprep.mubr.bf16.mxu0 %v8728
  %9158 = vmatmul.mubr.bf16.gmra.mxu0 %v8716
  %v9159 = vpop.f32.mrf.mxu0
  %v9160 = vadd.f32 0.0, %v9159
  %v9161 = vpop.f32.mrf.mxu0
  %v9162 = vadd.f32 0.0, %v9161
  %v9163 = vpop.f32.mrf.mxu0
  %v9164 = vadd.f32 0.0, %v9163
  %v9165 = vpop.f32.mrf.mxu0
  %v9166 = vadd.f32 0.0, %v9165
  %9167 = vmatprep.mubr.bf16.mxu0 %v8744
  %9168 = vmatmul.mubr.bf16.gmra.mxu0 %v8736
  %v9169 = vpop.f32.mrf.mxu0
  %v9170 = vadd.f32 0.0, %v9169
  %v9171 = vpop.f32.mrf.mxu0
  %v9172 = vadd.f32 0.0, %v9171
  %v9173 = vpop.f32.mrf.mxu0
  %v9174 = vadd.f32 0.0, %v9173
  %v9175 = vpop.f32.mrf.mxu0
  %v9176 = vadd.f32 0.0, %v9175
  %9177 = vmatprep.mubr.bf16.mxu0 %v8760
  %9178 = vmatmul.mubr.bf16.gmra.mxu0 %v8752
  %v9179 = vpop.f32.mrf.mxu0
  %v9180 = vadd.f32 0.0, %v9179
  %v9181 = vpop.f32.mrf.mxu0
  %v9182 = vadd.f32 0.0, %v9181
  %v9183 = vpop.f32.mrf.mxu0
  %v9184 = vadd.f32 0.0, %v9183
  %v9185 = vpop.f32.mrf.mxu0
  %v9186 = vadd.f32 0.0, %v9185
  %9187 = vmatprep.mubr.bf16.mxu0 %v8776
  %9188 = vmatmul.mubr.bf16.gmra.mxu0 %v8768
  %v9189 = vpop.f32.mrf.mxu0
  %v9190 = vadd.f32 0.0, %v9189
  %v9191 = vpop.f32.mrf.mxu0
  %v9192 = vadd.f32 0.0, %v9191
  %v9193 = vpop.f32.mrf.mxu0
  %v9194 = vadd.f32 0.0, %v9193
  %v9195 = vpop.f32.mrf.mxu0
  %v9196 = vadd.f32 0.0, %v9195
  %9197 = vmatprep.mubr.bf16.mxu0 %v8792
  %9198 = vmatmul.mubr.bf16.gmra.mxu0 %v8784
  %v9199 = vpop.f32.mrf.mxu0
  %v9200 = vadd.f32 0.0, %v9199
  %v9201 = vpop.f32.mrf.mxu0
  %v9202 = vadd.f32 0.0, %v9201
  %v9203 = vpop.f32.mrf.mxu0
  %v9204 = vadd.f32 0.0, %v9203
  %v9205 = vpop.f32.mrf.mxu0
  %v9206 = vadd.f32 0.0, %v9205
  %9207 = vmatprep.mubr.bf16.mxu0 %v8808
  %9208 = vmatmul.mubr.bf16.gmra.mxu0 %v8800
  %v9209 = vpop.f32.mrf.mxu0
  %v9210 = vadd.f32 0.0, %v9209
  %v9211 = vpop.f32.mrf.mxu0
  %v9212 = vadd.f32 0.0, %v9211
  %v9213 = vpop.f32.mrf.mxu0
  %v9214 = vadd.f32 0.0, %v9213
  %v9215 = vpop.f32.mrf.mxu0
  %v9216 = vadd.f32 0.0, %v9215
  %9217 = vmatprep.mubr.bf16.mxu0 %v8824
  %9218 = vmatmul.mubr.bf16.gmra.mxu0 %v8816
  %v9219 = vpop.f32.mrf.mxu0
  %v9220 = vadd.f32 0.0, %v9219
  %v9221 = vpop.f32.mrf.mxu0
  %v9222 = vadd.f32 0.0, %v9221
  %v9223 = vpop.f32.mrf.mxu0
  %v9224 = vadd.f32 0.0, %v9223
  %v9225 = vpop.f32.mrf.mxu0
  %v9226 = vadd.f32 0.0, %v9225
  %9227 = vmatprep.mubr.bf16.mxu0 %v8840
  %9228 = vmatmul.mubr.bf16.gmra.mxu0 %v8832
  %v9229 = vpop.f32.mrf.mxu0
  %v9230 = vadd.f32 0.0, %v9229
  %v9231 = vpop.f32.mrf.mxu0
  %v9232 = vadd.f32 0.0, %v9231
  %v9233 = vpop.f32.mrf.mxu0
  %v9234 = vadd.f32 0.0, %v9233
  %v9235 = vpop.f32.mrf.mxu0
  %v9236 = vadd.f32 0.0, %v9235
  %9237 = vmatprep.mubr.bf16.mxu0 %v8856
  %9238 = vmatmul.mubr.bf16.gmra.mxu0 %v8848
  %v9239 = vpop.f32.mrf.mxu0
  %v9240 = vadd.f32 0.0, %v9239
  %v9241 = vpop.f32.mrf.mxu0
  %v9242 = vadd.f32 0.0, %v9241
  %v9243 = vpop.f32.mrf.mxu0
  %v9244 = vadd.f32 0.0, %v9243
  %v9245 = vpop.f32.mrf.mxu0
  %v9246 = vadd.f32 0.0, %v9245
  %9247 = vmatprep.mubr.bf16.mxu0 %v8872
  %9248 = vmatmul.mubr.bf16.gmra.mxu0 %v8864
  %v9249 = vpop.f32.mrf.mxu0
  %v9250 = vadd.f32 0.0, %v9249
  %v9251 = vpop.f32.mrf.mxu0
  %v9252 = vadd.f32 0.0, %v9251
  %v9253 = vpop.f32.mrf.mxu0
  %v9254 = vadd.f32 0.0, %v9253
  %v9255 = vpop.f32.mrf.mxu0
  %v9256 = vadd.f32 0.0, %v9255
  %9257 = vmatprep.mubr.bf16.mxu0 %v8888
  %9258 = vmatmul.mubr.bf16.gmra.mxu0 %v8880
  %v9259 = vpop.f32.mrf.mxu0
  %v9260 = vadd.f32 0.0, %v9259
  %v9261 = vpop.f32.mrf.mxu0
  %v9262 = vadd.f32 0.0, %v9261
  %v9263 = vpop.f32.mrf.mxu0
  %v9264 = vadd.f32 0.0, %v9263
  %v9265 = vpop.f32.mrf.mxu0
  %v9266 = vadd.f32 0.0, %v9265
  %9267 = vmatprep.mubr.bf16.mxu0 %v8904
  %9268 = vmatmul.mubr.bf16.gmra.mxu0 %v8896
  %v9269 = vpop.f32.mrf.mxu0
  %v9270 = vadd.f32 0.0, %v9269
  %v9271 = vpop.f32.mrf.mxu0
  %v9272 = vadd.f32 0.0, %v9271
  %v9273 = vpop.f32.mrf.mxu0
  %v9274 = vadd.f32 0.0, %v9273
  %v9275 = vpop.f32.mrf.mxu0
  %v9276 = vadd.f32 0.0, %v9275
  %9277 = vmatprep.mubr.bf16.mxu0 %v8920
  %9278 = vmatmul.mubr.bf16.gmra.mxu0 %v8912
  %v9279 = vpop.f32.mrf.mxu0
  %v9280 = vadd.f32 0.0, %v9279
  %v9281 = vpop.f32.mrf.mxu0
  %v9282 = vadd.f32 0.0, %v9281
  %v9283 = vpop.f32.mrf.mxu0
  %v9284 = vadd.f32 0.0, %v9283
  %v9285 = vpop.f32.mrf.mxu0
  %v9286 = vadd.f32 0.0, %v9285
  %9287 = vmatprep.mubr.bf16.mxu0 %v8936
  %9288 = vmatmul.mubr.bf16.gmra.mxu0 %v8928
  %v9289 = vpop.f32.mrf.mxu0
  %v9290 = vadd.f32 0.0, %v9289
  %v9291 = vpop.f32.mrf.mxu0
  %v9292 = vadd.f32 0.0, %v9291
  %v9293 = vpop.f32.mrf.mxu0
  %v9294 = vadd.f32 0.0, %v9293
  %v9295 = vpop.f32.mrf.mxu0
  %v9296 = vadd.f32 0.0, %v9295
  %9297 = vdwg.mxu0
  %v9298 = vld [vmem:[%s7] sm:$0xff]
  %v9299 = vld [vmem:[%s7 + $0x8] sm:$0xff]
  %v9300 = vld [vmem:[%s7 + $0x10] sm:$0xff]
  %v9301 = vld [vmem:[%s7 + $0x18] sm:$0xff]
  %v9302 = vld [vmem:[%s7 + $0x20] sm:$0xff]
  %v9303 = vld [vmem:[%s7 + $0x28] sm:$0xff]
  %v9304 = vld [vmem:[%s7 + $0x30] sm:$0xff]
  %v9305 = vld [vmem:[%s7 + $0x38] sm:$0xff]
  %v9306 = vld [vmem:[%s7 + $0x40] sm:$0xff]
  %v9307 = vld [vmem:[%s7 + $0x48] sm:$0xff]
  %v9308 = vld [vmem:[%s7 + $0x50] sm:$0xff]
  %v9309 = vld [vmem:[%s7 + $0x58] sm:$0xff]
  %v9310 = vld [vmem:[%s7 + $0x60] sm:$0xff]
  %v9311 = vld [vmem:[%s7 + $0x68] sm:$0xff]
  %v9312 = vld [vmem:[%s7 + $0x70] sm:$0xff]
  %v9313 = vld [vmem:[%s7 + $0x78] sm:$0xff]
  %v9314 = vld [vmem:[%s7 + $0x80] sm:$0xff]
  %v9315 = vld [vmem:[%s7 + $0x88] sm:$0xff]
  %v9316 = vld [vmem:[%s7 + $0x90] sm:$0xff]
  %v9317 = vld [vmem:[%s7 + $0x98] sm:$0xff]
  %v9318 = vld [vmem:[%s7 + $0xa0] sm:$0xff]
  %v9319 = vld [vmem:[%s7 + $0xa8] sm:$0xff]
  %v9320 = vld [vmem:[%s7 + $0xb0] sm:$0xff]
  %v9321 = vld [vmem:[%s7 + $0xb8] sm:$0xff]
  %v9322 = vld [vmem:[%s7 + $0xc0] sm:$0xff]
  %v9323 = vld [vmem:[%s7 + $0xc8] sm:$0xff]
  %v9324 = vld [vmem:[%s7 + $0xd0] sm:$0xff]
  %v9325 = vld [vmem:[%s7 + $0xd8] sm:$0xff]
  %v9326 = vld [vmem:[%s7 + $0xe0] sm:$0xff]
  %v9327 = vld [vmem:[%s7 + $0xe8] sm:$0xff]
  %v9328 = vld [vmem:[%s7 + $0xf0] sm:$0xff]
  %v9329 = vld [vmem:[%s7 + $0xf8] sm:$0xff]
  %v9330 = vld [vmem:[%s7 + $0x100] sm:$0xff]
  %v9331 = vld [vmem:[%s7 + $0x108] sm:$0xff]
  %v9332 = vld [vmem:[%s7 + $0x110] sm:$0xff]
  %v9333 = vld [vmem:[%s7 + $0x118] sm:$0xff]
  %v9334 = vld [vmem:[%s7 + $0x120] sm:$0xff]
  %v9335 = vld [vmem:[%s7 + $0x128] sm:$0xff]
  %v9336 = vld [vmem:[%s7 + $0x130] sm:$0xff]
  %v9337 = vld [vmem:[%s7 + $0x138] sm:$0xff]
  %v9338 = vld [vmem:[%s7 + $0x140] sm:$0xff]
  %v9339 = vld [vmem:[%s7 + $0x148] sm:$0xff]
  %v9340 = vld [vmem:[%s7 + $0x150] sm:$0xff]
  %v9341 = vld [vmem:[%s7 + $0x158] sm:$0xff]
  %v9342 = vld [vmem:[%s7 + $0x160] sm:$0xff]
  %v9343 = vld [vmem:[%s7 + $0x168] sm:$0xff]
  %v9344 = vld [vmem:[%s7 + $0x170] sm:$0xff]
  %v9345 = vld [vmem:[%s7 + $0x178] sm:$0xff]
  %v9346 = vld [vmem:[%s7 + $0x180] sm:$0xff]
  %v9347 = vld [vmem:[%s7 + $0x188] sm:$0xff]
  %v9348 = vld [vmem:[%s7 + $0x190] sm:$0xff]
  %v9349 = vld [vmem:[%s7 + $0x198] sm:$0xff]
  %v9350 = vld [vmem:[%s7 + $0x1a0] sm:$0xff]
  %v9351 = vld [vmem:[%s7 + $0x1a8] sm:$0xff]
  %v9352 = vld [vmem:[%s7 + $0x1b0] sm:$0xff]
  %v9353 = vld [vmem:[%s7 + $0x1b8] sm:$0xff]
  %v9354 = vadd.f32 %v9298, %v9160
  %v9355 = vadd.f32 %v9299, %v9162
  %v9356 = vadd.f32 %v9300, %v9164
  %v9357 = vadd.f32 %v9301, %v9166
  %v9358 = vadd.f32 %v9302, %v9170
  %v9359 = vadd.f32 %v9303, %v9172
  %v9360 = vadd.f32 %v9304, %v9174
  %v9361 = vadd.f32 %v9305, %v9176
  %v9362 = vadd.f32 %v9306, %v9180
  %v9363 = vadd.f32 %v9307, %v9182
  %v9364 = vadd.f32 %v9308, %v9184
  %v9365 = vadd.f32 %v9309, %v9186
  %v9366 = vadd.f32 %v9310, %v9190
  %v9367 = vadd.f32 %v9311, %v9192
  %v9368 = vadd.f32 %v9312, %v9194
  %v9369 = vadd.f32 %v9313, %v9196
  %v9370 = vadd.f32 %v9314, %v9200
  %v9371 = vadd.f32 %v9315, %v9202
  %v9372 = vadd.f32 %v9316, %v9204
  %v9373 = vadd.f32 %v9317, %v9206
  %v9374 = vadd.f32 %v9318, %v9210
  %v9375 = vadd.f32 %v9319, %v9212
  %v9376 = vadd.f32 %v9320, %v9214
  %v9377 = vadd.f32 %v9321, %v9216
  %v9378 = vadd.f32 %v9322, %v9220
  %v9379 = vadd.f32 %v9323, %v9222
  %v9380 = vadd.f32 %v9324, %v9224
  %v9381 = vadd.f32 %v9325, %v9226
  %v9382 = vadd.f32 %v9326, %v9230
  %v9383 = vadd.f32 %v9327, %v9232
  %v9384 = vadd.f32 %v9328, %v9234
  %v9385 = vadd.f32 %v9329, %v9236
  %v9386 = vadd.f32 %v9330, %v9240
  %v9387 = vadd.f32 %v9331, %v9242
  %v9388 = vadd.f32 %v9332, %v9244
  %v9389 = vadd.f32 %v9333, %v9246
  %v9390 = vadd.f32 %v9334, %v9250
  %v9391 = vadd.f32 %v9335, %v9252
  %v9392 = vadd.f32 %v9336, %v9254
  %v9393 = vadd.f32 %v9337, %v9256
  %v9394 = vadd.f32 %v9338, %v9260
  %v9395 = vadd.f32 %v9339, %v9262
  %v9396 = vadd.f32 %v9340, %v9264
  %v9397 = vadd.f32 %v9341, %v9266
  %v9398 = vadd.f32 %v9342, %v9270
  %v9399 = vadd.f32 %v9343, %v9272
  %v9400 = vadd.f32 %v9344, %v9274
  %v9401 = vadd.f32 %v9345, %v9276
  %v9402 = vadd.f32 %v9346, %v9280
  %v9403 = vadd.f32 %v9347, %v9282
  %v9404 = vadd.f32 %v9348, %v9284
  %v9405 = vadd.f32 %v9349, %v9286
  %v9406 = vadd.f32 %v9350, %v9290
  %v9407 = vadd.f32 %v9351, %v9292
  %v9408 = vadd.f32 %v9352, %v9294
  %v9409 = vadd.f32 %v9353, %v9296
  %9410 = vst [vmem:[%s7] sm:$0xff] %v9354
  %9411 = vst [vmem:[%s7 + $0x8] sm:$0xff] %v9355
  %9412 = vst [vmem:[%s7 + $0x10] sm:$0xff] %v9356
  %9413 = vst [vmem:[%s7 + $0x18] sm:$0xff] %v9357
  %9414 = vst [vmem:[%s7 + $0x20] sm:$0xff] %v9358
  %9415 = vst [vmem:[%s7 + $0x28] sm:$0xff] %v9359
  %9416 = vst [vmem:[%s7 + $0x30] sm:$0xff] %v9360
  %9417 = vst [vmem:[%s7 + $0x38] sm:$0xff] %v9361
  %9418 = vst [vmem:[%s7 + $0x40] sm:$0xff] %v9362
  %9419 = vst [vmem:[%s7 + $0x48] sm:$0xff] %v9363
  %9420 = vst [vmem:[%s7 + $0x50] sm:$0xff] %v9364
  %9421 = vst [vmem:[%s7 + $0x58] sm:$0xff] %v9365
  %9422 = vst [vmem:[%s7 + $0x60] sm:$0xff] %v9366
  %9423 = vst [vmem:[%s7 + $0x68] sm:$0xff] %v9367
  %9424 = vst [vmem:[%s7 + $0x70] sm:$0xff] %v9368
  %9425 = vst [vmem:[%s7 + $0x78] sm:$0xff] %v9369
  %9426 = vst [vmem:[%s7 + $0x80] sm:$0xff] %v9370
  %9427 = vst [vmem:[%s7 + $0x88] sm:$0xff] %v9371
  %9428 = vst [vmem:[%s7 + $0x90] sm:$0xff] %v9372
  %9429 = vst [vmem:[%s7 + $0x98] sm:$0xff] %v9373
  %9430 = vst [vmem:[%s7 + $0xa0] sm:$0xff] %v9374
  %9431 = vst [vmem:[%s7 + $0xa8] sm:$0xff] %v9375
  %9432 = vst [vmem:[%s7 + $0xb0] sm:$0xff] %v9376
  %9433 = vst [vmem:[%s7 + $0xb8] sm:$0xff] %v9377
  %9434 = vst [vmem:[%s7 + $0xc0] sm:$0xff] %v9378
  %9435 = vst [vmem:[%s7 + $0xc8] sm:$0xff] %v9379
  %9436 = vst [vmem:[%s7 + $0xd0] sm:$0xff] %v9380
  %9437 = vst [vmem:[%s7 + $0xd8] sm:$0xff] %v9381
  %9438 = vst [vmem:[%s7 + $0xe0] sm:$0xff] %v9382
  %9439 = vst [vmem:[%s7 + $0xe8] sm:$0xff] %v9383
  %9440 = vst [vmem:[%s7 + $0xf0] sm:$0xff] %v9384
  %9441 = vst [vmem:[%s7 + $0xf8] sm:$0xff] %v9385
  %9442 = vst [vmem:[%s7 + $0x100] sm:$0xff] %v9386
  %9443 = vst [vmem:[%s7 + $0x108] sm:$0xff] %v9387
  %9444 = vst [vmem:[%s7 + $0x110] sm:$0xff] %v9388
  %9445 = vst [vmem:[%s7 + $0x118] sm:$0xff] %v9389
  %9446 = vst [vmem:[%s7 + $0x120] sm:$0xff] %v9390
  %9447 = vst [vmem:[%s7 + $0x128] sm:$0xff] %v9391
  %9448 = vst [vmem:[%s7 + $0x130] sm:$0xff] %v9392
  %9449 = vst [vmem:[%s7 + $0x138] sm:$0xff] %v9393
  %9450 = vst [vmem:[%s7 + $0x140] sm:$0xff] %v9394
  %9451 = vst [vmem:[%s7 + $0x148] sm:$0xff] %v9395
  %9452 = vst [vmem:[%s7 + $0x150] sm:$0xff] %v9396
  %9453 = vst [vmem:[%s7 + $0x158] sm:$0xff] %v9397
  %9454 = vst [vmem:[%s7 + $0x160] sm:$0xff] %v9398
  %9455 = vst [vmem:[%s7 + $0x168] sm:$0xff] %v9399
  %9456 = vst [vmem:[%s7 + $0x170] sm:$0xff] %v9400
  %9457 = vst [vmem:[%s7 + $0x178] sm:$0xff] %v9401
  %9458 = vst [vmem:[%s7 + $0x180] sm:$0xff] %v9402
  %9459 = vst [vmem:[%s7 + $0x188] sm:$0xff] %v9403
  %9460 = vst [vmem:[%s7 + $0x190] sm:$0xff] %v9404
  %9461 = vst [vmem:[%s7 + $0x198] sm:$0xff] %v9405
  %9462 = vst [vmem:[%s7 + $0x1a0] sm:$0xff] %v9406
  %9463 = vst [vmem:[%s7 + $0x1a8] sm:$0xff] %v9407
  %9464 = vst [vmem:[%s7 + $0x1b0] sm:$0xff] %v9408
  %9465 = vst [vmem:[%s7 + $0x1b8] sm:$0xff] %v9409
  %v9466 = vld [vmem:[%s7] sm:$0xff]
  %v9467 = vld [vmem:[%s7 + $0x8] sm:$0xff]
  %v9468 = vld [vmem:[%s7 + $0x10] sm:$0xff]
  %v9469 = vld [vmem:[%s7 + $0x18] sm:$0xff]
  %v9470 = vld [vmem:[%s7 + $0x20] sm:$0xff]
  %v9471 = vld [vmem:[%s7 + $0x28] sm:$0xff]
  %v9472 = vld [vmem:[%s7 + $0x30] sm:$0xff]
  %v9473 = vld [vmem:[%s7 + $0x38] sm:$0xff]
  %v9474 = vsel %vm1174, %v9466, 0.0
  %v9475 = vsel %vm1174, %v9467, 0.0
  %v9476 = vsel %vm1175, %v9468, 0.0
  %v9477 = vsel %vm1175, %v9469, 0.0
  %v9478 = vsel %vm1176, %v9470, 0.0
  %v9479 = vsel %vm1176, %v9471, 0.0
  %v9480 = vsel %vm1177, %v9472, 0.0
  %v9481 = vsel %vm1177, %v9473, 0.0
  %v9482 = vadd.f32 %v9474, %v9476
  %v9483 = vadd.f32 %v9482, %v9478
  %v9484 = vadd.f32 %v9483, %v9480
  %v9485 = vrot.slane %v9484, 4
  %v9486 = vadd.f32 %v9484, %v9485
  %v9487 = vrot.slane %v9486, 2
  %v9488 = vadd.f32 %v9486, %v9487
  %v9489 = vrot.slane %v9488, 1
  %v9490 = vadd.f32 %v9488, %v9489
  %v9491 = vadd.f32 %v9475, %v9477
  %v9492 = vadd.f32 %v9491, %v9479
  %v9493 = vadd.f32 %v9492, %v9481
  %v9494 = vrot.slane %v9493, 4
  %v9495 = vadd.f32 %v9493, %v9494
  %v9496 = vrot.slane %v9495, 2
  %v9497 = vadd.f32 %v9495, %v9496
  %v9498 = vrot.slane %v9497, 1
  %v9499 = vadd.f32 %v9497, %v9498
  %v9500 = vadd.f32 %v9490, 0.0
  %v9501 = vadd.f32 %v9499, 0.0
  %v9502 = vmul.f32 %v9474, %v9474
  %v9503 = vmul.f32 %v9475, %v9475
  %v9504 = vmul.f32 %v9476, %v9476
  %v9505 = vmul.f32 %v9477, %v9477
  %v9506 = vmul.f32 %v9478, %v9478
  %v9507 = vmul.f32 %v9479, %v9479
  %v9508 = vmul.f32 %v9480, %v9480
  %v9509 = vmul.f32 %v9481, %v9481
  %v9510 = vadd.f32 %v9502, %v9504
  %v9511 = vadd.f32 %v9510, %v9506
  %v9512 = vadd.f32 %v9511, %v9508
  %v9513 = vrot.slane %v9512, 4
  %v9514 = vadd.f32 %v9512, %v9513
  %v9515 = vrot.slane %v9514, 2
  %v9516 = vadd.f32 %v9514, %v9515
  %v9517 = vrot.slane %v9516, 1
  %v9518 = vadd.f32 %v9516, %v9517
  %v9519 = vadd.f32 %v9503, %v9505
  %v9520 = vadd.f32 %v9519, %v9507
  %v9521 = vadd.f32 %v9520, %v9509
  %v9522 = vrot.slane %v9521, 4
  %v9523 = vadd.f32 %v9521, %v9522
  %v9524 = vrot.slane %v9523, 2
  %v9525 = vadd.f32 %v9523, %v9524
  %v9526 = vrot.slane %v9525, 1
  %v9527 = vadd.f32 %v9525, %v9526
  %v9528 = vadd.f32 %v9518, 0.0
  %v9529 = vadd.f32 %v9527, 0.0
  %v9530 = vld [vmem:[%s7 + $0x40] sm:$0xff]
  %v9531 = vld [vmem:[%s7 + $0x48] sm:$0xff]
  %v9532 = vld [vmem:[%s7 + $0x50] sm:$0xff]
  %v9533 = vld [vmem:[%s7 + $0x58] sm:$0xff]
  %v9534 = vld [vmem:[%s7 + $0x60] sm:$0xff]
  %v9535 = vld [vmem:[%s7 + $0x68] sm:$0xff]
  %v9536 = vld [vmem:[%s7 + $0x70] sm:$0xff]
  %v9537 = vld [vmem:[%s7 + $0x78] sm:$0xff]
  %v9538 = vsel %vm1174, %v9530, 0.0
  %v9539 = vsel %vm1174, %v9531, 0.0
  %v9540 = vsel %vm1175, %v9532, 0.0
  %v9541 = vsel %vm1175, %v9533, 0.0
  %v9542 = vsel %vm1176, %v9534, 0.0
  %v9543 = vsel %vm1176, %v9535, 0.0
  %v9544 = vsel %vm1177, %v9536, 0.0
  %v9545 = vsel %vm1177, %v9537, 0.0
  %v9546 = vadd.f32 %v9538, %v9540
  %v9547 = vadd.f32 %v9546, %v9542
  %v9548 = vadd.f32 %v9547, %v9544
  %v9549 = vrot.slane %v9548, 4
  %v9550 = vadd.f32 %v9548, %v9549
  %v9551 = vrot.slane %v9550, 2
  %v9552 = vadd.f32 %v9550, %v9551
  %v9553 = vrot.slane %v9552, 1
  %v9554 = vadd.f32 %v9552, %v9553
  %v9555 = vadd.f32 %v9539, %v9541
  %v9556 = vadd.f32 %v9555, %v9543
  %v9557 = vadd.f32 %v9556, %v9545
  %v9558 = vrot.slane %v9557, 4
  %v9559 = vadd.f32 %v9557, %v9558
  %v9560 = vrot.slane %v9559, 2
  %v9561 = vadd.f32 %v9559, %v9560
  %v9562 = vrot.slane %v9561, 1
  %v9563 = vadd.f32 %v9561, %v9562
  %v9564 = vadd.f32 %v9500, %v9554
  %v9565 = vadd.f32 %v9501, %v9563
  %v9566 = vmul.f32 %v9538, %v9538
  %v9567 = vmul.f32 %v9539, %v9539
  %v9568 = vmul.f32 %v9540, %v9540
  %v9569 = vmul.f32 %v9541, %v9541
  %v9570 = vmul.f32 %v9542, %v9542
  %v9571 = vmul.f32 %v9543, %v9543
  %v9572 = vmul.f32 %v9544, %v9544
  %v9573 = vmul.f32 %v9545, %v9545
  %v9574 = vadd.f32 %v9566, %v9568
  %v9575 = vadd.f32 %v9574, %v9570
  %v9576 = vadd.f32 %v9575, %v9572
  %v9577 = vrot.slane %v9576, 4
  %v9578 = vadd.f32 %v9576, %v9577
  %v9579 = vrot.slane %v9578, 2
  %v9580 = vadd.f32 %v9578, %v9579
  %v9581 = vrot.slane %v9580, 1
  %v9582 = vadd.f32 %v9580, %v9581
  %v9583 = vadd.f32 %v9567, %v9569
  %v9584 = vadd.f32 %v9583, %v9571
  %v9585 = vadd.f32 %v9584, %v9573
  %v9586 = vrot.slane %v9585, 4
  %v9587 = vadd.f32 %v9585, %v9586
  %v9588 = vrot.slane %v9587, 2
  %v9589 = vadd.f32 %v9587, %v9588
  %v9590 = vrot.slane %v9589, 1
  %v9591 = vadd.f32 %v9589, %v9590
  %v9592 = vadd.f32 %v9528, %v9582
  %v9593 = vadd.f32 %v9529, %v9591
  %v9594 = vld [vmem:[%s7 + $0x80] sm:$0xff]
  %v9595 = vld [vmem:[%s7 + $0x88] sm:$0xff]
  %v9596 = vld [vmem:[%s7 + $0x90] sm:$0xff]
  %v9597 = vld [vmem:[%s7 + $0x98] sm:$0xff]
  %v9598 = vld [vmem:[%s7 + $0xa0] sm:$0xff]
  %v9599 = vld [vmem:[%s7 + $0xa8] sm:$0xff]
  %v9600 = vld [vmem:[%s7 + $0xb0] sm:$0xff]
  %v9601 = vld [vmem:[%s7 + $0xb8] sm:$0xff]
  %v9602 = vsel %vm1174, %v9594, 0.0
  %v9603 = vsel %vm1174, %v9595, 0.0
  %v9604 = vsel %vm1175, %v9596, 0.0
  %v9605 = vsel %vm1175, %v9597, 0.0
  %v9606 = vsel %vm1176, %v9598, 0.0
  %v9607 = vsel %vm1176, %v9599, 0.0
  %v9608 = vsel %vm1177, %v9600, 0.0
  %v9609 = vsel %vm1177, %v9601, 0.0
  %v9610 = vadd.f32 %v9602, %v9604
  %v9611 = vadd.f32 %v9610, %v9606
  %v9612 = vadd.f32 %v9611, %v9608
  %v9613 = vrot.slane %v9612, 4
  %v9614 = vadd.f32 %v9612, %v9613
  %v9615 = vrot.slane %v9614, 2
  %v9616 = vadd.f32 %v9614, %v9615
  %v9617 = vrot.slane %v9616, 1
  %v9618 = vadd.f32 %v9616, %v9617
  %v9619 = vadd.f32 %v9603, %v9605
  %v9620 = vadd.f32 %v9619, %v9607
  %v9621 = vadd.f32 %v9620, %v9609
  %v9622 = vrot.slane %v9621, 4
  %v9623 = vadd.f32 %v9621, %v9622
  %v9624 = vrot.slane %v9623, 2
  %v9625 = vadd.f32 %v9623, %v9624
  %v9626 = vrot.slane %v9625, 1
  %v9627 = vadd.f32 %v9625, %v9626
  %v9628 = vadd.f32 %v9564, %v9618
  %v9629 = vadd.f32 %v9565, %v9627
  %v9630 = vmul.f32 %v9602, %v9602
  %v9631 = vmul.f32 %v9603, %v9603
  %v9632 = vmul.f32 %v9604, %v9604
  %v9633 = vmul.f32 %v9605, %v9605
  %v9634 = vmul.f32 %v9606, %v9606
  %v9635 = vmul.f32 %v9607, %v9607
  %v9636 = vmul.f32 %v9608, %v9608
  %v9637 = vmul.f32 %v9609, %v9609
  %v9638 = vadd.f32 %v9630, %v9632
  %v9639 = vadd.f32 %v9638, %v9634
  %v9640 = vadd.f32 %v9639, %v9636
  %v9641 = vrot.slane %v9640, 4
  %v9642 = vadd.f32 %v9640, %v9641
  %v9643 = vrot.slane %v9642, 2
  %v9644 = vadd.f32 %v9642, %v9643
  %v9645 = vrot.slane %v9644, 1
  %v9646 = vadd.f32 %v9644, %v9645
  %v9647 = vadd.f32 %v9631, %v9633
  %v9648 = vadd.f32 %v9647, %v9635
  %v9649 = vadd.f32 %v9648, %v9637
  %v9650 = vrot.slane %v9649, 4
  %v9651 = vadd.f32 %v9649, %v9650
  %v9652 = vrot.slane %v9651, 2
  %v9653 = vadd.f32 %v9651, %v9652
  %v9654 = vrot.slane %v9653, 1
  %v9655 = vadd.f32 %v9653, %v9654
  %v9656 = vadd.f32 %v9592, %v9646
  %v9657 = vadd.f32 %v9593, %v9655
  %v9658 = vld [vmem:[%s7 + $0xc0] sm:$0xff]
  %v9659 = vld [vmem:[%s7 + $0xc8] sm:$0xff]
  %v9660 = vld [vmem:[%s7 + $0xd0] sm:$0xff]
  %v9661 = vld [vmem:[%s7 + $0xd8] sm:$0xff]
  %v9662 = vld [vmem:[%s7 + $0xe0] sm:$0xff]
  %v9663 = vld [vmem:[%s7 + $0xe8] sm:$0xff]
  %v9664 = vld [vmem:[%s7 + $0xf0] sm:$0xff]
  %v9665 = vld [vmem:[%s7 + $0xf8] sm:$0xff]
  %v9666 = vsel %vm1174, %v9658, 0.0
  %v9667 = vsel %vm1174, %v9659, 0.0
  %v9668 = vsel %vm1175, %v9660, 0.0
  %v9669 = vsel %vm1175, %v9661, 0.0
  %v9670 = vsel %vm1176, %v9662, 0.0
  %v9671 = vsel %vm1176, %v9663, 0.0
  %v9672 = vsel %vm1177, %v9664, 0.0
  %v9673 = vsel %vm1177, %v9665, 0.0
  %v9674 = vadd.f32 %v9666, %v9668
  %v9675 = vadd.f32 %v9674, %v9670
  %v9676 = vadd.f32 %v9675, %v9672
  %v9677 = vrot.slane %v9676, 4
  %v9678 = vadd.f32 %v9676, %v9677
  %v9679 = vrot.slane %v9678, 2
  %v9680 = vadd.f32 %v9678, %v9679
  %v9681 = vrot.slane %v9680, 1
  %v9682 = vadd.f32 %v9680, %v9681
  %v9683 = vadd.f32 %v9667, %v9669
  %v9684 = vadd.f32 %v9683, %v9671
  %v9685 = vadd.f32 %v9684, %v9673
  %v9686 = vrot.slane %v9685, 4
  %v9687 = vadd.f32 %v9685, %v9686
  %v9688 = vrot.slane %v9687, 2
  %v9689 = vadd.f32 %v9687, %v9688
  %v9690 = vrot.slane %v9689, 1
  %v9691 = vadd.f32 %v9689, %v9690
  %v9692 = vadd.f32 %v9628, %v9682
  %v9693 = vadd.f32 %v9629, %v9691
  %v9694 = vmul.f32 %v9666, %v9666
  %v9695 = vmul.f32 %v9667, %v9667
  %v9696 = vmul.f32 %v9668, %v9668
  %v9697 = vmul.f32 %v9669, %v9669
  %v9698 = vmul.f32 %v9670, %v9670
  %v9699 = vmul.f32 %v9671, %v9671
  %v9700 = vmul.f32 %v9672, %v9672
  %v9701 = vmul.f32 %v9673, %v9673
  %v9702 = vadd.f32 %v9694, %v9696
  %v9703 = vadd.f32 %v9702, %v9698
  %v9704 = vadd.f32 %v9703, %v9700
  %v9705 = vrot.slane %v9704, 4
  %v9706 = vadd.f32 %v9704, %v9705
  %v9707 = vrot.slane %v9706, 2
  %v9708 = vadd.f32 %v9706, %v9707
  %v9709 = vrot.slane %v9708, 1
  %v9710 = vadd.f32 %v9708, %v9709
  %v9711 = vadd.f32 %v9695, %v9697
  %v9712 = vadd.f32 %v9711, %v9699
  %v9713 = vadd.f32 %v9712, %v9701
  %v9714 = vrot.slane %v9713, 4
  %v9715 = vadd.f32 %v9713, %v9714
  %v9716 = vrot.slane %v9715, 2
  %v9717 = vadd.f32 %v9715, %v9716
  %v9718 = vrot.slane %v9717, 1
  %v9719 = vadd.f32 %v9717, %v9718
  %v9720 = vadd.f32 %v9656, %v9710
  %v9721 = vadd.f32 %v9657, %v9719
  %v9722 = vld [vmem:[%s7 + $0x100] sm:$0xff]
  %v9723 = vld [vmem:[%s7 + $0x108] sm:$0xff]
  %v9724 = vld [vmem:[%s7 + $0x110] sm:$0xff]
  %v9725 = vld [vmem:[%s7 + $0x118] sm:$0xff]
  %v9726 = vld [vmem:[%s7 + $0x120] sm:$0xff]
  %v9727 = vld [vmem:[%s7 + $0x128] sm:$0xff]
  %v9728 = vld [vmem:[%s7 + $0x130] sm:$0xff]
  %v9729 = vld [vmem:[%s7 + $0x138] sm:$0xff]
  %v9730 = vsel %vm1174, %v9722, 0.0
  %v9731 = vsel %vm1174, %v9723, 0.0
  %v9732 = vsel %vm1175, %v9724, 0.0
  %v9733 = vsel %vm1175, %v9725, 0.0
  %v9734 = vsel %vm1176, %v9726, 0.0
  %v9735 = vsel %vm1176, %v9727, 0.0
  %v9736 = vsel %vm1177, %v9728, 0.0
  %v9737 = vsel %vm1177, %v9729, 0.0
  %v9738 = vadd.f32 %v9730, %v9732
  %v9739 = vadd.f32 %v9738, %v9734
  %v9740 = vadd.f32 %v9739, %v9736
  %v9741 = vrot.slane %v9740, 4
  %v9742 = vadd.f32 %v9740, %v9741
  %v9743 = vrot.slane %v9742, 2
  %v9744 = vadd.f32 %v9742, %v9743
  %v9745 = vrot.slane %v9744, 1
  %v9746 = vadd.f32 %v9744, %v9745
  %v9747 = vadd.f32 %v9731, %v9733
  %v9748 = vadd.f32 %v9747, %v9735
  %v9749 = vadd.f32 %v9748, %v9737
  %v9750 = vrot.slane %v9749, 4
  %v9751 = vadd.f32 %v9749, %v9750
  %v9752 = vrot.slane %v9751, 2
  %v9753 = vadd.f32 %v9751, %v9752
  %v9754 = vrot.slane %v9753, 1
  %v9755 = vadd.f32 %v9753, %v9754
  %v9756 = vadd.f32 %v9692, %v9746
  %v9757 = vadd.f32 %v9693, %v9755
  %v9758 = vmul.f32 %v9730, %v9730
  %v9759 = vmul.f32 %v9731, %v9731
  %v9760 = vmul.f32 %v9732, %v9732
  %v9761 = vmul.f32 %v9733, %v9733
  %v9762 = vmul.f32 %v9734, %v9734
  %v9763 = vmul.f32 %v9735, %v9735
  %v9764 = vmul.f32 %v9736, %v9736
  %v9765 = vmul.f32 %v9737, %v9737
  %v9766 = vadd.f32 %v9758, %v9760
  %v9767 = vadd.f32 %v9766, %v9762
  %v9768 = vadd.f32 %v9767, %v9764
  %v9769 = vrot.slane %v9768, 4
  %v9770 = vadd.f32 %v9768, %v9769
  %v9771 = vrot.slane %v9770, 2
  %v9772 = vadd.f32 %v9770, %v9771
  %v9773 = vrot.slane %v9772, 1
  %v9774 = vadd.f32 %v9772, %v9773
  %v9775 = vadd.f32 %v9759, %v9761
  %v9776 = vadd.f32 %v9775, %v9763
  %v9777 = vadd.f32 %v9776, %v9765
  %v9778 = vrot.slane %v9777, 4
  %v9779 = vadd.f32 %v9777, %v9778
  %v9780 = vrot.slane %v9779, 2
  %v9781 = vadd.f32 %v9779, %v9780
  %v9782 = vrot.slane %v9781, 1
  %v9783 = vadd.f32 %v9781, %v9782
  %v9784 = vadd.f32 %v9720, %v9774
  %v9785 = vadd.f32 %v9721, %v9783
  %v9786 = vld [vmem:[%s7 + $0x140] sm:$0xff]
  %v9787 = vld [vmem:[%s7 + $0x148] sm:$0xff]
  %v9788 = vld [vmem:[%s7 + $0x150] sm:$0xff]
  %v9789 = vld [vmem:[%s7 + $0x158] sm:$0xff]
  %v9790 = vld [vmem:[%s7 + $0x160] sm:$0xff]
  %v9791 = vld [vmem:[%s7 + $0x168] sm:$0xff]
  %v9792 = vld [vmem:[%s7 + $0x170] sm:$0xff]
  %v9793 = vld [vmem:[%s7 + $0x178] sm:$0xff]
  %v9794 = vsel %vm1174, %v9786, 0.0
  %v9795 = vsel %vm1174, %v9787, 0.0
  %v9796 = vsel %vm1175, %v9788, 0.0
  %v9797 = vsel %vm1175, %v9789, 0.0
  %v9798 = vsel %vm1176, %v9790, 0.0
  %v9799 = vsel %vm1176, %v9791, 0.0
  %v9800 = vsel %vm1177, %v9792, 0.0
  %v9801 = vsel %vm1177, %v9793, 0.0
  %v9802 = vadd.f32 %v9794, %v9796
  %v9803 = vadd.f32 %v9802, %v9798
  %v9804 = vadd.f32 %v9803, %v9800
  %v9805 = vrot.slane %v9804, 4
  %v9806 = vadd.f32 %v9804, %v9805
  %v9807 = vrot.slane %v9806, 2
  %v9808 = vadd.f32 %v9806, %v9807
  %v9809 = vrot.slane %v9808, 1
  %v9810 = vadd.f32 %v9808, %v9809
  %v9811 = vadd.f32 %v9795, %v9797
  %v9812 = vadd.f32 %v9811, %v9799
  %v9813 = vadd.f32 %v9812, %v9801
  %v9814 = vrot.slane %v9813, 4
  %v9815 = vadd.f32 %v9813, %v9814
  %v9816 = vrot.slane %v9815, 2
  %v9817 = vadd.f32 %v9815, %v9816
  %v9818 = vrot.slane %v9817, 1
  %v9819 = vadd.f32 %v9817, %v9818
  %v9820 = vadd.f32 %v9756, %v9810
  %v9821 = vadd.f32 %v9757, %v9819
  %v9822 = vmul.f32 %v9794, %v9794
  %v9823 = vmul.f32 %v9795, %v9795
  %v9824 = vmul.f32 %v9796, %v9796
  %v9825 = vmul.f32 %v9797, %v9797
  %v9826 = vmul.f32 %v9798, %v9798
  %v9827 = vmul.f32 %v9799, %v9799
  %v9828 = vmul.f32 %v9800, %v9800
  %v9829 = vmul.f32 %v9801, %v9801
  %v9830 = vadd.f32 %v9822, %v9824
  %v9831 = vadd.f32 %v9830, %v9826
  %v9832 = vadd.f32 %v9831, %v9828
  %v9833 = vrot.slane %v9832, 4
  %v9834 = vadd.f32 %v9832, %v9833
  %v9835 = vrot.slane %v9834, 2
  %v9836 = vadd.f32 %v9834, %v9835
  %v9837 = vrot.slane %v9836, 1
  %v9838 = vadd.f32 %v9836, %v9837
  %v9839 = vadd.f32 %v9823, %v9825
  %v9840 = vadd.f32 %v9839, %v9827
  %v9841 = vadd.f32 %v9840, %v9829
  %v9842 = vrot.slane %v9841, 4
  %v9843 = vadd.f32 %v9841, %v9842
  %v9844 = vrot.slane %v9843, 2
  %v9845 = vadd.f32 %v9843, %v9844
  %v9846 = vrot.slane %v9845, 1
  %v9847 = vadd.f32 %v9845, %v9846
  %v9848 = vadd.f32 %v9784, %v9838
  %v9849 = vadd.f32 %v9785, %v9847
  %v9850 = vld [vmem:[%s7 + $0x180] sm:$0xff]
  %v9851 = vld [vmem:[%s7 + $0x188] sm:$0xff]
  %v9852 = vld [vmem:[%s7 + $0x190] sm:$0xff]
  %v9853 = vld [vmem:[%s7 + $0x198] sm:$0xff]
  %v9854 = vld [vmem:[%s7 + $0x1a0] sm:$0xff]
  %v9855 = vld [vmem:[%s7 + $0x1a8] sm:$0xff]
  %v9856 = vld [vmem:[%s7 + $0x1b0] sm:$0xff]
  %v9857 = vld [vmem:[%s7 + $0x1b8] sm:$0xff]
  %v9858 = vsel %vm1174, %v9850, 0.0
  %v9859 = vsel %vm1174, %v9851, 0.0
  %v9860 = vsel %vm1175, %v9852, 0.0
  %v9861 = vsel %vm1175, %v9853, 0.0
  %v9862 = vsel %vm1176, %v9854, 0.0
  %v9863 = vsel %vm1176, %v9855, 0.0
  %v9864 = vsel %vm1177, %v9856, 0.0
  %v9865 = vsel %vm1177, %v9857, 0.0
  %v9866 = vadd.f32 %v9858, %v9860
  %v9867 = vadd.f32 %v9866, %v9862
  %v9868 = vadd.f32 %v9867, %v9864
  %v9869 = vrot.slane %v9868, 4
  %v9870 = vadd.f32 %v9868, %v9869
  %v9871 = vrot.slane %v9870, 2
  %v9872 = vadd.f32 %v9870, %v9871
  %v9873 = vrot.slane %v9872, 1
  %v9874 = vadd.f32 %v9872, %v9873
  %v9875 = vadd.f32 %v9859, %v9861
  %v9876 = vadd.f32 %v9875, %v9863
  %v9877 = vadd.f32 %v9876, %v9865
  %v9878 = vrot.slane %v9877, 4
  %v9879 = vadd.f32 %v9877, %v9878
  %v9880 = vrot.slane %v9879, 2
  %v9881 = vadd.f32 %v9879, %v9880
  %v9882 = vrot.slane %v9881, 1
  %v9883 = vadd.f32 %v9881, %v9882
  %v9884 = vadd.f32 %v9820, %v9874
  %v9885 = vadd.f32 %v9821, %v9883
  %v9886 = vmul.f32 %v9858, %v9858
  %v9887 = vmul.f32 %v9859, %v9859
  %v9888 = vmul.f32 %v9860, %v9860
  %v9889 = vmul.f32 %v9861, %v9861
  %v9890 = vmul.f32 %v9862, %v9862
  %v9891 = vmul.f32 %v9863, %v9863
  %v9892 = vmul.f32 %v9864, %v9864
  %v9893 = vmul.f32 %v9865, %v9865
  %v9894 = vadd.f32 %v9886, %v9888
  %v9895 = vadd.f32 %v9894, %v9890
  %v9896 = vadd.f32 %v9895, %v9892
  %v9897 = vrot.slane %v9896, 4
  %v9898 = vadd.f32 %v9896, %v9897
  %v9899 = vrot.slane %v9898, 2
  %v9900 = vadd.f32 %v9898, %v9899
  %v9901 = vrot.slane %v9900, 1
  %v9902 = vadd.f32 %v9900, %v9901
  %v9903 = vadd.f32 %v9887, %v9889
  %v9904 = vadd.f32 %v9903, %v9891
  %v9905 = vadd.f32 %v9904, %v9893
  %v9906 = vrot.slane %v9905, 4
  %v9907 = vadd.f32 %v9905, %v9906
  %v9908 = vrot.slane %v9907, 2
  %v9909 = vadd.f32 %v9907, %v9908
  %v9910 = vrot.slane %v9909, 1
  %v9911 = vadd.f32 %v9909, %v9910
  %v9912 = vadd.f32 %v9848, %v9902
  %v9913 = vadd.f32 %v9849, %v9911
  %v9914 = vmul.f32 %v9884, 0.0051020407
  %v9915 = vmul.f32 %v9885, 0.0051020407
  %v9916 = vmul.f32 %v9912, 0.0051020407
  %v9917 = vmul.f32 %v9913, 0.0051020407
  %v9918 = vmul.f32 %v9914, %v9914
  %v9919 = vmul.f32 %v9915, %v9915
  %v9920 = vsub.f32 %v9916, %v9918
  %v9921 = vsub.f32 %v9917, %v9919
  %v9922 = vadd.f32 %v9920, 1e-05
  %v9923 = vadd.f32 %v9921, 1e-05
  %v9924 = vrsqrt.pop %v9922
  %v9925 = vrsqrt.pop %v9923
  %v9926 = vld [vmem:[%s5] sm:$0x3]
  %v9928 = vlaneseq
  %v9929 = vshrl.u32 %v9928, 7
  %v9930 = vsub.s32 0, %v9929
  %v9931 = vrot.slane %v9926, %v9930
  %v9932 = vlaneseq
  %v9933 = vshrl.u32 %v9932, 7
  %v9934 = vsub.s32 1, %v9933
  %v9935 = vrot.slane %v9926, %v9934
  %v9938 = vmul.f32 %v9924, %v9931
  %v9939 = vmul.f32 %v9925, %v9935
  %v9940 = vld [vmem:[%s6] sm:$0x3]
  %v9941 = vmul.f32 %v9914, %v9938
  %v9942 = vmul.f32 %v9915, %v9939
  %v9945 = vcombine.low %v9941, %v9942
  %v9947 = vunpack.c.l.s4 1966171168
  %v9948 = vunpack.c.0.s8 %v9947
  %v9949 = vlaneseq
  %v9950 = vshrl.u32 %v9949, 7
  %v9951 = vsub.s32 %v9948, %v9950
  %v9952 = vrot.slane %v9945, %v9951
  %v9954 = vunpack.c.l.s4 1966171168
  %v9955 = vunpack.c.0.s8 %v9954
  %v9956 = vlaneseq
  %v9957 = vshrl.u32 %v9956, 7
  %v9958 = vsub.s32 %v9955, %v9957
  %v9959 = vrot.slane %v9952, %v9958
  %v9961 = vsub.f32 %v9940, %v9959
  %v9962 = vlaneseq
  %v9963 = vshrl.u32 %v9962, 7
  %v9964 = vsub.s32 0, %v9963
  %v9965 = vrot.slane %v9938, %v9964
  %v9966 = vlaneseq
  %v9967 = vshrl.u32 %v9966, 7
  %v9968 = vsub.s32 0, %v9967
  %v9969 = vrot.slane %v9939, %v9968
  %v9970 = vmul.f32 %v9466, %v9965
  %v9971 = vmul.f32 %v9467, %v9969
  %v9972 = vmul.f32 %v9468, %v9965
  %v9973 = vmul.f32 %v9469, %v9969
  %v9974 = vmul.f32 %v9470, %v9965
  %v9975 = vmul.f32 %v9471, %v9969
  %v9976 = vmul.f32 %v9472, %v9965
  %v9977 = vmul.f32 %v9473, %v9969
  %v9979 = vlaneseq
  %v9980 = vshrl.u32 %v9979, 7
  %v9981 = vsub.s32 0, %v9980
  %v9982 = vrot.slane %v9961, %v9981
  %v9983 = vlaneseq
  %v9984 = vshrl.u32 %v9983, 7
  %v9985 = vsub.s32 1, %v9984
  %v9986 = vrot.slane %v9961, %v9985
  %v9989 = vadd.f32 %v9970, %v9982
  %v9990 = vadd.f32 %v9971, %v9986
  %v9991 = vadd.f32 %v9972, %v9982
  %v9992 = vadd.f32 %v9973, %v9986
  %v9993 = vadd.f32 %v9974, %v9982
  %v9994 = vadd.f32 %v9975, %v9986
  %v9995 = vadd.f32 %v9976, %v9982
  %v9996 = vadd.f32 %v9977, %v9986
  %9997 = vst [vmem:[%s7] sm:$0xff] %v9989
  %9998 = vst [vmem:[%s7 + $0x8] sm:$0xff] %v9990
  %9999 = vst [vmem:[%s7 + $0x10] sm:$0xff] %v9991
  %10000 = vst [vmem:[%s7 + $0x18] sm:$0xff] %v9992
  %10001 = vst [vmem:[%s7 + $0x20] sm:$0xff] %v9993
  %10002 = vst [vmem:[%s7 + $0x28] sm:$0xff] %v9994
  %10003 = vst [vmem:[%s7 + $0x30] sm:$0xff] %v9995
  %10004 = vst [vmem:[%s7 + $0x38] sm:$0xff] %v9996
  %v10005 = vld [vmem:[%s7 + $0x40] sm:$0xff]
  %v10006 = vld [vmem:[%s7 + $0x48] sm:$0xff]
  %v10007 = vld [vmem:[%s7 + $0x50] sm:$0xff]
  %v10008 = vld [vmem:[%s7 + $0x58] sm:$0xff]
  %v10009 = vld [vmem:[%s7 + $0x60] sm:$0xff]
  %v10010 = vld [vmem:[%s7 + $0x68] sm:$0xff]
  %v10011 = vld [vmem:[%s7 + $0x70] sm:$0xff]
  %v10012 = vld [vmem:[%s7 + $0x78] sm:$0xff]
  %v10013 = vmul.f32 %v10005, %v9965
  %v10014 = vmul.f32 %v10006, %v9969
  %v10015 = vmul.f32 %v10007, %v9965
  %v10016 = vmul.f32 %v10008, %v9969
  %v10017 = vmul.f32 %v10009, %v9965
  %v10018 = vmul.f32 %v10010, %v9969
  %v10019 = vmul.f32 %v10011, %v9965
  %v10020 = vmul.f32 %v10012, %v9969
  %v10021 = vadd.f32 %v10013, %v9982
  %v10022 = vadd.f32 %v10014, %v9986
  %v10023 = vadd.f32 %v10015, %v9982
  %v10024 = vadd.f32 %v10016, %v9986
  %v10025 = vadd.f32 %v10017, %v9982
  %v10026 = vadd.f32 %v10018, %v9986
  %v10027 = vadd.f32 %v10019, %v9982
  %v10028 = vadd.f32 %v10020, %v9986
  %10029 = vst [vmem:[%s7 + $0x40] sm:$0xff] %v10021
  %10030 = vst [vmem:[%s7 + $0x48] sm:$0xff] %v10022
  %10031 = vst [vmem:[%s7 + $0x50] sm:$0xff] %v10023
  %10032 = vst [vmem:[%s7 + $0x58] sm:$0xff] %v10024
  %10033 = vst [vmem:[%s7 + $0x60] sm:$0xff] %v10025
  %10034 = vst [vmem:[%s7 + $0x68] sm:$0xff] %v10026
  %10035 = vst [vmem:[%s7 + $0x70] sm:$0xff] %v10027
  %10036 = vst [vmem:[%s7 + $0x78] sm:$0xff] %v10028
  %v10037 = vld [vmem:[%s7 + $0x80] sm:$0xff]
  %v10038 = vld [vmem:[%s7 + $0x88] sm:$0xff]
  %v10039 = vld [vmem:[%s7 + $0x90] sm:$0xff]
  %v10040 = vld [vmem:[%s7 + $0x98] sm:$0xff]
  %v10041 = vld [vmem:[%s7 + $0xa0] sm:$0xff]
  %v10042 = vld [vmem:[%s7 + $0xa8] sm:$0xff]
  %v10043 = vld [vmem:[%s7 + $0xb0] sm:$0xff]
  %v10044 = vld [vmem:[%s7 + $0xb8] sm:$0xff]
  %v10045 = vmul.f32 %v10037, %v9965
  %v10046 = vmul.f32 %v10038, %v9969
  %v10047 = vmul.f32 %v10039, %v9965
  %v10048 = vmul.f32 %v10040, %v9969
  %v10049 = vmul.f32 %v10041, %v9965
  %v10050 = vmul.f32 %v10042, %v9969
  %v10051 = vmul.f32 %v10043, %v9965
  %v10052 = vmul.f32 %v10044, %v9969
  %v10053 = vadd.f32 %v10045, %v9982
  %v10054 = vadd.f32 %v10046, %v9986
  %v10055 = vadd.f32 %v10047, %v9982
  %v10056 = vadd.f32 %v10048, %v9986
  %v10057 = vadd.f32 %v10049, %v9982
  %v10058 = vadd.f32 %v10050, %v9986
  %v10059 = vadd.f32 %v10051, %v9982
  %v10060 = vadd.f32 %v10052, %v9986
  %10061 = vst [vmem:[%s7 + $0x80] sm:$0xff] %v10053
  %10062 = vst [vmem:[%s7 + $0x88] sm:$0xff] %v10054
  %10063 = vst [vmem:[%s7 + $0x90] sm:$0xff] %v10055
  %10064 = vst [vmem:[%s7 + $0x98] sm:$0xff] %v10056
  %10065 = vst [vmem:[%s7 + $0xa0] sm:$0xff] %v10057
  %10066 = vst [vmem:[%s7 + $0xa8] sm:$0xff] %v10058
  %10067 = vst [vmem:[%s7 + $0xb0] sm:$0xff] %v10059
  %10068 = vst [vmem:[%s7 + $0xb8] sm:$0xff] %v10060
  %v10069 = vld [vmem:[%s7 + $0xc0] sm:$0xff]
  %v10070 = vld [vmem:[%s7 + $0xc8] sm:$0xff]
  %v10071 = vld [vmem:[%s7 + $0xd0] sm:$0xff]
  %v10072 = vld [vmem:[%s7 + $0xd8] sm:$0xff]
  %v10073 = vld [vmem:[%s7 + $0xe0] sm:$0xff]
  %v10074 = vld [vmem:[%s7 + $0xe8] sm:$0xff]
  %v10075 = vld [vmem:[%s7 + $0xf0] sm:$0xff]
  %v10076 = vld [vmem:[%s7 + $0xf8] sm:$0xff]
  %v10077 = vmul.f32 %v10069, %v9965
  %v10078 = vmul.f32 %v10070, %v9969
  %v10079 = vmul.f32 %v10071, %v9965
  %v10080 = vmul.f32 %v10072, %v9969
  %v10081 = vmul.f32 %v10073, %v9965
  %v10082 = vmul.f32 %v10074, %v9969
  %v10083 = vmul.f32 %v10075, %v9965
  %v10084 = vmul.f32 %v10076, %v9969
  %v10085 = vadd.f32 %v10077, %v9982
  %v10086 = vadd.f32 %v10078, %v9986
  %v10087 = vadd.f32 %v10079, %v9982
  %v10088 = vadd.f32 %v10080, %v9986
  %v10089 = vadd.f32 %v10081, %v9982
  %v10090 = vadd.f32 %v10082, %v9986
  %v10091 = vadd.f32 %v10083, %v9982
  %v10092 = vadd.f32 %v10084, %v9986
  %10093 = vst [vmem:[%s7 + $0xc0] sm:$0xff] %v10085
  %10094 = vst [vmem:[%s7 + $0xc8] sm:$0xff] %v10086
  %10095 = vst [vmem:[%s7 + $0xd0] sm:$0xff] %v10087
  %10096 = vst [vmem:[%s7 + $0xd8] sm:$0xff] %v10088
  %10097 = vst [vmem:[%s7 + $0xe0] sm:$0xff] %v10089
  %10098 = vst [vmem:[%s7 + $0xe8] sm:$0xff] %v10090
  %10099 = vst [vmem:[%s7 + $0xf0] sm:$0xff] %v10091
  %10100 = vst [vmem:[%s7 + $0xf8] sm:$0xff] %v10092
  %v10101 = vld [vmem:[%s7 + $0x100] sm:$0xff]
  %v10102 = vld [vmem:[%s7 + $0x108] sm:$0xff]
  %v10103 = vld [vmem:[%s7 + $0x110] sm:$0xff]
  %v10104 = vld [vmem:[%s7 + $0x118] sm:$0xff]
  %v10105 = vld [vmem:[%s7 + $0x120] sm:$0xff]
  %v10106 = vld [vmem:[%s7 + $0x128] sm:$0xff]
  %v10107 = vld [vmem:[%s7 + $0x130] sm:$0xff]
  %v10108 = vld [vmem:[%s7 + $0x138] sm:$0xff]
  %v10109 = vmul.f32 %v10101, %v9965
  %v10110 = vmul.f32 %v10102, %v9969
  %v10111 = vmul.f32 %v10103, %v9965
  %v10112 = vmul.f32 %v10104, %v9969
  %v10113 = vmul.f32 %v10105, %v9965
  %v10114 = vmul.f32 %v10106, %v9969
  %v10115 = vmul.f32 %v10107, %v9965
  %v10116 = vmul.f32 %v10108, %v9969
  %v10117 = vadd.f32 %v10109, %v9982
  %v10118 = vadd.f32 %v10110, %v9986
  %v10119 = vadd.f32 %v10111, %v9982
  %v10120 = vadd.f32 %v10112, %v9986
  %v10121 = vadd.f32 %v10113, %v9982
  %v10122 = vadd.f32 %v10114, %v9986
  %v10123 = vadd.f32 %v10115, %v9982
  %v10124 = vadd.f32 %v10116, %v9986
  %10125 = vst [vmem:[%s7 + $0x100] sm:$0xff] %v10117
  %10126 = vst [vmem:[%s7 + $0x108] sm:$0xff] %v10118
  %10127 = vst [vmem:[%s7 + $0x110] sm:$0xff] %v10119
  %10128 = vst [vmem:[%s7 + $0x118] sm:$0xff] %v10120
  %10129 = vst [vmem:[%s7 + $0x120] sm:$0xff] %v10121
  %10130 = vst [vmem:[%s7 + $0x128] sm:$0xff] %v10122
  %10131 = vst [vmem:[%s7 + $0x130] sm:$0xff] %v10123
  %10132 = vst [vmem:[%s7 + $0x138] sm:$0xff] %v10124
  %v10133 = vld [vmem:[%s7 + $0x140] sm:$0xff]
  %v10134 = vld [vmem:[%s7 + $0x148] sm:$0xff]
  %v10135 = vld [vmem:[%s7 + $0x150] sm:$0xff]
  %v10136 = vld [vmem:[%s7 + $0x158] sm:$0xff]
  %v10137 = vld [vmem:[%s7 + $0x160] sm:$0xff]
  %v10138 = vld [vmem:[%s7 + $0x168] sm:$0xff]
  %v10139 = vld [vmem:[%s7 + $0x170] sm:$0xff]
  %v10140 = vld [vmem:[%s7 + $0x178] sm:$0xff]
  %v10141 = vmul.f32 %v10133, %v9965
  %v10142 = vmul.f32 %v10134, %v9969
  %v10143 = vmul.f32 %v10135, %v9965
  %v10144 = vmul.f32 %v10136, %v9969
  %v10145 = vmul.f32 %v10137, %v9965
  %v10146 = vmul.f32 %v10138, %v9969
  %v10147 = vmul.f32 %v10139, %v9965
  %v10148 = vmul.f32 %v10140, %v9969
  %v10149 = vadd.f32 %v10141, %v9982
  %v10150 = vadd.f32 %v10142, %v9986
  %v10151 = vadd.f32 %v10143, %v9982
  %v10152 = vadd.f32 %v10144, %v9986
  %v10153 = vadd.f32 %v10145, %v9982
  %v10154 = vadd.f32 %v10146, %v9986
  %v10155 = vadd.f32 %v10147, %v9982
  %v10156 = vadd.f32 %v10148, %v9986
  %10157 = vst [vmem:[%s7 + $0x140] sm:$0xff] %v10149
  %10158 = vst [vmem:[%s7 + $0x148] sm:$0xff] %v10150
  %10159 = vst [vmem:[%s7 + $0x150] sm:$0xff] %v10151
  %10160 = vst [vmem:[%s7 + $0x158] sm:$0xff] %v10152
  %10161 = vst [vmem:[%s7 + $0x160] sm:$0xff] %v10153
  %10162 = vst [vmem:[%s7 + $0x168] sm:$0xff] %v10154
  %10163 = vst [vmem:[%s7 + $0x170] sm:$0xff] %v10155
  %10164 = vst [vmem:[%s7 + $0x178] sm:$0xff] %v10156
  %v10165 = vld [vmem:[%s7 + $0x180] sm:$0xff]
  %v10166 = vld [vmem:[%s7 + $0x188] sm:$0xff]
  %v10167 = vld [vmem:[%s7 + $0x190] sm:$0xff]
  %v10168 = vld [vmem:[%s7 + $0x198] sm:$0xff]
  %v10169 = vld [vmem:[%s7 + $0x1a0] sm:$0xff]
  %v10170 = vld [vmem:[%s7 + $0x1a8] sm:$0xff]
  %v10171 = vld [vmem:[%s7 + $0x1b0] sm:$0xff]
  %v10172 = vld [vmem:[%s7 + $0x1b8] sm:$0xff]
  %v10173 = vmul.f32 %v10165, %v9965
  %v10174 = vmul.f32 %v10166, %v9969
  %v10175 = vmul.f32 %v10167, %v9965
  %v10176 = vmul.f32 %v10168, %v9969
  %v10177 = vmul.f32 %v10169, %v9965
  %v10178 = vmul.f32 %v10170, %v9969
  %v10179 = vmul.f32 %v10171, %v9965
  %v10180 = vmul.f32 %v10172, %v9969
  %v10181 = vadd.f32 %v10173, %v9982
  %v10182 = vadd.f32 %v10174, %v9986
  %v10183 = vadd.f32 %v10175, %v9982
  %v10184 = vadd.f32 %v10176, %v9986
  %v10185 = vadd.f32 %v10177, %v9982
  %v10186 = vadd.f32 %v10178, %v9986
  %v10187 = vadd.f32 %v10179, %v9982
  %v10188 = vadd.f32 %v10180, %v9986
  %10189 = vst [vmem:[%s7 + $0x180] sm:$0xff] %v10181
  %10190 = vst [vmem:[%s7 + $0x188] sm:$0xff] %v10182
  %10191 = vst [vmem:[%s7 + $0x190] sm:$0xff] %v10183
  %10192 = vst [vmem:[%s7 + $0x198] sm:$0xff] %v10184
  %10193 = vst [vmem:[%s7 + $0x1a0] sm:$0xff] %v10185
  %10194 = vst [vmem:[%s7 + $0x1a8] sm:$0xff] %v10186
  %10195 = vst [vmem:[%s7 + $0x1b0] sm:$0xff] %v10187
  %10196 = vst [vmem:[%s7 + $0x1b8] sm:$0xff] %v10188
  // Predicated region
  $region60: #{fused_bn_add_relu_conv_bn.1} parent=0 // pred_check
    _
  $region61: #{fused_bn_add_relu_conv_bn.1} parent=0 // pred_check_branch
    %10198 = sbr.rel (0) target = $region63
  $region62: #{fused_bn_add_relu_conv_bn.1} parent=0 // pred_region
    _
  $region63: #{fused_bn_add_relu_conv_bn.1} parent=0 // pred_fallthru
    _
  // Predicated region
  $region64: #{fused_bn_add_relu_conv_bn.1} parent=0 // pred_check
    _
  $region65: #{fused_bn_add_relu_conv_bn.1} parent=0 // pred_check_branch
    %10200 = sbr.rel (0) target = $region67
  $region66: #{fused_bn_add_relu_conv_bn.1} parent=0 // pred_region
    _
  $region67: #{fused_bn_add_relu_conv_bn.1} parent=0 // pred_fallthru
    _
  %10201 = vsyncmov [#allocation4]
  %s10202 = vpop.sfrf %10201
  %p10203 = scmp.eq.s32.totalorder %s10202, 0
  %p10204 = pneg %p10203
  %10206 = shalt.err (%p10204)

</llo_original>
